<compile_context>
chip_gen: v7x
topology: tpu7x:2x2x1
jax: 0.10.0
libtpu: 0.0.40
codegen_flags: <defaults>
</compile_context>

<pallas_src>
import functools

import jax
import jax.numpy as jnp
from jax.experimental import pallas as pl
from jax.experimental.pallas import tpu as pltpu

BN_EPS = 1e-5
C_PAD = 8          # input channels padded 3 -> 8 for a clean (8,128)-aligned tile


def _dma_start(copy, priority=None):
    """Start an async copy, using a background DMA priority when the installed
    JAX exposes it (falls back cleanly otherwise)."""
    if priority is None:
        copy.start()
        return
    try:
        copy.start(priority=priority)
    except TypeError:
        copy.start()


# ------------------------------- Pallas kernel ------------------------------ #

def ae_kernel(x_ref, *refs, n_layers, n_pts, rows, tile_rows,
              clouds_per_tile, tiles_per_cloud):
    """refs = [W_l, gamma_l, beta_l]*5, dW1, db1, dW2, db2, dW3_hbm, db3, out,
              sum_l*5, ssq_l*5, shift_l*5, wscaled_l*5, zmax, w3_buf, w3_sem."""
    i0 = 0
    enc = refs[i0:i0 + 3 * n_layers]; i0 += 3 * n_layers
    dW1, db1, dW2, db2, dW3_hbm, db3 = refs[i0:i0 + 6]; i0 += 6
    out_ref = refs[i0]; i0 += 1
    sum_r = refs[i0:i0 + n_layers]; i0 += n_layers
    ssq_r = refs[i0:i0 + n_layers]; i0 += n_layers
    shift_r = refs[i0:i0 + n_layers]; i0 += n_layers
    wsc_r = refs[i0:i0 + n_layers]; i0 += n_layers
    zmax, w3_buf, w3_sem = refs[i0:i0 + 3]

    def enc_w(i):     return enc[3 * i]
    def enc_gamma(i): return enc[3 * i + 1]
    def enc_beta(i):  return enc[3 * i + 2]

    s = pl.program_id(0)                      # sweep index: 0..n_layers
    t = pl.program_id(1)                      # row-tile index within a sweep
    first_tile = t == 0
    last_tile = t == pl.num_programs(1) - 1

    # Kick off the decoder-W3 DMA on the very first grid step (background priority)
    # so its transfer overlaps the whole encoder; waited on right before the final
    # decoder matmul.
    @pl.when((s == 0) & first_tile)
    def _():
        _dma_start(pltpu.make_async_copy(dW3_hbm, w3_buf, w3_sem), priority=1)

    x_tile = x_ref[...]                       # (tile_rows, C_PAD) bf16

    def forward_to(n_apply, keep_f32_last=False):
        """Apply layers 0..n_apply-1 using BN-scale-folded weights + shift."""
        h = x_tile
        for i in range(n_apply):
            pre = jnp.dot(h, wsc_r[i][...], preferred_element_type=jnp.float32)
            a = jnp.maximum(pre + shift_r[i][...], 0.0)      # folded BN shift + ReLU
            h = a if (keep_f32_last and i == n_apply - 1) else a.astype(jnp.bfloat16)
        return h

    # ---- sweeps 0..n_layers-1: accumulate BN batch statistics for layer l ---- #
    for l in range(n_layers):
        @pl.when(s == l)
        def _(l=l):
            @pl.when(first_tile)
            def _():
                sum_r[l][...] = jnp.zeros(sum_r[l].shape, jnp.float32)
                ssq_r[l][...] = jnp.zeros(ssq_r[l].shape, jnp.float32)

            h = forward_to(l)
            pre = jnp.dot(h, enc_w(l)[...], preferred_element_type=jnp.float32)
            sum_r[l][...] += jnp.sum(pre, axis=0, keepdims=True)
            ssq_r[l][...] += jnp.sum(pre * pre, axis=0, keepdims=True)

            @pl.when(last_tile)
            def _():
                # One-pass biased variance: E[x^2] - E[x]^2 (clamped for safety).
                # TODO(synk): a two-pass / compensated variance would track the f32
                #             PyTorch reference more tightly for very large B*N.
                mean = sum_r[l][...] * (1.0 / rows)
                var = jnp.maximum(ssq_r[l][...] * (1.0 / rows) - mean * mean, 0.0)
                scale = enc_gamma(l)[...] * jax.lax.rsqrt(var + BN_EPS)
                shift_r[l][...] = enc_beta(l)[...] - mean * scale
                # Fold the BN scale into the layer weights once: later sweeps do a
                # single matmul + add instead of matmul + mul + add.
                wsc_r[l][...] = (enc_w(l)[...].astype(jnp.float32)
                                 * scale).astype(jnp.bfloat16)

    # ---- final sweep: apply all layers, per-cloud max, then decoder ---- #
    @pl.when(s == n_layers)
    def _():
        h = forward_to(n_layers, keep_f32_last=True)        # (tile_rows, 128) f32
        z_dim = h.shape[-1]

        if clouds_per_tile is not None:
            # Tile covers whole point clouds: per-cloud max is final, single dynamic
            # k-row store into zmax (no read-modify-write, no init needed).
            cmax = jnp.max(h.reshape(clouds_per_tile, n_pts, z_dim), axis=1)
            start = t * clouds_per_tile
            if clouds_per_tile % 8 == 0:
                start = pl.multiple_of(start, 8)
            zmax[pl.ds(start, clouds_per_tile), :] = cmax
        else:
            # Fallback: several tiles per cloud -> running max on one dynamic row.
            @pl.when(first_tile)
            def _():
                # ReLU outputs are >= 0, so 0 is a valid identity for the max.
                zmax[...] = jnp.zeros(zmax.shape, zmax.dtype)
            b = t // tiles_per_cloud
            tmax = jnp.max(h, axis=0, keepdims=True)         # (1, 128)
            zmax[pl.ds(b, 1), :] = jnp.maximum(zmax[pl.ds(b, 1), :], tmax)

        @pl.when(last_tile)
        def _():
            # Decoder: 3 small matmuls on the (B, 128) bottleneck (never leaves VMEM).
            pltpu.make_async_copy(dW3_hbm, w3_buf, w3_sem).wait()
            z = zmax[...].astype(jnp.bfloat16)
            h1 = jnp.maximum(
                jnp.dot(z, dW1[...], preferred_element_type=jnp.float32) + db1[...], 0.0)
            h2 = jnp.maximum(
                jnp.dot(h1.astype(jnp.bfloat16), dW2[...],
                        preferred_element_type=jnp.float32) + db2[...], 0.0)
            out_ref[...] = jnp.dot(h2.astype(jnp.bfloat16), w3_buf[...],
                                   preferred_element_type=jnp.float32) + db3[...]


# -------------------------------- host wrapper ------------------------------ #

def _pick_tiling(n_clouds, n_pts, cap=1024):
    """Pick (tile_rows, clouds_per_tile, tiles_per_cloud).

    Prefer tiles spanning k whole point clouds (largest k with k | B,
    k*N <= cap and k*N a multiple of 8) so per-cloud max is tile-local and the
    matmul M dimension is large.  Fall back to several tiles per cloud when a
    single cloud does not fit."""
    best_k = None
    for k in range(1, n_clouds + 1):
        if n_clouds % k == 0 and (k * n_pts) % 8 == 0 and k * n_pts <= cap:
            best_k = k
    if best_k is not None:
        return best_k * n_pts, best_k, None
    best_t = None
    for cand in range(8, min(n_pts, cap) + 1, 8):
        if n_pts % cand == 0:
            best_t = cand
    if best_t is None:
        # TODO(synk): ragged N (no multiple-of-8 tiling) would need masked row tiles.
        raise ValueError("N must allow an (8,128)-aligned row tiling")
    return best_t, None, n_pts // best_t


def autoencoder_forward(x, enc_params, dec_params):
    """x: (B, 3, N) in PyTorch NCL layout.  Returns (B, 3, 1024) float32."""
    B, c_in, n_pts = x.shape
    rows = B * n_pts

    # NCL -> (B*N, C); zero-pad channels 3 -> 8; ship as bf16 (the first matmul
    # consumes bf16 anyway and x is re-streamed on every sweep).
    xt = jnp.transpose(x, (0, 2, 1)).reshape(rows, c_in)
    xt = jnp.pad(xt, ((0, 0), (0, C_PAD - c_in))).astype(jnp.bfloat16)

    tile_rows, clouds_per_tile, tiles_per_cloud = _pick_tiling(B, n_pts)
    n_tiles = rows // tile_rows

    n_layers = len(enc_params)

    # Conv biases are intentionally NOT passed: training-mode BN cancels them exactly.
    enc_flat, w_shapes = [], []
    for li, (W, _b, gamma, beta) in enumerate(enc_params):
        Wp = jnp.pad(W, ((0, C_PAD - W.shape[0]), (0, 0))) if li == 0 else W
        w_shapes.append(Wp.shape)
        enc_flat += [Wp.astype(jnp.bfloat16),
                     gamma.astype(jnp.float32),
                     beta.astype(jnp.float32)]
    enc_dims = [s[1] for s in w_shapes]
    z_dim = enc_dims[-1]

    w1, b1, w2, b2, w3, b3 = dec_params
    dec_flat = [w1.astype(jnp.bfloat16), b1.astype(jnp.float32),
                w2.astype(jnp.bfloat16), b2.astype(jnp.float32),
                w3.astype(jnp.bfloat16), b3.astype(jnp.float32)]
    out_dim = w3.shape[1]                     # 3072

    const2 = lambda s, t: (0, 0)
    full = lambda a: pl.BlockSpec(a.shape, const2)    # whole array, resident in VMEM

    in_specs = ([pl.BlockSpec((tile_rows, C_PAD), lambda s, t: (t, 0))]
                + [full(a) for a in enc_flat]
                + [full(dec_flat[0]), full(dec_flat[1]),
                   full(dec_flat[2]), full(dec_flat[3]),
                   pl.BlockSpec(memory_space=pl.ANY),   # W3 stays in HBM, manual DMA
                   full(dec_flat[5])])
    # NOTE: the resident f32 (B, out_dim) output block is fine for small B; for very
    # large B re-budget against v7x's 64 MiB VMEM (bf16 output or lane-blocked decoder).
    out_spec = pl.BlockSpec((B, out_dim), const2)

    scratch = ([pltpu.VMEM((1, c), jnp.float32) for c in enc_dims]      # BN sum
               + [pltpu.VMEM((1, c), jnp.float32) for c in enc_dims]    # BN sum of sq
               + [pltpu.VMEM((1, c), jnp.float32) for c in enc_dims]    # folded shift
               + [pltpu.VMEM(s, jnp.bfloat16) for s in w_shapes]        # W * BN-scale
               + [pltpu.VMEM((B, z_dim), jnp.float32),                  # per-cloud max
                  pltpu.VMEM(w3.shape, jnp.bfloat16),                   # prefetched W3
                  pltpu.SemaphoreType.DMA(())])

    grid_spec = pltpu.PrefetchScalarGridSpec(
        num_scalar_prefetch=0,
        grid=(n_layers + 1, n_tiles),     # (BN-stat sweeps + final sweep, row tiles)
        in_specs=in_specs,
        out_specs=out_spec,
        scratch_shapes=scratch)

    flat = pl.pallas_call(
        functools.partial(ae_kernel, n_layers=n_layers, n_pts=n_pts, rows=rows,
                          tile_rows=tile_rows, clouds_per_tile=clouds_per_tile,
                          tiles_per_cloud=tiles_per_cloud),
        out_shape=jax.ShapeDtypeStruct((B, out_dim), jnp.float32),
        grid_spec=grid_spec,
        compiler_params=pltpu.CompilerParams(
            # Both axes carry cross-iteration scratch dependencies (BN statistics,
            # per-cloud max), so neither may be sharded across TensorCores.
            dimension_semantics=("arbitrary", "arbitrary"),
            vmem_limit_bytes=48 * 1024 * 1024),
    )(xt, *enc_flat, *dec_flat)

    return flat.reshape(B, 3, -1)             # x.view(bs, 3, -1)


# ----------------------------- deterministic params -------------------------- #

def init_params(key):
    n_filters = [64, 128, 128, 256, 128]
    layer_sizes = [256, 256, 1024 * 3]
    keys = iter(jax.random.split(key, 2 * (len(n_filters) + len(layer_sizes))))

    enc_params = []
    in_c = 3
    for out_c in n_filters:
        W = jax.random.normal(next(keys), (in_c, out_c), jnp.float32) / jnp.sqrt(
            jnp.float32(in_c))
        # Conv bias kept for parameter parity but provably inert under training-mode BN.
        b = 0.01 * jax.random.normal(next(keys), (1, out_c), jnp.float32)
        gamma = jnp.ones((1, out_c), jnp.float32)    # BatchNorm1d default weight
        beta = jnp.zeros((1, out_c), jnp.float32)    # BatchNorm1d default bias
        enc_params.append((W, b, gamma, beta))
        in_c = out_c

    dec_params = []
    in_c = 128
    for out_c in layer_sizes:
        W = jax.random.normal(next(keys), (in_c, out_c), jnp.float32) / jnp.sqrt(
            jnp.float32(in_c))
        b = 0.01 * jax.random.normal(next(keys), (1, out_c), jnp.float32)
        dec_params += [W, b]
        in_c = out_c

    return enc_params, dec_params


if __name__ == "__main__":
    key = jax.random.PRNGKey(0)
    k_param, k_x = jax.random.split(key)

    enc_params, dec_params = init_params(k_param)

    B, C, N = 2, 3, 16                  # small point cloud: 2 clouds of 16 3-D points
    x = jax.random.normal(k_x, (B, C, N), jnp.float32)

    out = autoencoder_forward(x, enc_params, dec_params)
    out = jax.block_until_ready(out)

    assert out.shape == (B, 3, 1024), out.shape
    assert bool(jnp.all(jnp.isfinite(out)))
    print("KERNEL_OK")
</pallas_src>

<mosaic_0001>
module attributes {stable_mosaic.version = 11 : i64} {
  func.func @ae_kernel(%arg0: i32, %arg1: i32, %arg2: memref<32x8xbf16, #tpu.memory_space<vmem>>, %arg3: memref<8x64xbf16, #tpu.memory_space<vmem>>, %arg4: memref<1x64xf32, #tpu.memory_space<vmem>>, %arg5: memref<1x64xf32, #tpu.memory_space<vmem>>, %arg6: memref<64x128xbf16, #tpu.memory_space<vmem>>, %arg7: memref<1x128xf32, #tpu.memory_space<vmem>>, %arg8: memref<1x128xf32, #tpu.memory_space<vmem>>, %arg9: memref<128x128xbf16, #tpu.memory_space<vmem>>, %arg10: memref<1x128xf32, #tpu.memory_space<vmem>>, %arg11: memref<1x128xf32, #tpu.memory_space<vmem>>, %arg12: memref<128x256xbf16, #tpu.memory_space<vmem>>, %arg13: memref<1x256xf32, #tpu.memory_space<vmem>>, %arg14: memref<1x256xf32, #tpu.memory_space<vmem>>, %arg15: memref<256x128xbf16, #tpu.memory_space<vmem>>, %arg16: memref<1x128xf32, #tpu.memory_space<vmem>>, %arg17: memref<1x128xf32, #tpu.memory_space<vmem>>, %arg18: memref<128x256xbf16, #tpu.memory_space<vmem>>, %arg19: memref<1x256xf32, #tpu.memory_space<vmem>>, %arg20: memref<256x256xbf16, #tpu.memory_space<vmem>>, %arg21: memref<1x256xf32, #tpu.memory_space<vmem>>, %arg22: memref<256x3072xbf16, #tpu.memory_space<any>>, %arg23: memref<1x3072xf32, #tpu.memory_space<vmem>>, %arg24: memref<2x3072xf32, #tpu.memory_space<vmem>>, %arg25: memref<1x64xf32, #tpu.memory_space<vmem>>, %arg26: memref<1x128xf32, #tpu.memory_space<vmem>>, %arg27: memref<1x128xf32, #tpu.memory_space<vmem>>, %arg28: memref<1x256xf32, #tpu.memory_space<vmem>>, %arg29: memref<1x128xf32, #tpu.memory_space<vmem>>, %arg30: memref<1x64xf32, #tpu.memory_space<vmem>>, %arg31: memref<1x128xf32, #tpu.memory_space<vmem>>, %arg32: memref<1x128xf32, #tpu.memory_space<vmem>>, %arg33: memref<1x256xf32, #tpu.memory_space<vmem>>, %arg34: memref<1x128xf32, #tpu.memory_space<vmem>>, %arg35: memref<1x64xf32, #tpu.memory_space<vmem>>, %arg36: memref<1x128xf32, #tpu.memory_space<vmem>>, %arg37: memref<1x128xf32, #tpu.memory_space<vmem>>, %arg38: memref<1x256xf32, #tpu.memory_space<vmem>>, %arg39: memref<1x128xf32, #tpu.memory_space<vmem>>, %arg40: memref<8x64xbf16, #tpu.memory_space<vmem>>, %arg41: memref<64x128xbf16, #tpu.memory_space<vmem>>, %arg42: memref<128x128xbf16, #tpu.memory_space<vmem>>, %arg43: memref<128x256xbf16, #tpu.memory_space<vmem>>, %arg44: memref<256x128xbf16, #tpu.memory_space<vmem>>, %arg45: memref<2x128xf32, #tpu.memory_space<vmem>>, %arg46: memref<256x3072xbf16, #tpu.memory_space<vmem>>, %arg47: memref<!tpu.dma_semaphore, #tpu.memory_space<semaphore_mem>>) attributes {dimension_semantics = [#tpu.dimension_semantics<arbitrary>, #tpu.dimension_semantics<arbitrary>], iteration_bounds = array<i64: 6, 1>, scalar_prefetch = 0 : i64, scratch_operands = 23 : i64, tpu.core_type = #tpu.core_type<tc>, window_params = [{transform_indices = @transform_0, window_bounds = array<i64: 32, 8>}, {pipeline_mode = #tpu.pipeline_mode<synchronous>, transform_indices = @transform_1, window_bounds = array<i64: 8, 64>}, {pipeline_mode = #tpu.pipeline_mode<synchronous>, transform_indices = @transform_2, window_bounds = array<i64: 1, 64>}, {pipeline_mode = #tpu.pipeline_mode<synchronous>, transform_indices = @transform_3, window_bounds = array<i64: 1, 64>}, {pipeline_mode = #tpu.pipeline_mode<synchronous>, transform_indices = @transform_4, window_bounds = array<i64: 64, 128>}, {pipeline_mode = #tpu.pipeline_mode<synchronous>, transform_indices = @transform_5, window_bounds = array<i64: 1, 128>}, {pipeline_mode = #tpu.pipeline_mode<synchronous>, transform_indices = @transform_6, window_bounds = array<i64: 1, 128>}, {pipeline_mode = #tpu.pipeline_mode<synchronous>, transform_indices = @transform_7, window_bounds = array<i64: 128, 128>}, {pipeline_mode = #tpu.pipeline_mode<synchronous>, transform_indices = @transform_8, window_bounds = array<i64: 1, 128>}, {pipeline_mode = #tpu.pipeline_mode<synchronous>, transform_indices = @transform_9, window_bounds = array<i64: 1, 128>}, {pipeline_mode = #tpu.pipeline_mode<synchronous>, transform_indices = @transform_10, window_bounds = array<i64: 128, 256>}, {pipeline_mode = #tpu.pipeline_mode<synchronous>, transform_indices = @transform_11, window_bounds = array<i64: 1, 256>}, {pipeline_mode = #tpu.pipeline_mode<synchronous>, transform_indices = @transform_12, window_bounds = array<i64: 1, 256>}, {pipeline_mode = #tpu.pipeline_mode<synchronous>, transform_indices = @transform_13, window_bounds = array<i64: 256, 128>}, {pipeline_mode = #tpu.pipeline_mode<synchronous>, transform_indices = @transform_14, window_bounds = array<i64: 1, 128>}, {pipeline_mode = #tpu.pipeline_mode<synchronous>, transform_indices = @transform_15, window_bounds = array<i64: 1, 128>}, {pipeline_mode = #tpu.pipeline_mode<synchronous>, transform_indices = @transform_16, window_bounds = array<i64: 128, 256>}, {pipeline_mode = #tpu.pipeline_mode<synchronous>, transform_indices = @transform_17, window_bounds = array<i64: 1, 256>}, {pipeline_mode = #tpu.pipeline_mode<synchronous>, transform_indices = @transform_18, window_bounds = array<i64: 256, 256>}, {pipeline_mode = #tpu.pipeline_mode<synchronous>, transform_indices = @transform_19, window_bounds = array<i64: 1, 256>}, {}, {pipeline_mode = #tpu.pipeline_mode<synchronous>, transform_indices = @transform_21, window_bounds = array<i64: 1, 3072>}, {pipeline_mode = #tpu.pipeline_mode<synchronous>, transform_indices = @transform_22, window_bounds = array<i64: 2, 3072>}]} {
    %c0_i32 = arith.constant 0 : i32
    %0 = arith.cmpi eq, %arg1, %c0_i32 : i32
    %c0_i32_0 = arith.constant 0 : i32
    %1 = arith.cmpi eq, %arg1, %c0_i32_0 : i32
    %c0_i32_1 = arith.constant 0 : i32
    %2 = arith.cmpi eq, %arg0, %c0_i32_1 : i32
    %3 = arith.andi %2, %0 : i1
    %4 = arith.extui %3 : i1 to i32
    %c0_i32_2 = arith.constant 0 : i32
    %5 = arith.cmpi ne, %4, %c0_i32_2 : i32
    scf.if %5 {
      tpu.enqueue_dma source(%arg22 : memref<256x3072xbf16, #tpu.memory_space<any>>) target(%arg46 : memref<256x3072xbf16, #tpu.memory_space<vmem>>) target_semaphore(%arg47 : memref<!tpu.dma_semaphore, #tpu.memory_space<semaphore_mem>>) {priority = 1 : i32}
    } else {
    }
    %c0 = arith.constant 0 : index
    %c0_3 = arith.constant 0 : index
    %6 = vector.load %arg2[%c0, %c0_3] : memref<32x8xbf16, #tpu.memory_space<vmem>>, vector<32x8xbf16>
    %c0_i32_4 = arith.constant 0 : i32
    %7 = arith.cmpi eq, %arg0, %c0_i32_4 : i32
    %8 = arith.extui %7 : i1 to i32
    %c0_i32_5 = arith.constant 0 : i32
    %9 = arith.cmpi ne, %8, %c0_i32_5 : i32
    scf.if %9 {
      %25 = arith.extui %0 : i1 to i32
      %c0_i32_11 = arith.constant 0 : i32
      %26 = arith.cmpi ne, %25, %c0_i32_11 : i32
      scf.if %26 {
        %cst_25 = arith.constant 0.000000e+00 : f32
        %42 = vector.broadcast %cst_25 : f32 to vector<1x64xf32>
        %c0_26 = arith.constant 0 : index
        %c0_27 = arith.constant 0 : index
        %43 = vector.load %arg25[%c0_26, %c0_27] : memref<1x64xf32, #tpu.memory_space<vmem>>, vector<1x64xf32>
        tpu.vector_store %arg25[%c0_26, %c0_27], %42 {strides = array<i32>} : memref<1x64xf32, #tpu.memory_space<vmem>>, vector<1x64xf32>,
        %cst_28 = arith.constant 0.000000e+00 : f32
        %44 = vector.broadcast %cst_28 : f32 to vector<1x64xf32>
        %c0_29 = arith.constant 0 : index
        %c0_30 = arith.constant 0 : index
        %45 = vector.load %arg30[%c0_29, %c0_30] : memref<1x64xf32, #tpu.memory_space<vmem>>, vector<1x64xf32>
        tpu.vector_store %arg30[%c0_29, %c0_30], %44 {strides = array<i32>} : memref<1x64xf32, #tpu.memory_space<vmem>>, vector<1x64xf32>,
      } else {
      }
      %c0_12 = arith.constant 0 : index
      %c0_13 = arith.constant 0 : index
      %27 = vector.load %arg3[%c0_12, %c0_13] : memref<8x64xbf16, #tpu.memory_space<vmem>>, vector<8x64xbf16>
      %cst = arith.constant dense<0.000000e+00> : vector<32x64xf32>
      %28 = tpu.matmul %6, %27, %cst {dimension_numbers = #tpu.dot_dimension_numbers<[1], [0], [0], [1], [0, 0, 1, 1], [], []>} : vector<32x8xbf16>, vector<8x64xbf16>, vector<32x64xf32> -> vector<32x64xf32>
      %c0_14 = arith.constant 0 : index
      %c0_15 = arith.constant 0 : index
      %29 = vector.load %arg25[%c0_14, %c0_15] : memref<1x64xf32, #tpu.memory_space<vmem>>, vector<1x64xf32>
      %cst_16 = arith.constant dense<0.000000e+00> : vector<64xf32>
      %30 = vector.multi_reduction <add>, %28, %cst_16 [0] : vector<32x64xf32> to vector<64xf32>
      %31 = vector.shape_cast %30 : vector<64xf32> to vector<1x64xf32>
      %32 = arith.addf %29, %31 : vector<1x64xf32>
      %c0_17 = arith.constant 0 : index
      %c0_18 = arith.constant 0 : index
      %33 = vector.load %arg25[%c0_17, %c0_18] : memref<1x64xf32, #tpu.memory_space<vmem>>, vector<1x64xf32>
      tpu.vector_store %arg25[%c0_17, %c0_18], %32 {strides = array<i32>} : memref<1x64xf32, #tpu.memory_space<vmem>>, vector<1x64xf32>,
      %c0_19 = arith.constant 0 : index
      %c0_20 = arith.constant 0 : index
      %34 = vector.load %arg30[%c0_19, %c0_20] : memref<1x64xf32, #tpu.memory_space<vmem>>, vector<1x64xf32>
      %35 = arith.mulf %28, %28 : vector<32x64xf32>
      %cst_21 = arith.constant dense<0.000000e+00> : vector<64xf32>
      %36 = vector.multi_reduction <add>, %35, %cst_21 [0] : vector<32x64xf32> to vector<64xf32>
      %37 = vector.shape_cast %36 : vector<64xf32> to vector<1x64xf32>
      %38 = arith.addf %34, %37 : vector<1x64xf32>
      %c0_22 = arith.constant 0 : index
      %c0_23 = arith.constant 0 : index
      %39 = vector.load %arg30[%c0_22, %c0_23] : memref<1x64xf32, #tpu.memory_space<vmem>>, vector<1x64xf32>
      tpu.vector_store %arg30[%c0_22, %c0_23], %38 {strides = array<i32>} : memref<1x64xf32, #tpu.memory_space<vmem>>, vector<1x64xf32>,
      %40 = arith.extui %1 : i1 to i32
      %c0_i32_24 = arith.constant 0 : i32
      %41 = arith.cmpi ne, %40, %c0_i32_24 : i32
      scf.if %41 {
        %c0_25 = arith.constant 0 : index
        %c0_26 = arith.constant 0 : index
        %42 = vector.load %arg25[%c0_25, %c0_26] : memref<1x64xf32, #tpu.memory_space<vmem>>, vector<1x64xf32>
        %cst_27 = arith.constant 3.125000e-02 : f32
        %43 = vector.broadcast %cst_27 : f32 to vector<1x64xf32>
        %44 = arith.mulf %42, %43 : vector<1x64xf32>
        %c0_28 = arith.constant 0 : index
        %c0_29 = arith.constant 0 : index
        %45 = vector.load %arg30[%c0_28, %c0_29] : memref<1x64xf32, #tpu.memory_space<vmem>>, vector<1x64xf32>
        %cst_30 = arith.constant 3.125000e-02 : f32
        %46 = vector.broadcast %cst_30 : f32 to vector<1x64xf32>
        %47 = arith.mulf %45, %46 : vector<1x64xf32>
        %48 = arith.mulf %44, %44 : vector<1x64xf32>
        %49 = arith.subf %47, %48 : vector<1x64xf32>
        %cst_31 = arith.constant 0.000000e+00 : f32
        %50 = vector.broadcast %cst_31 : f32 to vector<1x64xf32>
        %51 = arith.maximumf %49, %50 : vector<1x64xf32>
        %c0_32 = arith.constant 0 : index
        %c0_33 = arith.constant 0 : index
        %52 = vector.load %arg4[%c0_32, %c0_33] : memref<1x64xf32, #tpu.memory_space<vmem>>, vector<1x64xf32>
        %cst_34 = arith.constant 9.99999974E-6 : f32
        %53 = vector.broadcast %cst_34 : f32 to vector<1x64xf32>
        %54 = arith.addf %51, %53 : vector<1x64xf32>
        %55 = math.rsqrt %54 : vector<1x64xf32>
        %56 = arith.mulf %52, %55 : vector<1x64xf32>
        %c0_35 = arith.constant 0 : index
        %c0_36 = arith.constant 0 : index
        %57 = vector.load %arg5[%c0_35, %c0_36] : memref<1x64xf32, #tpu.memory_space<vmem>>, vector<1x64xf32>
        %58 = arith.mulf %44, %56 : vector<1x64xf32>
        %59 = arith.subf %57, %58 : vector<1x64xf32>
        %c0_37 = arith.constant 0 : index
        %c0_38 = arith.constant 0 : index
        %60 = vector.load %arg35[%c0_37, %c0_38] : memref<1x64xf32, #tpu.memory_space<vmem>>, vector<1x64xf32>
        tpu.vector_store %arg35[%c0_37, %c0_38], %59 {strides = array<i32>} : memref<1x64xf32, #tpu.memory_space<vmem>>, vector<1x64xf32>,
        %c0_39 = arith.constant 0 : index
        %c0_40 = arith.constant 0 : index
        %61 = vector.load %arg3[%c0_39, %c0_40] : memref<8x64xbf16, #tpu.memory_space<vmem>>, vector<8x64xbf16>
        %62 = arith.extf %61 : vector<8x64xbf16> to vector<8x64xf32>
        %63 = vector.broadcast %56 : vector<1x64xf32> to vector<8x64xf32>
        %64 = arith.mulf %62, %63 : vector<8x64xf32>
        %65 = arith.truncf %64 : vector<8x64xf32> to vector<8x64xbf16>
        %c0_41 = arith.constant 0 : index
        %c0_42 = arith.constant 0 : index
        %66 = vector.load %arg40[%c0_41, %c0_42] : memref<8x64xbf16, #tpu.memory_space<vmem>>, vector<8x64xbf16>
        tpu.vector_store %arg40[%c0_41, %c0_42], %65 {strides = array<i32>} : memref<8x64xbf16, #tpu.memory_space<vmem>>, vector<8x64xbf16>,
      } else {
      }
    } else {
    }
    %c1_i32 = arith.constant 1 : i32
    %10 = arith.cmpi eq, %arg0, %c1_i32 : i32
    %11 = arith.extui %10 : i1 to i32
    %c0_i32_6 = arith.constant 0 : i32
    %12 = arith.cmpi ne, %11, %c0_i32_6 : i32
    scf.if %12 {
      %25 = arith.extui %0 : i1 to i32
      %c0_i32_11 = arith.constant 0 : i32
      %26 = arith.cmpi ne, %25, %c0_i32_11 : i32
      scf.if %26 {
        %cst_31 = arith.constant 0.000000e+00 : f32
        %50 = vector.broadcast %cst_31 : f32 to vector<1x128xf32>
        %c0_32 = arith.constant 0 : index
        %c0_33 = arith.constant 0 : index
        %51 = vector.load %arg26[%c0_32, %c0_33] : memref<1x128xf32, #tpu.memory_space<vmem>>, vector<1x128xf32>
        tpu.vector_store %arg26[%c0_32, %c0_33], %50 {strides = array<i32>} : memref<1x128xf32, #tpu.memory_space<vmem>>, vector<1x128xf32>,
        %cst_34 = arith.constant 0.000000e+00 : f32
        %52 = vector.broadcast %cst_34 : f32 to vector<1x128xf32>
        %c0_35 = arith.constant 0 : index
        %c0_36 = arith.constant 0 : index
        %53 = vector.load %arg31[%c0_35, %c0_36] : memref<1x128xf32, #tpu.memory_space<vmem>>, vector<1x128xf32>
        tpu.vector_store %arg31[%c0_35, %c0_36], %52 {strides = array<i32>} : memref<1x128xf32, #tpu.memory_space<vmem>>, vector<1x128xf32>,
      } else {
      }
      %c0_12 = arith.constant 0 : index
      %c0_13 = arith.constant 0 : index
      %27 = vector.load %arg40[%c0_12, %c0_13] : memref<8x64xbf16, #tpu.memory_space<vmem>>, vector<8x64xbf16>
      %cst = arith.constant dense<0.000000e+00> : vector<32x64xf32>
      %28 = tpu.matmul %6, %27, %cst {dimension_numbers = #tpu.dot_dimension_numbers<[1], [0], [0], [1], [0, 0, 1, 1], [], []>} : vector<32x8xbf16>, vector<8x64xbf16>, vector<32x64xf32> -> vector<32x64xf32>
      %c0_14 = arith.constant 0 : index
      %c0_15 = arith.constant 0 : index
      %29 = vector.load %arg35[%c0_14, %c0_15] : memref<1x64xf32, #tpu.memory_space<vmem>>, vector<1x64xf32>
      %30 = vector.broadcast %29 : vector<1x64xf32> to vector<32x64xf32>
      %31 = arith.addf %28, %30 : vector<32x64xf32>
      %cst_16 = arith.constant 0.000000e+00 : f32
      %32 = vector.broadcast %cst_16 : f32 to vector<32x64xf32>
      %33 = arith.maximumf %31, %32 : vector<32x64xf32>
      %34 = arith.truncf %33 : vector<32x64xf32> to vector<32x64xbf16>
      %c0_17 = arith.constant 0 : index
      %c0_18 = arith.constant 0 : index
      %35 = vector.load %arg6[%c0_17, %c0_18] : memref<64x128xbf16, #tpu.memory_space<vmem>>, vector<64x128xbf16>
      %cst_19 = arith.constant dense<0.000000e+00> : vector<32x128xf32>
      %36 = tpu.matmul %34, %35, %cst_19 {dimension_numbers = #tpu.dot_dimension_numbers<[1], [0], [0], [1], [0, 0, 1, 1], [], []>} : vector<32x64xbf16>, vector<64x128xbf16>, vector<32x128xf32> -> vector<32x128xf32>
      %c0_20 = arith.constant 0 : index
      %c0_21 = arith.constant 0 : index
      %37 = vector.load %arg26[%c0_20, %c0_21] : memref<1x128xf32, #tpu.memory_space<vmem>>, vector<1x128xf32>
      %cst_22 = arith.constant dense<0.000000e+00> : vector<128xf32>
      %38 = vector.multi_reduction <add>, %36, %cst_22 [0] : vector<32x128xf32> to vector<128xf32>
      %39 = vector.shape_cast %38 : vector<128xf32> to vector<1x128xf32>
      %40 = arith.addf %37, %39 : vector<1x128xf32>
      %c0_23 = arith.constant 0 : index
      %c0_24 = arith.constant 0 : index
      %41 = vector.load %arg26[%c0_23, %c0_24] : memref<1x128xf32, #tpu.memory_space<vmem>>, vector<1x128xf32>
      tpu.vector_store %arg26[%c0_23, %c0_24], %40 {strides = array<i32>} : memref<1x128xf32, #tpu.memory_space<vmem>>, vector<1x128xf32>,
      %c0_25 = arith.constant 0 : index
      %c0_26 = arith.constant 0 : index
      %42 = vector.load %arg31[%c0_25, %c0_26] : memref<1x128xf32, #tpu.memory_space<vmem>>, vector<1x128xf32>
      %43 = arith.mulf %36, %36 : vector<32x128xf32>
      %cst_27 = arith.constant dense<0.000000e+00> : vector<128xf32>
      %44 = vector.multi_reduction <add>, %43, %cst_27 [0] : vector<32x128xf32> to vector<128xf32>
      %45 = vector.shape_cast %44 : vector<128xf32> to vector<1x128xf32>
      %46 = arith.addf %42, %45 : vector<1x128xf32>
      %c0_28 = arith.constant 0 : index
      %c0_29 = arith.constant 0 : index
      %47 = vector.load %arg31[%c0_28, %c0_29] : memref<1x128xf32, #tpu.memory_space<vmem>>, vector<1x128xf32>
      tpu.vector_store %arg31[%c0_28, %c0_29], %46 {strides = array<i32>} : memref<1x128xf32, #tpu.memory_space<vmem>>, vector<1x128xf32>,
      %48 = arith.extui %1 : i1 to i32
      %c0_i32_30 = arith.constant 0 : i32
      %49 = arith.cmpi ne, %48, %c0_i32_30 : i32
      scf.if %49 {
        %c0_31 = arith.constant 0 : index
        %c0_32 = arith.constant 0 : index
        %50 = vector.load %arg26[%c0_31, %c0_32] : memref<1x128xf32, #tpu.memory_space<vmem>>, vector<1x128xf32>
        %cst_33 = arith.constant 3.125000e-02 : f32
        %51 = vector.broadcast %cst_33 : f32 to vector<1x128xf32>
        %52 = arith.mulf %50, %51 : vector<1x128xf32>
        %c0_34 = arith.constant 0 : index
        %c0_35 = arith.constant 0 : index
        %53 = vector.load %arg31[%c0_34, %c0_35] : memref<1x128xf32, #tpu.memory_space<vmem>>, vector<1x128xf32>
        %cst_36 = arith.constant 3.125000e-02 : f32
        %54 = vector.broadcast %cst_36 : f32 to vector<1x128xf32>
        %55 = arith.mulf %53, %54 : vector<1x128xf32>
        %56 = arith.mulf %52, %52 : vector<1x128xf32>
        %57 = arith.subf %55, %56 : vector<1x128xf32>
        %cst_37 = arith.constant 0.000000e+00 : f32
        %58 = vector.broadcast %cst_37 : f32 to vector<1x128xf32>
        %59 = arith.maximumf %57, %58 : vector<1x128xf32>
        %c0_38 = arith.constant 0 : index
        %c0_39 = arith.constant 0 : index
        %60 = vector.load %arg7[%c0_38, %c0_39] : memref<1x128xf32, #tpu.memory_space<vmem>>, vector<1x128xf32>
        %cst_40 = arith.constant 9.99999974E-6 : f32
        %61 = vector.broadcast %cst_40 : f32 to vector<1x128xf32>
        %62 = arith.addf %59, %61 : vector<1x128xf32>
        %63 = math.rsqrt %62 : vector<1x128xf32>
        %64 = arith.mulf %60, %63 : vector<1x128xf32>
        %c0_41 = arith.constant 0 : index
        %c0_42 = arith.constant 0 : index
        %65 = vector.load %arg8[%c0_41, %c0_42] : memref<1x128xf32, #tpu.memory_space<vmem>>, vector<1x128xf32>
        %66 = arith.mulf %52, %64 : vector<1x128xf32>
        %67 = arith.subf %65, %66 : vector<1x128xf32>
        %c0_43 = arith.constant 0 : index
        %c0_44 = arith.constant 0 : index
        %68 = vector.load %arg36[%c0_43, %c0_44] : memref<1x128xf32, #tpu.memory_space<vmem>>, vector<1x128xf32>
        tpu.vector_store %arg36[%c0_43, %c0_44], %67 {strides = array<i32>} : memref<1x128xf32, #tpu.memory_space<vmem>>, vector<1x128xf32>,
        %c0_45 = arith.constant 0 : index
        %c0_46 = arith.constant 0 : index
        %69 = vector.load %arg6[%c0_45, %c0_46] : memref<64x128xbf16, #tpu.memory_space<vmem>>, vector<64x128xbf16>
        %70 = arith.extf %69 : vector<64x128xbf16> to vector<64x128xf32>
        %71 = vector.broadcast %64 : vector<1x128xf32> to vector<64x128xf32>
        %72 = arith.mulf %70, %71 : vector<64x128xf32>
        %73 = arith.truncf %72 : vector<64x128xf32> to vector<64x128xbf16>
        %c0_47 = arith.constant 0 : index
        %c0_48 = arith.constant 0 : index
        %74 = vector.load %arg41[%c0_47, %c0_48] : memref<64x128xbf16, #tpu.memory_space<vmem>>, vector<64x128xbf16>
        tpu.vector_store %arg41[%c0_47, %c0_48], %73 {strides = array<i32>} : memref<64x128xbf16, #tpu.memory_space<vmem>>, vector<64x128xbf16>,
      } else {
      }
    } else {
    }
    %c2_i32 = arith.constant 2 : i32
    %13 = arith.cmpi eq, %arg0, %c2_i32 : i32
    %14 = arith.extui %13 : i1 to i32
    %c0_i32_7 = arith.constant 0 : i32
    %15 = arith.cmpi ne, %14, %c0_i32_7 : i32
    scf.if %15 {
      %25 = arith.extui %0 : i1 to i32
      %c0_i32_11 = arith.constant 0 : i32
      %26 = arith.cmpi ne, %25, %c0_i32_11 : i32
      scf.if %26 {
        %cst_37 = arith.constant 0.000000e+00 : f32
        %58 = vector.broadcast %cst_37 : f32 to vector<1x128xf32>
        %c0_38 = arith.constant 0 : index
        %c0_39 = arith.constant 0 : index
        %59 = vector.load %arg27[%c0_38, %c0_39] : memref<1x128xf32, #tpu.memory_space<vmem>>, vector<1x128xf32>
        tpu.vector_store %arg27[%c0_38, %c0_39], %58 {strides = array<i32>} : memref<1x128xf32, #tpu.memory_space<vmem>>, vector<1x128xf32>,
        %cst_40 = arith.constant 0.000000e+00 : f32
        %60 = vector.broadcast %cst_40 : f32 to vector<1x128xf32>
        %c0_41 = arith.constant 0 : index
        %c0_42 = arith.constant 0 : index
        %61 = vector.load %arg32[%c0_41, %c0_42] : memref<1x128xf32, #tpu.memory_space<vmem>>, vector<1x128xf32>
        tpu.vector_store %arg32[%c0_41, %c0_42], %60 {strides = array<i32>} : memref<1x128xf32, #tpu.memory_space<vmem>>, vector<1x128xf32>,
      } else {
      }
      %c0_12 = arith.constant 0 : index
      %c0_13 = arith.constant 0 : index
      %27 = vector.load %arg40[%c0_12, %c0_13] : memref<8x64xbf16, #tpu.memory_space<vmem>>, vector<8x64xbf16>
      %cst = arith.constant dense<0.000000e+00> : vector<32x64xf32>
      %28 = tpu.matmul %6, %27, %cst {dimension_numbers = #tpu.dot_dimension_numbers<[1], [0], [0], [1], [0, 0, 1, 1], [], []>} : vector<32x8xbf16>, vector<8x64xbf16>, vector<32x64xf32> -> vector<32x64xf32>
      %c0_14 = arith.constant 0 : index
      %c0_15 = arith.constant 0 : index
      %29 = vector.load %arg35[%c0_14, %c0_15] : memref<1x64xf32, #tpu.memory_space<vmem>>, vector<1x64xf32>
      %30 = vector.broadcast %29 : vector<1x64xf32> to vector<32x64xf32>
      %31 = arith.addf %28, %30 : vector<32x64xf32>
      %cst_16 = arith.constant 0.000000e+00 : f32
      %32 = vector.broadcast %cst_16 : f32 to vector<32x64xf32>
      %33 = arith.maximumf %31, %32 : vector<32x64xf32>
      %34 = arith.truncf %33 : vector<32x64xf32> to vector<32x64xbf16>
      %c0_17 = arith.constant 0 : index
      %c0_18 = arith.constant 0 : index
      %35 = vector.load %arg41[%c0_17, %c0_18] : memref<64x128xbf16, #tpu.memory_space<vmem>>, vector<64x128xbf16>
      %cst_19 = arith.constant dense<0.000000e+00> : vector<32x128xf32>
      %36 = tpu.matmul %34, %35, %cst_19 {dimension_numbers = #tpu.dot_dimension_numbers<[1], [0], [0], [1], [0, 0, 1, 1], [], []>} : vector<32x64xbf16>, vector<64x128xbf16>, vector<32x128xf32> -> vector<32x128xf32>
      %c0_20 = arith.constant 0 : index
      %c0_21 = arith.constant 0 : index
      %37 = vector.load %arg36[%c0_20, %c0_21] : memref<1x128xf32, #tpu.memory_space<vmem>>, vector<1x128xf32>
      %38 = vector.broadcast %37 : vector<1x128xf32> to vector<32x128xf32>
      %39 = arith.addf %36, %38 : vector<32x128xf32>
      %cst_22 = arith.constant 0.000000e+00 : f32
      %40 = vector.broadcast %cst_22 : f32 to vector<32x128xf32>
      %41 = arith.maximumf %39, %40 : vector<32x128xf32>
      %42 = arith.truncf %41 : vector<32x128xf32> to vector<32x128xbf16>
      %c0_23 = arith.constant 0 : index
      %c0_24 = arith.constant 0 : index
      %43 = vector.load %arg9[%c0_23, %c0_24] : memref<128x128xbf16, #tpu.memory_space<vmem>>, vector<128x128xbf16>
      %cst_25 = arith.constant dense<0.000000e+00> : vector<32x128xf32>
      %44 = tpu.matmul %42, %43, %cst_25 {dimension_numbers = #tpu.dot_dimension_numbers<[1], [0], [0], [1], [0, 0, 1, 1], [], []>} : vector<32x128xbf16>, vector<128x128xbf16>, vector<32x128xf32> -> vector<32x128xf32>
      %c0_26 = arith.constant 0 : index
      %c0_27 = arith.constant 0 : index
      %45 = vector.load %arg27[%c0_26, %c0_27] : memref<1x128xf32, #tpu.memory_space<vmem>>, vector<1x128xf32>
      %cst_28 = arith.constant dense<0.000000e+00> : vector<128xf32>
      %46 = vector.multi_reduction <add>, %44, %cst_28 [0] : vector<32x128xf32> to vector<128xf32>
      %47 = vector.shape_cast %46 : vector<128xf32> to vector<1x128xf32>
      %48 = arith.addf %45, %47 : vector<1x128xf32>
      %c0_29 = arith.constant 0 : index
      %c0_30 = arith.constant 0 : index
      %49 = vector.load %arg27[%c0_29, %c0_30] : memref<1x128xf32, #tpu.memory_space<vmem>>, vector<1x128xf32>
      tpu.vector_store %arg27[%c0_29, %c0_30], %48 {strides = array<i32>} : memref<1x128xf32, #tpu.memory_space<vmem>>, vector<1x128xf32>,
      %c0_31 = arith.constant 0 : index
      %c0_32 = arith.constant 0 : index
      %50 = vector.load %arg32[%c0_31, %c0_32] : memref<1x128xf32, #tpu.memory_space<vmem>>, vector<1x128xf32>
      %51 = arith.mulf %44, %44 : vector<32x128xf32>
      %cst_33 = arith.constant dense<0.000000e+00> : vector<128xf32>
      %52 = vector.multi_reduction <add>, %51, %cst_33 [0] : vector<32x128xf32> to vector<128xf32>
      %53 = vector.shape_cast %52 : vector<128xf32> to vector<1x128xf32>
      %54 = arith.addf %50, %53 : vector<1x128xf32>
      %c0_34 = arith.constant 0 : index
      %c0_35 = arith.constant 0 : index
      %55 = vector.load %arg32[%c0_34, %c0_35] : memref<1x128xf32, #tpu.memory_space<vmem>>, vector<1x128xf32>
      tpu.vector_store %arg32[%c0_34, %c0_35], %54 {strides = array<i32>} : memref<1x128xf32, #tpu.memory_space<vmem>>, vector<1x128xf32>,
      %56 = arith.extui %1 : i1 to i32
      %c0_i32_36 = arith.constant 0 : i32
      %57 = arith.cmpi ne, %56, %c0_i32_36 : i32
      scf.if %57 {
        %c0_37 = arith.constant 0 : index
        %c0_38 = arith.constant 0 : index
        %58 = vector.load %arg27[%c0_37, %c0_38] : memref<1x128xf32, #tpu.memory_space<vmem>>, vector<1x128xf32>
        %cst_39 = arith.constant 3.125000e-02 : f32
        %59 = vector.broadcast %cst_39 : f32 to vector<1x128xf32>
        %60 = arith.mulf %58, %59 : vector<1x128xf32>
        %c0_40 = arith.constant 0 : index
        %c0_41 = arith.constant 0 : index
        %61 = vector.load %arg32[%c0_40, %c0_41] : memref<1x128xf32, #tpu.memory_space<vmem>>, vector<1x128xf32>
        %cst_42 = arith.constant 3.125000e-02 : f32
        %62 = vector.broadcast %cst_42 : f32 to vector<1x128xf32>
        %63 = arith.mulf %61, %62 : vector<1x128xf32>
        %64 = arith.mulf %60, %60 : vector<1x128xf32>
        %65 = arith.subf %63, %64 : vector<1x128xf32>
        %cst_43 = arith.constant 0.000000e+00 : f32
        %66 = vector.broadcast %cst_43 : f32 to vector<1x128xf32>
        %67 = arith.maximumf %65, %66 : vector<1x128xf32>
        %c0_44 = arith.constant 0 : index
        %c0_45 = arith.constant 0 : index
        %68 = vector.load %arg10[%c0_44, %c0_45] : memref<1x128xf32, #tpu.memory_space<vmem>>, vector<1x128xf32>
        %cst_46 = arith.constant 9.99999974E-6 : f32
        %69 = vector.broadcast %cst_46 : f32 to vector<1x128xf32>
        %70 = arith.addf %67, %69 : vector<1x128xf32>
        %71 = math.rsqrt %70 : vector<1x128xf32>
        %72 = arith.mulf %68, %71 : vector<1x128xf32>
        %c0_47 = arith.constant 0 : index
        %c0_48 = arith.constant 0 : index
        %73 = vector.load %arg11[%c0_47, %c0_48] : memref<1x128xf32, #tpu.memory_space<vmem>>, vector<1x128xf32>
        %74 = arith.mulf %60, %72 : vector<1x128xf32>
        %75 = arith.subf %73, %74 : vector<1x128xf32>
        %c0_49 = arith.constant 0 : index
        %c0_50 = arith.constant 0 : index
        %76 = vector.load %arg37[%c0_49, %c0_50] : memref<1x128xf32, #tpu.memory_space<vmem>>, vector<1x128xf32>
        tpu.vector_store %arg37[%c0_49, %c0_50], %75 {strides = array<i32>} : memref<1x128xf32, #tpu.memory_space<vmem>>, vector<1x128xf32>,
        %c0_51 = arith.constant 0 : index
        %c0_52 = arith.constant 0 : index
        %77 = vector.load %arg9[%c0_51, %c0_52] : memref<128x128xbf16, #tpu.memory_space<vmem>>, vector<128x128xbf16>
        %78 = arith.extf %77 : vector<128x128xbf16> to vector<128x128xf32>
        %79 = vector.broadcast %72 : vector<1x128xf32> to vector<128x128xf32>
        %80 = arith.mulf %78, %79 : vector<128x128xf32>
        %81 = arith.truncf %80 : vector<128x128xf32> to vector<128x128xbf16>
        %c0_53 = arith.constant 0 : index
        %c0_54 = arith.constant 0 : index
        %82 = vector.load %arg42[%c0_53, %c0_54] : memref<128x128xbf16, #tpu.memory_space<vmem>>, vector<128x128xbf16>
        tpu.vector_store %arg42[%c0_53, %c0_54], %81 {strides = array<i32>} : memref<128x128xbf16, #tpu.memory_space<vmem>>, vector<128x128xbf16>,
      } else {
      }
    } else {
    }
    %c3_i32 = arith.constant 3 : i32
    %16 = arith.cmpi eq, %arg0, %c3_i32 : i32
    %17 = arith.extui %16 : i1 to i32
    %c0_i32_8 = arith.constant 0 : i32
    %18 = arith.cmpi ne, %17, %c0_i32_8 : i32
    scf.if %18 {
      %25 = arith.extui %0 : i1 to i32
      %c0_i32_11 = arith.constant 0 : i32
      %26 = arith.cmpi ne, %25, %c0_i32_11 : i32
      scf.if %26 {
        %cst_43 = arith.constant 0.000000e+00 : f32
        %66 = vector.broadcast %cst_43 : f32 to vector<1x256xf32>
        %c0_44 = arith.constant 0 : index
        %c0_45 = arith.constant 0 : index
        %67 = vector.load %arg28[%c0_44, %c0_45] : memref<1x256xf32, #tpu.memory_space<vmem>>, vector<1x256xf32>
        tpu.vector_store %arg28[%c0_44, %c0_45], %66 {strides = array<i32>} : memref<1x256xf32, #tpu.memory_space<vmem>>, vector<1x256xf32>,
        %cst_46 = arith.constant 0.000000e+00 : f32
        %68 = vector.broadcast %cst_46 : f32 to vector<1x256xf32>
        %c0_47 = arith.constant 0 : index
        %c0_48 = arith.constant 0 : index
        %69 = vector.load %arg33[%c0_47, %c0_48] : memref<1x256xf32, #tpu.memory_space<vmem>>, vector<1x256xf32>
        tpu.vector_store %arg33[%c0_47, %c0_48], %68 {strides = array<i32>} : memref<1x256xf32, #tpu.memory_space<vmem>>, vector<1x256xf32>,
      } else {
      }
      %c0_12 = arith.constant 0 : index
      %c0_13 = arith.constant 0 : index
      %27 = vector.load %arg40[%c0_12, %c0_13] : memref<8x64xbf16, #tpu.memory_space<vmem>>, vector<8x64xbf16>
      %cst = arith.constant dense<0.000000e+00> : vector<32x64xf32>
      %28 = tpu.matmul %6, %27, %cst {dimension_numbers = #tpu.dot_dimension_numbers<[1], [0], [0], [1], [0, 0, 1, 1], [], []>} : vector<32x8xbf16>, vector<8x64xbf16>, vector<32x64xf32> -> vector<32x64xf32>
      %c0_14 = arith.constant 0 : index
      %c0_15 = arith.constant 0 : index
      %29 = vector.load %arg35[%c0_14, %c0_15] : memref<1x64xf32, #tpu.memory_space<vmem>>, vector<1x64xf32>
      %30 = vector.broadcast %29 : vector<1x64xf32> to vector<32x64xf32>
      %31 = arith.addf %28, %30 : vector<32x64xf32>
      %cst_16 = arith.constant 0.000000e+00 : f32
      %32 = vector.broadcast %cst_16 : f32 to vector<32x64xf32>
      %33 = arith.maximumf %31, %32 : vector<32x64xf32>
      %34 = arith.truncf %33 : vector<32x64xf32> to vector<32x64xbf16>
      %c0_17 = arith.constant 0 : index
      %c0_18 = arith.constant 0 : index
      %35 = vector.load %arg41[%c0_17, %c0_18] : memref<64x128xbf16, #tpu.memory_space<vmem>>, vector<64x128xbf16>
      %cst_19 = arith.constant dense<0.000000e+00> : vector<32x128xf32>
      %36 = tpu.matmul %34, %35, %cst_19 {dimension_numbers = #tpu.dot_dimension_numbers<[1], [0], [0], [1], [0, 0, 1, 1], [], []>} : vector<32x64xbf16>, vector<64x128xbf16>, vector<32x128xf32> -> vector<32x128xf32>
      %c0_20 = arith.constant 0 : index
      %c0_21 = arith.constant 0 : index
      %37 = vector.load %arg36[%c0_20, %c0_21] : memref<1x128xf32, #tpu.memory_space<vmem>>, vector<1x128xf32>
      %38 = vector.broadcast %37 : vector<1x128xf32> to vector<32x128xf32>
      %39 = arith.addf %36, %38 : vector<32x128xf32>
      %cst_22 = arith.constant 0.000000e+00 : f32
      %40 = vector.broadcast %cst_22 : f32 to vector<32x128xf32>
      %41 = arith.maximumf %39, %40 : vector<32x128xf32>
      %42 = arith.truncf %41 : vector<32x128xf32> to vector<32x128xbf16>
      %c0_23 = arith.constant 0 : index
      %c0_24 = arith.constant 0 : index
      %43 = vector.load %arg42[%c0_23, %c0_24] : memref<128x128xbf16, #tpu.memory_space<vmem>>, vector<128x128xbf16>
      %cst_25 = arith.constant dense<0.000000e+00> : vector<32x128xf32>
      %44 = tpu.matmul %42, %43, %cst_25 {dimension_numbers = #tpu.dot_dimension_numbers<[1], [0], [0], [1], [0, 0, 1, 1], [], []>} : vector<32x128xbf16>, vector<128x128xbf16>, vector<32x128xf32> -> vector<32x128xf32>
      %c0_26 = arith.constant 0 : index
      %c0_27 = arith.constant 0 : index
      %45 = vector.load %arg37[%c0_26, %c0_27] : memref<1x128xf32, #tpu.memory_space<vmem>>, vector<1x128xf32>
      %46 = vector.broadcast %45 : vector<1x128xf32> to vector<32x128xf32>
      %47 = arith.addf %44, %46 : vector<32x128xf32>
      %cst_28 = arith.constant 0.000000e+00 : f32
      %48 = vector.broadcast %cst_28 : f32 to vector<32x128xf32>
      %49 = arith.maximumf %47, %48 : vector<32x128xf32>
      %50 = arith.truncf %49 : vector<32x128xf32> to vector<32x128xbf16>
      %c0_29 = arith.constant 0 : index
      %c0_30 = arith.constant 0 : index
      %51 = vector.load %arg12[%c0_29, %c0_30] : memref<128x256xbf16, #tpu.memory_space<vmem>>, vector<128x256xbf16>
      %cst_31 = arith.constant dense<0.000000e+00> : vector<32x256xf32>
      %52 = tpu.matmul %50, %51, %cst_31 {dimension_numbers = #tpu.dot_dimension_numbers<[1], [0], [0], [1], [0, 0, 1, 1], [], []>} : vector<32x128xbf16>, vector<128x256xbf16>, vector<32x256xf32> -> vector<32x256xf32>
      %c0_32 = arith.constant 0 : index
      %c0_33 = arith.constant 0 : index
      %53 = vector.load %arg28[%c0_32, %c0_33] : memref<1x256xf32, #tpu.memory_space<vmem>>, vector<1x256xf32>
      %cst_34 = arith.constant dense<0.000000e+00> : vector<256xf32>
      %54 = vector.multi_reduction <add>, %52, %cst_34 [0] : vector<32x256xf32> to vector<256xf32>
      %55 = vector.shape_cast %54 : vector<256xf32> to vector<1x256xf32>
      %56 = arith.addf %53, %55 : vector<1x256xf32>
      %c0_35 = arith.constant 0 : index
      %c0_36 = arith.constant 0 : index
      %57 = vector.load %arg28[%c0_35, %c0_36] : memref<1x256xf32, #tpu.memory_space<vmem>>, vector<1x256xf32>
      tpu.vector_store %arg28[%c0_35, %c0_36], %56 {strides = array<i32>} : memref<1x256xf32, #tpu.memory_space<vmem>>, vector<1x256xf32>,
      %c0_37 = arith.constant 0 : index
      %c0_38 = arith.constant 0 : index
      %58 = vector.load %arg33[%c0_37, %c0_38] : memref<1x256xf32, #tpu.memory_space<vmem>>, vector<1x256xf32>
      %59 = arith.mulf %52, %52 : vector<32x256xf32>
      %cst_39 = arith.constant dense<0.000000e+00> : vector<256xf32>
      %60 = vector.multi_reduction <add>, %59, %cst_39 [0] : vector<32x256xf32> to vector<256xf32>
      %61 = vector.shape_cast %60 : vector<256xf32> to vector<1x256xf32>
      %62 = arith.addf %58, %61 : vector<1x256xf32>
      %c0_40 = arith.constant 0 : index
      %c0_41 = arith.constant 0 : index
      %63 = vector.load %arg33[%c0_40, %c0_41] : memref<1x256xf32, #tpu.memory_space<vmem>>, vector<1x256xf32>
      tpu.vector_store %arg33[%c0_40, %c0_41], %62 {strides = array<i32>} : memref<1x256xf32, #tpu.memory_space<vmem>>, vector<1x256xf32>,
      %64 = arith.extui %1 : i1 to i32
      %c0_i32_42 = arith.constant 0 : i32
      %65 = arith.cmpi ne, %64, %c0_i32_42 : i32
      scf.if %65 {
        %c0_43 = arith.constant 0 : index
        %c0_44 = arith.constant 0 : index
        %66 = vector.load %arg28[%c0_43, %c0_44] : memref<1x256xf32, #tpu.memory_space<vmem>>, vector<1x256xf32>
        %cst_45 = arith.constant 3.125000e-02 : f32
        %67 = vector.broadcast %cst_45 : f32 to vector<1x256xf32>
        %68 = arith.mulf %66, %67 : vector<1x256xf32>
        %c0_46 = arith.constant 0 : index
        %c0_47 = arith.constant 0 : index
        %69 = vector.load %arg33[%c0_46, %c0_47] : memref<1x256xf32, #tpu.memory_space<vmem>>, vector<1x256xf32>
        %cst_48 = arith.constant 3.125000e-02 : f32
        %70 = vector.broadcast %cst_48 : f32 to vector<1x256xf32>
        %71 = arith.mulf %69, %70 : vector<1x256xf32>
        %72 = arith.mulf %68, %68 : vector<1x256xf32>
        %73 = arith.subf %71, %72 : vector<1x256xf32>
        %cst_49 = arith.constant 0.000000e+00 : f32
        %74 = vector.broadcast %cst_49 : f32 to vector<1x256xf32>
        %75 = arith.maximumf %73, %74 : vector<1x256xf32>
        %c0_50 = arith.constant 0 : index
        %c0_51 = arith.constant 0 : index
        %76 = vector.load %arg13[%c0_50, %c0_51] : memref<1x256xf32, #tpu.memory_space<vmem>>, vector<1x256xf32>
        %cst_52 = arith.constant 9.99999974E-6 : f32
        %77 = vector.broadcast %cst_52 : f32 to vector<1x256xf32>
        %78 = arith.addf %75, %77 : vector<1x256xf32>
        %79 = math.rsqrt %78 : vector<1x256xf32>
        %80 = arith.mulf %76, %79 : vector<1x256xf32>
        %c0_53 = arith.constant 0 : index
        %c0_54 = arith.constant 0 : index
        %81 = vector.load %arg14[%c0_53, %c0_54] : memref<1x256xf32, #tpu.memory_space<vmem>>, vector<1x256xf32>
        %82 = arith.mulf %68, %80 : vector<1x256xf32>
        %83 = arith.subf %81, %82 : vector<1x256xf32>
        %c0_55 = arith.constant 0 : index
        %c0_56 = arith.constant 0 : index
        %84 = vector.load %arg38[%c0_55, %c0_56] : memref<1x256xf32, #tpu.memory_space<vmem>>, vector<1x256xf32>
        tpu.vector_store %arg38[%c0_55, %c0_56], %83 {strides = array<i32>} : memref<1x256xf32, #tpu.memory_space<vmem>>, vector<1x256xf32>,
        %c0_57 = arith.constant 0 : index
        %c0_58 = arith.constant 0 : index
        %85 = vector.load %arg12[%c0_57, %c0_58] : memref<128x256xbf16, #tpu.memory_space<vmem>>, vector<128x256xbf16>
        %86 = arith.extf %85 : vector<128x256xbf16> to vector<128x256xf32>
        %87 = vector.broadcast %80 : vector<1x256xf32> to vector<128x256xf32>
        %88 = arith.mulf %86, %87 : vector<128x256xf32>
        %89 = arith.truncf %88 : vector<128x256xf32> to vector<128x256xbf16>
        %c0_59 = arith.constant 0 : index
        %c0_60 = arith.constant 0 : index
        %90 = vector.load %arg43[%c0_59, %c0_60] : memref<128x256xbf16, #tpu.memory_space<vmem>>, vector<128x256xbf16>
        tpu.vector_store %arg43[%c0_59, %c0_60], %89 {strides = array<i32>} : memref<128x256xbf16, #tpu.memory_space<vmem>>, vector<128x256xbf16>,
      } else {
      }
    } else {
    }
    %c4_i32 = arith.constant 4 : i32
    %19 = arith.cmpi eq, %arg0, %c4_i32 : i32
    %20 = arith.extui %19 : i1 to i32
    %c0_i32_9 = arith.constant 0 : i32
    %21 = arith.cmpi ne, %20, %c0_i32_9 : i32
    scf.if %21 {
      %25 = arith.extui %0 : i1 to i32
      %c0_i32_11 = arith.constant 0 : i32
      %26 = arith.cmpi ne, %25, %c0_i32_11 : i32
      scf.if %26 {
        %cst_49 = arith.constant 0.000000e+00 : f32
        %74 = vector.broadcast %cst_49 : f32 to vector<1x128xf32>
        %c0_50 = arith.constant 0 : index
        %c0_51 = arith.constant 0 : index
        %75 = vector.load %arg29[%c0_50, %c0_51] : memref<1x128xf32, #tpu.memory_space<vmem>>, vector<1x128xf32>
        tpu.vector_store %arg29[%c0_50, %c0_51], %74 {strides = array<i32>} : memref<1x128xf32, #tpu.memory_space<vmem>>, vector<1x128xf32>,
        %cst_52 = arith.constant 0.000000e+00 : f32
        %76 = vector.broadcast %cst_52 : f32 to vector<1x128xf32>
        %c0_53 = arith.constant 0 : index
        %c0_54 = arith.constant 0 : index
        %77 = vector.load %arg34[%c0_53, %c0_54] : memref<1x128xf32, #tpu.memory_space<vmem>>, vector<1x128xf32>
        tpu.vector_store %arg34[%c0_53, %c0_54], %76 {strides = array<i32>} : memref<1x128xf32, #tpu.memory_space<vmem>>, vector<1x128xf32>,
      } else {
      }
      %c0_12 = arith.constant 0 : index
      %c0_13 = arith.constant 0 : index
      %27 = vector.load %arg40[%c0_12, %c0_13] : memref<8x64xbf16, #tpu.memory_space<vmem>>, vector<8x64xbf16>
      %cst = arith.constant dense<0.000000e+00> : vector<32x64xf32>
      %28 = tpu.matmul %6, %27, %cst {dimension_numbers = #tpu.dot_dimension_numbers<[1], [0], [0], [1], [0, 0, 1, 1], [], []>} : vector<32x8xbf16>, vector<8x64xbf16>, vector<32x64xf32> -> vector<32x64xf32>
      %c0_14 = arith.constant 0 : index
      %c0_15 = arith.constant 0 : index
      %29 = vector.load %arg35[%c0_14, %c0_15] : memref<1x64xf32, #tpu.memory_space<vmem>>, vector<1x64xf32>
      %30 = vector.broadcast %29 : vector<1x64xf32> to vector<32x64xf32>
      %31 = arith.addf %28, %30 : vector<32x64xf32>
      %cst_16 = arith.constant 0.000000e+00 : f32
      %32 = vector.broadcast %cst_16 : f32 to vector<32x64xf32>
      %33 = arith.maximumf %31, %32 : vector<32x64xf32>
      %34 = arith.truncf %33 : vector<32x64xf32> to vector<32x64xbf16>
      %c0_17 = arith.constant 0 : index
      %c0_18 = arith.constant 0 : index
      %35 = vector.load %arg41[%c0_17, %c0_18] : memref<64x128xbf16, #tpu.memory_space<vmem>>, vector<64x128xbf16>
      %cst_19 = arith.constant dense<0.000000e+00> : vector<32x128xf32>
      %36 = tpu.matmul %34, %35, %cst_19 {dimension_numbers = #tpu.dot_dimension_numbers<[1], [0], [0], [1], [0, 0, 1, 1], [], []>} : vector<32x64xbf16>, vector<64x128xbf16>, vector<32x128xf32> -> vector<32x128xf32>
      %c0_20 = arith.constant 0 : index
      %c0_21 = arith.constant 0 : index
      %37 = vector.load %arg36[%c0_20, %c0_21] : memref<1x128xf32, #tpu.memory_space<vmem>>, vector<1x128xf32>
      %38 = vector.broadcast %37 : vector<1x128xf32> to vector<32x128xf32>
      %39 = arith.addf %36, %38 : vector<32x128xf32>
      %cst_22 = arith.constant 0.000000e+00 : f32
      %40 = vector.broadcast %cst_22 : f32 to vector<32x128xf32>
      %41 = arith.maximumf %39, %40 : vector<32x128xf32>
      %42 = arith.truncf %41 : vector<32x128xf32> to vector<32x128xbf16>
      %c0_23 = arith.constant 0 : index
      %c0_24 = arith.constant 0 : index
      %43 = vector.load %arg42[%c0_23, %c0_24] : memref<128x128xbf16, #tpu.memory_space<vmem>>, vector<128x128xbf16>
      %cst_25 = arith.constant dense<0.000000e+00> : vector<32x128xf32>
      %44 = tpu.matmul %42, %43, %cst_25 {dimension_numbers = #tpu.dot_dimension_numbers<[1], [0], [0], [1], [0, 0, 1, 1], [], []>} : vector<32x128xbf16>, vector<128x128xbf16>, vector<32x128xf32> -> vector<32x128xf32>
      %c0_26 = arith.constant 0 : index
      %c0_27 = arith.constant 0 : index
      %45 = vector.load %arg37[%c0_26, %c0_27] : memref<1x128xf32, #tpu.memory_space<vmem>>, vector<1x128xf32>
      %46 = vector.broadcast %45 : vector<1x128xf32> to vector<32x128xf32>
      %47 = arith.addf %44, %46 : vector<32x128xf32>
      %cst_28 = arith.constant 0.000000e+00 : f32
      %48 = vector.broadcast %cst_28 : f32 to vector<32x128xf32>
      %49 = arith.maximumf %47, %48 : vector<32x128xf32>
      %50 = arith.truncf %49 : vector<32x128xf32> to vector<32x128xbf16>
      %c0_29 = arith.constant 0 : index
      %c0_30 = arith.constant 0 : index
      %51 = vector.load %arg43[%c0_29, %c0_30] : memref<128x256xbf16, #tpu.memory_space<vmem>>, vector<128x256xbf16>
      %cst_31 = arith.constant dense<0.000000e+00> : vector<32x256xf32>
      %52 = tpu.matmul %50, %51, %cst_31 {dimension_numbers = #tpu.dot_dimension_numbers<[1], [0], [0], [1], [0, 0, 1, 1], [], []>} : vector<32x128xbf16>, vector<128x256xbf16>, vector<32x256xf32> -> vector<32x256xf32>
      %c0_32 = arith.constant 0 : index
      %c0_33 = arith.constant 0 : index
      %53 = vector.load %arg38[%c0_32, %c0_33] : memref<1x256xf32, #tpu.memory_space<vmem>>, vector<1x256xf32>
      %54 = vector.broadcast %53 : vector<1x256xf32> to vector<32x256xf32>
      %55 = arith.addf %52, %54 : vector<32x256xf32>
      %cst_34 = arith.constant 0.000000e+00 : f32
      %56 = vector.broadcast %cst_34 : f32 to vector<32x256xf32>
      %57 = arith.maximumf %55, %56 : vector<32x256xf32>
      %58 = arith.truncf %57 : vector<32x256xf32> to vector<32x256xbf16>
      %c0_35 = arith.constant 0 : index
      %c0_36 = arith.constant 0 : index
      %59 = vector.load %arg15[%c0_35, %c0_36] : memref<256x128xbf16, #tpu.memory_space<vmem>>, vector<256x128xbf16>
      %cst_37 = arith.constant dense<0.000000e+00> : vector<32x128xf32>
      %60 = tpu.matmul %58, %59, %cst_37 {dimension_numbers = #tpu.dot_dimension_numbers<[1], [0], [0], [1], [0, 0, 1, 1], [], []>} : vector<32x256xbf16>, vector<256x128xbf16>, vector<32x128xf32> -> vector<32x128xf32>
      %c0_38 = arith.constant 0 : index
      %c0_39 = arith.constant 0 : index
      %61 = vector.load %arg29[%c0_38, %c0_39] : memref<1x128xf32, #tpu.memory_space<vmem>>, vector<1x128xf32>
      %cst_40 = arith.constant dense<0.000000e+00> : vector<128xf32>
      %62 = vector.multi_reduction <add>, %60, %cst_40 [0] : vector<32x128xf32> to vector<128xf32>
      %63 = vector.shape_cast %62 : vector<128xf32> to vector<1x128xf32>
      %64 = arith.addf %61, %63 : vector<1x128xf32>
      %c0_41 = arith.constant 0 : index
      %c0_42 = arith.constant 0 : index
      %65 = vector.load %arg29[%c0_41, %c0_42] : memref<1x128xf32, #tpu.memory_space<vmem>>, vector<1x128xf32>
      tpu.vector_store %arg29[%c0_41, %c0_42], %64 {strides = array<i32>} : memref<1x128xf32, #tpu.memory_space<vmem>>, vector<1x128xf32>,
      %c0_43 = arith.constant 0 : index
      %c0_44 = arith.constant 0 : index
      %66 = vector.load %arg34[%c0_43, %c0_44] : memref<1x128xf32, #tpu.memory_space<vmem>>, vector<1x128xf32>
      %67 = arith.mulf %60, %60 : vector<32x128xf32>
      %cst_45 = arith.constant dense<0.000000e+00> : vector<128xf32>
      %68 = vector.multi_reduction <add>, %67, %cst_45 [0] : vector<32x128xf32> to vector<128xf32>
      %69 = vector.shape_cast %68 : vector<128xf32> to vector<1x128xf32>
      %70 = arith.addf %66, %69 : vector<1x128xf32>
      %c0_46 = arith.constant 0 : index
      %c0_47 = arith.constant 0 : index
      %71 = vector.load %arg34[%c0_46, %c0_47] : memref<1x128xf32, #tpu.memory_space<vmem>>, vector<1x128xf32>
      tpu.vector_store %arg34[%c0_46, %c0_47], %70 {strides = array<i32>} : memref<1x128xf32, #tpu.memory_space<vmem>>, vector<1x128xf32>,
      %72 = arith.extui %1 : i1 to i32
      %c0_i32_48 = arith.constant 0 : i32
      %73 = arith.cmpi ne, %72, %c0_i32_48 : i32
      scf.if %73 {
        %c0_49 = arith.constant 0 : index
        %c0_50 = arith.constant 0 : index
        %74 = vector.load %arg29[%c0_49, %c0_50] : memref<1x128xf32, #tpu.memory_space<vmem>>, vector<1x128xf32>
        %cst_51 = arith.constant 3.125000e-02 : f32
        %75 = vector.broadcast %cst_51 : f32 to vector<1x128xf32>
        %76 = arith.mulf %74, %75 : vector<1x128xf32>
        %c0_52 = arith.constant 0 : index
        %c0_53 = arith.constant 0 : index
        %77 = vector.load %arg34[%c0_52, %c0_53] : memref<1x128xf32, #tpu.memory_space<vmem>>, vector<1x128xf32>
        %cst_54 = arith.constant 3.125000e-02 : f32
        %78 = vector.broadcast %cst_54 : f32 to vector<1x128xf32>
        %79 = arith.mulf %77, %78 : vector<1x128xf32>
        %80 = arith.mulf %76, %76 : vector<1x128xf32>
        %81 = arith.subf %79, %80 : vector<1x128xf32>
        %cst_55 = arith.constant 0.000000e+00 : f32
        %82 = vector.broadcast %cst_55 : f32 to vector<1x128xf32>
        %83 = arith.maximumf %81, %82 : vector<1x128xf32>
        %c0_56 = arith.constant 0 : index
        %c0_57 = arith.constant 0 : index
        %84 = vector.load %arg16[%c0_56, %c0_57] : memref<1x128xf32, #tpu.memory_space<vmem>>, vector<1x128xf32>
        %cst_58 = arith.constant 9.99999974E-6 : f32
        %85 = vector.broadcast %cst_58 : f32 to vector<1x128xf32>
        %86 = arith.addf %83, %85 : vector<1x128xf32>
        %87 = math.rsqrt %86 : vector<1x128xf32>
        %88 = arith.mulf %84, %87 : vector<1x128xf32>
        %c0_59 = arith.constant 0 : index
        %c0_60 = arith.constant 0 : index
        %89 = vector.load %arg17[%c0_59, %c0_60] : memref<1x128xf32, #tpu.memory_space<vmem>>, vector<1x128xf32>
        %90 = arith.mulf %76, %88 : vector<1x128xf32>
        %91 = arith.subf %89, %90 : vector<1x128xf32>
        %c0_61 = arith.constant 0 : index
        %c0_62 = arith.constant 0 : index
        %92 = vector.load %arg39[%c0_61, %c0_62] : memref<1x128xf32, #tpu.memory_space<vmem>>, vector<1x128xf32>
        tpu.vector_store %arg39[%c0_61, %c0_62], %91 {strides = array<i32>} : memref<1x128xf32, #tpu.memory_space<vmem>>, vector<1x128xf32>,
        %c0_63 = arith.constant 0 : index
        %c0_64 = arith.constant 0 : index
        %93 = vector.load %arg15[%c0_63, %c0_64] : memref<256x128xbf16, #tpu.memory_space<vmem>>, vector<256x128xbf16>
        %94 = arith.extf %93 : vector<256x128xbf16> to vector<256x128xf32>
        %95 = vector.broadcast %88 : vector<1x128xf32> to vector<256x128xf32>
        %96 = arith.mulf %94, %95 : vector<256x128xf32>
        %97 = arith.truncf %96 : vector<256x128xf32> to vector<256x128xbf16>
        %c0_65 = arith.constant 0 : index
        %c0_66 = arith.constant 0 : index
        %98 = vector.load %arg44[%c0_65, %c0_66] : memref<256x128xbf16, #tpu.memory_space<vmem>>, vector<256x128xbf16>
        tpu.vector_store %arg44[%c0_65, %c0_66], %97 {strides = array<i32>} : memref<256x128xbf16, #tpu.memory_space<vmem>>, vector<256x128xbf16>,
      } else {
      }
    } else {
    }
    %c5_i32 = arith.constant 5 : i32
    %22 = arith.cmpi eq, %arg0, %c5_i32 : i32
    %23 = arith.extui %22 : i1 to i32
    %c0_i32_10 = arith.constant 0 : i32
    %24 = arith.cmpi ne, %23, %c0_i32_10 : i32
    scf.if %24 {
      %c0_11 = arith.constant 0 : index
      %c0_12 = arith.constant 0 : index
      %25 = vector.load %arg40[%c0_11, %c0_12] : memref<8x64xbf16, #tpu.memory_space<vmem>>, vector<8x64xbf16>
      %cst = arith.constant dense<0.000000e+00> : vector<32x64xf32>
      %26 = tpu.matmul %6, %25, %cst {dimension_numbers = #tpu.dot_dimension_numbers<[1], [0], [0], [1], [0, 0, 1, 1], [], []>} : vector<32x8xbf16>, vector<8x64xbf16>, vector<32x64xf32> -> vector<32x64xf32>
      %c0_13 = arith.constant 0 : index
      %c0_14 = arith.constant 0 : index
      %27 = vector.load %arg35[%c0_13, %c0_14] : memref<1x64xf32, #tpu.memory_space<vmem>>, vector<1x64xf32>
      %28 = vector.broadcast %27 : vector<1x64xf32> to vector<32x64xf32>
      %29 = arith.addf %26, %28 : vector<32x64xf32>
      %cst_15 = arith.constant 0.000000e+00 : f32
      %30 = vector.broadcast %cst_15 : f32 to vector<32x64xf32>
      %31 = arith.maximumf %29, %30 : vector<32x64xf32>
      %32 = arith.truncf %31 : vector<32x64xf32> to vector<32x64xbf16>
      %c0_16 = arith.constant 0 : index
      %c0_17 = arith.constant 0 : index
      %33 = vector.load %arg41[%c0_16, %c0_17] : memref<64x128xbf16, #tpu.memory_space<vmem>>, vector<64x128xbf16>
      %cst_18 = arith.constant dense<0.000000e+00> : vector<32x128xf32>
      %34 = tpu.matmul %32, %33, %cst_18 {dimension_numbers = #tpu.dot_dimension_numbers<[1], [0], [0], [1], [0, 0, 1, 1], [], []>} : vector<32x64xbf16>, vector<64x128xbf16>, vector<32x128xf32> -> vector<32x128xf32>
      %c0_19 = arith.constant 0 : index
      %c0_20 = arith.constant 0 : index
      %35 = vector.load %arg36[%c0_19, %c0_20] : memref<1x128xf32, #tpu.memory_space<vmem>>, vector<1x128xf32>
      %36 = vector.broadcast %35 : vector<1x128xf32> to vector<32x128xf32>
      %37 = arith.addf %34, %36 : vector<32x128xf32>
      %cst_21 = arith.constant 0.000000e+00 : f32
      %38 = vector.broadcast %cst_21 : f32 to vector<32x128xf32>
      %39 = arith.maximumf %37, %38 : vector<32x128xf32>
      %40 = arith.truncf %39 : vector<32x128xf32> to vector<32x128xbf16>
      %c0_22 = arith.constant 0 : index
      %c0_23 = arith.constant 0 : index
      %41 = vector.load %arg42[%c0_22, %c0_23] : memref<128x128xbf16, #tpu.memory_space<vmem>>, vector<128x128xbf16>
      %cst_24 = arith.constant dense<0.000000e+00> : vector<32x128xf32>
      %42 = tpu.matmul %40, %41, %cst_24 {dimension_numbers = #tpu.dot_dimension_numbers<[1], [0], [0], [1], [0, 0, 1, 1], [], []>} : vector<32x128xbf16>, vector<128x128xbf16>, vector<32x128xf32> -> vector<32x128xf32>
      %c0_25 = arith.constant 0 : index
      %c0_26 = arith.constant 0 : index
      %43 = vector.load %arg37[%c0_25, %c0_26] : memref<1x128xf32, #tpu.memory_space<vmem>>, vector<1x128xf32>
      %44 = vector.broadcast %43 : vector<1x128xf32> to vector<32x128xf32>
      %45 = arith.addf %42, %44 : vector<32x128xf32>
      %cst_27 = arith.constant 0.000000e+00 : f32
      %46 = vector.broadcast %cst_27 : f32 to vector<32x128xf32>
      %47 = arith.maximumf %45, %46 : vector<32x128xf32>
      %48 = arith.truncf %47 : vector<32x128xf32> to vector<32x128xbf16>
      %c0_28 = arith.constant 0 : index
      %c0_29 = arith.constant 0 : index
      %49 = vector.load %arg43[%c0_28, %c0_29] : memref<128x256xbf16, #tpu.memory_space<vmem>>, vector<128x256xbf16>
      %cst_30 = arith.constant dense<0.000000e+00> : vector<32x256xf32>
      %50 = tpu.matmul %48, %49, %cst_30 {dimension_numbers = #tpu.dot_dimension_numbers<[1], [0], [0], [1], [0, 0, 1, 1], [], []>} : vector<32x128xbf16>, vector<128x256xbf16>, vector<32x256xf32> -> vector<32x256xf32>
      %c0_31 = arith.constant 0 : index
      %c0_32 = arith.constant 0 : index
      %51 = vector.load %arg38[%c0_31, %c0_32] : memref<1x256xf32, #tpu.memory_space<vmem>>, vector<1x256xf32>
      %52 = vector.broadcast %51 : vector<1x256xf32> to vector<32x256xf32>
      %53 = arith.addf %50, %52 : vector<32x256xf32>
      %cst_33 = arith.constant 0.000000e+00 : f32
      %54 = vector.broadcast %cst_33 : f32 to vector<32x256xf32>
      %55 = arith.maximumf %53, %54 : vector<32x256xf32>
      %56 = arith.truncf %55 : vector<32x256xf32> to vector<32x256xbf16>
      %c0_34 = arith.constant 0 : index
      %c0_35 = arith.constant 0 : index
      %57 = vector.load %arg44[%c0_34, %c0_35] : memref<256x128xbf16, #tpu.memory_space<vmem>>, vector<256x128xbf16>
      %cst_36 = arith.constant dense<0.000000e+00> : vector<32x128xf32>
      %58 = tpu.matmul %56, %57, %cst_36 {dimension_numbers = #tpu.dot_dimension_numbers<[1], [0], [0], [1], [0, 0, 1, 1], [], []>} : vector<32x256xbf16>, vector<256x128xbf16>, vector<32x128xf32> -> vector<32x128xf32>
      %c0_37 = arith.constant 0 : index
      %c0_38 = arith.constant 0 : index
      %59 = vector.load %arg39[%c0_37, %c0_38] : memref<1x128xf32, #tpu.memory_space<vmem>>, vector<1x128xf32>
      %60 = vector.broadcast %59 : vector<1x128xf32> to vector<32x128xf32>
      %61 = arith.addf %58, %60 : vector<32x128xf32>
      %cst_39 = arith.constant 0.000000e+00 : f32
      %62 = vector.broadcast %cst_39 : f32 to vector<32x128xf32>
      %63 = arith.maximumf %61, %62 : vector<32x128xf32>
      %64 = vector.shape_cast %63 : vector<32x128xf32> to vector<2x16x128xf32>
      %cst_40 = arith.constant dense<0xFF800000> : vector<2x128xf32>
      %65 = vector.multi_reduction <maximumf>, %64, %cst_40 [1] : vector<2x16x128xf32> to vector<2x128xf32>
      %c2_i32_41 = arith.constant 2 : i32
      %66 = arith.muli %arg1, %c2_i32_41 : i32
      %67 = arith.index_cast %66 : i32 to index
      %c0_42 = arith.constant 0 : index
      %68 = vector.load %arg45[%67, %c0_42] : memref<2x128xf32, #tpu.memory_space<vmem>>, vector<2x128xf32>
      tpu.vector_store %arg45[%67, %c0_42], %65 {strides = array<i32>} : memref<2x128xf32, #tpu.memory_space<vmem>>, vector<2x128xf32>,
      %69 = arith.extui %1 : i1 to i32
      %c0_i32_43 = arith.constant 0 : i32
      %70 = arith.cmpi ne, %69, %c0_i32_43 : i32
      scf.if %70 {
        tpu.wait_dma2 semaphore(%arg47 : memref<!tpu.dma_semaphore, #tpu.memory_space<semaphore_mem>>) src(%arg22 : memref<256x3072xbf16, #tpu.memory_space<any>>) dst(%arg46 : memref<256x3072xbf16, #tpu.memory_space<vmem>>)
        %c0_44 = arith.constant 0 : index
        %c0_45 = arith.constant 0 : index
        %71 = vector.load %arg45[%c0_44, %c0_45] : memref<2x128xf32, #tpu.memory_space<vmem>>, vector<2x128xf32>
        %72 = arith.truncf %71 : vector<2x128xf32> to vector<2x128xbf16>
        %c0_46 = arith.constant 0 : index
        %c0_47 = arith.constant 0 : index
        %73 = vector.load %arg18[%c0_46, %c0_47] : memref<128x256xbf16, #tpu.memory_space<vmem>>, vector<128x256xbf16>
        %cst_48 = arith.constant dense<0.000000e+00> : vector<2x256xf32>
        %74 = tpu.matmul %72, %73, %cst_48 {dimension_numbers = #tpu.dot_dimension_numbers<[1], [0], [0], [1], [0, 0, 1, 1], [], []>} : vector<2x128xbf16>, vector<128x256xbf16>, vector<2x256xf32> -> vector<2x256xf32>
        %c0_49 = arith.constant 0 : index
        %c0_50 = arith.constant 0 : index
        %75 = vector.load %arg19[%c0_49, %c0_50] : memref<1x256xf32, #tpu.memory_space<vmem>>, vector<1x256xf32>
        %76 = vector.broadcast %75 : vector<1x256xf32> to vector<2x256xf32>
        %77 = arith.addf %74, %76 : vector<2x256xf32>
        %cst_51 = arith.constant 0.000000e+00 : f32
        %78 = vector.broadcast %cst_51 : f32 to vector<2x256xf32>
        %79 = arith.maximumf %77, %78 : vector<2x256xf32>
        %80 = arith.truncf %79 : vector<2x256xf32> to vector<2x256xbf16>
        %c0_52 = arith.constant 0 : index
        %c0_53 = arith.constant 0 : index
        %81 = vector.load %arg20[%c0_52, %c0_53] : memref<256x256xbf16, #tpu.memory_space<vmem>>, vector<256x256xbf16>
        %cst_54 = arith.constant dense<0.000000e+00> : vector<2x256xf32>
        %82 = tpu.matmul %80, %81, %cst_54 {dimension_numbers = #tpu.dot_dimension_numbers<[1], [0], [0], [1], [0, 0, 1, 1], [], []>} : vector<2x256xbf16>, vector<256x256xbf16>, vector<2x256xf32> -> vector<2x256xf32>
        %c0_55 = arith.constant 0 : index
        %c0_56 = arith.constant 0 : index
        %83 = vector.load %arg21[%c0_55, %c0_56] : memref<1x256xf32, #tpu.memory_space<vmem>>, vector<1x256xf32>
        %84 = vector.broadcast %83 : vector<1x256xf32> to vector<2x256xf32>
        %85 = arith.addf %82, %84 : vector<2x256xf32>
        %cst_57 = arith.constant 0.000000e+00 : f32
        %86 = vector.broadcast %cst_57 : f32 to vector<2x256xf32>
        %87 = arith.maximumf %85, %86 : vector<2x256xf32>
        %88 = arith.truncf %87 : vector<2x256xf32> to vector<2x256xbf16>
        %c0_58 = arith.constant 0 : index
        %c0_59 = arith.constant 0 : index
        %89 = vector.load %arg46[%c0_58, %c0_59] : memref<256x3072xbf16, #tpu.memory_space<vmem>>, vector<256x3072xbf16>
        %cst_60 = arith.constant dense<0.000000e+00> : vector<2x3072xf32>
        %90 = tpu.matmul %88, %89, %cst_60 {dimension_numbers = #tpu.dot_dimension_numbers<[1], [0], [0], [1], [0, 0, 1, 1], [], []>} : vector<2x256xbf16>, vector<256x3072xbf16>, vector<2x3072xf32> -> vector<2x3072xf32>
        %c0_61 = arith.constant 0 : index
        %c0_62 = arith.constant 0 : index
        %91 = vector.load %arg23[%c0_61, %c0_62] : memref<1x3072xf32, #tpu.memory_space<vmem>>, vector<1x3072xf32>
        %92 = vector.broadcast %91 : vector<1x3072xf32> to vector<2x3072xf32>
        %93 = arith.addf %90, %92 : vector<2x3072xf32>
        %c0_63 = arith.constant 0 : index
        %c0_64 = arith.constant 0 : index
        %94 = vector.load %arg24[%c0_63, %c0_64] : memref<2x3072xf32, #tpu.memory_space<vmem>>, vector<2x3072xf32>
        tpu.vector_store %arg24[%c0_63, %c0_64], %93 {strides = array<i32>} : memref<2x3072xf32, #tpu.memory_space<vmem>>, vector<2x3072xf32>,
      } else {
      }
    } else {
    }
    return
  }
  func.func @transform_0(%arg0: i32, %arg1: i32) -> (i32, i32) {
    %c0_i32 = arith.constant 0 : i32
    %c0_i32_0 = arith.constant 0 : i32
    return %arg1, %c0_i32 : i32, i32
  }
  func.func @transform_1(%arg0: i32, %arg1: i32) -> (i32, i32) {
    %c0_i32 = arith.constant 0 : i32
    %c0_i32_0 = arith.constant 0 : i32
    %c0_i32_1 = arith.constant 0 : i32
    return %c0_i32, %c0_i32_0 : i32, i32
  }
  func.func @transform_2(%arg0: i32, %arg1: i32) -> (i32, i32) {
    %c0_i32 = arith.constant 0 : i32
    %c0_i32_0 = arith.constant 0 : i32
    %c0_i32_1 = arith.constant 0 : i32
    return %c0_i32, %c0_i32_0 : i32, i32
  }
  func.func @transform_3(%arg0: i32, %arg1: i32) -> (i32, i32) {
    %c0_i32 = arith.constant 0 : i32
    %c0_i32_0 = arith.constant 0 : i32
    %c0_i32_1 = arith.constant 0 : i32
    return %c0_i32, %c0_i32_0 : i32, i32
  }
  func.func @transform_4(%arg0: i32, %arg1: i32) -> (i32, i32) {
    %c0_i32 = arith.constant 0 : i32
    %c0_i32_0 = arith.constant 0 : i32
    %c0_i32_1 = arith.constant 0 : i32
    return %c0_i32, %c0_i32_0 : i32, i32
  }
  func.func @transform_5(%arg0: i32, %arg1: i32) -> (i32, i32) {
    %c0_i32 = arith.constant 0 : i32
    %c0_i32_0 = arith.constant 0 : i32
    %c0_i32_1 = arith.constant 0 : i32
    return %c0_i32, %c0_i32_0 : i32, i32
  }
  func.func @transform_6(%arg0: i32, %arg1: i32) -> (i32, i32) {
    %c0_i32 = arith.constant 0 : i32
    %c0_i32_0 = arith.constant 0 : i32
    %c0_i32_1 = arith.constant 0 : i32
    return %c0_i32, %c0_i32_0 : i32, i32
  }
  func.func @transform_7(%arg0: i32, %arg1: i32) -> (i32, i32) {
    %c0_i32 = arith.constant 0 : i32
    %c0_i32_0 = arith.constant 0 : i32
    %c0_i32_1 = arith.constant 0 : i32
    return %c0_i32, %c0_i32_0 : i32, i32
  }
  func.func @transform_8(%arg0: i32, %arg1: i32) -> (i32, i32) {
    %c0_i32 = arith.constant 0 : i32
    %c0_i32_0 = arith.constant 0 : i32
    %c0_i32_1 = arith.constant 0 : i32
    return %c0_i32, %c0_i32_0 : i32, i32
  }
  func.func @transform_9(%arg0: i32, %arg1: i32) -> (i32, i32) {
    %c0_i32 = arith.constant 0 : i32
    %c0_i32_0 = arith.constant 0 : i32
    %c0_i32_1 = arith.constant 0 : i32
    return %c0_i32, %c0_i32_0 : i32, i32
  }
  func.func @transform_10(%arg0: i32, %arg1: i32) -> (i32, i32) {
    %c0_i32 = arith.constant 0 : i32
    %c0_i32_0 = arith.constant 0 : i32
    %c0_i32_1 = arith.constant 0 : i32
    return %c0_i32, %c0_i32_0 : i32, i32
  }
  func.func @transform_11(%arg0: i32, %arg1: i32) -> (i32, i32) {
    %c0_i32 = arith.constant 0 : i32
    %c0_i32_0 = arith.constant 0 : i32
    %c0_i32_1 = arith.constant 0 : i32
    return %c0_i32, %c0_i32_0 : i32, i32
  }
  func.func @transform_12(%arg0: i32, %arg1: i32) -> (i32, i32) {
    %c0_i32 = arith.constant 0 : i32
    %c0_i32_0 = arith.constant 0 : i32
    %c0_i32_1 = arith.constant 0 : i32
    return %c0_i32, %c0_i32_0 : i32, i32
  }
  func.func @transform_13(%arg0: i32, %arg1: i32) -> (i32, i32) {
    %c0_i32 = arith.constant 0 : i32
    %c0_i32_0 = arith.constant 0 : i32
    %c0_i32_1 = arith.constant 0 : i32
    return %c0_i32, %c0_i32_0 : i32, i32
  }
  func.func @transform_14(%arg0: i32, %arg1: i32) -> (i32, i32) {
    %c0_i32 = arith.constant 0 : i32
    %c0_i32_0 = arith.constant 0 : i32
    %c0_i32_1 = arith.constant 0 : i32
    return %c0_i32, %c0_i32_0 : i32, i32
  }
  func.func @transform_15(%arg0: i32, %arg1: i32) -> (i32, i32) {
    %c0_i32 = arith.constant 0 : i32
    %c0_i32_0 = arith.constant 0 : i32
    %c0_i32_1 = arith.constant 0 : i32
    return %c0_i32, %c0_i32_0 : i32, i32
  }
  func.func @transform_16(%arg0: i32, %arg1: i32) -> (i32, i32) {
    %c0_i32 = arith.constant 0 : i32
    %c0_i32_0 = arith.constant 0 : i32
    %c0_i32_1 = arith.constant 0 : i32
    return %c0_i32, %c0_i32_0 : i32, i32
  }
  func.func @transform_17(%arg0: i32, %arg1: i32) -> (i32, i32) {
    %c0_i32 = arith.constant 0 : i32
    %c0_i32_0 = arith.constant 0 : i32
    %c0_i32_1 = arith.constant 0 : i32
    return %c0_i32, %c0_i32_0 : i32, i32
  }
  func.func @transform_18(%arg0: i32, %arg1: i32) -> (i32, i32) {
    %c0_i32 = arith.constant 0 : i32
    %c0_i32_0 = arith.constant 0 : i32
    %c0_i32_1 = arith.constant 0 : i32
    return %c0_i32, %c0_i32_0 : i32, i32
  }
  func.func @transform_19(%arg0: i32, %arg1: i32) -> (i32, i32) {
    %c0_i32 = arith.constant 0 : i32
    %c0_i32_0 = arith.constant 0 : i32
    %c0_i32_1 = arith.constant 0 : i32
    return %c0_i32, %c0_i32_0 : i32, i32
  }
  func.func @transform_21(%arg0: i32, %arg1: i32) -> (i32, i32) {
    %c0_i32 = arith.constant 0 : i32
    %c0_i32_0 = arith.constant 0 : i32
    %c0_i32_1 = arith.constant 0 : i32
    return %c0_i32, %c0_i32_0 : i32, i32
  }
  func.func @transform_22(%arg0: i32, %arg1: i32) -> (i32, i32) {
    %c0_i32 = arith.constant 0 : i32
    %c0_i32_0 = arith.constant 0 : i32
    %c0_i32_1 = arith.constant 0 : i32
    return %c0_i32, %c0_i32_0 : i32, i32
  }
}

</mosaic_0001>

<llo_original>
// kernel: tpu_custom_call.1
$region0: #{tpu_custom_call.1}
  #allocation0 [shape = 'u32[]', space=smem, size = 0x4, offset = 0x4, fixed_abs, tag = 'smem constant byte address 0x4 - core index']
  #allocation1 [shape = 'u32[144,128]{1,0:T(1,128)}', space=vmem, size = 0x12000, scoped, tag = 'internal scratch']
  #allocation2 [shape = 'f32[1,64]{1,0:T(1,128)}', space=vmem, size = 0x200, scoped, tag = 'scratch operand']
  #allocation3 [shape = 'f32[1,128]{1,0:T(1,128)}', space=vmem, size = 0x200, scoped, tag = 'scratch operand']
  #allocation4 [shape = 'f32[1,128]{1,0:T(1,128)}', space=vmem, size = 0x200, scoped, tag = 'scratch operand']
  #allocation5 [shape = 'f32[1,256]{1,0:T(1,128)}', space=vmem, size = 0x400, scoped, tag = 'scratch operand']
  #allocation6 [shape = 'f32[1,128]{1,0:T(1,128)}', space=vmem, size = 0x200, scoped, tag = 'scratch operand']
  #allocation7 [shape = 'f32[1,64]{1,0:T(1,128)}', space=vmem, size = 0x200, scoped, tag = 'scratch operand']
  #allocation8 [shape = 'f32[1,128]{1,0:T(1,128)}', space=vmem, size = 0x200, scoped, tag = 'scratch operand']
  #allocation9 [shape = 'f32[1,128]{1,0:T(1,128)}', space=vmem, size = 0x200, scoped, tag = 'scratch operand']
  #allocation10 [shape = 'f32[1,256]{1,0:T(1,128)}', space=vmem, size = 0x400, scoped, tag = 'scratch operand']
  #allocation11 [shape = 'f32[1,128]{1,0:T(1,128)}', space=vmem, size = 0x200, scoped, tag = 'scratch operand']
  #allocation12 [shape = 'f32[1,64]{1,0:T(1,128)}', space=vmem, size = 0x200, scoped, tag = 'scratch operand']
  #allocation13 [shape = 'f32[1,128]{1,0:T(1,128)}', space=vmem, size = 0x200, scoped, tag = 'scratch operand']
  #allocation14 [shape = 'f32[1,128]{1,0:T(1,128)}', space=vmem, size = 0x200, scoped, tag = 'scratch operand']
  #allocation15 [shape = 'f32[1,256]{1,0:T(1,128)}', space=vmem, size = 0x400, scoped, tag = 'scratch operand']
  #allocation16 [shape = 'f32[1,128]{1,0:T(1,128)}', space=vmem, size = 0x200, scoped, tag = 'scratch operand']
  #allocation17 [shape = 'bf16[8,64]{1,0:T(8,128)(2,1)}', space=vmem, size = 0x800, scoped, tag = 'scratch operand']
  #allocation18 [shape = 'bf16[64,128]{1,0:T(16,128)(2,1)}', space=vmem, size = 0x4000, scoped, tag = 'scratch operand']
  #allocation19 [shape = 'bf16[128,128]{1,0:T(16,128)(2,1)}', space=vmem, size = 0x8000, scoped, tag = 'scratch operand']
  #allocation20 [shape = 'bf16[128,256]{1,0:T(16,128)(2,1)}', space=vmem, size = 0x10000, scoped, tag = 'scratch operand']
  #allocation21 [shape = 'bf16[256,128]{1,0:T(16,128)(2,1)}', space=vmem, size = 0x10000, scoped, tag = 'scratch operand']
  #allocation22 [shape = 'f32[2,128]{1,0:T(2,128)}', space=vmem, size = 0x400, scoped, tag = 'scratch operand']
  #allocation23 [shape = 'bf16[256,3072]{1,0:T(16,128)(2,1)}', space=vmem, size = 0x180000, scoped, tag = 'scratch operand']
  #allocation24 [shape = 's32[1]{0}', space=sflag, size = 0x4, scoped, tag = 'scratch operand']
  #allocation58 [shape = 's32[]', space=sflag, size = 0x4, offset = 0, fixed_abs, tag = 'sflag constant byte address 0x0 - dummy sync flag']
  %s0 = inlined_call_operand.vmem [shape: bf16[32,8], index: 0, kind: input, shape index: {}]
  %s1 = inlined_call_operand.hbm [shape: bf16[8,64], index: 1, kind: input, shape index: {}]
  %s2 = inlined_call_operand.hbm [shape: f32[1,64], index: 2, kind: input, shape index: {}]
  %s3 = inlined_call_operand.hbm [shape: f32[1,64], index: 3, kind: input, shape index: {}]
  %s4 = inlined_call_operand.hbm [shape: bf16[64,128], index: 4, kind: input, shape index: {}]
  %s5 = inlined_call_operand.hbm [shape: f32[1,128], index: 5, kind: input, shape index: {}]
  %s6 = inlined_call_operand.hbm [shape: f32[1,128], index: 6, kind: input, shape index: {}]
  %s7 = inlined_call_operand.hbm [shape: bf16[128,128], index: 7, kind: input, shape index: {}]
  %s8 = inlined_call_operand.hbm [shape: f32[1,128], index: 8, kind: input, shape index: {}]
  %s9 = inlined_call_operand.hbm [shape: f32[1,128], index: 9, kind: input, shape index: {}]
  %s10 = inlined_call_operand.hbm [shape: bf16[128,256], index: 10, kind: input, shape index: {}]
  %s11 = inlined_call_operand.hbm [shape: f32[1,256], index: 11, kind: input, shape index: {}]
  %s12 = inlined_call_operand.hbm [shape: f32[1,256], index: 12, kind: input, shape index: {}]
  %s13 = inlined_call_operand.hbm [shape: bf16[256,128], index: 13, kind: input, shape index: {}]
  %s14 = inlined_call_operand.hbm [shape: f32[1,128], index: 14, kind: input, shape index: {}]
  %s15 = inlined_call_operand.hbm [shape: f32[1,128], index: 15, kind: input, shape index: {}]
  %s16 = inlined_call_operand.hbm [shape: bf16[128,256], index: 16, kind: input, shape index: {}]
  %s17 = inlined_call_operand.hbm [shape: f32[1,256], index: 17, kind: input, shape index: {}]
  %s18 = inlined_call_operand.hbm [shape: bf16[256,256], index: 18, kind: input, shape index: {}]
  %s19 = inlined_call_operand.hbm [shape: f32[1,256], index: 19, kind: input, shape index: {}]
  %s20 = inlined_call_operand.hbm [shape: bf16[256,3072], index: 20, kind: input, shape index: {}]
  %s21 = inlined_call_operand.hbm [shape: f32[1,3072], index: 21, kind: input, shape index: {}]
  %s22 = inlined_call_operand.hbm [shape: f32[2,3072], index: 22, kind: output, shape index: {}]
  %s23 = sld [smem:[#allocation0]]
  $region269: #{tpu_custom_call.1} parent=0
    _
  %s25 = ssub.s32 1, %s23
  %s26 = scalar_select 0, %s25, %s23
  $region1: #{tpu_custom_call.1} parent=0
    #allocation25 [shape = 'u8[2048]{0}', space=vmem, size = 0x800, scoped, tag = 'input window, operand 1, single buffered']
    #allocation26 [shape = 's32[2]{0}', space=sflag, size = 0x8, scoped, tag = 'scoped memory for tpu_custom_call.1']
    #allocation27 [shape = 's32[2]{0}', space=sflag, size = 0x8, scoped, tag = 'scoped memory for tpu_custom_call.1']
    #allocation28 [shape = 'u8[512]{0}', space=vmem, size = 0x400, scoped, tag = 'input window, operand 2, single buffered']
    #allocation29 [shape = 's32[1]{0}', space=sflag, size = 0x4, scoped, tag = 'scoped memory for tpu_custom_call.1']
    #allocation30 [shape = 'u8[512]{0}', space=vmem, size = 0x400, scoped, tag = 'input window, operand 3, single buffered']
    #allocation31 [shape = 'u8[16384]{0}', space=vmem, size = 0x4000, scoped, tag = 'input window, operand 4, single buffered']
    #allocation32 [shape = 's32[1]{0}', space=sflag, size = 0x4, scoped, tag = 'scoped memory for tpu_custom_call.1']
    #allocation33 [shape = 'u8[512]{0}', space=vmem, size = 0x400, scoped, tag = 'input window, operand 5, single buffered']
    #allocation34 [shape = 'u8[512]{0}', space=vmem, size = 0x400, scoped, tag = 'input window, operand 6, single buffered']
    #allocation35 [shape = 's32[1]{0}', space=sflag, size = 0x4, scoped, tag = 'scoped memory for tpu_custom_call.1']
    #allocation36 [shape = 'u8[32768]{0}', space=vmem, size = 0x8000, scoped, tag = 'input window, operand 7, single buffered']
    #allocation37 [shape = 'u8[512]{0}', space=vmem, size = 0x400, scoped, tag = 'input window, operand 8, single buffered']
    #allocation38 [shape = 's32[1]{0}', space=sflag, size = 0x4, scoped, tag = 'scoped memory for tpu_custom_call.1']
    #allocation39 [shape = 'u8[512]{0}', space=vmem, size = 0x400, scoped, tag = 'input window, operand 9, single buffered']
    #allocation40 [shape = 'u8[65536]{0}', space=vmem, size = 0x10000, scoped, tag = 'input window, operand 10, single buffered']
    #allocation41 [shape = 's32[1]{0}', space=sflag, size = 0x4, scoped, tag = 'scoped memory for tpu_custom_call.1']
    #allocation42 [shape = 'u8[1024]{0}', space=vmem, size = 0x400, scoped, tag = 'input window, operand 11, single buffered']
    #allocation43 [shape = 'u8[1024]{0}', space=vmem, size = 0x400, scoped, tag = 'input window, operand 12, single buffered']
    #allocation44 [shape = 's32[1]{0}', space=sflag, size = 0x4, scoped, tag = 'scoped memory for tpu_custom_call.1']
    #allocation45 [shape = 'u8[65536]{0}', space=vmem, size = 0x10000, scoped, tag = 'input window, operand 13, single buffered']
    #allocation46 [shape = 'u8[512]{0}', space=vmem, size = 0x400, scoped, tag = 'input window, operand 14, single buffered']
    #allocation47 [shape = 's32[1]{0}', space=sflag, size = 0x4, scoped, tag = 'scoped memory for tpu_custom_call.1']
    #allocation48 [shape = 'u8[512]{0}', space=vmem, size = 0x400, scoped, tag = 'input window, operand 15, single buffered']
    #allocation49 [shape = 'u8[65536]{0}', space=vmem, size = 0x10000, scoped, tag = 'input window, operand 16, single buffered']
    #allocation50 [shape = 's32[1]{0}', space=sflag, size = 0x4, scoped, tag = 'scoped memory for tpu_custom_call.1']
    #allocation51 [shape = 'u8[1024]{0}', space=vmem, size = 0x400, scoped, tag = 'input window, operand 17, single buffered']
    #allocation52 [shape = 'u8[131072]{0}', space=vmem, size = 0x20000, scoped, tag = 'input window, operand 18, single buffered']
    #allocation53 [shape = 's32[1]{0}', space=sflag, size = 0x4, scoped, tag = 'scoped memory for tpu_custom_call.1']
    #allocation54 [shape = 'u8[1024]{0}', space=vmem, size = 0x400, scoped, tag = 'input window, operand 19, single buffered']
    #allocation55 [shape = 'u8[12288]{0}', space=vmem, size = 0x3000, scoped, tag = 'input window, operand 21, single buffered']
    #allocation56 [shape = 's32[1]{0}', space=sflag, size = 0x4, scoped, tag = 'scoped memory for tpu_custom_call.1']
    #allocation57 [shape = 'u8[24576]{0}', space=vmem, size = 0x6000, scoped, tag = 'output window, operand 0, single buffered']
    %27 = vsyncpa [#allocation26], 0
    %28 = vsyncpa [#allocation29], 0
    %29 = vsyncpa [#allocation32], 0
    %30 = vsyncpa [#allocation35], 0
    %31 = vsyncpa [#allocation38], 0
    %32 = vsyncpa [#allocation41], 0
    %33 = vsyncpa [#allocation44], 0
    %34 = vsyncpa [#allocation47], 0
    %35 = vsyncpa [#allocation50], 0
    %36 = vsyncpa [#allocation53], 0
    %37 = vsyncpa [#allocation56], 0
    %38 = vsyncpa [#allocation27], 0
    loop: start=0, step=1, limit=8
    $region2: #{tpu_custom_call.1} parent=1 // loop_pre_header
      _
    $region3: #{tpu_custom_call.1} parent=1 // loop_header
      %s40 = sphi 0, %s44
      %p41 = scmp.ge.s32.totalorder %s40, 8
      %s47 = sphi 0, %s59
      %s48 = sphi 0, %s55
      %s49 = sphi 0, %s47
      %s50 = sphi 0, %s48
      %s51 = sphi 0, %s49
      %s52 = sphi 0, %s50
      %s62 = sphi 0, %s64
      %s65 = sphi 0, %s62
      %s66 = sphi 0, %s65
      %s82 = sphi 0, %s66
      %s86 = sphi 0, %s86
      %s88 = sphi 0, %s86
      %s89 = sphi 0, %s88
      %s103 = sphi 0, %s89
      %s107 = sphi 0, %s107
      %s109 = sphi 0, %s107
      %s110 = sphi 0, %s109
      %s124 = sphi 0, %s110
      %s128 = sphi 0, %s128
      %s130 = sphi 0, %s128
      %s131 = sphi 0, %s130
      %s145 = sphi 0, %s131
      %s149 = sphi 0, %s149
      %s151 = sphi 0, %s149
      %s152 = sphi 0, %s151
      %s166 = sphi 0, %s152
      %s170 = sphi 0, %s170
      %s172 = sphi 0, %s170
      %s173 = sphi 0, %s172
      %s187 = sphi 0, %s173
      %s191 = sphi 0, %s191
      %s193 = sphi 0, %s191
      %s194 = sphi 0, %s193
      %s208 = sphi 0, %s194
      %s212 = sphi 0, %s212
      %s214 = sphi 0, %s212
      %s215 = sphi 0, %s214
      %s229 = sphi 0, %s215
      %s233 = sphi 0, %s233
      %s235 = sphi 0, %s233
      %s236 = sphi 0, %s235
      %s250 = sphi 0, %s236
      %s254 = sphi 0, %s254
      %s256 = sphi 0, %s254
      %s257 = sphi 0, %s256
      %s271 = sphi 0, %s257
      %s275 = sphi 0, %s275
      %s277 = sphi 0, %s275
      %s278 = sphi 0, %s277
      %s292 = sphi 0, %s278
      %s296 = sphi 0, %s296
      %s298 = sphi 0, %s296
      %s299 = sphi 0, %s298
      %s313 = sphi 0, %s299
      %s317 = sphi 0, %s317
      %s319 = sphi 0, %s317
      %s320 = sphi 0, %s319
      %s334 = sphi 0, %s320
      %s338 = sphi 0, %s338
      %s340 = sphi 0, %s338
      %s341 = sphi 0, %s340
      %s355 = sphi 0, %s341
      %s359 = sphi 0, %s359
      %s361 = sphi 0, %s359
      %s362 = sphi 0, %s361
      %s376 = sphi 0, %s362
      %s380 = sphi 0, %s380
      %s382 = sphi 0, %s380
      %s383 = sphi 0, %s382
      %s397 = sphi 0, %s383
      %s401 = sphi 0, %s401
      %s403 = sphi 0, %s401
      %s404 = sphi 0, %s403
      %s418 = sphi 0, %s404
      %s422 = sphi 0, %s422
      %s424 = sphi 0, %s422
      %s425 = sphi 0, %s424
      %s439 = sphi 0, %s425
      %s443 = sphi 0, %s443
      %s445 = sphi 0, %s443
      %s446 = sphi 0, %s445
      %s460 = sphi 0, %s446
      %s464 = sphi 0, %s464
      %s466 = sphi 0, %s464
      %s467 = sphi 0, %s466
      %s481 = sphi 0, %s467
      %s485 = sphi 0, %s485
      %s487 = sphi 0, %s485
      %s488 = sphi 0, %s487
      %s502 = sphi 0, %s488
      %s506 = sphi 0, %s506
      %s508 = sphi 0, %s506
      %s509 = sphi 0, %s508
      %s523 = sphi 0, %s509
    $region4: #{tpu_custom_call.1} parent=1 // loop_header_branch
      %43 = sbr.rel (%p41) target = $region8
    $region5: #{tpu_custom_call.1} parent=1 // loop_body
      %s45 = ssub.s32 %s40, 1
      %s46 = ssub.s32 %s40, 2
      %s53 = sadd.s32 1, %s48
      %p54 = scmp.ge.s32.totalorder %s53, 1
      %s55 = scalar_select %p54, 0, %s53
      %s56 = sadd.s32 1, %s47
      %s57 = scalar_select %p54, %s56, %s47
      %p58 = scmp.ge.s32.totalorder %s57, 6
      %s59 = scalar_select %p58, 0, %s57
      %s60 = ssub.s32 %s48, %s55
      %p61 = scmp.eq.s32.totalorder %s60, 0
      %s63 = sadd.s32 %s62, 1
      %s64 = scalar_select %p61, %s62, %s63
      %p67 = pneg %p61
      %p68 = scmp.eq.s32.totalorder %s40, 5
      %p69 = por %p67, %p68
      %p70 = scmp.ne.s32.totalorder %s62, %s65
      %p71 = scmp.eq.s32.totalorder %s40, 0
      %p72 = por %p70, %p71
      %p73 = scmp.ne.s32.totalorder %s62, %s65
      %p74 = scmp.eq.s32.totalorder %s45, 5
      %p75 = por %p73, %p74
      %p76 = scmp.ne.s32.totalorder %s65, %s66
      %p77 = scmp.eq.s32.totalorder %s45, 0
      %p78 = por %p76, %p77
      %p79 = scmp.ne.s32.totalorder %s65, %s66
      %p80 = scmp.eq.s32.totalorder %s46, 5
      %p81 = por %p79, %p80
      %p83 = scmp.ne.s32.totalorder %s66, %s82
      %p84 = scmp.eq.s32.totalorder %s46, 0
      %p85 = por %p83, %p84
      %s87 = sadd.s32 %s86, 1
      %p90 = scmp.eq.s32.totalorder %s40, 5
      %p91 = scmp.ne.s32.totalorder %s86, %s88
      %p92 = scmp.eq.s32.totalorder %s40, 0
      %p93 = por %p91, %p92
      %p94 = scmp.ne.s32.totalorder %s86, %s88
      %p95 = scmp.eq.s32.totalorder %s45, 5
      %p96 = por %p94, %p95
      %p97 = scmp.ne.s32.totalorder %s88, %s89
      %p98 = scmp.eq.s32.totalorder %s45, 0
      %p99 = por %p97, %p98
      %p100 = scmp.ne.s32.totalorder %s88, %s89
      %p101 = scmp.eq.s32.totalorder %s46, 5
      %p102 = por %p100, %p101
      %p104 = scmp.ne.s32.totalorder %s89, %s103
      %p105 = scmp.eq.s32.totalorder %s46, 0
      %p106 = por %p104, %p105
      %s108 = sadd.s32 %s107, 1
      %p111 = scmp.eq.s32.totalorder %s40, 5
      %p112 = scmp.ne.s32.totalorder %s107, %s109
      %p113 = scmp.eq.s32.totalorder %s40, 0
      %p114 = por %p112, %p113
      %p115 = scmp.ne.s32.totalorder %s107, %s109
      %p116 = scmp.eq.s32.totalorder %s45, 5
      %p117 = por %p115, %p116
      %p118 = scmp.ne.s32.totalorder %s109, %s110
      %p119 = scmp.eq.s32.totalorder %s45, 0
      %p120 = por %p118, %p119
      %p121 = scmp.ne.s32.totalorder %s109, %s110
      %p122 = scmp.eq.s32.totalorder %s46, 5
      %p123 = por %p121, %p122
      %p125 = scmp.ne.s32.totalorder %s110, %s124
      %p126 = scmp.eq.s32.totalorder %s46, 0
      %p127 = por %p125, %p126
      %s129 = sadd.s32 %s128, 1
      %p132 = scmp.eq.s32.totalorder %s40, 5
      %p133 = scmp.ne.s32.totalorder %s128, %s130
      %p134 = scmp.eq.s32.totalorder %s40, 0
      %p135 = por %p133, %p134
      %p136 = scmp.ne.s32.totalorder %s128, %s130
      %p137 = scmp.eq.s32.totalorder %s45, 5
      %p138 = por %p136, %p137
      %p139 = scmp.ne.s32.totalorder %s130, %s131
      %p140 = scmp.eq.s32.totalorder %s45, 0
      %p141 = por %p139, %p140
      %p142 = scmp.ne.s32.totalorder %s130, %s131
      %p143 = scmp.eq.s32.totalorder %s46, 5
      %p144 = por %p142, %p143
      %p146 = scmp.ne.s32.totalorder %s131, %s145
      %p147 = scmp.eq.s32.totalorder %s46, 0
      %p148 = por %p146, %p147
      %s150 = sadd.s32 %s149, 1
      %p153 = scmp.eq.s32.totalorder %s40, 5
      %p154 = scmp.ne.s32.totalorder %s149, %s151
      %p155 = scmp.eq.s32.totalorder %s40, 0
      %p156 = por %p154, %p155
      %p157 = scmp.ne.s32.totalorder %s149, %s151
      %p158 = scmp.eq.s32.totalorder %s45, 5
      %p159 = por %p157, %p158
      %p160 = scmp.ne.s32.totalorder %s151, %s152
      %p161 = scmp.eq.s32.totalorder %s45, 0
      %p162 = por %p160, %p161
      %p163 = scmp.ne.s32.totalorder %s151, %s152
      %p164 = scmp.eq.s32.totalorder %s46, 5
      %p165 = por %p163, %p164
      %p167 = scmp.ne.s32.totalorder %s152, %s166
      %p168 = scmp.eq.s32.totalorder %s46, 0
      %p169 = por %p167, %p168
      %s171 = sadd.s32 %s170, 1
      %p174 = scmp.eq.s32.totalorder %s40, 5
      %p175 = scmp.ne.s32.totalorder %s170, %s172
      %p176 = scmp.eq.s32.totalorder %s40, 0
      %p177 = por %p175, %p176
      %p178 = scmp.ne.s32.totalorder %s170, %s172
      %p179 = scmp.eq.s32.totalorder %s45, 5
      %p180 = por %p178, %p179
      %p181 = scmp.ne.s32.totalorder %s172, %s173
      %p182 = scmp.eq.s32.totalorder %s45, 0
      %p183 = por %p181, %p182
      %p184 = scmp.ne.s32.totalorder %s172, %s173
      %p185 = scmp.eq.s32.totalorder %s46, 5
      %p186 = por %p184, %p185
      %p188 = scmp.ne.s32.totalorder %s173, %s187
      %p189 = scmp.eq.s32.totalorder %s46, 0
      %p190 = por %p188, %p189
      %s192 = sadd.s32 %s191, 1
      %p195 = scmp.eq.s32.totalorder %s40, 5
      %p196 = scmp.ne.s32.totalorder %s191, %s193
      %p197 = scmp.eq.s32.totalorder %s40, 0
      %p198 = por %p196, %p197
      %p199 = scmp.ne.s32.totalorder %s191, %s193
      %p200 = scmp.eq.s32.totalorder %s45, 5
      %p201 = por %p199, %p200
      %p202 = scmp.ne.s32.totalorder %s193, %s194
      %p203 = scmp.eq.s32.totalorder %s45, 0
      %p204 = por %p202, %p203
      %p205 = scmp.ne.s32.totalorder %s193, %s194
      %p206 = scmp.eq.s32.totalorder %s46, 5
      %p207 = por %p205, %p206
      %p209 = scmp.ne.s32.totalorder %s194, %s208
      %p210 = scmp.eq.s32.totalorder %s46, 0
      %p211 = por %p209, %p210
      %s213 = sadd.s32 %s212, 1
      %p216 = scmp.eq.s32.totalorder %s40, 5
      %p217 = scmp.ne.s32.totalorder %s212, %s214
      %p218 = scmp.eq.s32.totalorder %s40, 0
      %p219 = por %p217, %p218
      %p220 = scmp.ne.s32.totalorder %s212, %s214
      %p221 = scmp.eq.s32.totalorder %s45, 5
      %p222 = por %p220, %p221
      %p223 = scmp.ne.s32.totalorder %s214, %s215
      %p224 = scmp.eq.s32.totalorder %s45, 0
      %p225 = por %p223, %p224
      %p226 = scmp.ne.s32.totalorder %s214, %s215
      %p227 = scmp.eq.s32.totalorder %s46, 5
      %p228 = por %p226, %p227
      %p230 = scmp.ne.s32.totalorder %s215, %s229
      %p231 = scmp.eq.s32.totalorder %s46, 0
      %p232 = por %p230, %p231
      %s234 = sadd.s32 %s233, 1
      %p237 = scmp.eq.s32.totalorder %s40, 5
      %p238 = scmp.ne.s32.totalorder %s233, %s235
      %p239 = scmp.eq.s32.totalorder %s40, 0
      %p240 = por %p238, %p239
      %p241 = scmp.ne.s32.totalorder %s233, %s235
      %p242 = scmp.eq.s32.totalorder %s45, 5
      %p243 = por %p241, %p242
      %p244 = scmp.ne.s32.totalorder %s235, %s236
      %p245 = scmp.eq.s32.totalorder %s45, 0
      %p246 = por %p244, %p245
      %p247 = scmp.ne.s32.totalorder %s235, %s236
      %p248 = scmp.eq.s32.totalorder %s46, 5
      %p249 = por %p247, %p248
      %p251 = scmp.ne.s32.totalorder %s236, %s250
      %p252 = scmp.eq.s32.totalorder %s46, 0
      %p253 = por %p251, %p252
      %s255 = sadd.s32 %s254, 1
      %p258 = scmp.eq.s32.totalorder %s40, 5
      %p259 = scmp.ne.s32.totalorder %s254, %s256
      %p260 = scmp.eq.s32.totalorder %s40, 0
      %p261 = por %p259, %p260
      %p262 = scmp.ne.s32.totalorder %s254, %s256
      %p263 = scmp.eq.s32.totalorder %s45, 5
      %p264 = por %p262, %p263
      %p265 = scmp.ne.s32.totalorder %s256, %s257
      %p266 = scmp.eq.s32.totalorder %s45, 0
      %p267 = por %p265, %p266
      %p268 = scmp.ne.s32.totalorder %s256, %s257
      %p269 = scmp.eq.s32.totalorder %s46, 5
      %p270 = por %p268, %p269
      %p272 = scmp.ne.s32.totalorder %s257, %s271
      %p273 = scmp.eq.s32.totalorder %s46, 0
      %p274 = por %p272, %p273
      %s276 = sadd.s32 %s275, 1
      %p279 = scmp.eq.s32.totalorder %s40, 5
      %p280 = scmp.ne.s32.totalorder %s275, %s277
      %p281 = scmp.eq.s32.totalorder %s40, 0
      %p282 = por %p280, %p281
      %p283 = scmp.ne.s32.totalorder %s275, %s277
      %p284 = scmp.eq.s32.totalorder %s45, 5
      %p285 = por %p283, %p284
      %p286 = scmp.ne.s32.totalorder %s277, %s278
      %p287 = scmp.eq.s32.totalorder %s45, 0
      %p288 = por %p286, %p287
      %p289 = scmp.ne.s32.totalorder %s277, %s278
      %p290 = scmp.eq.s32.totalorder %s46, 5
      %p291 = por %p289, %p290
      %p293 = scmp.ne.s32.totalorder %s278, %s292
      %p294 = scmp.eq.s32.totalorder %s46, 0
      %p295 = por %p293, %p294
      %s297 = sadd.s32 %s296, 1
      %p300 = scmp.eq.s32.totalorder %s40, 5
      %p301 = scmp.ne.s32.totalorder %s296, %s298
      %p302 = scmp.eq.s32.totalorder %s40, 0
      %p303 = por %p301, %p302
      %p304 = scmp.ne.s32.totalorder %s296, %s298
      %p305 = scmp.eq.s32.totalorder %s45, 5
      %p306 = por %p304, %p305
      %p307 = scmp.ne.s32.totalorder %s298, %s299
      %p308 = scmp.eq.s32.totalorder %s45, 0
      %p309 = por %p307, %p308
      %p310 = scmp.ne.s32.totalorder %s298, %s299
      %p311 = scmp.eq.s32.totalorder %s46, 5
      %p312 = por %p310, %p311
      %p314 = scmp.ne.s32.totalorder %s299, %s313
      %p315 = scmp.eq.s32.totalorder %s46, 0
      %p316 = por %p314, %p315
      %s318 = sadd.s32 %s317, 1
      %p321 = scmp.eq.s32.totalorder %s40, 5
      %p322 = scmp.ne.s32.totalorder %s317, %s319
      %p323 = scmp.eq.s32.totalorder %s40, 0
      %p324 = por %p322, %p323
      %p325 = scmp.ne.s32.totalorder %s317, %s319
      %p326 = scmp.eq.s32.totalorder %s45, 5
      %p327 = por %p325, %p326
      %p328 = scmp.ne.s32.totalorder %s319, %s320
      %p329 = scmp.eq.s32.totalorder %s45, 0
      %p330 = por %p328, %p329
      %p331 = scmp.ne.s32.totalorder %s319, %s320
      %p332 = scmp.eq.s32.totalorder %s46, 5
      %p333 = por %p331, %p332
      %p335 = scmp.ne.s32.totalorder %s320, %s334
      %p336 = scmp.eq.s32.totalorder %s46, 0
      %p337 = por %p335, %p336
      %s339 = sadd.s32 %s338, 1
      %p342 = scmp.eq.s32.totalorder %s40, 5
      %p343 = scmp.ne.s32.totalorder %s338, %s340
      %p344 = scmp.eq.s32.totalorder %s40, 0
      %p345 = por %p343, %p344
      %p346 = scmp.ne.s32.totalorder %s338, %s340
      %p347 = scmp.eq.s32.totalorder %s45, 5
      %p348 = por %p346, %p347
      %p349 = scmp.ne.s32.totalorder %s340, %s341
      %p350 = scmp.eq.s32.totalorder %s45, 0
      %p351 = por %p349, %p350
      %p352 = scmp.ne.s32.totalorder %s340, %s341
      %p353 = scmp.eq.s32.totalorder %s46, 5
      %p354 = por %p352, %p353
      %p356 = scmp.ne.s32.totalorder %s341, %s355
      %p357 = scmp.eq.s32.totalorder %s46, 0
      %p358 = por %p356, %p357
      %s360 = sadd.s32 %s359, 1
      %p363 = scmp.eq.s32.totalorder %s40, 5
      %p364 = scmp.ne.s32.totalorder %s359, %s361
      %p365 = scmp.eq.s32.totalorder %s40, 0
      %p366 = por %p364, %p365
      %p367 = scmp.ne.s32.totalorder %s359, %s361
      %p368 = scmp.eq.s32.totalorder %s45, 5
      %p369 = por %p367, %p368
      %p370 = scmp.ne.s32.totalorder %s361, %s362
      %p371 = scmp.eq.s32.totalorder %s45, 0
      %p372 = por %p370, %p371
      %p373 = scmp.ne.s32.totalorder %s361, %s362
      %p374 = scmp.eq.s32.totalorder %s46, 5
      %p375 = por %p373, %p374
      %p377 = scmp.ne.s32.totalorder %s362, %s376
      %p378 = scmp.eq.s32.totalorder %s46, 0
      %p379 = por %p377, %p378
      %s381 = sadd.s32 %s380, 1
      %p384 = scmp.eq.s32.totalorder %s40, 5
      %p385 = scmp.ne.s32.totalorder %s380, %s382
      %p386 = scmp.eq.s32.totalorder %s40, 0
      %p387 = por %p385, %p386
      %p388 = scmp.ne.s32.totalorder %s380, %s382
      %p389 = scmp.eq.s32.totalorder %s45, 5
      %p390 = por %p388, %p389
      %p391 = scmp.ne.s32.totalorder %s382, %s383
      %p392 = scmp.eq.s32.totalorder %s45, 0
      %p393 = por %p391, %p392
      %p394 = scmp.ne.s32.totalorder %s382, %s383
      %p395 = scmp.eq.s32.totalorder %s46, 5
      %p396 = por %p394, %p395
      %p398 = scmp.ne.s32.totalorder %s383, %s397
      %p399 = scmp.eq.s32.totalorder %s46, 0
      %p400 = por %p398, %p399
      %s402 = sadd.s32 %s401, 1
      %p405 = scmp.eq.s32.totalorder %s40, 5
      %p406 = scmp.ne.s32.totalorder %s401, %s403
      %p407 = scmp.eq.s32.totalorder %s40, 0
      %p408 = por %p406, %p407
      %p409 = scmp.ne.s32.totalorder %s401, %s403
      %p410 = scmp.eq.s32.totalorder %s45, 5
      %p411 = por %p409, %p410
      %p412 = scmp.ne.s32.totalorder %s403, %s404
      %p413 = scmp.eq.s32.totalorder %s45, 0
      %p414 = por %p412, %p413
      %p415 = scmp.ne.s32.totalorder %s403, %s404
      %p416 = scmp.eq.s32.totalorder %s46, 5
      %p417 = por %p415, %p416
      %p419 = scmp.ne.s32.totalorder %s404, %s418
      %p420 = scmp.eq.s32.totalorder %s46, 0
      %p421 = por %p419, %p420
      %s423 = sadd.s32 %s422, 1
      %p426 = scmp.eq.s32.totalorder %s40, 5
      %p427 = scmp.ne.s32.totalorder %s422, %s424
      %p428 = scmp.eq.s32.totalorder %s40, 0
      %p429 = por %p427, %p428
      %p430 = scmp.ne.s32.totalorder %s422, %s424
      %p431 = scmp.eq.s32.totalorder %s45, 5
      %p432 = por %p430, %p431
      %p433 = scmp.ne.s32.totalorder %s424, %s425
      %p434 = scmp.eq.s32.totalorder %s45, 0
      %p435 = por %p433, %p434
      %p436 = scmp.ne.s32.totalorder %s424, %s425
      %p437 = scmp.eq.s32.totalorder %s46, 5
      %p438 = por %p436, %p437
      %p440 = scmp.ne.s32.totalorder %s425, %s439
      %p441 = scmp.eq.s32.totalorder %s46, 0
      %p442 = por %p440, %p441
      %s444 = sadd.s32 %s443, 1
      %p447 = scmp.eq.s32.totalorder %s40, 5
      %p448 = scmp.ne.s32.totalorder %s443, %s445
      %p449 = scmp.eq.s32.totalorder %s40, 0
      %p450 = por %p448, %p449
      %p451 = scmp.ne.s32.totalorder %s443, %s445
      %p452 = scmp.eq.s32.totalorder %s45, 5
      %p453 = por %p451, %p452
      %p454 = scmp.ne.s32.totalorder %s445, %s446
      %p455 = scmp.eq.s32.totalorder %s45, 0
      %p456 = por %p454, %p455
      %p457 = scmp.ne.s32.totalorder %s445, %s446
      %p458 = scmp.eq.s32.totalorder %s46, 5
      %p459 = por %p457, %p458
      %p461 = scmp.ne.s32.totalorder %s446, %s460
      %p462 = scmp.eq.s32.totalorder %s46, 0
      %p463 = por %p461, %p462
      %s465 = sadd.s32 %s464, 1
      %p468 = scmp.eq.s32.totalorder %s40, 5
      %p469 = scmp.ne.s32.totalorder %s464, %s466
      %p470 = scmp.eq.s32.totalorder %s40, 0
      %p471 = por %p469, %p470
      %p472 = scmp.ne.s32.totalorder %s464, %s466
      %p473 = scmp.eq.s32.totalorder %s45, 5
      %p474 = por %p472, %p473
      %p475 = scmp.ne.s32.totalorder %s466, %s467
      %p476 = scmp.eq.s32.totalorder %s45, 0
      %p477 = por %p475, %p476
      %p478 = scmp.ne.s32.totalorder %s466, %s467
      %p479 = scmp.eq.s32.totalorder %s46, 5
      %p480 = por %p478, %p479
      %p482 = scmp.ne.s32.totalorder %s467, %s481
      %p483 = scmp.eq.s32.totalorder %s46, 0
      %p484 = por %p482, %p483
      %s486 = sadd.s32 %s485, 1
      %p489 = scmp.eq.s32.totalorder %s40, 5
      %p490 = scmp.ne.s32.totalorder %s485, %s487
      %p491 = scmp.eq.s32.totalorder %s40, 0
      %p492 = por %p490, %p491
      %p493 = scmp.ne.s32.totalorder %s485, %s487
      %p494 = scmp.eq.s32.totalorder %s45, 5
      %p495 = por %p493, %p494
      %p496 = scmp.ne.s32.totalorder %s487, %s488
      %p497 = scmp.eq.s32.totalorder %s45, 0
      %p498 = por %p496, %p497
      %p499 = scmp.ne.s32.totalorder %s487, %s488
      %p500 = scmp.eq.s32.totalorder %s46, 5
      %p501 = por %p499, %p500
      %p503 = scmp.ne.s32.totalorder %s488, %s502
      %p504 = scmp.eq.s32.totalorder %s46, 0
      %p505 = por %p503, %p504
      %s507 = sadd.s32 %s506, 1
      %p510 = scmp.eq.s32.totalorder %s40, 5
      %p511 = scmp.ne.s32.totalorder %s506, %s508
      %p512 = scmp.eq.s32.totalorder %s40, 0
      %p513 = por %p511, %p512
      %p514 = scmp.ne.s32.totalorder %s506, %s508
      %p515 = scmp.eq.s32.totalorder %s45, 5
      %p516 = por %p514, %p515
      %p517 = scmp.ne.s32.totalorder %s508, %s509
      %p518 = scmp.eq.s32.totalorder %s45, 0
      %p519 = por %p517, %p518
      %p520 = scmp.ne.s32.totalorder %s508, %s509
      %p521 = scmp.eq.s32.totalorder %s46, 5
      %p522 = por %p520, %p521
      %p524 = scmp.ne.s32.totalorder %s509, %s523
      %p525 = scmp.eq.s32.totalorder %s46, 0
      %p526 = por %p524, %p525
      %p527 = scmp.le.s32.totalorder 1, %s40
      %p528 = scmp.lt.s32.totalorder %s40, 7
      %p529 = pnand %p527, %p528
      %p530 = pneg %p529
      // Predicated region
      $region9: #{tpu_custom_call.1} parent=5 // pred_check
        _
      $region10: #{tpu_custom_call.1} parent=5 // pred_check_branch
        %532 = sbr.rel (%p529) target = $region12
      $region11: #{tpu_custom_call.1} parent=5 // pred_region
        %s533 = ssub.s32 %s40, 1
        // Predicated region
        $region13: #{tpu_custom_call.1} parent=11 // pred_check
          %p534 = pneg %p78
        $region14: #{tpu_custom_call.1} parent=11 // pred_check_branch
          %536 = sbr.rel (%p534) target = $region16
        $region15: #{tpu_custom_call.1} parent=11 // pred_region
          %s537 = smul.u32 4, %s50
          %p538 = scmp.lt.s32.totalorder %s537, 3
          %s539 = scalar_select %p538, %s537, 3
          %s540 = smul.addr %s539, 4
          %s541 = scalar_lea.vmem %s0, %s540
          %s542 = smul.u32 4, %s50
        $region16: #{tpu_custom_call.1} parent=11 // pred_fallthru
          _
        // Predicated region
        $region17: #{tpu_custom_call.1} parent=11 // pred_check
          %p543 = pneg %p99
        $region18: #{tpu_custom_call.1} parent=11 // pred_check_branch
          %545 = sbr.rel (%p543) target = $region20
        $region19: #{tpu_custom_call.1} parent=11 // pred_region
          %s547 = ssub.s32 64, 64
          %548 = vsyncadd [#allocation26], %s547
          %s550 = sshll.u32 [#allocation25], 4
          %s551 = int_to_ptr.vmem [resolvable:$true] %s550
          %553 = dma.hbm_to_vmem [thread:$0]  %s1, 64, %s551, [#allocation26]
        $region20: #{tpu_custom_call.1} parent=11 // pred_fallthru
          _
        // Predicated region
        $region21: #{tpu_custom_call.1} parent=11 // pred_check
          %p554 = pneg %p120
        $region22: #{tpu_custom_call.1} parent=11 // pred_check_branch
          %556 = sbr.rel (%p554) target = $region24
        $region23: #{tpu_custom_call.1} parent=11 // pred_region
          %s558 = ssub.s32 16, 16
          %559 = vsyncadd [#allocation29], %s558
          %s561 = sshll.u32 [#allocation28], 4
          %s562 = int_to_ptr.vmem [resolvable:$true] %s561
          %564 = dma.hbm_to_vmem [thread:$0]  %s2, 16, %s562, [#allocation29]
        $region24: #{tpu_custom_call.1} parent=11 // pred_fallthru
          _
        // Predicated region
        $region25: #{tpu_custom_call.1} parent=11 // pred_check
          %p565 = pneg %p141
        $region26: #{tpu_custom_call.1} parent=11 // pred_check_branch
          %567 = sbr.rel (%p565) target = $region28
        $region27: #{tpu_custom_call.1} parent=11 // pred_region
          %s569 = ssub.s32 16, 16
          %570 = vsyncadd [#allocation29], %s569
          %s572 = sshll.u32 [#allocation30], 4
          %s573 = int_to_ptr.vmem [resolvable:$true] %s572
          %575 = dma.hbm_to_vmem [thread:$0]  %s3, 16, %s573, [#allocation29]
        $region28: #{tpu_custom_call.1} parent=11 // pred_fallthru
          _
        // Predicated region
        $region29: #{tpu_custom_call.1} parent=11 // pred_check
          %p576 = pneg %p162
        $region30: #{tpu_custom_call.1} parent=11 // pred_check_branch
          %578 = sbr.rel (%p576) target = $region32
        $region31: #{tpu_custom_call.1} parent=11 // pred_region
          %s580 = ssub.s32 512, 512
          %581 = vsyncadd [#allocation32], %s580
          %s582 = sshll.u32 [#allocation31], 4
          %s583 = int_to_ptr.vmem [resolvable:$true] %s582
          %588 = dma.hbm_to_vmem [thread:$0]  %s4, 512, %s583, [#allocation32], 64, 64, 4
        $region32: #{tpu_custom_call.1} parent=11 // pred_fallthru
          _
        // Predicated region
        $region33: #{tpu_custom_call.1} parent=11 // pred_check
          %p589 = pneg %p183
        $region34: #{tpu_custom_call.1} parent=11 // pred_check_branch
          %591 = sbr.rel (%p589) target = $region36
        $region35: #{tpu_custom_call.1} parent=11 // pred_region
          %s593 = ssub.s32 16, 16
          %594 = vsyncadd [#allocation32], %s593
          %s596 = sshll.u32 [#allocation33], 4
          %s597 = int_to_ptr.vmem [resolvable:$true] %s596
          %599 = dma.hbm_to_vmem [thread:$0]  %s5, 16, %s597, [#allocation32]
        $region36: #{tpu_custom_call.1} parent=11 // pred_fallthru
          _
        // Predicated region
        $region37: #{tpu_custom_call.1} parent=11 // pred_check
          %p600 = pneg %p204
        $region38: #{tpu_custom_call.1} parent=11 // pred_check_branch
          %602 = sbr.rel (%p600) target = $region40
        $region39: #{tpu_custom_call.1} parent=11 // pred_region
          %s604 = ssub.s32 16, 16
          %605 = vsyncadd [#allocation35], %s604
          %s607 = sshll.u32 [#allocation34], 4
          %s608 = int_to_ptr.vmem [resolvable:$true] %s607
          %610 = dma.hbm_to_vmem [thread:$0]  %s6, 16, %s608, [#allocation35]
        $region40: #{tpu_custom_call.1} parent=11 // pred_fallthru
          _
        // Predicated region
        $region41: #{tpu_custom_call.1} parent=11 // pred_check
          %p611 = pneg %p225
        $region42: #{tpu_custom_call.1} parent=11 // pred_check_branch
          %613 = sbr.rel (%p611) target = $region44
        $region43: #{tpu_custom_call.1} parent=11 // pred_region
          %s615 = ssub.s32 1024, 1024
          %616 = vsyncadd [#allocation35], %s615
          %s617 = sshll.u32 [#allocation36], 4
          %s618 = int_to_ptr.vmem [resolvable:$true] %s617
          %623 = dma.hbm_to_vmem [thread:$0]  %s7, 1024, %s618, [#allocation35], 64, 64, 4
        $region44: #{tpu_custom_call.1} parent=11 // pred_fallthru
          _
        // Predicated region
        $region45: #{tpu_custom_call.1} parent=11 // pred_check
          %p624 = pneg %p246
        $region46: #{tpu_custom_call.1} parent=11 // pred_check_branch
          %626 = sbr.rel (%p624) target = $region48
        $region47: #{tpu_custom_call.1} parent=11 // pred_region
          %s628 = ssub.s32 16, 16
          %629 = vsyncadd [#allocation38], %s628
          %s631 = sshll.u32 [#allocation37], 4
          %s632 = int_to_ptr.vmem [resolvable:$true] %s631
          %634 = dma.hbm_to_vmem [thread:$0]  %s8, 16, %s632, [#allocation38]
        $region48: #{tpu_custom_call.1} parent=11 // pred_fallthru
          _
        // Predicated region
        $region49: #{tpu_custom_call.1} parent=11 // pred_check
          %p635 = pneg %p267
        $region50: #{tpu_custom_call.1} parent=11 // pred_check_branch
          %637 = sbr.rel (%p635) target = $region52
        $region51: #{tpu_custom_call.1} parent=11 // pred_region
          %s639 = ssub.s32 16, 16
          %640 = vsyncadd [#allocation38], %s639
          %s642 = sshll.u32 [#allocation39], 4
          %s643 = int_to_ptr.vmem [resolvable:$true] %s642
          %645 = dma.hbm_to_vmem [thread:$0]  %s9, 16, %s643, [#allocation38]
        $region52: #{tpu_custom_call.1} parent=11 // pred_fallthru
          _
        // Predicated region
        $region53: #{tpu_custom_call.1} parent=11 // pred_check
          %p646 = pneg %p288
        $region54: #{tpu_custom_call.1} parent=11 // pred_check_branch
          %648 = sbr.rel (%p646) target = $region56
        $region55: #{tpu_custom_call.1} parent=11 // pred_region
          %s650 = ssub.s32 2048, 2048
          %651 = vsyncadd [#allocation41], %s650
          %s652 = sshll.u32 [#allocation40], 4
          %s653 = int_to_ptr.vmem [resolvable:$true] %s652
          %658 = dma.hbm_to_vmem [thread:$0]  %s10, 2048, %s653, [#allocation41], 128, 128, 8
        $region56: #{tpu_custom_call.1} parent=11 // pred_fallthru
          _
        // Predicated region
        $region57: #{tpu_custom_call.1} parent=11 // pred_check
          %p659 = pneg %p309
        $region58: #{tpu_custom_call.1} parent=11 // pred_check_branch
          %661 = sbr.rel (%p659) target = $region60
        $region59: #{tpu_custom_call.1} parent=11 // pred_region
          %s663 = ssub.s32 32, 32
          %664 = vsyncadd [#allocation41], %s663
          %s666 = sshll.u32 [#allocation42], 4
          %s667 = int_to_ptr.vmem [resolvable:$true] %s666
          %669 = dma.hbm_to_vmem [thread:$0]  %s11, 32, %s667, [#allocation41]
        $region60: #{tpu_custom_call.1} parent=11 // pred_fallthru
          _
        // Predicated region
        $region61: #{tpu_custom_call.1} parent=11 // pred_check
          %p670 = pneg %p330
        $region62: #{tpu_custom_call.1} parent=11 // pred_check_branch
          %672 = sbr.rel (%p670) target = $region64
        $region63: #{tpu_custom_call.1} parent=11 // pred_region
          %s674 = ssub.s32 32, 32
          %675 = vsyncadd [#allocation44], %s674
          %s677 = sshll.u32 [#allocation43], 4
          %s678 = int_to_ptr.vmem [resolvable:$true] %s677
          %680 = dma.hbm_to_vmem [thread:$0]  %s12, 32, %s678, [#allocation44]
        $region64: #{tpu_custom_call.1} parent=11 // pred_fallthru
          _
        // Predicated region
        $region65: #{tpu_custom_call.1} parent=11 // pred_check
          %p681 = pneg %p351
        $region66: #{tpu_custom_call.1} parent=11 // pred_check_branch
          %683 = sbr.rel (%p681) target = $region68
        $region67: #{tpu_custom_call.1} parent=11 // pred_region
          %s685 = ssub.s32 2048, 2048
          %686 = vsyncadd [#allocation44], %s685
          %s687 = sshll.u32 [#allocation45], 4
          %s688 = int_to_ptr.vmem [resolvable:$true] %s687
          %693 = dma.hbm_to_vmem [thread:$0]  %s13, 2048, %s688, [#allocation44], 64, 64, 4
        $region68: #{tpu_custom_call.1} parent=11 // pred_fallthru
          _
        // Predicated region
        $region69: #{tpu_custom_call.1} parent=11 // pred_check
          %p694 = pneg %p372
        $region70: #{tpu_custom_call.1} parent=11 // pred_check_branch
          %696 = sbr.rel (%p694) target = $region72
        $region71: #{tpu_custom_call.1} parent=11 // pred_region
          %s698 = ssub.s32 16, 16
          %699 = vsyncadd [#allocation47], %s698
          %s701 = sshll.u32 [#allocation46], 4
          %s702 = int_to_ptr.vmem [resolvable:$true] %s701
          %704 = dma.hbm_to_vmem [thread:$0]  %s14, 16, %s702, [#allocation47]
        $region72: #{tpu_custom_call.1} parent=11 // pred_fallthru
          _
        // Predicated region
        $region73: #{tpu_custom_call.1} parent=11 // pred_check
          %p705 = pneg %p393
        $region74: #{tpu_custom_call.1} parent=11 // pred_check_branch
          %707 = sbr.rel (%p705) target = $region76
        $region75: #{tpu_custom_call.1} parent=11 // pred_region
          %s709 = ssub.s32 16, 16
          %710 = vsyncadd [#allocation47], %s709
          %s712 = sshll.u32 [#allocation48], 4
          %s713 = int_to_ptr.vmem [resolvable:$true] %s712
          %715 = dma.hbm_to_vmem [thread:$0]  %s15, 16, %s713, [#allocation47]
        $region76: #{tpu_custom_call.1} parent=11 // pred_fallthru
          _
        // Predicated region
        $region77: #{tpu_custom_call.1} parent=11 // pred_check
          %p716 = pneg %p414
        $region78: #{tpu_custom_call.1} parent=11 // pred_check_branch
          %718 = sbr.rel (%p716) target = $region80
        $region79: #{tpu_custom_call.1} parent=11 // pred_region
          %s720 = ssub.s32 2048, 2048
          %721 = vsyncadd [#allocation50], %s720
          %s722 = sshll.u32 [#allocation49], 4
          %s723 = int_to_ptr.vmem [resolvable:$true] %s722
          %728 = dma.hbm_to_vmem [thread:$0]  %s16, 2048, %s723, [#allocation50], 128, 128, 8
        $region80: #{tpu_custom_call.1} parent=11 // pred_fallthru
          _
        // Predicated region
        $region81: #{tpu_custom_call.1} parent=11 // pred_check
          %p729 = pneg %p435
        $region82: #{tpu_custom_call.1} parent=11 // pred_check_branch
          %731 = sbr.rel (%p729) target = $region84
        $region83: #{tpu_custom_call.1} parent=11 // pred_region
          %s733 = ssub.s32 32, 32
          %734 = vsyncadd [#allocation50], %s733
          %s736 = sshll.u32 [#allocation51], 4
          %s737 = int_to_ptr.vmem [resolvable:$true] %s736
          %739 = dma.hbm_to_vmem [thread:$0]  %s17, 32, %s737, [#allocation50]
        $region84: #{tpu_custom_call.1} parent=11 // pred_fallthru
          _
        // Predicated region
        $region85: #{tpu_custom_call.1} parent=11 // pred_check
          %p740 = pneg %p456
        $region86: #{tpu_custom_call.1} parent=11 // pred_check_branch
          %742 = sbr.rel (%p740) target = $region88
        $region87: #{tpu_custom_call.1} parent=11 // pred_region
          %s744 = ssub.s32 4096, 4096
          %745 = vsyncadd [#allocation53], %s744
          %s746 = sshll.u32 [#allocation52], 4
          %s747 = int_to_ptr.vmem [resolvable:$true] %s746
          %752 = dma.hbm_to_vmem [thread:$0]  %s18, 4096, %s747, [#allocation53], 128, 128, 8
        $region88: #{tpu_custom_call.1} parent=11 // pred_fallthru
          _
        // Predicated region
        $region89: #{tpu_custom_call.1} parent=11 // pred_check
          %p753 = pneg %p477
        $region90: #{tpu_custom_call.1} parent=11 // pred_check_branch
          %755 = sbr.rel (%p753) target = $region92
        $region91: #{tpu_custom_call.1} parent=11 // pred_region
          %s757 = ssub.s32 32, 32
          %758 = vsyncadd [#allocation53], %s757
          %s760 = sshll.u32 [#allocation54], 4
          %s761 = int_to_ptr.vmem [resolvable:$true] %s760
          %763 = dma.hbm_to_vmem [thread:$0]  %s19, 32, %s761, [#allocation53]
        $region92: #{tpu_custom_call.1} parent=11 // pred_fallthru
          _
        // Predicated region
        $region93: #{tpu_custom_call.1} parent=11 // pred_check
          %p764 = pneg %p498
        $region94: #{tpu_custom_call.1} parent=11 // pred_check_branch
          %766 = sbr.rel (%p764) target = $region96
        $region95: #{tpu_custom_call.1} parent=11 // pred_region
          %s768 = ssub.s32 384, 384
          %769 = vsyncadd [#allocation56], %s768
          %s771 = sshll.u32 [#allocation55], 4
          %s772 = int_to_ptr.vmem [resolvable:$true] %s771
          %774 = dma.hbm_to_vmem [thread:$0]  %s21, 384, %s772, [#allocation56]
        $region96: #{tpu_custom_call.1} parent=11 // pred_fallthru
          _
      $region12: #{tpu_custom_call.1} parent=5 // pred_fallthru
        _
      %p775 = scmp.lt.s32.totalorder %s40, 6
      // Predicated region
      $region97: #{tpu_custom_call.1} parent=5 // pred_check
        %p776 = pneg %p775
      $region98: #{tpu_custom_call.1} parent=5 // pred_check_branch
        %778 = sbr.rel (%p776) target = $region100
      $region99: #{tpu_custom_call.1} parent=5 // pred_region
        _
      $region100: #{tpu_custom_call.1} parent=5 // pred_fallthru
        _
      %p779 = scmp.le.s32.totalorder 1, %s40
      %p780 = scmp.lt.s32.totalorder %s40, 7
      %p781 = pnand %p779, %p780
      %p782 = pneg %p781
      // Predicated region
      $region101: #{tpu_custom_call.1} parent=5 // pred_check
        _
      $region102: #{tpu_custom_call.1} parent=5 // pred_check_branch
        %784 = sbr.rel (%p781) target = $region104
      $region103: #{tpu_custom_call.1} parent=5 // pred_region
        %s785 = ssub.s32 %s40, 1
        // Predicated region
        $region105: #{tpu_custom_call.1} parent=103 // pred_check
          %p786 = pneg %p99
        $region106: #{tpu_custom_call.1} parent=103 // pred_check_branch
          %788 = sbr.rel (%p786) target = $region108
        $region107: #{tpu_custom_call.1} parent=103 // pred_region
          %789 = dma.done [#allocation26], 64
        $region108: #{tpu_custom_call.1} parent=103 // pred_fallthru
          _
        // Predicated region
        $region109: #{tpu_custom_call.1} parent=103 // pred_check
          %p790 = pneg %p120
        $region110: #{tpu_custom_call.1} parent=103 // pred_check_branch
          %792 = sbr.rel (%p790) target = $region112
        $region111: #{tpu_custom_call.1} parent=103 // pred_region
          %793 = dma.done [#allocation29], 16
        $region112: #{tpu_custom_call.1} parent=103 // pred_fallthru
          _
        // Predicated region
        $region113: #{tpu_custom_call.1} parent=103 // pred_check
          %p794 = pneg %p141
        $region114: #{tpu_custom_call.1} parent=103 // pred_check_branch
          %796 = sbr.rel (%p794) target = $region116
        $region115: #{tpu_custom_call.1} parent=103 // pred_region
          %797 = dma.done [#allocation29], 16
        $region116: #{tpu_custom_call.1} parent=103 // pred_fallthru
          _
        // Predicated region
        $region117: #{tpu_custom_call.1} parent=103 // pred_check
          %p798 = pneg %p162
        $region118: #{tpu_custom_call.1} parent=103 // pred_check_branch
          %800 = sbr.rel (%p798) target = $region120
        $region119: #{tpu_custom_call.1} parent=103 // pred_region
          %801 = dma.done [#allocation32], 512
        $region120: #{tpu_custom_call.1} parent=103 // pred_fallthru
          _
        // Predicated region
        $region121: #{tpu_custom_call.1} parent=103 // pred_check
          %p802 = pneg %p183
        $region122: #{tpu_custom_call.1} parent=103 // pred_check_branch
          %804 = sbr.rel (%p802) target = $region124
        $region123: #{tpu_custom_call.1} parent=103 // pred_region
          %805 = dma.done [#allocation32], 16
        $region124: #{tpu_custom_call.1} parent=103 // pred_fallthru
          _
        // Predicated region
        $region125: #{tpu_custom_call.1} parent=103 // pred_check
          %p806 = pneg %p204
        $region126: #{tpu_custom_call.1} parent=103 // pred_check_branch
          %808 = sbr.rel (%p806) target = $region128
        $region127: #{tpu_custom_call.1} parent=103 // pred_region
          %809 = dma.done [#allocation35], 16
        $region128: #{tpu_custom_call.1} parent=103 // pred_fallthru
          _
        // Predicated region
        $region129: #{tpu_custom_call.1} parent=103 // pred_check
          %p810 = pneg %p225
        $region130: #{tpu_custom_call.1} parent=103 // pred_check_branch
          %812 = sbr.rel (%p810) target = $region132
        $region131: #{tpu_custom_call.1} parent=103 // pred_region
          %813 = dma.done [#allocation35], 1024
        $region132: #{tpu_custom_call.1} parent=103 // pred_fallthru
          _
        // Predicated region
        $region133: #{tpu_custom_call.1} parent=103 // pred_check
          %p814 = pneg %p246
        $region134: #{tpu_custom_call.1} parent=103 // pred_check_branch
          %816 = sbr.rel (%p814) target = $region136
        $region135: #{tpu_custom_call.1} parent=103 // pred_region
          %817 = dma.done [#allocation38], 16
        $region136: #{tpu_custom_call.1} parent=103 // pred_fallthru
          _
        // Predicated region
        $region137: #{tpu_custom_call.1} parent=103 // pred_check
          %p818 = pneg %p267
        $region138: #{tpu_custom_call.1} parent=103 // pred_check_branch
          %820 = sbr.rel (%p818) target = $region140
        $region139: #{tpu_custom_call.1} parent=103 // pred_region
          %821 = dma.done [#allocation38], 16
        $region140: #{tpu_custom_call.1} parent=103 // pred_fallthru
          _
        // Predicated region
        $region141: #{tpu_custom_call.1} parent=103 // pred_check
          %p822 = pneg %p288
        $region142: #{tpu_custom_call.1} parent=103 // pred_check_branch
          %824 = sbr.rel (%p822) target = $region144
        $region143: #{tpu_custom_call.1} parent=103 // pred_region
          %825 = dma.done [#allocation41], 2048
        $region144: #{tpu_custom_call.1} parent=103 // pred_fallthru
          _
        // Predicated region
        $region145: #{tpu_custom_call.1} parent=103 // pred_check
          %p826 = pneg %p309
        $region146: #{tpu_custom_call.1} parent=103 // pred_check_branch
          %828 = sbr.rel (%p826) target = $region148
        $region147: #{tpu_custom_call.1} parent=103 // pred_region
          %829 = dma.done [#allocation41], 32
        $region148: #{tpu_custom_call.1} parent=103 // pred_fallthru
          _
        // Predicated region
        $region149: #{tpu_custom_call.1} parent=103 // pred_check
          %p830 = pneg %p330
        $region150: #{tpu_custom_call.1} parent=103 // pred_check_branch
          %832 = sbr.rel (%p830) target = $region152
        $region151: #{tpu_custom_call.1} parent=103 // pred_region
          %833 = dma.done [#allocation44], 32
        $region152: #{tpu_custom_call.1} parent=103 // pred_fallthru
          _
        // Predicated region
        $region153: #{tpu_custom_call.1} parent=103 // pred_check
          %p834 = pneg %p351
        $region154: #{tpu_custom_call.1} parent=103 // pred_check_branch
          %836 = sbr.rel (%p834) target = $region156
        $region155: #{tpu_custom_call.1} parent=103 // pred_region
          %837 = dma.done [#allocation44], 2048
        $region156: #{tpu_custom_call.1} parent=103 // pred_fallthru
          _
        // Predicated region
        $region157: #{tpu_custom_call.1} parent=103 // pred_check
          %p838 = pneg %p372
        $region158: #{tpu_custom_call.1} parent=103 // pred_check_branch
          %840 = sbr.rel (%p838) target = $region160
        $region159: #{tpu_custom_call.1} parent=103 // pred_region
          %841 = dma.done [#allocation47], 16
        $region160: #{tpu_custom_call.1} parent=103 // pred_fallthru
          _
        // Predicated region
        $region161: #{tpu_custom_call.1} parent=103 // pred_check
          %p842 = pneg %p393
        $region162: #{tpu_custom_call.1} parent=103 // pred_check_branch
          %844 = sbr.rel (%p842) target = $region164
        $region163: #{tpu_custom_call.1} parent=103 // pred_region
          %845 = dma.done [#allocation47], 16
        $region164: #{tpu_custom_call.1} parent=103 // pred_fallthru
          _
        // Predicated region
        $region165: #{tpu_custom_call.1} parent=103 // pred_check
          %p846 = pneg %p414
        $region166: #{tpu_custom_call.1} parent=103 // pred_check_branch
          %848 = sbr.rel (%p846) target = $region168
        $region167: #{tpu_custom_call.1} parent=103 // pred_region
          %849 = dma.done [#allocation50], 2048
        $region168: #{tpu_custom_call.1} parent=103 // pred_fallthru
          _
        // Predicated region
        $region169: #{tpu_custom_call.1} parent=103 // pred_check
          %p850 = pneg %p435
        $region170: #{tpu_custom_call.1} parent=103 // pred_check_branch
          %852 = sbr.rel (%p850) target = $region172
        $region171: #{tpu_custom_call.1} parent=103 // pred_region
          %853 = dma.done [#allocation50], 32
        $region172: #{tpu_custom_call.1} parent=103 // pred_fallthru
          _
        // Predicated region
        $region173: #{tpu_custom_call.1} parent=103 // pred_check
          %p854 = pneg %p456
        $region174: #{tpu_custom_call.1} parent=103 // pred_check_branch
          %856 = sbr.rel (%p854) target = $region176
        $region175: #{tpu_custom_call.1} parent=103 // pred_region
          %857 = dma.done [#allocation53], 4096
        $region176: #{tpu_custom_call.1} parent=103 // pred_fallthru
          _
        // Predicated region
        $region177: #{tpu_custom_call.1} parent=103 // pred_check
          %p858 = pneg %p477
        $region178: #{tpu_custom_call.1} parent=103 // pred_check_branch
          %860 = sbr.rel (%p858) target = $region180
        $region179: #{tpu_custom_call.1} parent=103 // pred_region
          %861 = dma.done [#allocation53], 32
        $region180: #{tpu_custom_call.1} parent=103 // pred_fallthru
          _
        // Predicated region
        $region181: #{tpu_custom_call.1} parent=103 // pred_check
          %p862 = pneg %p498
        $region182: #{tpu_custom_call.1} parent=103 // pred_check_branch
          %864 = sbr.rel (%p862) target = $region184
        $region183: #{tpu_custom_call.1} parent=103 // pred_region
          %865 = dma.done [#allocation56], 384
        $region184: #{tpu_custom_call.1} parent=103 // pred_fallthru
          _
        %s866 = smul.u32 4, %s50
        %p867 = scmp.lt.s32.totalorder %s866, 3
        %s868 = scalar_select %p867, %s866, 3
        %s869 = smul.addr %s868, 4
        %s870 = scalar_lea.vmem %s0, %s869
        %p871 = pneg %p78
        %p872 = pneg %p75
        %p873 = pneg %p99
        %p874 = pneg %p96
        %p875 = pneg %p120
        %p876 = pneg %p117
        %p877 = pneg %p141
        %p878 = pneg %p138
        %p879 = pneg %p162
        %p880 = pneg %p159
        %p881 = pneg %p183
        %p882 = pneg %p180
        %p883 = pneg %p204
        %p884 = pneg %p201
        %p885 = pneg %p225
        %p886 = pneg %p222
        %p887 = pneg %p246
        %p888 = pneg %p243
        %p889 = pneg %p267
        %p890 = pneg %p264
        %p891 = pneg %p288
        %p892 = pneg %p285
        %p893 = pneg %p309
        %p894 = pneg %p306
        %p895 = pneg %p330
        %p896 = pneg %p327
        %p897 = pneg %p351
        %p898 = pneg %p348
        %p899 = pneg %p372
        %p900 = pneg %p369
        %p901 = pneg %p393
        %p902 = pneg %p390
        %p903 = pneg %p414
        %p904 = pneg %p411
        %p905 = pneg %p435
        %p906 = pneg %p432
        %p907 = pneg %p456
        %p908 = pneg %p453
        %p909 = pneg %p477
        %p910 = pneg %p474
        %p911 = pneg %p498
        %p912 = pneg %p495
        %p913 = pneg %p519
        %p914 = pneg %p516
        %s915 = smul.u32 4, %s50
        %p916 = scmp.lt.s32.totalorder %s915, 3
        %s917 = scalar_select %p916, %s915, 3
        %s918 = smul.addr %s917, 4
        %s919 = scalar_lea.vmem %s0, %s918
        %s920 = smul.u32 4, %s50
        %p922 = scmp.eq.s32.totalorder %s50, 0
        %p923 = scmp.eq.s32.totalorder %s49, 0
        %p924 = pnand %p923, %p922
        %p925 = pneg %p924
        // Predicated region
        $region185: #{tpu_custom_call.1} parent=103 // pred_check
          _
        $region186: #{tpu_custom_call.1} parent=103 // pred_check_branch
          %927 = sbr.rel (%p924) target = $region188
        $region187: #{tpu_custom_call.1} parent=103 // pred_region
          #allocation59 [shape = 'u32[9]{0}', space=smem, size = 0x24, scoped, tag = 'DMA stride descriptor']
          %s929 = sshll.u32 1, 14
          %s930 = sxor.u32 4294967295, %s929
          %s932 = sld [smem:[#allocation0]]
          %s933 = sadd.s32 2, %s932
          %s935 = sshll.u32 7, 26
          %s936 = sxor.u32 4294967295, %s935
          %s937 = sand.u32 0, %s936
          %s938 = sshll.u32 %s933, 26
          %s939 = sor.u32 %s937, %s938
          %s940 = sshll.u32 [#allocation23], 4
          %s941 = int_to_ptr.vmem [resolvable:$true] %s940
          %944 = sst [smem:[#allocation59]] 3072
          %s945 = scalar_lea.smem [#allocation59], 1
          %946 = sst [smem:[%s945]] 3072
          %s947 = scalar_lea.smem [#allocation59], 2
          %948 = sst [smem:[%s947]] 24
          %s949 = scalar_lea.smem [#allocation59], 3
          %950 = sst [smem:[%s949]] 64
          %s951 = scalar_lea.smem [#allocation59], 4
          %952 = sst [smem:[%s951]] 128
          %s953 = scalar_lea.smem [#allocation59], 5
          %954 = sst [smem:[%s953]] 2
          %s955 = scalar_lea.smem [#allocation59], 6
          %956 = sst [smem:[%s955]] 1536
          %s957 = scalar_lea.smem [#allocation59], 7
          %958 = sst [smem:[%s957]] 64
          %s959 = scalar_lea.smem [#allocation59], 8
          %960 = sst [smem:[%s959]] 4
          %962 = dma.general %s20, 49152, %s941, [#allocation24], [#allocation58], [#allocation59], %s939, 0
        $region188: #{tpu_custom_call.1} parent=103 // pred_fallthru
          _
        %v963 = vld [vmem:[%s919] sm:$0xf]
        %v964 = vld [vmem:[%s919 + $0x4] sm:$0xf]
        %v965 = vld [vmem:[%s919 + $0x8] sm:$0xf]
        %v966 = vld [vmem:[%s919 + $0xc] sm:$0xf]
        // Predicated region
        $region189: #{tpu_custom_call.1} parent=103 // pred_check
          %p967 = pneg %p923
        $region190: #{tpu_custom_call.1} parent=103 // pred_check_branch
          %969 = sbr.rel (%p967) target = $region192
        $region191: #{tpu_custom_call.1} parent=103 // pred_region
          // Predicated region
          $region193: #{tpu_custom_call.1} parent=191 // pred_check
            %p970 = pneg %p922
          $region194: #{tpu_custom_call.1} parent=191 // pred_check_branch
            %972 = sbr.rel (%p970) target = $region196
          $region195: #{tpu_custom_call.1} parent=191 // pred_region
            %vm973 = vcmask 516096
            %974 = vst.msk [vmem:[#allocation2] sm:$0x1] %vm973, 0.0
            %975 = vst.msk [vmem:[#allocation7] sm:$0x1] %vm973, 0.0
          $region196: #{tpu_custom_call.1} parent=191 // pred_fallthru
            _
          %v976 = vld [vmem:[#allocation25] sm:$0xf]
          %v981 = vunpack.c.l.b16 %v963
          %v982 = vunpack.c.l.b16 %v964
          %v983 = vunpack.c.l.b16 %v965
          %v984 = vunpack.c.l.b16 %v966
          %v985 = vpack.c.b16 %v982, %v981
          %v986 = vpack.c.b16 %v984, %v983
          %vm987 = vcmask 64512
          %v989 = vsel %vm987, %v985, 0
          %v992 = vsel %vm987, %v986, 0
          %vm994 = vcmask 1043456
          %v996 = vsel %vm994, %v976, 0
          %998 = vmatprep.subr.bf16.mxu0 0
          %999 = vmatpush1.bf16.msra.mxu0 %v996
          %1000 = vmatprep.subr.bf16.mxu0 0
          %1001 = vmatpush1.bf16.msra.mxu0 0
          %1002 = vmatprep.subr.bf16.mxu0 0
          %1003 = vmatpush1.bf16.msra.mxu0 0
          %1004 = vmatprep.subr.bf16.mxu0 0
          %1005 = vmatpush1.bf16.msra.mxu0 0
          %1006 = vmatprep.subr.bf16.mxu0 0
          %1007 = vmatpush1.bf16.msra.mxu0 0
          %1008 = vmatprep.subr.bf16.mxu0 0
          %1009 = vmatpush1.bf16.msra.mxu0 0
          %1010 = vmatprep.subr.bf16.mxu0 0
          %1011 = vmatpush1.bf16.msra.mxu0 0
          %1012 = vmatprep.subr.bf16.mxu0 0
          %1013 = vmatpush1.bf16.msra.mxu0 0
          %1014 = vmatprep.subr.bf16.mxu0 0
          %1015 = vmatpush1.bf16.msra.mxu0 0
          %1016 = vmatprep.subr.bf16.mxu0 0
          %1017 = vmatpush1.bf16.msra.mxu0 0
          %1018 = vmatprep.subr.bf16.mxu0 0
          %1019 = vmatpush1.bf16.msra.mxu0 0
          %1020 = vmatprep.subr.bf16.mxu0 0
          %1021 = vmatpush1.bf16.msra.mxu0 0
          %1022 = vmatprep.subr.bf16.mxu0 0
          %1023 = vmatpush1.bf16.msra.mxu0 0
          %1024 = vmatprep.subr.bf16.mxu0 0
          %1025 = vmatpush1.bf16.msra.mxu0 0
          %1026 = vmatprep.subr.bf16.mxu0 0
          %1027 = vmatpush1.bf16.msra.mxu0 0
          %1028 = vmatprep.subr.bf16.mxu0 0
          %1029 = vmatpush1.bf16.msra.mxu0 0
          %1030 = vmatprep.mubr.bf16.mxu0 0
          %1031 = vmatmul.mubr.bf16.gmra.mrb[0].mxu0 %v989
          %v1032 = vpop.f32.mrb[0].mxu0
          %v1033 = vadd.f32 0.0, %v1032
          %v1034 = vpop.f32.mrb[0].mxu0
          %v1035 = vpop.f32.mrb[0].mxu0
          %v1036 = vadd.f32 0.0, %v1035
          %v1037 = vpop.f32.mrb[0].mxu0
          %1038 = vmatprep.mubr.bf16.mxu0 0
          %1039 = vmatmul.mubr.bf16.gmra.mrb[0].mxu0 %v992
          %v1040 = vpop.f32.mrb[0].mxu0
          %v1041 = vadd.f32 0.0, %v1040
          %v1042 = vpop.f32.mrb[0].mxu0
          %v1043 = vpop.f32.mrb[0].mxu0
          %v1044 = vadd.f32 0.0, %v1043
          %v1045 = vpop.f32.mrb[0].mxu0
          %1046 = vdwg.mxu0
          %v1047 = vld [vmem:[#allocation2] sm:$0x1]
          %vm1048 = vcmask 523264
          %v1049 = vsel %vm1048, %v1033, 0.0
          %v1050 = vsel %vm1048, %v1036, 0.0
          %v1051 = vadd.f32 %v1049, %v1050
          %v1052 = vsel %vm1048, %v1041, 0.0
          %v1053 = vadd.f32 %v1051, %v1052
          %v1054 = vsel %vm1048, %v1044, 0.0
          %v1055 = vadd.f32 %v1053, %v1054
          %v1056 = vrot.slane %v1055, 4
          %v1057 = vadd.f32 %v1055, %v1056
          %v1058 = vrot.slane %v1057, 2
          %v1059 = vadd.f32 %v1057, %v1058
          %v1060 = vrot.slane %v1059, 1
          %v1061 = vadd.f32 %v1059, %v1060
          %v1062 = vadd.f32 %v1047, %v1061
          %vm1063 = vcmask 516096
          %1064 = vst.msk [vmem:[#allocation2] sm:$0x1] %vm1063, %v1062
          %v1065 = vld [vmem:[#allocation7] sm:$0x1]
          %v1066 = vmul.f32 %v1033, %v1033
          %v1067 = vmul.f32 %v1036, %v1036
          %v1068 = vmul.f32 %v1041, %v1041
          %v1069 = vmul.f32 %v1044, %v1044
          %v1070 = vsel %vm1048, %v1066, 0.0
          %v1071 = vsel %vm1048, %v1067, 0.0
          %v1072 = vadd.f32 %v1070, %v1071
          %v1073 = vsel %vm1048, %v1068, 0.0
          %v1074 = vadd.f32 %v1072, %v1073
          %v1075 = vsel %vm1048, %v1069, 0.0
          %v1076 = vadd.f32 %v1074, %v1075
          %v1077 = vrot.slane %v1076, 4
          %v1078 = vadd.f32 %v1076, %v1077
          %v1079 = vrot.slane %v1078, 2
          %v1080 = vadd.f32 %v1078, %v1079
          %v1081 = vrot.slane %v1080, 1
          %v1082 = vadd.f32 %v1080, %v1081
          %v1083 = vadd.f32 %v1065, %v1082
          %1084 = vst.msk [vmem:[#allocation7] sm:$0x1] %vm1063, %v1083
          // Predicated region
          $region197: #{tpu_custom_call.1} parent=191 // pred_check
            %p1085 = pneg %p922
          $region198: #{tpu_custom_call.1} parent=191 // pred_check_branch
            %1087 = sbr.rel (%p1085) target = $region200
          $region199: #{tpu_custom_call.1} parent=191 // pred_region
            %v1088 = vld [vmem:[#allocation2] sm:$0x1]
            %v1089 = vmul.f32 %v1088, 0.03125
            %v1090 = vld [vmem:[#allocation7] sm:$0x1]
            %v1091 = vmul.f32 %v1090, 0.03125
            %v1092 = vmul.f32 %v1089, %v1089
            %v1093 = vsub.f32 %v1091, %v1092
            %v1094 = vmax.f32 %v1093, 0.0
            %v1095 = vld [vmem:[#allocation28] sm:$0x1]
            %v1096 = vadd.f32 %v1094, 1e-05
            %v1097 = vrsqrt.pop %v1096
            %v1098 = vmul.f32 %v1095, %v1097
            %v1099 = vld [vmem:[#allocation30] sm:$0x1]
            %v1100 = vmul.f32 %v1089, %v1098
            %v1101 = vsub.f32 %v1099, %v1100
            %1102 = vst.msk [vmem:[#allocation12] sm:$0x1] %vm1063, %v1101
            %v1103 = vld [vmem:[#allocation25] sm:$0xf]
            %v1104 = vunpack.c.l.bf16 %v1103
            %v1106 = vlaneseq
            %v1107 = vshrl.u32 %v1106, 7
            %v1108 = vsub.s32 0, %v1107
            %v1109 = vrot.slane %v1098, %v1108
            %v1111 = vmul.f32 %v1104, %v1109
            %v1112 = vpack.c.bf16 %v1111, %v1111
            %vm1113 = vcmask 519168
            %1114 = vst.msk [vmem:[#allocation17] sm:$0xf] %vm1113, %v1112
          $region200: #{tpu_custom_call.1} parent=191 // pred_fallthru
            _
        $region192: #{tpu_custom_call.1} parent=103 // pred_fallthru
          _
        %p1115 = scmp.eq.s32.totalorder %s49, 1
        // Predicated region
        $region201: #{tpu_custom_call.1} parent=103 // pred_check
          %p1116 = pneg %p1115
        $region202: #{tpu_custom_call.1} parent=103 // pred_check_branch
          %1118 = sbr.rel (%p1116) target = $region204
        $region203: #{tpu_custom_call.1} parent=103 // pred_region
          // Predicated region
          $region205: #{tpu_custom_call.1} parent=203 // pred_check
            %p1119 = pneg %p922
          $region206: #{tpu_custom_call.1} parent=203 // pred_check_branch
            %1121 = sbr.rel (%p1119) target = $region208
          $region207: #{tpu_custom_call.1} parent=203 // pred_region
            %1122 = vst [vmem:[#allocation3] sm:$0x1] 0.0
            %1123 = vst [vmem:[#allocation8] sm:$0x1] 0.0
          $region208: #{tpu_custom_call.1} parent=203 // pred_fallthru
            _
          %v1124 = vld [vmem:[#allocation17] sm:$0xf]
          %v1125 = vld [vmem:[#allocation12] sm:$0x1]
          %v1127 = vlaneseq
          %v1128 = vshrl.u32 %v1127, 7
          %v1129 = vsub.s32 0, %v1128
          %v1130 = vrot.slane %v1125, %v1129
          %v1136 = vunpack.c.l.b16 %v963
          %v1137 = vunpack.c.l.b16 %v964
          %v1138 = vunpack.c.l.b16 %v965
          %v1139 = vunpack.c.l.b16 %v966
          %v1140 = vpack.c.b16 %v1137, %v1136
          %v1141 = vpack.c.b16 %v1139, %v1138
          %vm1142 = vcmask 64512
          %v1144 = vsel %vm1142, %v1140, 0
          %v1147 = vsel %vm1142, %v1141, 0
          %vm1149 = vcmask 1043456
          %v1151 = vsel %vm1149, %v1124, 0
          %1153 = vmatprep.subr.bf16.mxu0 0
          %1154 = vmatpush1.bf16.msra.mxu0 %v1151
          %1155 = vmatprep.subr.bf16.mxu0 0
          %1156 = vmatpush1.bf16.msra.mxu0 0
          %1157 = vmatprep.subr.bf16.mxu0 0
          %1158 = vmatpush1.bf16.msra.mxu0 0
          %1159 = vmatprep.subr.bf16.mxu0 0
          %1160 = vmatpush1.bf16.msra.mxu0 0
          %1161 = vmatprep.subr.bf16.mxu0 0
          %1162 = vmatpush1.bf16.msra.mxu0 0
          %1163 = vmatprep.subr.bf16.mxu0 0
          %1164 = vmatpush1.bf16.msra.mxu0 0
          %1165 = vmatprep.subr.bf16.mxu0 0
          %1166 = vmatpush1.bf16.msra.mxu0 0
          %1167 = vmatprep.subr.bf16.mxu0 0
          %1168 = vmatpush1.bf16.msra.mxu0 0
          %1169 = vmatprep.subr.bf16.mxu0 0
          %1170 = vmatpush1.bf16.msra.mxu0 0
          %1171 = vmatprep.subr.bf16.mxu0 0
          %1172 = vmatpush1.bf16.msra.mxu0 0
          %1173 = vmatprep.subr.bf16.mxu0 0
          %1174 = vmatpush1.bf16.msra.mxu0 0
          %1175 = vmatprep.subr.bf16.mxu0 0
          %1176 = vmatpush1.bf16.msra.mxu0 0
          %1177 = vmatprep.subr.bf16.mxu0 0
          %1178 = vmatpush1.bf16.msra.mxu0 0
          %1179 = vmatprep.subr.bf16.mxu0 0
          %1180 = vmatpush1.bf16.msra.mxu0 0
          %1181 = vmatprep.subr.bf16.mxu0 0
          %1182 = vmatpush1.bf16.msra.mxu0 0
          %1183 = vmatprep.subr.bf16.mxu0 0
          %1184 = vmatpush1.bf16.msra.mxu0 0
          %1185 = vmatprep.mubr.bf16.mxu0 0
          %1186 = vmatmul.mubr.bf16.gmra.mrb[0].mxu0 %v1144
          %v1187 = vpop.f32.mrb[0].mxu0
          %v1188 = vadd.f32 %v1130, %v1187
          %v1189 = vpop.f32.mrb[0].mxu0
          %v1190 = vpop.f32.mrb[0].mxu0
          %v1191 = vadd.f32 %v1130, %v1190
          %v1192 = vpop.f32.mrb[0].mxu0
          %1193 = vmatprep.mubr.bf16.mxu0 0
          %1194 = vmatmul.mubr.bf16.gmra.mrb[0].mxu0 %v1147
          %v1195 = vpop.f32.mrb[0].mxu0
          %v1196 = vadd.f32 %v1130, %v1195
          %v1197 = vpop.f32.mrb[0].mxu0
          %v1198 = vpop.f32.mrb[0].mxu0
          %v1199 = vadd.f32 %v1130, %v1198
          %v1200 = vpop.f32.mrb[0].mxu0
          %1201 = vdwg.mxu0
          %v1202 = vmax.f32 %v1188, 0.0
          %v1203 = vmax.f32 %v1191, 0.0
          %v1204 = vmax.f32 %v1196, 0.0
          %v1205 = vmax.f32 %v1199, 0.0
          %v1206 = vpack.c.bf16 %v1203, %v1202
          %v1207 = vpack.c.bf16 %v1205, %v1204
          %v1208 = vld [vmem:[#allocation31] sm:$0xf]
          %v1209 = vld [vmem:[#allocation31 + $0x4] sm:$0xf]
          %v1210 = vld [vmem:[#allocation31 + $0x8] sm:$0xf]
          %v1211 = vld [vmem:[#allocation31 + $0xc] sm:$0xf]
          %v1212 = vld [vmem:[#allocation31 + $0x10] sm:$0xf]
          %v1213 = vld [vmem:[#allocation31 + $0x14] sm:$0xf]
          %v1214 = vld [vmem:[#allocation31 + $0x18] sm:$0xf]
          %v1215 = vld [vmem:[#allocation31 + $0x1c] sm:$0xf]
          %v1224 = vunpack.c.l.b16 %v1208
          %v1225 = vunpack.c.l.b16 %v1209
          %v1226 = vunpack.c.l.b16 %v1210
          %v1227 = vunpack.c.l.b16 %v1211
          %v1228 = vunpack.c.l.b16 %v1212
          %v1229 = vunpack.c.l.b16 %v1213
          %v1230 = vunpack.c.l.b16 %v1214
          %v1231 = vunpack.c.l.b16 %v1215
          %v1232 = vpack.c.b16 %v1225, %v1224
          %v1233 = vpack.c.b16 %v1227, %v1226
          %v1234 = vpack.c.b16 %v1229, %v1228
          %v1235 = vpack.c.b16 %v1231, %v1230
          %vm1240 = vcmask 523264
          %v1242 = vsel %vm1240, %v1206, 0
          %v1245 = vsel %vm1240, %v1207, 0
          %1247 = vmatprep.subr.bf16.mxu0 0
          %1248 = vmatpush1.bf16.msra.mxu0 %v1232
          %1249 = vmatprep.subr.bf16.mxu0 0
          %1250 = vmatpush1.bf16.msra.mxu0 %v1233
          %1251 = vmatprep.subr.bf16.mxu0 0
          %1252 = vmatpush1.bf16.msra.mxu0 %v1234
          %1253 = vmatprep.subr.bf16.mxu0 0
          %1254 = vmatpush1.bf16.msra.mxu0 %v1235
          %1255 = vmatprep.subr.bf16.mxu0 0
          %1256 = vmatpush1.bf16.msra.mxu0 0
          %1257 = vmatprep.subr.bf16.mxu0 0
          %1258 = vmatpush1.bf16.msra.mxu0 0
          %1259 = vmatprep.subr.bf16.mxu0 0
          %1260 = vmatpush1.bf16.msra.mxu0 0
          %1261 = vmatprep.subr.bf16.mxu0 0
          %1262 = vmatpush1.bf16.msra.mxu0 0
          %1263 = vmatprep.subr.bf16.mxu0 0
          %1264 = vmatpush1.bf16.msra.mxu0 0
          %1265 = vmatprep.subr.bf16.mxu0 0
          %1266 = vmatpush1.bf16.msra.mxu0 0
          %1267 = vmatprep.subr.bf16.mxu0 0
          %1268 = vmatpush1.bf16.msra.mxu0 0
          %1269 = vmatprep.subr.bf16.mxu0 0
          %1270 = vmatpush1.bf16.msra.mxu0 0
          %1271 = vmatprep.subr.bf16.mxu0 0
          %1272 = vmatpush1.bf16.msra.mxu0 0
          %1273 = vmatprep.subr.bf16.mxu0 0
          %1274 = vmatpush1.bf16.msra.mxu0 0
          %1275 = vmatprep.subr.bf16.mxu0 0
          %1276 = vmatpush1.bf16.msra.mxu0 0
          %1277 = vmatprep.subr.bf16.mxu0 0
          %1278 = vmatpush1.bf16.msra.mxu0 0
          %1279 = vmatprep.mubr.bf16.mxu0 0
          %1280 = vmatmul.mubr.bf16.gmra.mrb[0].mxu0 %v1242
          %v1281 = vpop.f32.mrb[0].mxu0
          %v1282 = vadd.f32 0.0, %v1281
          %v1283 = vpop.f32.mrb[0].mxu0
          %v1284 = vpop.f32.mrb[0].mxu0
          %v1285 = vadd.f32 0.0, %v1284
          %v1286 = vpop.f32.mrb[0].mxu0
          %1287 = vmatprep.mubr.bf16.mxu0 0
          %1288 = vmatmul.mubr.bf16.gmra.mrb[0].mxu0 %v1245
          %v1289 = vpop.f32.mrb[0].mxu0
          %v1290 = vadd.f32 0.0, %v1289
          %v1291 = vpop.f32.mrb[0].mxu0
          %v1292 = vpop.f32.mrb[0].mxu0
          %v1293 = vadd.f32 0.0, %v1292
          %v1294 = vpop.f32.mrb[0].mxu0
          %1295 = vdwg.mxu0
          %v1296 = vld [vmem:[#allocation3] sm:$0x1]
          %v1297 = vadd.f32 %v1282, %v1285
          %v1298 = vadd.f32 %v1297, %v1290
          %v1299 = vadd.f32 %v1298, %v1293
          %v1300 = vrot.slane %v1299, 4
          %v1301 = vadd.f32 %v1299, %v1300
          %v1302 = vrot.slane %v1301, 2
          %v1303 = vadd.f32 %v1301, %v1302
          %v1304 = vrot.slane %v1303, 1
          %v1305 = vadd.f32 %v1303, %v1304
          %v1306 = vadd.f32 %v1296, %v1305
          %1307 = vst [vmem:[#allocation3] sm:$0x1] %v1306
          %v1308 = vld [vmem:[#allocation8] sm:$0x1]
          %v1309 = vmul.f32 %v1282, %v1282
          %v1310 = vmul.f32 %v1285, %v1285
          %v1311 = vmul.f32 %v1290, %v1290
          %v1312 = vmul.f32 %v1293, %v1293
          %v1313 = vadd.f32 %v1309, %v1310
          %v1314 = vadd.f32 %v1313, %v1311
          %v1315 = vadd.f32 %v1314, %v1312
          %v1316 = vrot.slane %v1315, 4
          %v1317 = vadd.f32 %v1315, %v1316
          %v1318 = vrot.slane %v1317, 2
          %v1319 = vadd.f32 %v1317, %v1318
          %v1320 = vrot.slane %v1319, 1
          %v1321 = vadd.f32 %v1319, %v1320
          %v1322 = vadd.f32 %v1308, %v1321
          %1323 = vst [vmem:[#allocation8] sm:$0x1] %v1322
          // Predicated region
          $region209: #{tpu_custom_call.1} parent=203 // pred_check
            %p1324 = pneg %p922
          $region210: #{tpu_custom_call.1} parent=203 // pred_check_branch
            %1326 = sbr.rel (%p1324) target = $region212
          $region211: #{tpu_custom_call.1} parent=203 // pred_region
            %v1327 = vld [vmem:[#allocation3] sm:$0x1]
            %v1328 = vmul.f32 %v1327, 0.03125
            %v1329 = vld [vmem:[#allocation8] sm:$0x1]
            %v1330 = vmul.f32 %v1329, 0.03125
            %v1331 = vmul.f32 %v1328, %v1328
            %v1332 = vsub.f32 %v1330, %v1331
            %v1333 = vmax.f32 %v1332, 0.0
            %v1334 = vld [vmem:[#allocation33] sm:$0x1]
            %v1335 = vadd.f32 %v1333, 1e-05
            %v1336 = vrsqrt.pop %v1335
            %v1337 = vmul.f32 %v1334, %v1336
            %v1338 = vld [vmem:[#allocation34] sm:$0x1]
            %v1339 = vmul.f32 %v1328, %v1337
            %v1340 = vsub.f32 %v1338, %v1339
            %1341 = vst [vmem:[#allocation13] sm:$0x1] %v1340
            %v1342 = vld [vmem:[#allocation31] sm:$0xf]
            %v1343 = vld [vmem:[#allocation31 + $0x4] sm:$0xf]
            %v1344 = vld [vmem:[#allocation31 + $0x8] sm:$0xf]
            %v1345 = vld [vmem:[#allocation31 + $0xc] sm:$0xf]
            %v1346 = vld [vmem:[#allocation31 + $0x10] sm:$0xf]
            %v1347 = vld [vmem:[#allocation31 + $0x14] sm:$0xf]
            %v1348 = vld [vmem:[#allocation31 + $0x18] sm:$0xf]
            %v1349 = vld [vmem:[#allocation31 + $0x1c] sm:$0xf]
            %v1350 = vunpack.c.l.bf16 %v1342
            %v1351 = vunpack.c.l.bf16 %v1343
            %v1352 = vunpack.c.l.bf16 %v1344
            %v1353 = vunpack.c.l.bf16 %v1345
            %v1354 = vunpack.c.l.bf16 %v1346
            %v1355 = vunpack.c.l.bf16 %v1347
            %v1356 = vunpack.c.l.bf16 %v1348
            %v1357 = vunpack.c.l.bf16 %v1349
            %v1359 = vlaneseq
            %v1360 = vshrl.u32 %v1359, 7
            %v1361 = vsub.s32 0, %v1360
            %v1362 = vrot.slane %v1337, %v1361
            %v1364 = vmul.f32 %v1350, %v1362
            %v1365 = vmul.f32 %v1351, %v1362
            %v1366 = vmul.f32 %v1352, %v1362
            %v1367 = vmul.f32 %v1353, %v1362
            %v1368 = vmul.f32 %v1354, %v1362
            %v1369 = vmul.f32 %v1355, %v1362
            %v1370 = vmul.f32 %v1356, %v1362
            %v1371 = vmul.f32 %v1357, %v1362
            %v1372 = vpack.c.bf16 %v1365, %v1364
            %v1373 = vpack.c.bf16 %v1367, %v1366
            %v1374 = vpack.c.bf16 %v1369, %v1368
            %v1375 = vpack.c.bf16 %v1371, %v1370
            %1376 = vst [vmem:[#allocation18] sm:$0xff] %v1372
            %1377 = vst [vmem:[#allocation18 + $0x8] sm:$0xff] %v1373
            %1378 = vst [vmem:[#allocation18 + $0x10] sm:$0xff] %v1374
            %1379 = vst [vmem:[#allocation18 + $0x18] sm:$0xff] %v1375
          $region212: #{tpu_custom_call.1} parent=203 // pred_fallthru
            _
        $region204: #{tpu_custom_call.1} parent=103 // pred_fallthru
          _
        %p1380 = scmp.eq.s32.totalorder %s49, 2
        // Predicated region
        $region213: #{tpu_custom_call.1} parent=103 // pred_check
          %p1381 = pneg %p1380
        $region214: #{tpu_custom_call.1} parent=103 // pred_check_branch
          %1383 = sbr.rel (%p1381) target = $region216
        $region215: #{tpu_custom_call.1} parent=103 // pred_region
          // Predicated region
          $region217: #{tpu_custom_call.1} parent=215 // pred_check
            %p1384 = pneg %p922
          $region218: #{tpu_custom_call.1} parent=215 // pred_check_branch
            %1386 = sbr.rel (%p1384) target = $region220
          $region219: #{tpu_custom_call.1} parent=215 // pred_region
            %1387 = vst [vmem:[#allocation4] sm:$0x1] 0.0
            %1388 = vst [vmem:[#allocation9] sm:$0x1] 0.0
          $region220: #{tpu_custom_call.1} parent=215 // pred_fallthru
            _
          %v1389 = vld [vmem:[#allocation17] sm:$0xf]
          %v1390 = vld [vmem:[#allocation12] sm:$0x1]
          %v1392 = vlaneseq
          %v1393 = vshrl.u32 %v1392, 7
          %v1394 = vsub.s32 0, %v1393
          %v1395 = vrot.slane %v1390, %v1394
          %v1401 = vunpack.c.l.b16 %v963
          %v1402 = vunpack.c.l.b16 %v964
          %v1403 = vunpack.c.l.b16 %v965
          %v1404 = vunpack.c.l.b16 %v966
          %v1405 = vpack.c.b16 %v1402, %v1401
          %v1406 = vpack.c.b16 %v1404, %v1403
          %vm1407 = vcmask 64512
          %v1409 = vsel %vm1407, %v1405, 0
          %v1412 = vsel %vm1407, %v1406, 0
          %vm1414 = vcmask 1043456
          %v1416 = vsel %vm1414, %v1389, 0
          %1418 = vmatprep.subr.bf16.mxu0 0
          %1419 = vmatpush1.bf16.msra.mxu0 %v1416
          %1420 = vmatprep.subr.bf16.mxu0 0
          %1421 = vmatpush1.bf16.msra.mxu0 0
          %1422 = vmatprep.subr.bf16.mxu0 0
          %1423 = vmatpush1.bf16.msra.mxu0 0
          %1424 = vmatprep.subr.bf16.mxu0 0
          %1425 = vmatpush1.bf16.msra.mxu0 0
          %1426 = vmatprep.subr.bf16.mxu0 0
          %1427 = vmatpush1.bf16.msra.mxu0 0
          %1428 = vmatprep.subr.bf16.mxu0 0
          %1429 = vmatpush1.bf16.msra.mxu0 0
          %1430 = vmatprep.subr.bf16.mxu0 0
          %1431 = vmatpush1.bf16.msra.mxu0 0
          %1432 = vmatprep.subr.bf16.mxu0 0
          %1433 = vmatpush1.bf16.msra.mxu0 0
          %1434 = vmatprep.subr.bf16.mxu0 0
          %1435 = vmatpush1.bf16.msra.mxu0 0
          %1436 = vmatprep.subr.bf16.mxu0 0
          %1437 = vmatpush1.bf16.msra.mxu0 0
          %1438 = vmatprep.subr.bf16.mxu0 0
          %1439 = vmatpush1.bf16.msra.mxu0 0
          %1440 = vmatprep.subr.bf16.mxu0 0
          %1441 = vmatpush1.bf16.msra.mxu0 0
          %1442 = vmatprep.subr.bf16.mxu0 0
          %1443 = vmatpush1.bf16.msra.mxu0 0
          %1444 = vmatprep.subr.bf16.mxu0 0
          %1445 = vmatpush1.bf16.msra.mxu0 0
          %1446 = vmatprep.subr.bf16.mxu0 0
          %1447 = vmatpush1.bf16.msra.mxu0 0
          %1448 = vmatprep.subr.bf16.mxu0 0
          %1449 = vmatpush1.bf16.msra.mxu0 0
          %1450 = vmatprep.mubr.bf16.mxu0 0
          %1451 = vmatmul.mubr.bf16.gmra.mrb[0].mxu0 %v1409
          %v1452 = vpop.f32.mrb[0].mxu0
          %v1453 = vadd.f32 %v1395, %v1452
          %v1454 = vpop.f32.mrb[0].mxu0
          %v1455 = vpop.f32.mrb[0].mxu0
          %v1456 = vadd.f32 %v1395, %v1455
          %v1457 = vpop.f32.mrb[0].mxu0
          %1458 = vmatprep.mubr.bf16.mxu0 0
          %1459 = vmatmul.mubr.bf16.gmra.mrb[0].mxu0 %v1412
          %v1460 = vpop.f32.mrb[0].mxu0
          %v1461 = vadd.f32 %v1395, %v1460
          %v1462 = vpop.f32.mrb[0].mxu0
          %v1463 = vpop.f32.mrb[0].mxu0
          %v1464 = vadd.f32 %v1395, %v1463
          %v1465 = vpop.f32.mrb[0].mxu0
          %1466 = vdwg.mxu0
          %v1467 = vmax.f32 %v1453, 0.0
          %v1468 = vmax.f32 %v1456, 0.0
          %v1469 = vmax.f32 %v1461, 0.0
          %v1470 = vmax.f32 %v1464, 0.0
          %v1471 = vpack.c.bf16 %v1468, %v1467
          %v1472 = vpack.c.bf16 %v1470, %v1469
          %v1473 = vld [vmem:[#allocation18] sm:$0xff]
          %v1474 = vld [vmem:[#allocation18 + $0x8] sm:$0xff]
          %v1475 = vld [vmem:[#allocation18 + $0x10] sm:$0xff]
          %v1476 = vld [vmem:[#allocation18 + $0x18] sm:$0xff]
          %v1477 = vld [vmem:[#allocation13] sm:$0x1]
          %v1479 = vlaneseq
          %v1480 = vshrl.u32 %v1479, 7
          %v1481 = vsub.s32 0, %v1480
          %v1482 = vrot.slane %v1477, %v1481
          %vm1484 = vcmask 523264
          %v1486 = vsel %vm1484, %v1471, 0
          %v1489 = vsel %vm1484, %v1472, 0
          %1491 = vmatprep.subr.bf16.mxu0 0
          %1492 = vmatpush1.bf16.msra.mxu0 %v1473
          %1493 = vmatprep.subr.bf16.mxu0 0
          %1494 = vmatpush1.bf16.msra.mxu0 %v1474
          %1495 = vmatprep.subr.bf16.mxu0 0
          %1496 = vmatpush1.bf16.msra.mxu0 %v1475
          %1497 = vmatprep.subr.bf16.mxu0 0
          %1498 = vmatpush1.bf16.msra.mxu0 %v1476
          %1499 = vmatprep.subr.bf16.mxu0 0
          %1500 = vmatpush1.bf16.msra.mxu0 0
          %1501 = vmatprep.subr.bf16.mxu0 0
          %1502 = vmatpush1.bf16.msra.mxu0 0
          %1503 = vmatprep.subr.bf16.mxu0 0
          %1504 = vmatpush1.bf16.msra.mxu0 0
          %1505 = vmatprep.subr.bf16.mxu0 0
          %1506 = vmatpush1.bf16.msra.mxu0 0
          %1507 = vmatprep.subr.bf16.mxu0 0
          %1508 = vmatpush1.bf16.msra.mxu0 0
          %1509 = vmatprep.subr.bf16.mxu0 0
          %1510 = vmatpush1.bf16.msra.mxu0 0
          %1511 = vmatprep.subr.bf16.mxu0 0
          %1512 = vmatpush1.bf16.msra.mxu0 0
          %1513 = vmatprep.subr.bf16.mxu0 0
          %1514 = vmatpush1.bf16.msra.mxu0 0
          %1515 = vmatprep.subr.bf16.mxu0 0
          %1516 = vmatpush1.bf16.msra.mxu0 0
          %1517 = vmatprep.subr.bf16.mxu0 0
          %1518 = vmatpush1.bf16.msra.mxu0 0
          %1519 = vmatprep.subr.bf16.mxu0 0
          %1520 = vmatpush1.bf16.msra.mxu0 0
          %1521 = vmatprep.subr.bf16.mxu0 0
          %1522 = vmatpush1.bf16.msra.mxu0 0
          %1523 = vmatprep.mubr.bf16.mxu0 0
          %1524 = vmatmul.mubr.bf16.gmra.mrb[0].mxu0 %v1486
          %v1525 = vpop.f32.mrb[0].mxu0
          %v1526 = vadd.f32 %v1482, %v1525
          %v1527 = vpop.f32.mrb[0].mxu0
          %v1528 = vpop.f32.mrb[0].mxu0
          %v1529 = vadd.f32 %v1482, %v1528
          %v1530 = vpop.f32.mrb[0].mxu0
          %1531 = vmatprep.mubr.bf16.mxu0 0
          %1532 = vmatmul.mubr.bf16.gmra.mrb[0].mxu0 %v1489
          %v1533 = vpop.f32.mrb[0].mxu0
          %v1534 = vadd.f32 %v1482, %v1533
          %v1535 = vpop.f32.mrb[0].mxu0
          %v1536 = vpop.f32.mrb[0].mxu0
          %v1537 = vadd.f32 %v1482, %v1536
          %v1538 = vpop.f32.mrb[0].mxu0
          %1539 = vdwg.mxu0
          %v1540 = vmax.f32 %v1526, 0.0
          %v1541 = vmax.f32 %v1529, 0.0
          %v1542 = vmax.f32 %v1534, 0.0
          %v1543 = vmax.f32 %v1537, 0.0
          %v1544 = vpack.c.bf16 %v1541, %v1540
          %v1545 = vpack.c.bf16 %v1543, %v1542
          %v1546 = vld [vmem:[#allocation36] sm:$0xf]
          %v1547 = vld [vmem:[#allocation36 + $0x4] sm:$0xf]
          %v1548 = vld [vmem:[#allocation36 + $0x8] sm:$0xf]
          %v1549 = vld [vmem:[#allocation36 + $0xc] sm:$0xf]
          %v1550 = vld [vmem:[#allocation36 + $0x10] sm:$0xf]
          %v1551 = vld [vmem:[#allocation36 + $0x14] sm:$0xf]
          %v1552 = vld [vmem:[#allocation36 + $0x18] sm:$0xf]
          %v1553 = vld [vmem:[#allocation36 + $0x1c] sm:$0xf]
          %v1554 = vld [vmem:[#allocation36 + $0x20] sm:$0xf]
          %v1555 = vld [vmem:[#allocation36 + $0x24] sm:$0xf]
          %v1556 = vld [vmem:[#allocation36 + $0x28] sm:$0xf]
          %v1557 = vld [vmem:[#allocation36 + $0x2c] sm:$0xf]
          %v1558 = vld [vmem:[#allocation36 + $0x30] sm:$0xf]
          %v1559 = vld [vmem:[#allocation36 + $0x34] sm:$0xf]
          %v1560 = vld [vmem:[#allocation36 + $0x38] sm:$0xf]
          %v1561 = vld [vmem:[#allocation36 + $0x3c] sm:$0xf]
          %v1578 = vunpack.c.l.b16 %v1546
          %v1579 = vunpack.c.l.b16 %v1547
          %v1580 = vunpack.c.l.b16 %v1548
          %v1581 = vunpack.c.l.b16 %v1549
          %v1582 = vunpack.c.l.b16 %v1550
          %v1583 = vunpack.c.l.b16 %v1551
          %v1584 = vunpack.c.l.b16 %v1552
          %v1585 = vunpack.c.l.b16 %v1553
          %v1586 = vunpack.c.l.b16 %v1554
          %v1587 = vunpack.c.l.b16 %v1555
          %v1588 = vunpack.c.l.b16 %v1556
          %v1589 = vunpack.c.l.b16 %v1557
          %v1590 = vunpack.c.l.b16 %v1558
          %v1591 = vunpack.c.l.b16 %v1559
          %v1592 = vunpack.c.l.b16 %v1560
          %v1593 = vunpack.c.l.b16 %v1561
          %v1594 = vpack.c.b16 %v1579, %v1578
          %v1595 = vpack.c.b16 %v1581, %v1580
          %v1596 = vpack.c.b16 %v1583, %v1582
          %v1597 = vpack.c.b16 %v1585, %v1584
          %v1598 = vpack.c.b16 %v1587, %v1586
          %v1599 = vpack.c.b16 %v1589, %v1588
          %v1600 = vpack.c.b16 %v1591, %v1590
          %v1601 = vpack.c.b16 %v1593, %v1592
          %1610 = vmatprep.subr.bf16.mxu0 0
          %1611 = vmatpush1.bf16.msra.mxu0 %v1594
          %1612 = vmatprep.subr.bf16.mxu0 0
          %1613 = vmatpush1.bf16.msra.mxu0 %v1595
          %1614 = vmatprep.subr.bf16.mxu0 0
          %1615 = vmatpush1.bf16.msra.mxu0 %v1596
          %1616 = vmatprep.subr.bf16.mxu0 0
          %1617 = vmatpush1.bf16.msra.mxu0 %v1597
          %1618 = vmatprep.subr.bf16.mxu0 0
          %1619 = vmatpush1.bf16.msra.mxu0 %v1598
          %1620 = vmatprep.subr.bf16.mxu0 0
          %1621 = vmatpush1.bf16.msra.mxu0 %v1599
          %1622 = vmatprep.subr.bf16.mxu0 0
          %1623 = vmatpush1.bf16.msra.mxu0 %v1600
          %1624 = vmatprep.subr.bf16.mxu0 0
          %1625 = vmatpush1.bf16.msra.mxu0 %v1601
          %1626 = vmatprep.subr.bf16.mxu0 0
          %1627 = vmatpush1.bf16.msra.mxu0 0
          %1628 = vmatprep.subr.bf16.mxu0 0
          %1629 = vmatpush1.bf16.msra.mxu0 0
          %1630 = vmatprep.subr.bf16.mxu0 0
          %1631 = vmatpush1.bf16.msra.mxu0 0
          %1632 = vmatprep.subr.bf16.mxu0 0
          %1633 = vmatpush1.bf16.msra.mxu0 0
          %1634 = vmatprep.subr.bf16.mxu0 0
          %1635 = vmatpush1.bf16.msra.mxu0 0
          %1636 = vmatprep.subr.bf16.mxu0 0
          %1637 = vmatpush1.bf16.msra.mxu0 0
          %1638 = vmatprep.subr.bf16.mxu0 0
          %1639 = vmatpush1.bf16.msra.mxu0 0
          %1640 = vmatprep.subr.bf16.mxu0 0
          %1641 = vmatpush1.bf16.msra.mxu0 0
          %1642 = vmatprep.mubr.bf16.mxu0 0
          %1643 = vmatmul.mubr.bf16.gmra.mrb[0].mxu0 %v1544
          %v1644 = vpop.f32.mrb[0].mxu0
          %v1645 = vadd.f32 0.0, %v1644
          %v1646 = vpop.f32.mrb[0].mxu0
          %v1647 = vpop.f32.mrb[0].mxu0
          %v1648 = vadd.f32 0.0, %v1647
          %v1649 = vpop.f32.mrb[0].mxu0
          %1650 = vmatprep.mubr.bf16.mxu0 0
          %1651 = vmatmul.mubr.bf16.gmra.mrb[0].mxu0 %v1545
          %v1652 = vpop.f32.mrb[0].mxu0
          %v1653 = vadd.f32 0.0, %v1652
          %v1654 = vpop.f32.mrb[0].mxu0
          %v1655 = vpop.f32.mrb[0].mxu0
          %v1656 = vadd.f32 0.0, %v1655
          %v1657 = vpop.f32.mrb[0].mxu0
          %1658 = vdwg.mxu0
          %v1659 = vld [vmem:[#allocation4] sm:$0x1]
          %v1660 = vadd.f32 %v1645, %v1648
          %v1661 = vadd.f32 %v1660, %v1653
          %v1662 = vadd.f32 %v1661, %v1656
          %v1663 = vrot.slane %v1662, 4
          %v1664 = vadd.f32 %v1662, %v1663
          %v1665 = vrot.slane %v1664, 2
          %v1666 = vadd.f32 %v1664, %v1665
          %v1667 = vrot.slane %v1666, 1
          %v1668 = vadd.f32 %v1666, %v1667
          %v1669 = vadd.f32 %v1659, %v1668
          %1670 = vst [vmem:[#allocation4] sm:$0x1] %v1669
          %v1671 = vld [vmem:[#allocation9] sm:$0x1]
          %v1672 = vmul.f32 %v1645, %v1645
          %v1673 = vmul.f32 %v1648, %v1648
          %v1674 = vmul.f32 %v1653, %v1653
          %v1675 = vmul.f32 %v1656, %v1656
          %v1676 = vadd.f32 %v1672, %v1673
          %v1677 = vadd.f32 %v1676, %v1674
          %v1678 = vadd.f32 %v1677, %v1675
          %v1679 = vrot.slane %v1678, 4
          %v1680 = vadd.f32 %v1678, %v1679
          %v1681 = vrot.slane %v1680, 2
          %v1682 = vadd.f32 %v1680, %v1681
          %v1683 = vrot.slane %v1682, 1
          %v1684 = vadd.f32 %v1682, %v1683
          %v1685 = vadd.f32 %v1671, %v1684
          %1686 = vst [vmem:[#allocation9] sm:$0x1] %v1685
          // Predicated region
          $region221: #{tpu_custom_call.1} parent=215 // pred_check
            %p1687 = pneg %p922
          $region222: #{tpu_custom_call.1} parent=215 // pred_check_branch
            %1689 = sbr.rel (%p1687) target = $region224
          $region223: #{tpu_custom_call.1} parent=215 // pred_region
            %v1690 = vld [vmem:[#allocation4] sm:$0x1]
            %v1691 = vmul.f32 %v1690, 0.03125
            %v1692 = vld [vmem:[#allocation9] sm:$0x1]
            %v1693 = vmul.f32 %v1692, 0.03125
            %v1694 = vmul.f32 %v1691, %v1691
            %v1695 = vsub.f32 %v1693, %v1694
            %v1696 = vmax.f32 %v1695, 0.0
            %v1697 = vld [vmem:[#allocation37] sm:$0x1]
            %v1698 = vadd.f32 %v1696, 1e-05
            %v1699 = vrsqrt.pop %v1698
            %v1700 = vmul.f32 %v1697, %v1699
            %v1701 = vld [vmem:[#allocation39] sm:$0x1]
            %v1702 = vmul.f32 %v1691, %v1700
            %v1703 = vsub.f32 %v1701, %v1702
            %1704 = vst [vmem:[#allocation14] sm:$0x1] %v1703
            %v1705 = vld [vmem:[#allocation36] sm:$0xf]
            %v1706 = vld [vmem:[#allocation36 + $0x4] sm:$0xf]
            %v1707 = vld [vmem:[#allocation36 + $0x8] sm:$0xf]
            %v1708 = vld [vmem:[#allocation36 + $0xc] sm:$0xf]
            %v1709 = vld [vmem:[#allocation36 + $0x10] sm:$0xf]
            %v1710 = vld [vmem:[#allocation36 + $0x14] sm:$0xf]
            %v1711 = vld [vmem:[#allocation36 + $0x18] sm:$0xf]
            %v1712 = vld [vmem:[#allocation36 + $0x1c] sm:$0xf]
            %v1713 = vld [vmem:[#allocation36 + $0x20] sm:$0xf]
            %v1714 = vld [vmem:[#allocation36 + $0x24] sm:$0xf]
            %v1715 = vld [vmem:[#allocation36 + $0x28] sm:$0xf]
            %v1716 = vld [vmem:[#allocation36 + $0x2c] sm:$0xf]
            %v1717 = vld [vmem:[#allocation36 + $0x30] sm:$0xf]
            %v1718 = vld [vmem:[#allocation36 + $0x34] sm:$0xf]
            %v1719 = vld [vmem:[#allocation36 + $0x38] sm:$0xf]
            %v1720 = vld [vmem:[#allocation36 + $0x3c] sm:$0xf]
            %v1721 = vunpack.c.l.bf16 %v1705
            %v1722 = vunpack.c.l.bf16 %v1706
            %v1723 = vunpack.c.l.bf16 %v1707
            %v1724 = vunpack.c.l.bf16 %v1708
            %v1725 = vunpack.c.l.bf16 %v1709
            %v1726 = vunpack.c.l.bf16 %v1710
            %v1727 = vunpack.c.l.bf16 %v1711
            %v1728 = vunpack.c.l.bf16 %v1712
            %v1729 = vunpack.c.l.bf16 %v1713
            %v1730 = vunpack.c.l.bf16 %v1714
            %v1731 = vunpack.c.l.bf16 %v1715
            %v1732 = vunpack.c.l.bf16 %v1716
            %v1733 = vunpack.c.l.bf16 %v1717
            %v1734 = vunpack.c.l.bf16 %v1718
            %v1735 = vunpack.c.l.bf16 %v1719
            %v1736 = vunpack.c.l.bf16 %v1720
            %v1738 = vlaneseq
            %v1739 = vshrl.u32 %v1738, 7
            %v1740 = vsub.s32 0, %v1739
            %v1741 = vrot.slane %v1700, %v1740
            %v1743 = vmul.f32 %v1721, %v1741
            %v1744 = vmul.f32 %v1722, %v1741
            %v1745 = vmul.f32 %v1723, %v1741
            %v1746 = vmul.f32 %v1724, %v1741
            %v1747 = vmul.f32 %v1725, %v1741
            %v1748 = vmul.f32 %v1726, %v1741
            %v1749 = vmul.f32 %v1727, %v1741
            %v1750 = vmul.f32 %v1728, %v1741
            %v1751 = vmul.f32 %v1729, %v1741
            %v1752 = vmul.f32 %v1730, %v1741
            %v1753 = vmul.f32 %v1731, %v1741
            %v1754 = vmul.f32 %v1732, %v1741
            %v1755 = vmul.f32 %v1733, %v1741
            %v1756 = vmul.f32 %v1734, %v1741
            %v1757 = vmul.f32 %v1735, %v1741
            %v1758 = vmul.f32 %v1736, %v1741
            %v1759 = vpack.c.bf16 %v1744, %v1743
            %v1760 = vpack.c.bf16 %v1746, %v1745
            %v1761 = vpack.c.bf16 %v1748, %v1747
            %v1762 = vpack.c.bf16 %v1750, %v1749
            %v1763 = vpack.c.bf16 %v1752, %v1751
            %v1764 = vpack.c.bf16 %v1754, %v1753
            %v1765 = vpack.c.bf16 %v1756, %v1755
            %v1766 = vpack.c.bf16 %v1758, %v1757
            %1767 = vst [vmem:[#allocation19] sm:$0xff] %v1759
            %1768 = vst [vmem:[#allocation19 + $0x8] sm:$0xff] %v1760
            %1769 = vst [vmem:[#allocation19 + $0x10] sm:$0xff] %v1761
            %1770 = vst [vmem:[#allocation19 + $0x18] sm:$0xff] %v1762
            %1771 = vst [vmem:[#allocation19 + $0x20] sm:$0xff] %v1763
            %1772 = vst [vmem:[#allocation19 + $0x28] sm:$0xff] %v1764
            %1773 = vst [vmem:[#allocation19 + $0x30] sm:$0xff] %v1765
            %1774 = vst [vmem:[#allocation19 + $0x38] sm:$0xff] %v1766
          $region224: #{tpu_custom_call.1} parent=215 // pred_fallthru
            _
        $region216: #{tpu_custom_call.1} parent=103 // pred_fallthru
          _
        %p1775 = scmp.eq.s32.totalorder %s49, 3
        // Predicated region
        $region225: #{tpu_custom_call.1} parent=103 // pred_check
          %p1776 = pneg %p1775
        $region226: #{tpu_custom_call.1} parent=103 // pred_check_branch
          %1778 = sbr.rel (%p1776) target = $region228
        $region227: #{tpu_custom_call.1} parent=103 // pred_region
          // Predicated region
          $region229: #{tpu_custom_call.1} parent=227 // pred_check
            %p1779 = pneg %p922
          $region230: #{tpu_custom_call.1} parent=227 // pred_check_branch
            %1781 = sbr.rel (%p1779) target = $region232
          $region231: #{tpu_custom_call.1} parent=227 // pred_region
            %v1782 = vlaneseq
            %vm1783 = vcmp.ge.s32.totalorder %v1782, 0
            %vm1784 = vcmp.lt.s32.totalorder %v1782, 256
            %vm1785 = vmand %vm1783, %vm1784
            %1786 = vst.msk [vmem:[#allocation5] sm:$0x3] %vm1785, 0.0
            %1787 = vst.msk [vmem:[#allocation10] sm:$0x3] %vm1785, 0.0
          $region232: #{tpu_custom_call.1} parent=227 // pred_fallthru
            _
          %v1788 = vld [vmem:[#allocation17] sm:$0xf]
          %v1789 = vld [vmem:[#allocation12] sm:$0x1]
          %v1791 = vlaneseq
          %v1792 = vshrl.u32 %v1791, 7
          %v1793 = vsub.s32 0, %v1792
          %v1794 = vrot.slane %v1789, %v1793
          %v1800 = vunpack.c.l.b16 %v963
          %v1801 = vunpack.c.l.b16 %v964
          %v1802 = vunpack.c.l.b16 %v965
          %v1803 = vunpack.c.l.b16 %v966
          %v1804 = vpack.c.b16 %v1801, %v1800
          %v1805 = vpack.c.b16 %v1803, %v1802
          %vm1806 = vcmask 64512
          %v1808 = vsel %vm1806, %v1804, 0
          %v1811 = vsel %vm1806, %v1805, 0
          %vm1813 = vcmask 1043456
          %v1815 = vsel %vm1813, %v1788, 0
          %1817 = vmatprep.subr.bf16.mxu0 0
          %1818 = vmatpush1.bf16.msra.mxu0 %v1815
          %1819 = vmatprep.subr.bf16.mxu0 0
          %1820 = vmatpush1.bf16.msra.mxu0 0
          %1821 = vmatprep.subr.bf16.mxu0 0
          %1822 = vmatpush1.bf16.msra.mxu0 0
          %1823 = vmatprep.subr.bf16.mxu0 0
          %1824 = vmatpush1.bf16.msra.mxu0 0
          %1825 = vmatprep.subr.bf16.mxu0 0
          %1826 = vmatpush1.bf16.msra.mxu0 0
          %1827 = vmatprep.subr.bf16.mxu0 0
          %1828 = vmatpush1.bf16.msra.mxu0 0
          %1829 = vmatprep.subr.bf16.mxu0 0
          %1830 = vmatpush1.bf16.msra.mxu0 0
          %1831 = vmatprep.subr.bf16.mxu0 0
          %1832 = vmatpush1.bf16.msra.mxu0 0
          %1833 = vmatprep.subr.bf16.mxu0 0
          %1834 = vmatpush1.bf16.msra.mxu0 0
          %1835 = vmatprep.subr.bf16.mxu0 0
          %1836 = vmatpush1.bf16.msra.mxu0 0
          %1837 = vmatprep.subr.bf16.mxu0 0
          %1838 = vmatpush1.bf16.msra.mxu0 0
          %1839 = vmatprep.subr.bf16.mxu0 0
          %1840 = vmatpush1.bf16.msra.mxu0 0
          %1841 = vmatprep.subr.bf16.mxu0 0
          %1842 = vmatpush1.bf16.msra.mxu0 0
          %1843 = vmatprep.subr.bf16.mxu0 0
          %1844 = vmatpush1.bf16.msra.mxu0 0
          %1845 = vmatprep.subr.bf16.mxu0 0
          %1846 = vmatpush1.bf16.msra.mxu0 0
          %1847 = vmatprep.subr.bf16.mxu0 0
          %1848 = vmatpush1.bf16.msra.mxu0 0
          %1849 = vmatprep.mubr.bf16.mxu0 0
          %1850 = vmatmul.mubr.bf16.gmra.mrb[0].mxu0 %v1808
          %v1851 = vpop.f32.mrb[0].mxu0
          %v1852 = vadd.f32 %v1794, %v1851
          %v1853 = vpop.f32.mrb[0].mxu0
          %v1854 = vpop.f32.mrb[0].mxu0
          %v1855 = vadd.f32 %v1794, %v1854
          %v1856 = vpop.f32.mrb[0].mxu0
          %1857 = vmatprep.mubr.bf16.mxu0 0
          %1858 = vmatmul.mubr.bf16.gmra.mrb[0].mxu0 %v1811
          %v1859 = vpop.f32.mrb[0].mxu0
          %v1860 = vadd.f32 %v1794, %v1859
          %v1861 = vpop.f32.mrb[0].mxu0
          %v1862 = vpop.f32.mrb[0].mxu0
          %v1863 = vadd.f32 %v1794, %v1862
          %v1864 = vpop.f32.mrb[0].mxu0
          %1865 = vdwg.mxu0
          %v1866 = vmax.f32 %v1852, 0.0
          %v1867 = vmax.f32 %v1855, 0.0
          %v1868 = vmax.f32 %v1860, 0.0
          %v1869 = vmax.f32 %v1863, 0.0
          %v1870 = vpack.c.bf16 %v1867, %v1866
          %v1871 = vpack.c.bf16 %v1869, %v1868
          %v1872 = vld [vmem:[#allocation18] sm:$0xff]
          %v1873 = vld [vmem:[#allocation18 + $0x8] sm:$0xff]
          %v1874 = vld [vmem:[#allocation18 + $0x10] sm:$0xff]
          %v1875 = vld [vmem:[#allocation18 + $0x18] sm:$0xff]
          %v1876 = vld [vmem:[#allocation13] sm:$0x1]
          %v1878 = vlaneseq
          %v1879 = vshrl.u32 %v1878, 7
          %v1880 = vsub.s32 0, %v1879
          %v1881 = vrot.slane %v1876, %v1880
          %vm1883 = vcmask 523264
          %v1885 = vsel %vm1883, %v1870, 0
          %v1888 = vsel %vm1883, %v1871, 0
          %1890 = vmatprep.subr.bf16.mxu0 0
          %1891 = vmatpush1.bf16.msra.mxu0 %v1872
          %1892 = vmatprep.subr.bf16.mxu0 0
          %1893 = vmatpush1.bf16.msra.mxu0 %v1873
          %1894 = vmatprep.subr.bf16.mxu0 0
          %1895 = vmatpush1.bf16.msra.mxu0 %v1874
          %1896 = vmatprep.subr.bf16.mxu0 0
          %1897 = vmatpush1.bf16.msra.mxu0 %v1875
          %1898 = vmatprep.subr.bf16.mxu0 0
          %1899 = vmatpush1.bf16.msra.mxu0 0
          %1900 = vmatprep.subr.bf16.mxu0 0
          %1901 = vmatpush1.bf16.msra.mxu0 0
          %1902 = vmatprep.subr.bf16.mxu0 0
          %1903 = vmatpush1.bf16.msra.mxu0 0
          %1904 = vmatprep.subr.bf16.mxu0 0
          %1905 = vmatpush1.bf16.msra.mxu0 0
          %1906 = vmatprep.subr.bf16.mxu0 0
          %1907 = vmatpush1.bf16.msra.mxu0 0
          %1908 = vmatprep.subr.bf16.mxu0 0
          %1909 = vmatpush1.bf16.msra.mxu0 0
          %1910 = vmatprep.subr.bf16.mxu0 0
          %1911 = vmatpush1.bf16.msra.mxu0 0
          %1912 = vmatprep.subr.bf16.mxu0 0
          %1913 = vmatpush1.bf16.msra.mxu0 0
          %1914 = vmatprep.subr.bf16.mxu0 0
          %1915 = vmatpush1.bf16.msra.mxu0 0
          %1916 = vmatprep.subr.bf16.mxu0 0
          %1917 = vmatpush1.bf16.msra.mxu0 0
          %1918 = vmatprep.subr.bf16.mxu0 0
          %1919 = vmatpush1.bf16.msra.mxu0 0
          %1920 = vmatprep.subr.bf16.mxu0 0
          %1921 = vmatpush1.bf16.msra.mxu0 0
          %1922 = vmatprep.mubr.bf16.mxu0 0
          %1923 = vmatmul.mubr.bf16.gmra.mrb[0].mxu0 %v1885
          %v1924 = vpop.f32.mrb[0].mxu0
          %v1925 = vadd.f32 %v1881, %v1924
          %v1926 = vpop.f32.mrb[0].mxu0
          %v1927 = vpop.f32.mrb[0].mxu0
          %v1928 = vadd.f32 %v1881, %v1927
          %v1929 = vpop.f32.mrb[0].mxu0
          %1930 = vmatprep.mubr.bf16.mxu0 0
          %1931 = vmatmul.mubr.bf16.gmra.mrb[0].mxu0 %v1888
          %v1932 = vpop.f32.mrb[0].mxu0
          %v1933 = vadd.f32 %v1881, %v1932
          %v1934 = vpop.f32.mrb[0].mxu0
          %v1935 = vpop.f32.mrb[0].mxu0
          %v1936 = vadd.f32 %v1881, %v1935
          %v1937 = vpop.f32.mrb[0].mxu0
          %1938 = vdwg.mxu0
          %v1939 = vmax.f32 %v1925, 0.0
          %v1940 = vmax.f32 %v1928, 0.0
          %v1941 = vmax.f32 %v1933, 0.0
          %v1942 = vmax.f32 %v1936, 0.0
          %v1943 = vpack.c.bf16 %v1940, %v1939
          %v1944 = vpack.c.bf16 %v1942, %v1941
          %v1945 = vld [vmem:[#allocation19] sm:$0xff]
          %v1946 = vld [vmem:[#allocation19 + $0x8] sm:$0xff]
          %v1947 = vld [vmem:[#allocation19 + $0x10] sm:$0xff]
          %v1948 = vld [vmem:[#allocation19 + $0x18] sm:$0xff]
          %v1949 = vld [vmem:[#allocation19 + $0x20] sm:$0xff]
          %v1950 = vld [vmem:[#allocation19 + $0x28] sm:$0xff]
          %v1951 = vld [vmem:[#allocation19 + $0x30] sm:$0xff]
          %v1952 = vld [vmem:[#allocation19 + $0x38] sm:$0xff]
          %v1953 = vld [vmem:[#allocation14] sm:$0x1]
          %v1955 = vlaneseq
          %v1956 = vshrl.u32 %v1955, 7
          %v1957 = vsub.s32 0, %v1956
          %v1958 = vrot.slane %v1953, %v1957
          %1960 = vmatprep.subr.bf16.mxu0 0
          %1961 = vmatpush1.bf16.msra.mxu0 %v1945
          %1962 = vmatprep.subr.bf16.mxu0 0
          %1963 = vmatpush1.bf16.msra.mxu0 %v1946
          %1964 = vmatprep.subr.bf16.mxu0 0
          %1965 = vmatpush1.bf16.msra.mxu0 %v1947
          %1966 = vmatprep.subr.bf16.mxu0 0
          %1967 = vmatpush1.bf16.msra.mxu0 %v1948
          %1968 = vmatprep.subr.bf16.mxu0 0
          %1969 = vmatpush1.bf16.msra.mxu0 %v1949
          %1970 = vmatprep.subr.bf16.mxu0 0
          %1971 = vmatpush1.bf16.msra.mxu0 %v1950
          %1972 = vmatprep.subr.bf16.mxu0 0
          %1973 = vmatpush1.bf16.msra.mxu0 %v1951
          %1974 = vmatprep.subr.bf16.mxu0 0
          %1975 = vmatpush1.bf16.msra.mxu0 %v1952
          %1976 = vmatprep.subr.bf16.mxu0 0
          %1977 = vmatpush1.bf16.msra.mxu0 0
          %1978 = vmatprep.subr.bf16.mxu0 0
          %1979 = vmatpush1.bf16.msra.mxu0 0
          %1980 = vmatprep.subr.bf16.mxu0 0
          %1981 = vmatpush1.bf16.msra.mxu0 0
          %1982 = vmatprep.subr.bf16.mxu0 0
          %1983 = vmatpush1.bf16.msra.mxu0 0
          %1984 = vmatprep.subr.bf16.mxu0 0
          %1985 = vmatpush1.bf16.msra.mxu0 0
          %1986 = vmatprep.subr.bf16.mxu0 0
          %1987 = vmatpush1.bf16.msra.mxu0 0
          %1988 = vmatprep.subr.bf16.mxu0 0
          %1989 = vmatpush1.bf16.msra.mxu0 0
          %1990 = vmatprep.subr.bf16.mxu0 0
          %1991 = vmatpush1.bf16.msra.mxu0 0
          %1992 = vmatprep.mubr.bf16.mxu0 0
          %1993 = vmatmul.mubr.bf16.gmra.mrb[0].mxu0 %v1943
          %v1994 = vpop.f32.mrb[0].mxu0
          %v1995 = vadd.f32 %v1958, %v1994
          %v1996 = vpop.f32.mrb[0].mxu0
          %v1997 = vpop.f32.mrb[0].mxu0
          %v1998 = vadd.f32 %v1958, %v1997
          %v1999 = vpop.f32.mrb[0].mxu0
          %2000 = vmatprep.mubr.bf16.mxu0 0
          %2001 = vmatmul.mubr.bf16.gmra.mrb[0].mxu0 %v1944
          %v2002 = vpop.f32.mrb[0].mxu0
          %v2003 = vadd.f32 %v1958, %v2002
          %v2004 = vpop.f32.mrb[0].mxu0
          %v2005 = vpop.f32.mrb[0].mxu0
          %v2006 = vadd.f32 %v1958, %v2005
          %v2007 = vpop.f32.mrb[0].mxu0
          %2008 = vdwg.mxu0
          %v2009 = vmax.f32 %v1995, 0.0
          %v2010 = vmax.f32 %v1998, 0.0
          %v2011 = vmax.f32 %v2003, 0.0
          %v2012 = vmax.f32 %v2006, 0.0
          %v2013 = vpack.c.bf16 %v2010, %v2009
          %v2014 = vpack.c.bf16 %v2012, %v2011
          %v2015 = vld [vmem:[#allocation40] sm:$0xff]
          %v2016 = vld [vmem:[#allocation40 + $0x8] sm:$0xff]
          %v2017 = vld [vmem:[#allocation40 + $0x10] sm:$0xff]
          %v2018 = vld [vmem:[#allocation40 + $0x18] sm:$0xff]
          %v2019 = vld [vmem:[#allocation40 + $0x20] sm:$0xff]
          %v2020 = vld [vmem:[#allocation40 + $0x28] sm:$0xff]
          %v2021 = vld [vmem:[#allocation40 + $0x30] sm:$0xff]
          %v2022 = vld [vmem:[#allocation40 + $0x38] sm:$0xff]
          %v2023 = vld [vmem:[#allocation40 + $0x40] sm:$0xff]
          %v2024 = vld [vmem:[#allocation40 + $0x48] sm:$0xff]
          %v2025 = vld [vmem:[#allocation40 + $0x50] sm:$0xff]
          %v2026 = vld [vmem:[#allocation40 + $0x58] sm:$0xff]
          %v2027 = vld [vmem:[#allocation40 + $0x60] sm:$0xff]
          %v2028 = vld [vmem:[#allocation40 + $0x68] sm:$0xff]
          %v2029 = vld [vmem:[#allocation40 + $0x70] sm:$0xff]
          %v2030 = vld [vmem:[#allocation40 + $0x78] sm:$0xff]
          %v2047 = vunpack.c.l.b16 %v2015
          %v2048 = vunpack.c.h.b16 %v2015
          %v2049 = vunpack.c.l.b16 %v2016
          %v2050 = vunpack.c.h.b16 %v2016
          %v2051 = vunpack.c.l.b16 %v2017
          %v2052 = vunpack.c.h.b16 %v2017
          %v2053 = vunpack.c.l.b16 %v2018
          %v2054 = vunpack.c.h.b16 %v2018
          %v2055 = vunpack.c.l.b16 %v2019
          %v2056 = vunpack.c.h.b16 %v2019
          %v2057 = vunpack.c.l.b16 %v2020
          %v2058 = vunpack.c.h.b16 %v2020
          %v2059 = vunpack.c.l.b16 %v2021
          %v2060 = vunpack.c.h.b16 %v2021
          %v2061 = vunpack.c.l.b16 %v2022
          %v2062 = vunpack.c.h.b16 %v2022
          %v2063 = vunpack.c.l.b16 %v2023
          %v2064 = vunpack.c.h.b16 %v2023
          %v2065 = vunpack.c.l.b16 %v2024
          %v2066 = vunpack.c.h.b16 %v2024
          %v2067 = vunpack.c.l.b16 %v2025
          %v2068 = vunpack.c.h.b16 %v2025
          %v2069 = vunpack.c.l.b16 %v2026
          %v2070 = vunpack.c.h.b16 %v2026
          %v2071 = vunpack.c.l.b16 %v2027
          %v2072 = vunpack.c.h.b16 %v2027
          %v2073 = vunpack.c.l.b16 %v2028
          %v2074 = vunpack.c.h.b16 %v2028
          %v2075 = vunpack.c.l.b16 %v2029
          %v2076 = vunpack.c.h.b16 %v2029
          %v2077 = vunpack.c.l.b16 %v2030
          %v2078 = vunpack.c.h.b16 %v2030
          %v2079 = vpack.c.b16 %v2049, %v2047
          %v2080 = vpack.c.b16 %v2050, %v2048
          %v2081 = vpack.c.b16 %v2053, %v2051
          %v2082 = vpack.c.b16 %v2054, %v2052
          %v2083 = vpack.c.b16 %v2057, %v2055
          %v2084 = vpack.c.b16 %v2058, %v2056
          %v2085 = vpack.c.b16 %v2061, %v2059
          %v2086 = vpack.c.b16 %v2062, %v2060
          %v2087 = vpack.c.b16 %v2065, %v2063
          %v2088 = vpack.c.b16 %v2066, %v2064
          %v2089 = vpack.c.b16 %v2069, %v2067
          %v2090 = vpack.c.b16 %v2070, %v2068
          %v2091 = vpack.c.b16 %v2073, %v2071
          %v2092 = vpack.c.b16 %v2074, %v2072
          %v2093 = vpack.c.b16 %v2077, %v2075
          %v2094 = vpack.c.b16 %v2078, %v2076
          %2111 = vmatprep.subr.bf16.mxu0 %v2080
          %2112 = vmatpush1.bf16.msra.mxu0 %v2079
          %2113 = vmatprep.subr.bf16.mxu0 %v2082
          %2114 = vmatpush1.bf16.msra.mxu0 %v2081
          %2115 = vmatprep.subr.bf16.mxu0 %v2084
          %2116 = vmatpush1.bf16.msra.mxu0 %v2083
          %2117 = vmatprep.subr.bf16.mxu0 %v2086
          %2118 = vmatpush1.bf16.msra.mxu0 %v2085
          %2119 = vmatprep.subr.bf16.mxu0 %v2088
          %2120 = vmatpush1.bf16.msra.mxu0 %v2087
          %2121 = vmatprep.subr.bf16.mxu0 %v2090
          %2122 = vmatpush1.bf16.msra.mxu0 %v2089
          %2123 = vmatprep.subr.bf16.mxu0 %v2092
          %2124 = vmatpush1.bf16.msra.mxu0 %v2091
          %2125 = vmatprep.subr.bf16.mxu0 %v2094
          %2126 = vmatpush1.bf16.msra.mxu0 %v2093
          %2127 = vmatprep.subr.bf16.mxu0 0
          %2128 = vmatpush1.bf16.msra.mxu0 0
          %2129 = vmatprep.subr.bf16.mxu0 0
          %2130 = vmatpush1.bf16.msra.mxu0 0
          %2131 = vmatprep.subr.bf16.mxu0 0
          %2132 = vmatpush1.bf16.msra.mxu0 0
          %2133 = vmatprep.subr.bf16.mxu0 0
          %2134 = vmatpush1.bf16.msra.mxu0 0
          %2135 = vmatprep.subr.bf16.mxu0 0
          %2136 = vmatpush1.bf16.msra.mxu0 0
          %2137 = vmatprep.subr.bf16.mxu0 0
          %2138 = vmatpush1.bf16.msra.mxu0 0
          %2139 = vmatprep.subr.bf16.mxu0 0
          %2140 = vmatpush1.bf16.msra.mxu0 0
          %2141 = vmatprep.subr.bf16.mxu0 0
          %2142 = vmatpush1.bf16.msra.mxu0 0
          %2143 = vmatprep.mubr.bf16.mxu0 0
          %2144 = vmatmul.mubr.bf16.gmra.mrb[0].mxu0 %v2013
          %v2145 = vpop.f32.mrb[0].mxu0
          %v2146 = vadd.f32 0.0, %v2145
          %v2147 = vpop.f32.mrb[0].mxu0
          %v2148 = vadd.f32 0.0, %v2147
          %v2149 = vpop.f32.mrb[0].mxu0
          %v2150 = vadd.f32 0.0, %v2149
          %v2151 = vpop.f32.mrb[0].mxu0
          %v2152 = vadd.f32 0.0, %v2151
          %2153 = vmatprep.mubr.bf16.mxu0 0
          %2154 = vmatmul.mubr.bf16.gmra.mrb[0].mxu0 %v2014
          %v2155 = vpop.f32.mrb[0].mxu0
          %v2156 = vadd.f32 0.0, %v2155
          %v2157 = vpop.f32.mrb[0].mxu0
          %v2158 = vadd.f32 0.0, %v2157
          %v2159 = vpop.f32.mrb[0].mxu0
          %v2160 = vadd.f32 0.0, %v2159
          %v2161 = vpop.f32.mrb[0].mxu0
          %v2162 = vadd.f32 0.0, %v2161
          %2163 = vdwg.mxu0
          %v2164 = vld [vmem:[#allocation5] sm:$0x3]
          %v2165 = vadd.f32 %v2146, %v2150
          %v2166 = vadd.f32 %v2165, %v2156
          %v2167 = vadd.f32 %v2166, %v2160
          %v2168 = vrot.slane %v2167, 4
          %v2169 = vadd.f32 %v2167, %v2168
          %v2170 = vrot.slane %v2169, 2
          %v2171 = vadd.f32 %v2169, %v2170
          %v2172 = vrot.slane %v2171, 1
          %v2173 = vadd.f32 %v2171, %v2172
          %v2174 = vadd.f32 %v2148, %v2152
          %v2175 = vadd.f32 %v2174, %v2158
          %v2176 = vadd.f32 %v2175, %v2162
          %v2177 = vrot.slane %v2176, 4
          %v2178 = vadd.f32 %v2176, %v2177
          %v2179 = vrot.slane %v2178, 2
          %v2180 = vadd.f32 %v2178, %v2179
          %v2181 = vrot.slane %v2180, 1
          %v2182 = vadd.f32 %v2180, %v2181
          %v2185 = vcombine.low %v2173, %v2182
          %v2187 = vunpack.c.l.s4 1966171168
          %v2188 = vunpack.c.0.s8 %v2187
          %v2189 = vlaneseq
          %v2190 = vshrl.u32 %v2189, 7
          %v2191 = vsub.s32 %v2188, %v2190
          %v2192 = vrot.slane %v2185, %v2191
          %v2194 = vunpack.c.l.s4 1966171168
          %v2195 = vunpack.c.0.s8 %v2194
          %v2196 = vlaneseq
          %v2197 = vshrl.u32 %v2196, 7
          %v2198 = vsub.s32 %v2195, %v2197
          %v2199 = vrot.slane %v2192, %v2198
          %v2201 = vadd.f32 %v2164, %v2199
          %v2202 = vlaneseq
          %vm2203 = vcmp.ge.s32.totalorder %v2202, 0
          %vm2204 = vcmp.lt.s32.totalorder %v2202, 256
          %vm2205 = vmand %vm2203, %vm2204
          %2206 = vst.msk [vmem:[#allocation5] sm:$0x3] %vm2205, %v2201
          %v2207 = vld [vmem:[#allocation10] sm:$0x3]
          %v2208 = vmul.f32 %v2146, %v2146
          %v2209 = vmul.f32 %v2148, %v2148
          %v2210 = vmul.f32 %v2150, %v2150
          %v2211 = vmul.f32 %v2152, %v2152
          %v2212 = vmul.f32 %v2156, %v2156
          %v2213 = vmul.f32 %v2158, %v2158
          %v2214 = vmul.f32 %v2160, %v2160
          %v2215 = vmul.f32 %v2162, %v2162
          %v2216 = vadd.f32 %v2208, %v2210
          %v2217 = vadd.f32 %v2216, %v2212
          %v2218 = vadd.f32 %v2217, %v2214
          %v2219 = vrot.slane %v2218, 4
          %v2220 = vadd.f32 %v2218, %v2219
          %v2221 = vrot.slane %v2220, 2
          %v2222 = vadd.f32 %v2220, %v2221
          %v2223 = vrot.slane %v2222, 1
          %v2224 = vadd.f32 %v2222, %v2223
          %v2225 = vadd.f32 %v2209, %v2211
          %v2226 = vadd.f32 %v2225, %v2213
          %v2227 = vadd.f32 %v2226, %v2215
          %v2228 = vrot.slane %v2227, 4
          %v2229 = vadd.f32 %v2227, %v2228
          %v2230 = vrot.slane %v2229, 2
          %v2231 = vadd.f32 %v2229, %v2230
          %v2232 = vrot.slane %v2231, 1
          %v2233 = vadd.f32 %v2231, %v2232
          %v2236 = vcombine.low %v2224, %v2233
          %v2238 = vunpack.c.l.s4 1966171168
          %v2239 = vunpack.c.0.s8 %v2238
          %v2240 = vlaneseq
          %v2241 = vshrl.u32 %v2240, 7
          %v2242 = vsub.s32 %v2239, %v2241
          %v2243 = vrot.slane %v2236, %v2242
          %v2245 = vunpack.c.l.s4 1966171168
          %v2246 = vunpack.c.0.s8 %v2245
          %v2247 = vlaneseq
          %v2248 = vshrl.u32 %v2247, 7
          %v2249 = vsub.s32 %v2246, %v2248
          %v2250 = vrot.slane %v2243, %v2249
          %v2252 = vadd.f32 %v2207, %v2250
          %2253 = vst.msk [vmem:[#allocation10] sm:$0x3] %vm2205, %v2252
          // Predicated region
          $region233: #{tpu_custom_call.1} parent=227 // pred_check
            %p2254 = pneg %p922
          $region234: #{tpu_custom_call.1} parent=227 // pred_check_branch
            %2256 = sbr.rel (%p2254) target = $region236
          $region235: #{tpu_custom_call.1} parent=227 // pred_region
            %v2257 = vld [vmem:[#allocation5] sm:$0x3]
            %v2258 = vmul.f32 %v2257, 0.03125
            %v2259 = vld [vmem:[#allocation10] sm:$0x3]
            %v2260 = vmul.f32 %v2259, 0.03125
            %v2261 = vmul.f32 %v2258, %v2258
            %v2262 = vsub.f32 %v2260, %v2261
            %v2263 = vmax.f32 %v2262, 0.0
            %v2264 = vld [vmem:[#allocation42] sm:$0x3]
            %v2265 = vadd.f32 %v2263, 1e-05
            %v2266 = vrsqrt.pop %v2265
            %v2267 = vmul.f32 %v2264, %v2266
            %v2268 = vld [vmem:[#allocation43] sm:$0x3]
            %v2269 = vmul.f32 %v2258, %v2267
            %v2270 = vsub.f32 %v2268, %v2269
            %2271 = vst.msk [vmem:[#allocation15] sm:$0x3] %vm2205, %v2270
            %v2272 = vld [vmem:[#allocation40] sm:$0xff]
            %v2273 = vld [vmem:[#allocation40 + $0x8] sm:$0xff]
            %v2274 = vld [vmem:[#allocation40 + $0x10] sm:$0xff]
            %v2275 = vld [vmem:[#allocation40 + $0x18] sm:$0xff]
            %v2276 = vld [vmem:[#allocation40 + $0x20] sm:$0xff]
            %v2277 = vld [vmem:[#allocation40 + $0x28] sm:$0xff]
            %v2278 = vld [vmem:[#allocation40 + $0x30] sm:$0xff]
            %v2279 = vld [vmem:[#allocation40 + $0x38] sm:$0xff]
            %v2280 = vld [vmem:[#allocation40 + $0x40] sm:$0xff]
            %v2281 = vld [vmem:[#allocation40 + $0x48] sm:$0xff]
            %v2282 = vld [vmem:[#allocation40 + $0x50] sm:$0xff]
            %v2283 = vld [vmem:[#allocation40 + $0x58] sm:$0xff]
            %v2284 = vld [vmem:[#allocation40 + $0x60] sm:$0xff]
            %v2285 = vld [vmem:[#allocation40 + $0x68] sm:$0xff]
            %v2286 = vld [vmem:[#allocation40 + $0x70] sm:$0xff]
            %v2287 = vld [vmem:[#allocation40 + $0x78] sm:$0xff]
            %v2288 = vunpack.c.l.bf16 %v2272
            %v2289 = vunpack.c.h.bf16 %v2272
            %v2290 = vunpack.c.l.bf16 %v2273
            %v2291 = vunpack.c.h.bf16 %v2273
            %v2292 = vunpack.c.l.bf16 %v2274
            %v2293 = vunpack.c.h.bf16 %v2274
            %v2294 = vunpack.c.l.bf16 %v2275
            %v2295 = vunpack.c.h.bf16 %v2275
            %v2296 = vunpack.c.l.bf16 %v2276
            %v2297 = vunpack.c.h.bf16 %v2276
            %v2298 = vunpack.c.l.bf16 %v2277
            %v2299 = vunpack.c.h.bf16 %v2277
            %v2300 = vunpack.c.l.bf16 %v2278
            %v2301 = vunpack.c.h.bf16 %v2278
            %v2302 = vunpack.c.l.bf16 %v2279
            %v2303 = vunpack.c.h.bf16 %v2279
            %v2304 = vunpack.c.l.bf16 %v2280
            %v2305 = vunpack.c.h.bf16 %v2280
            %v2306 = vunpack.c.l.bf16 %v2281
            %v2307 = vunpack.c.h.bf16 %v2281
            %v2308 = vunpack.c.l.bf16 %v2282
            %v2309 = vunpack.c.h.bf16 %v2282
            %v2310 = vunpack.c.l.bf16 %v2283
            %v2311 = vunpack.c.h.bf16 %v2283
            %v2312 = vunpack.c.l.bf16 %v2284
            %v2313 = vunpack.c.h.bf16 %v2284
            %v2314 = vunpack.c.l.bf16 %v2285
            %v2315 = vunpack.c.h.bf16 %v2285
            %v2316 = vunpack.c.l.bf16 %v2286
            %v2317 = vunpack.c.h.bf16 %v2286
            %v2318 = vunpack.c.l.bf16 %v2287
            %v2319 = vunpack.c.h.bf16 %v2287
            %v2321 = vlaneseq
            %v2322 = vshrl.u32 %v2321, 7
            %v2323 = vsub.s32 0, %v2322
            %v2324 = vrot.slane %v2267, %v2323
            %v2325 = vlaneseq
            %v2326 = vshrl.u32 %v2325, 7
            %v2327 = vsub.s32 1, %v2326
            %v2328 = vrot.slane %v2267, %v2327
            %v2331 = vmul.f32 %v2288, %v2324
            %v2332 = vmul.f32 %v2289, %v2328
            %v2333 = vmul.f32 %v2290, %v2324
            %v2334 = vmul.f32 %v2291, %v2328
            %v2335 = vmul.f32 %v2292, %v2324
            %v2336 = vmul.f32 %v2293, %v2328
            %v2337 = vmul.f32 %v2294, %v2324
            %v2338 = vmul.f32 %v2295, %v2328
            %v2339 = vmul.f32 %v2296, %v2324
            %v2340 = vmul.f32 %v2297, %v2328
            %v2341 = vmul.f32 %v2298, %v2324
            %v2342 = vmul.f32 %v2299, %v2328
            %v2343 = vmul.f32 %v2300, %v2324
            %v2344 = vmul.f32 %v2301, %v2328
            %v2345 = vmul.f32 %v2302, %v2324
            %v2346 = vmul.f32 %v2303, %v2328
            %v2347 = vmul.f32 %v2304, %v2324
            %v2348 = vmul.f32 %v2305, %v2328
            %v2349 = vmul.f32 %v2306, %v2324
            %v2350 = vmul.f32 %v2307, %v2328
            %v2351 = vmul.f32 %v2308, %v2324
            %v2352 = vmul.f32 %v2309, %v2328
            %v2353 = vmul.f32 %v2310, %v2324
            %v2354 = vmul.f32 %v2311, %v2328
            %v2355 = vmul.f32 %v2312, %v2324
            %v2356 = vmul.f32 %v2313, %v2328
            %v2357 = vmul.f32 %v2314, %v2324
            %v2358 = vmul.f32 %v2315, %v2328
            %v2359 = vmul.f32 %v2316, %v2324
            %v2360 = vmul.f32 %v2317, %v2328
            %v2361 = vmul.f32 %v2318, %v2324
            %v2362 = vmul.f32 %v2319, %v2328
            %v2363 = vpack.c.bf16 %v2333, %v2331
            %v2364 = vpack.c.bf16 %v2334, %v2332
            %v2365 = vpack.c.bf16 %v2337, %v2335
            %v2366 = vpack.c.bf16 %v2338, %v2336
            %v2367 = vpack.c.bf16 %v2341, %v2339
            %v2368 = vpack.c.bf16 %v2342, %v2340
            %v2369 = vpack.c.bf16 %v2345, %v2343
            %v2370 = vpack.c.bf16 %v2346, %v2344
            %v2371 = vpack.c.bf16 %v2349, %v2347
            %v2372 = vpack.c.bf16 %v2350, %v2348
            %v2373 = vpack.c.bf16 %v2353, %v2351
            %v2374 = vpack.c.bf16 %v2354, %v2352
            %v2375 = vpack.c.bf16 %v2357, %v2355
            %v2376 = vpack.c.bf16 %v2358, %v2356
            %v2377 = vpack.c.bf16 %v2361, %v2359
            %v2378 = vpack.c.bf16 %v2362, %v2360
            %2379 = vst [vmem:[#allocation20] sm:$0xff] %v2363
            %2380 = vst [vmem:[#allocation20 + $0x8] sm:$0xff] %v2364
            %2381 = vst [vmem:[#allocation20 + $0x10] sm:$0xff] %v2365
            %2382 = vst [vmem:[#allocation20 + $0x18] sm:$0xff] %v2366
            %2383 = vst [vmem:[#allocation20 + $0x20] sm:$0xff] %v2367
            %2384 = vst [vmem:[#allocation20 + $0x28] sm:$0xff] %v2368
            %2385 = vst [vmem:[#allocation20 + $0x30] sm:$0xff] %v2369
            %2386 = vst [vmem:[#allocation20 + $0x38] sm:$0xff] %v2370
            %2387 = vst [vmem:[#allocation20 + $0x40] sm:$0xff] %v2371
            %2388 = vst [vmem:[#allocation20 + $0x48] sm:$0xff] %v2372
            %2389 = vst [vmem:[#allocation20 + $0x50] sm:$0xff] %v2373
            %2390 = vst [vmem:[#allocation20 + $0x58] sm:$0xff] %v2374
            %2391 = vst [vmem:[#allocation20 + $0x60] sm:$0xff] %v2375
            %2392 = vst [vmem:[#allocation20 + $0x68] sm:$0xff] %v2376
            %2393 = vst [vmem:[#allocation20 + $0x70] sm:$0xff] %v2377
            %2394 = vst [vmem:[#allocation20 + $0x78] sm:$0xff] %v2378
          $region236: #{tpu_custom_call.1} parent=227 // pred_fallthru
            _
        $region228: #{tpu_custom_call.1} parent=103 // pred_fallthru
          _
        %p2395 = scmp.eq.s32.totalorder %s49, 4
        // Predicated region
        $region237: #{tpu_custom_call.1} parent=103 // pred_check
          %p2396 = pneg %p2395
        $region238: #{tpu_custom_call.1} parent=103 // pred_check_branch
          %2398 = sbr.rel (%p2396) target = $region240
        $region239: #{tpu_custom_call.1} parent=103 // pred_region
          // Predicated region
          $region241: #{tpu_custom_call.1} parent=239 // pred_check
            %p2399 = pneg %p922
          $region242: #{tpu_custom_call.1} parent=239 // pred_check_branch
            %2401 = sbr.rel (%p2399) target = $region244
          $region243: #{tpu_custom_call.1} parent=239 // pred_region
            %2402 = vst [vmem:[#allocation6] sm:$0x1] 0.0
            %2403 = vst [vmem:[#allocation11] sm:$0x1] 0.0
          $region244: #{tpu_custom_call.1} parent=239 // pred_fallthru
            _
          %v2404 = vld [vmem:[#allocation17] sm:$0xf]
          %v2405 = vld [vmem:[#allocation12] sm:$0x1]
          %v2407 = vlaneseq
          %v2408 = vshrl.u32 %v2407, 7
          %v2409 = vsub.s32 0, %v2408
          %v2410 = vrot.slane %v2405, %v2409
          %v2416 = vunpack.c.l.b16 %v963
          %v2417 = vunpack.c.l.b16 %v964
          %v2418 = vunpack.c.l.b16 %v965
          %v2419 = vunpack.c.l.b16 %v966
          %v2420 = vpack.c.b16 %v2417, %v2416
          %v2421 = vpack.c.b16 %v2419, %v2418
          %vm2422 = vcmask 64512
          %v2424 = vsel %vm2422, %v2420, 0
          %v2427 = vsel %vm2422, %v2421, 0
          %vm2429 = vcmask 1043456
          %v2431 = vsel %vm2429, %v2404, 0
          %2433 = vmatprep.subr.bf16.mxu0 0
          %2434 = vmatpush1.bf16.msra.mxu0 %v2431
          %2435 = vmatprep.subr.bf16.mxu0 0
          %2436 = vmatpush1.bf16.msra.mxu0 0
          %2437 = vmatprep.subr.bf16.mxu0 0
          %2438 = vmatpush1.bf16.msra.mxu0 0
          %2439 = vmatprep.subr.bf16.mxu0 0
          %2440 = vmatpush1.bf16.msra.mxu0 0
          %2441 = vmatprep.subr.bf16.mxu0 0
          %2442 = vmatpush1.bf16.msra.mxu0 0
          %2443 = vmatprep.subr.bf16.mxu0 0
          %2444 = vmatpush1.bf16.msra.mxu0 0
          %2445 = vmatprep.subr.bf16.mxu0 0
          %2446 = vmatpush1.bf16.msra.mxu0 0
          %2447 = vmatprep.subr.bf16.mxu0 0
          %2448 = vmatpush1.bf16.msra.mxu0 0
          %2449 = vmatprep.subr.bf16.mxu0 0
          %2450 = vmatpush1.bf16.msra.mxu0 0
          %2451 = vmatprep.subr.bf16.mxu0 0
          %2452 = vmatpush1.bf16.msra.mxu0 0
          %2453 = vmatprep.subr.bf16.mxu0 0
          %2454 = vmatpush1.bf16.msra.mxu0 0
          %2455 = vmatprep.subr.bf16.mxu0 0
          %2456 = vmatpush1.bf16.msra.mxu0 0
          %2457 = vmatprep.subr.bf16.mxu0 0
          %2458 = vmatpush1.bf16.msra.mxu0 0
          %2459 = vmatprep.subr.bf16.mxu0 0
          %2460 = vmatpush1.bf16.msra.mxu0 0
          %2461 = vmatprep.subr.bf16.mxu0 0
          %2462 = vmatpush1.bf16.msra.mxu0 0
          %2463 = vmatprep.subr.bf16.mxu0 0
          %2464 = vmatpush1.bf16.msra.mxu0 0
          %2465 = vmatprep.mubr.bf16.mxu0 0
          %2466 = vmatmul.mubr.bf16.gmra.mrb[0].mxu0 %v2424
          %v2467 = vpop.f32.mrb[0].mxu0
          %v2468 = vadd.f32 %v2410, %v2467
          %v2469 = vpop.f32.mrb[0].mxu0
          %v2470 = vpop.f32.mrb[0].mxu0
          %v2471 = vadd.f32 %v2410, %v2470
          %v2472 = vpop.f32.mrb[0].mxu0
          %2473 = vmatprep.mubr.bf16.mxu0 0
          %2474 = vmatmul.mubr.bf16.gmra.mrb[0].mxu0 %v2427
          %v2475 = vpop.f32.mrb[0].mxu0
          %v2476 = vadd.f32 %v2410, %v2475
          %v2477 = vpop.f32.mrb[0].mxu0
          %v2478 = vpop.f32.mrb[0].mxu0
          %v2479 = vadd.f32 %v2410, %v2478
          %v2480 = vpop.f32.mrb[0].mxu0
          %2481 = vdwg.mxu0
          %v2482 = vmax.f32 %v2468, 0.0
          %v2483 = vmax.f32 %v2471, 0.0
          %v2484 = vmax.f32 %v2476, 0.0
          %v2485 = vmax.f32 %v2479, 0.0
          %v2486 = vpack.c.bf16 %v2483, %v2482
          %v2487 = vpack.c.bf16 %v2485, %v2484
          %v2488 = vld [vmem:[#allocation18] sm:$0xff]
          %v2489 = vld [vmem:[#allocation18 + $0x8] sm:$0xff]
          %v2490 = vld [vmem:[#allocation18 + $0x10] sm:$0xff]
          %v2491 = vld [vmem:[#allocation18 + $0x18] sm:$0xff]
          %v2492 = vld [vmem:[#allocation13] sm:$0x1]
          %v2494 = vlaneseq
          %v2495 = vshrl.u32 %v2494, 7
          %v2496 = vsub.s32 0, %v2495
          %v2497 = vrot.slane %v2492, %v2496
          %vm2499 = vcmask 523264
          %v2501 = vsel %vm2499, %v2486, 0
          %v2504 = vsel %vm2499, %v2487, 0
          %2506 = vmatprep.subr.bf16.mxu0 0
          %2507 = vmatpush1.bf16.msra.mxu0 %v2488
          %2508 = vmatprep.subr.bf16.mxu0 0
          %2509 = vmatpush1.bf16.msra.mxu0 %v2489
          %2510 = vmatprep.subr.bf16.mxu0 0
          %2511 = vmatpush1.bf16.msra.mxu0 %v2490
          %2512 = vmatprep.subr.bf16.mxu0 0
          %2513 = vmatpush1.bf16.msra.mxu0 %v2491
          %2514 = vmatprep.subr.bf16.mxu0 0
          %2515 = vmatpush1.bf16.msra.mxu0 0
          %2516 = vmatprep.subr.bf16.mxu0 0
          %2517 = vmatpush1.bf16.msra.mxu0 0
          %2518 = vmatprep.subr.bf16.mxu0 0
          %2519 = vmatpush1.bf16.msra.mxu0 0
          %2520 = vmatprep.subr.bf16.mxu0 0
          %2521 = vmatpush1.bf16.msra.mxu0 0
          %2522 = vmatprep.subr.bf16.mxu0 0
          %2523 = vmatpush1.bf16.msra.mxu0 0
          %2524 = vmatprep.subr.bf16.mxu0 0
          %2525 = vmatpush1.bf16.msra.mxu0 0
          %2526 = vmatprep.subr.bf16.mxu0 0
          %2527 = vmatpush1.bf16.msra.mxu0 0
          %2528 = vmatprep.subr.bf16.mxu0 0
          %2529 = vmatpush1.bf16.msra.mxu0 0
          %2530 = vmatprep.subr.bf16.mxu0 0
          %2531 = vmatpush1.bf16.msra.mxu0 0
          %2532 = vmatprep.subr.bf16.mxu0 0
          %2533 = vmatpush1.bf16.msra.mxu0 0
          %2534 = vmatprep.subr.bf16.mxu0 0
          %2535 = vmatpush1.bf16.msra.mxu0 0
          %2536 = vmatprep.subr.bf16.mxu0 0
          %2537 = vmatpush1.bf16.msra.mxu0 0
          %2538 = vmatprep.mubr.bf16.mxu0 0
          %2539 = vmatmul.mubr.bf16.gmra.mrb[0].mxu0 %v2501
          %v2540 = vpop.f32.mrb[0].mxu0
          %v2541 = vadd.f32 %v2497, %v2540
          %v2542 = vpop.f32.mrb[0].mxu0
          %v2543 = vpop.f32.mrb[0].mxu0
          %v2544 = vadd.f32 %v2497, %v2543
          %v2545 = vpop.f32.mrb[0].mxu0
          %2546 = vmatprep.mubr.bf16.mxu0 0
          %2547 = vmatmul.mubr.bf16.gmra.mrb[0].mxu0 %v2504
          %v2548 = vpop.f32.mrb[0].mxu0
          %v2549 = vadd.f32 %v2497, %v2548
          %v2550 = vpop.f32.mrb[0].mxu0
          %v2551 = vpop.f32.mrb[0].mxu0
          %v2552 = vadd.f32 %v2497, %v2551
          %v2553 = vpop.f32.mrb[0].mxu0
          %2554 = vdwg.mxu0
          %v2555 = vmax.f32 %v2541, 0.0
          %v2556 = vmax.f32 %v2544, 0.0
          %v2557 = vmax.f32 %v2549, 0.0
          %v2558 = vmax.f32 %v2552, 0.0
          %v2559 = vpack.c.bf16 %v2556, %v2555
          %v2560 = vpack.c.bf16 %v2558, %v2557
          %v2561 = vld [vmem:[#allocation19] sm:$0xff]
          %v2562 = vld [vmem:[#allocation19 + $0x8] sm:$0xff]
          %v2563 = vld [vmem:[#allocation19 + $0x10] sm:$0xff]
          %v2564 = vld [vmem:[#allocation19 + $0x18] sm:$0xff]
          %v2565 = vld [vmem:[#allocation19 + $0x20] sm:$0xff]
          %v2566 = vld [vmem:[#allocation19 + $0x28] sm:$0xff]
          %v2567 = vld [vmem:[#allocation19 + $0x30] sm:$0xff]
          %v2568 = vld [vmem:[#allocation19 + $0x38] sm:$0xff]
          %v2569 = vld [vmem:[#allocation14] sm:$0x1]
          %v2571 = vlaneseq
          %v2572 = vshrl.u32 %v2571, 7
          %v2573 = vsub.s32 0, %v2572
          %v2574 = vrot.slane %v2569, %v2573
          %2576 = vmatprep.subr.bf16.mxu0 0
          %2577 = vmatpush1.bf16.msra.mxu0 %v2561
          %2578 = vmatprep.subr.bf16.mxu0 0
          %2579 = vmatpush1.bf16.msra.mxu0 %v2562
          %2580 = vmatprep.subr.bf16.mxu0 0
          %2581 = vmatpush1.bf16.msra.mxu0 %v2563
          %2582 = vmatprep.subr.bf16.mxu0 0
          %2583 = vmatpush1.bf16.msra.mxu0 %v2564
          %2584 = vmatprep.subr.bf16.mxu0 0
          %2585 = vmatpush1.bf16.msra.mxu0 %v2565
          %2586 = vmatprep.subr.bf16.mxu0 0
          %2587 = vmatpush1.bf16.msra.mxu0 %v2566
          %2588 = vmatprep.subr.bf16.mxu0 0
          %2589 = vmatpush1.bf16.msra.mxu0 %v2567
          %2590 = vmatprep.subr.bf16.mxu0 0
          %2591 = vmatpush1.bf16.msra.mxu0 %v2568
          %2592 = vmatprep.subr.bf16.mxu0 0
          %2593 = vmatpush1.bf16.msra.mxu0 0
          %2594 = vmatprep.subr.bf16.mxu0 0
          %2595 = vmatpush1.bf16.msra.mxu0 0
          %2596 = vmatprep.subr.bf16.mxu0 0
          %2597 = vmatpush1.bf16.msra.mxu0 0
          %2598 = vmatprep.subr.bf16.mxu0 0
          %2599 = vmatpush1.bf16.msra.mxu0 0
          %2600 = vmatprep.subr.bf16.mxu0 0
          %2601 = vmatpush1.bf16.msra.mxu0 0
          %2602 = vmatprep.subr.bf16.mxu0 0
          %2603 = vmatpush1.bf16.msra.mxu0 0
          %2604 = vmatprep.subr.bf16.mxu0 0
          %2605 = vmatpush1.bf16.msra.mxu0 0
          %2606 = vmatprep.subr.bf16.mxu0 0
          %2607 = vmatpush1.bf16.msra.mxu0 0
          %2608 = vmatprep.mubr.bf16.mxu0 0
          %2609 = vmatmul.mubr.bf16.gmra.mrb[0].mxu0 %v2559
          %v2610 = vpop.f32.mrb[0].mxu0
          %v2611 = vadd.f32 %v2574, %v2610
          %v2612 = vpop.f32.mrb[0].mxu0
          %v2613 = vpop.f32.mrb[0].mxu0
          %v2614 = vadd.f32 %v2574, %v2613
          %v2615 = vpop.f32.mrb[0].mxu0
          %2616 = vmatprep.mubr.bf16.mxu0 0
          %2617 = vmatmul.mubr.bf16.gmra.mrb[0].mxu0 %v2560
          %v2618 = vpop.f32.mrb[0].mxu0
          %v2619 = vadd.f32 %v2574, %v2618
          %v2620 = vpop.f32.mrb[0].mxu0
          %v2621 = vpop.f32.mrb[0].mxu0
          %v2622 = vadd.f32 %v2574, %v2621
          %v2623 = vpop.f32.mrb[0].mxu0
          %2624 = vdwg.mxu0
          %v2625 = vmax.f32 %v2611, 0.0
          %v2626 = vmax.f32 %v2614, 0.0
          %v2627 = vmax.f32 %v2619, 0.0
          %v2628 = vmax.f32 %v2622, 0.0
          %v2629 = vpack.c.bf16 %v2626, %v2625
          %v2630 = vpack.c.bf16 %v2628, %v2627
          %v2631 = vld [vmem:[#allocation20] sm:$0xff]
          %v2632 = vld [vmem:[#allocation20 + $0x8] sm:$0xff]
          %v2633 = vld [vmem:[#allocation20 + $0x10] sm:$0xff]
          %v2634 = vld [vmem:[#allocation20 + $0x18] sm:$0xff]
          %v2635 = vld [vmem:[#allocation20 + $0x20] sm:$0xff]
          %v2636 = vld [vmem:[#allocation20 + $0x28] sm:$0xff]
          %v2637 = vld [vmem:[#allocation20 + $0x30] sm:$0xff]
          %v2638 = vld [vmem:[#allocation20 + $0x38] sm:$0xff]
          %v2639 = vld [vmem:[#allocation20 + $0x40] sm:$0xff]
          %v2640 = vld [vmem:[#allocation20 + $0x48] sm:$0xff]
          %v2641 = vld [vmem:[#allocation20 + $0x50] sm:$0xff]
          %v2642 = vld [vmem:[#allocation20 + $0x58] sm:$0xff]
          %v2643 = vld [vmem:[#allocation20 + $0x60] sm:$0xff]
          %v2644 = vld [vmem:[#allocation20 + $0x68] sm:$0xff]
          %v2645 = vld [vmem:[#allocation20 + $0x70] sm:$0xff]
          %v2646 = vld [vmem:[#allocation20 + $0x78] sm:$0xff]
          %v2647 = vld [vmem:[#allocation15] sm:$0x3]
          %v2649 = vlaneseq
          %v2650 = vshrl.u32 %v2649, 7
          %v2651 = vsub.s32 0, %v2650
          %v2652 = vrot.slane %v2647, %v2651
          %v2653 = vlaneseq
          %v2654 = vshrl.u32 %v2653, 7
          %v2655 = vsub.s32 1, %v2654
          %v2656 = vrot.slane %v2647, %v2655
          %2659 = vmatprep.subr.bf16.mxu0 %v2632
          %2660 = vmatpush1.bf16.msra.mxu0 %v2631
          %2661 = vmatprep.subr.bf16.mxu0 %v2634
          %2662 = vmatpush1.bf16.msra.mxu0 %v2633
          %2663 = vmatprep.subr.bf16.mxu0 %v2636
          %2664 = vmatpush1.bf16.msra.mxu0 %v2635
          %2665 = vmatprep.subr.bf16.mxu0 %v2638
          %2666 = vmatpush1.bf16.msra.mxu0 %v2637
          %2667 = vmatprep.subr.bf16.mxu0 %v2640
          %2668 = vmatpush1.bf16.msra.mxu0 %v2639
          %2669 = vmatprep.subr.bf16.mxu0 %v2642
          %2670 = vmatpush1.bf16.msra.mxu0 %v2641
          %2671 = vmatprep.subr.bf16.mxu0 %v2644
          %2672 = vmatpush1.bf16.msra.mxu0 %v2643
          %2673 = vmatprep.subr.bf16.mxu0 %v2646
          %2674 = vmatpush1.bf16.msra.mxu0 %v2645
          %2675 = vmatprep.subr.bf16.mxu0 0
          %2676 = vmatpush1.bf16.msra.mxu0 0
          %2677 = vmatprep.subr.bf16.mxu0 0
          %2678 = vmatpush1.bf16.msra.mxu0 0
          %2679 = vmatprep.subr.bf16.mxu0 0
          %2680 = vmatpush1.bf16.msra.mxu0 0
          %2681 = vmatprep.subr.bf16.mxu0 0
          %2682 = vmatpush1.bf16.msra.mxu0 0
          %2683 = vmatprep.subr.bf16.mxu0 0
          %2684 = vmatpush1.bf16.msra.mxu0 0
          %2685 = vmatprep.subr.bf16.mxu0 0
          %2686 = vmatpush1.bf16.msra.mxu0 0
          %2687 = vmatprep.subr.bf16.mxu0 0
          %2688 = vmatpush1.bf16.msra.mxu0 0
          %2689 = vmatprep.subr.bf16.mxu0 0
          %2690 = vmatpush1.bf16.msra.mxu0 0
          %2691 = vmatprep.mubr.bf16.mxu0 0
          %2692 = vmatmul.mubr.bf16.gmra.mrb[0].mxu0 %v2629
          %v2693 = vpop.f32.mrb[0].mxu0
          %v2694 = vadd.f32 %v2652, %v2693
          %v2695 = vpop.f32.mrb[0].mxu0
          %v2696 = vadd.f32 %v2656, %v2695
          %v2697 = vpop.f32.mrb[0].mxu0
          %v2698 = vadd.f32 %v2652, %v2697
          %v2699 = vpop.f32.mrb[0].mxu0
          %v2700 = vadd.f32 %v2656, %v2699
          %2701 = vmatprep.mubr.bf16.mxu0 0
          %2702 = vmatmul.mubr.bf16.gmra.mrb[0].mxu0 %v2630
          %v2703 = vpop.f32.mrb[0].mxu0
          %v2704 = vadd.f32 %v2652, %v2703
          %v2705 = vpop.f32.mrb[0].mxu0
          %v2706 = vadd.f32 %v2656, %v2705
          %v2707 = vpop.f32.mrb[0].mxu0
          %v2708 = vadd.f32 %v2652, %v2707
          %v2709 = vpop.f32.mrb[0].mxu0
          %v2710 = vadd.f32 %v2656, %v2709
          %2711 = vdwg.mxu0
          %v2712 = vmax.f32 %v2694, 0.0
          %v2713 = vmax.f32 %v2696, 0.0
          %v2714 = vmax.f32 %v2698, 0.0
          %v2715 = vmax.f32 %v2700, 0.0
          %v2716 = vmax.f32 %v2704, 0.0
          %v2717 = vmax.f32 %v2706, 0.0
          %v2718 = vmax.f32 %v2708, 0.0
          %v2719 = vmax.f32 %v2710, 0.0
          %v2720 = vpack.c.bf16 %v2714, %v2712
          %v2721 = vpack.c.bf16 %v2715, %v2713
          %v2722 = vpack.c.bf16 %v2718, %v2716
          %v2723 = vpack.c.bf16 %v2719, %v2717
          %v2724 = vld [vmem:[#allocation45] sm:$0xf]
          %v2725 = vld [vmem:[#allocation45 + $0x4] sm:$0xf]
          %v2726 = vld [vmem:[#allocation45 + $0x8] sm:$0xf]
          %v2727 = vld [vmem:[#allocation45 + $0xc] sm:$0xf]
          %v2728 = vld [vmem:[#allocation45 + $0x10] sm:$0xf]
          %v2729 = vld [vmem:[#allocation45 + $0x14] sm:$0xf]
          %v2730 = vld [vmem:[#allocation45 + $0x18] sm:$0xf]
          %v2731 = vld [vmem:[#allocation45 + $0x1c] sm:$0xf]
          %v2732 = vld [vmem:[#allocation45 + $0x20] sm:$0xf]
          %v2733 = vld [vmem:[#allocation45 + $0x24] sm:$0xf]
          %v2734 = vld [vmem:[#allocation45 + $0x28] sm:$0xf]
          %v2735 = vld [vmem:[#allocation45 + $0x2c] sm:$0xf]
          %v2736 = vld [vmem:[#allocation45 + $0x30] sm:$0xf]
          %v2737 = vld [vmem:[#allocation45 + $0x34] sm:$0xf]
          %v2738 = vld [vmem:[#allocation45 + $0x38] sm:$0xf]
          %v2739 = vld [vmem:[#allocation45 + $0x3c] sm:$0xf]
          %v2740 = vld [vmem:[#allocation45 + $0x40] sm:$0xf]
          %v2741 = vld [vmem:[#allocation45 + $0x44] sm:$0xf]
          %v2742 = vld [vmem:[#allocation45 + $0x48] sm:$0xf]
          %v2743 = vld [vmem:[#allocation45 + $0x4c] sm:$0xf]
          %v2744 = vld [vmem:[#allocation45 + $0x50] sm:$0xf]
          %v2745 = vld [vmem:[#allocation45 + $0x54] sm:$0xf]
          %v2746 = vld [vmem:[#allocation45 + $0x58] sm:$0xf]
          %v2747 = vld [vmem:[#allocation45 + $0x5c] sm:$0xf]
          %v2748 = vld [vmem:[#allocation45 + $0x60] sm:$0xf]
          %v2749 = vld [vmem:[#allocation45 + $0x64] sm:$0xf]
          %v2750 = vld [vmem:[#allocation45 + $0x68] sm:$0xf]
          %v2751 = vld [vmem:[#allocation45 + $0x6c] sm:$0xf]
          %v2752 = vld [vmem:[#allocation45 + $0x70] sm:$0xf]
          %v2753 = vld [vmem:[#allocation45 + $0x74] sm:$0xf]
          %v2754 = vld [vmem:[#allocation45 + $0x78] sm:$0xf]
          %v2755 = vld [vmem:[#allocation45 + $0x7c] sm:$0xf]
          %v2788 = vunpack.c.l.b16 %v2724
          %v2789 = vunpack.c.l.b16 %v2725
          %v2790 = vunpack.c.l.b16 %v2726
          %v2791 = vunpack.c.l.b16 %v2727
          %v2792 = vunpack.c.l.b16 %v2728
          %v2793 = vunpack.c.l.b16 %v2729
          %v2794 = vunpack.c.l.b16 %v2730
          %v2795 = vunpack.c.l.b16 %v2731
          %v2796 = vunpack.c.l.b16 %v2732
          %v2797 = vunpack.c.l.b16 %v2733
          %v2798 = vunpack.c.l.b16 %v2734
          %v2799 = vunpack.c.l.b16 %v2735
          %v2800 = vunpack.c.l.b16 %v2736
          %v2801 = vunpack.c.l.b16 %v2737
          %v2802 = vunpack.c.l.b16 %v2738
          %v2803 = vunpack.c.l.b16 %v2739
          %v2804 = vunpack.c.l.b16 %v2740
          %v2805 = vunpack.c.l.b16 %v2741
          %v2806 = vunpack.c.l.b16 %v2742
          %v2807 = vunpack.c.l.b16 %v2743
          %v2808 = vunpack.c.l.b16 %v2744
          %v2809 = vunpack.c.l.b16 %v2745
          %v2810 = vunpack.c.l.b16 %v2746
          %v2811 = vunpack.c.l.b16 %v2747
          %v2812 = vunpack.c.l.b16 %v2748
          %v2813 = vunpack.c.l.b16 %v2749
          %v2814 = vunpack.c.l.b16 %v2750
          %v2815 = vunpack.c.l.b16 %v2751
          %v2816 = vunpack.c.l.b16 %v2752
          %v2817 = vunpack.c.l.b16 %v2753
          %v2818 = vunpack.c.l.b16 %v2754
          %v2819 = vunpack.c.l.b16 %v2755
          %v2820 = vpack.c.b16 %v2789, %v2788
          %v2821 = vpack.c.b16 %v2791, %v2790
          %v2822 = vpack.c.b16 %v2793, %v2792
          %v2823 = vpack.c.b16 %v2795, %v2794
          %v2824 = vpack.c.b16 %v2797, %v2796
          %v2825 = vpack.c.b16 %v2799, %v2798
          %v2826 = vpack.c.b16 %v2801, %v2800
          %v2827 = vpack.c.b16 %v2803, %v2802
          %v2828 = vpack.c.b16 %v2805, %v2804
          %v2829 = vpack.c.b16 %v2807, %v2806
          %v2830 = vpack.c.b16 %v2809, %v2808
          %v2831 = vpack.c.b16 %v2811, %v2810
          %v2832 = vpack.c.b16 %v2813, %v2812
          %v2833 = vpack.c.b16 %v2815, %v2814
          %v2834 = vpack.c.b16 %v2817, %v2816
          %v2835 = vpack.c.b16 %v2819, %v2818
          %2852 = vmatprep.subr.bf16.mxu0 0
          %2853 = vmatpush1.bf16.msra.mxu0 %v2820
          %2854 = vmatprep.subr.bf16.mxu0 0
          %2855 = vmatpush1.bf16.msra.mxu0 %v2821
          %2856 = vmatprep.subr.bf16.mxu0 0
          %2857 = vmatpush1.bf16.msra.mxu0 %v2822
          %2858 = vmatprep.subr.bf16.mxu0 0
          %2859 = vmatpush1.bf16.msra.mxu0 %v2823
          %2860 = vmatprep.subr.bf16.mxu0 0
          %2861 = vmatpush1.bf16.msra.mxu0 %v2824
          %2862 = vmatprep.subr.bf16.mxu0 0
          %2863 = vmatpush1.bf16.msra.mxu0 %v2825
          %2864 = vmatprep.subr.bf16.mxu0 0
          %2865 = vmatpush1.bf16.msra.mxu0 %v2826
          %2866 = vmatprep.subr.bf16.mxu0 0
          %2867 = vmatpush1.bf16.msra.mxu0 %v2827
          %2868 = vmatprep.subr.bf16.mxu0 0
          %2869 = vmatpush1.bf16.msra.mxu0 %v2828
          %2870 = vmatprep.subr.bf16.mxu0 0
          %2871 = vmatpush1.bf16.msra.mxu0 %v2829
          %2872 = vmatprep.subr.bf16.mxu0 0
          %2873 = vmatpush1.bf16.msra.mxu0 %v2830
          %2874 = vmatprep.subr.bf16.mxu0 0
          %2875 = vmatpush1.bf16.msra.mxu0 %v2831
          %2876 = vmatprep.subr.bf16.mxu0 0
          %2877 = vmatpush1.bf16.msra.mxu0 %v2832
          %2878 = vmatprep.subr.bf16.mxu0 0
          %2879 = vmatpush1.bf16.msra.mxu0 %v2833
          %2880 = vmatprep.subr.bf16.mxu0 0
          %2881 = vmatpush1.bf16.msra.mxu0 %v2834
          %2882 = vmatprep.subr.bf16.mxu0 0
          %2883 = vmatpush1.bf16.msra.mxu0 %v2835
          %2884 = vmatprep.mubr.bf16.mxu0 %v2721
          %2885 = vmatmul.mubr.bf16.gmra.mrb[0].mxu0 %v2720
          %v2886 = vpop.f32.mrb[0].mxu0
          %v2887 = vadd.f32 0.0, %v2886
          %v2888 = vpop.f32.mrb[0].mxu0
          %v2889 = vpop.f32.mrb[0].mxu0
          %v2890 = vadd.f32 0.0, %v2889
          %v2891 = vpop.f32.mrb[0].mxu0
          %2892 = vmatprep.mubr.bf16.mxu0 %v2723
          %2893 = vmatmul.mubr.bf16.gmra.mrb[0].mxu0 %v2722
          %v2894 = vpop.f32.mrb[0].mxu0
          %v2895 = vadd.f32 0.0, %v2894
          %v2896 = vpop.f32.mrb[0].mxu0
          %v2897 = vpop.f32.mrb[0].mxu0
          %v2898 = vadd.f32 0.0, %v2897
          %v2899 = vpop.f32.mrb[0].mxu0
          %2900 = vdwg.mxu0
          %v2901 = vld [vmem:[#allocation6] sm:$0x1]
          %v2902 = vadd.f32 %v2887, %v2890
          %v2903 = vadd.f32 %v2902, %v2895
          %v2904 = vadd.f32 %v2903, %v2898
          %v2905 = vrot.slane %v2904, 4
          %v2906 = vadd.f32 %v2904, %v2905
          %v2907 = vrot.slane %v2906, 2
          %v2908 = vadd.f32 %v2906, %v2907
          %v2909 = vrot.slane %v2908, 1
          %v2910 = vadd.f32 %v2908, %v2909
          %v2911 = vadd.f32 %v2901, %v2910
          %2912 = vst [vmem:[#allocation6] sm:$0x1] %v2911
          %v2913 = vld [vmem:[#allocation11] sm:$0x1]
          %v2914 = vmul.f32 %v2887, %v2887
          %v2915 = vmul.f32 %v2890, %v2890
          %v2916 = vmul.f32 %v2895, %v2895
          %v2917 = vmul.f32 %v2898, %v2898
          %v2918 = vadd.f32 %v2914, %v2915
          %v2919 = vadd.f32 %v2918, %v2916
          %v2920 = vadd.f32 %v2919, %v2917
          %v2921 = vrot.slane %v2920, 4
          %v2922 = vadd.f32 %v2920, %v2921
          %v2923 = vrot.slane %v2922, 2
          %v2924 = vadd.f32 %v2922, %v2923
          %v2925 = vrot.slane %v2924, 1
          %v2926 = vadd.f32 %v2924, %v2925
          %v2927 = vadd.f32 %v2913, %v2926
          %2928 = vst [vmem:[#allocation11] sm:$0x1] %v2927
          // Predicated region
          $region245: #{tpu_custom_call.1} parent=239 // pred_check
            %p2929 = pneg %p922
          $region246: #{tpu_custom_call.1} parent=239 // pred_check_branch
            %2931 = sbr.rel (%p2929) target = $region248
          $region247: #{tpu_custom_call.1} parent=239 // pred_region
            %v2932 = vld [vmem:[#allocation6] sm:$0x1]
            %v2933 = vmul.f32 %v2932, 0.03125
            %v2934 = vld [vmem:[#allocation11] sm:$0x1]
            %v2935 = vmul.f32 %v2934, 0.03125
            %v2936 = vmul.f32 %v2933, %v2933
            %v2937 = vsub.f32 %v2935, %v2936
            %v2938 = vmax.f32 %v2937, 0.0
            %v2939 = vld [vmem:[#allocation46] sm:$0x1]
            %v2940 = vadd.f32 %v2938, 1e-05
            %v2941 = vrsqrt.pop %v2940
            %v2942 = vmul.f32 %v2939, %v2941
            %v2943 = vld [vmem:[#allocation48] sm:$0x1]
            %v2944 = vmul.f32 %v2933, %v2942
            %v2945 = vsub.f32 %v2943, %v2944
            %2946 = vst [vmem:[#allocation16] sm:$0x1] %v2945
            %v2947 = vld [vmem:[#allocation45] sm:$0xf]
            %v2948 = vld [vmem:[#allocation45 + $0x4] sm:$0xf]
            %v2949 = vld [vmem:[#allocation45 + $0x8] sm:$0xf]
            %v2950 = vld [vmem:[#allocation45 + $0xc] sm:$0xf]
            %v2951 = vld [vmem:[#allocation45 + $0x10] sm:$0xf]
            %v2952 = vld [vmem:[#allocation45 + $0x14] sm:$0xf]
            %v2953 = vld [vmem:[#allocation45 + $0x18] sm:$0xf]
            %v2954 = vld [vmem:[#allocation45 + $0x1c] sm:$0xf]
            %v2955 = vld [vmem:[#allocation45 + $0x20] sm:$0xf]
            %v2956 = vld [vmem:[#allocation45 + $0x24] sm:$0xf]
            %v2957 = vld [vmem:[#allocation45 + $0x28] sm:$0xf]
            %v2958 = vld [vmem:[#allocation45 + $0x2c] sm:$0xf]
            %v2959 = vld [vmem:[#allocation45 + $0x30] sm:$0xf]
            %v2960 = vld [vmem:[#allocation45 + $0x34] sm:$0xf]
            %v2961 = vld [vmem:[#allocation45 + $0x38] sm:$0xf]
            %v2962 = vld [vmem:[#allocation45 + $0x3c] sm:$0xf]
            %v2963 = vld [vmem:[#allocation45 + $0x40] sm:$0xf]
            %v2964 = vld [vmem:[#allocation45 + $0x44] sm:$0xf]
            %v2965 = vld [vmem:[#allocation45 + $0x48] sm:$0xf]
            %v2966 = vld [vmem:[#allocation45 + $0x4c] sm:$0xf]
            %v2967 = vld [vmem:[#allocation45 + $0x50] sm:$0xf]
            %v2968 = vld [vmem:[#allocation45 + $0x54] sm:$0xf]
            %v2969 = vld [vmem:[#allocation45 + $0x58] sm:$0xf]
            %v2970 = vld [vmem:[#allocation45 + $0x5c] sm:$0xf]
            %v2971 = vld [vmem:[#allocation45 + $0x60] sm:$0xf]
            %v2972 = vld [vmem:[#allocation45 + $0x64] sm:$0xf]
            %v2973 = vld [vmem:[#allocation45 + $0x68] sm:$0xf]
            %v2974 = vld [vmem:[#allocation45 + $0x6c] sm:$0xf]
            %v2975 = vld [vmem:[#allocation45 + $0x70] sm:$0xf]
            %v2976 = vld [vmem:[#allocation45 + $0x74] sm:$0xf]
            %v2977 = vld [vmem:[#allocation45 + $0x78] sm:$0xf]
            %v2978 = vld [vmem:[#allocation45 + $0x7c] sm:$0xf]
            %v2979 = vunpack.c.l.bf16 %v2947
            %v2980 = vunpack.c.l.bf16 %v2948
            %v2981 = vunpack.c.l.bf16 %v2949
            %v2982 = vunpack.c.l.bf16 %v2950
            %v2983 = vunpack.c.l.bf16 %v2951
            %v2984 = vunpack.c.l.bf16 %v2952
            %v2985 = vunpack.c.l.bf16 %v2953
            %v2986 = vunpack.c.l.bf16 %v2954
            %v2987 = vunpack.c.l.bf16 %v2955
            %v2988 = vunpack.c.l.bf16 %v2956
            %v2989 = vunpack.c.l.bf16 %v2957
            %v2990 = vunpack.c.l.bf16 %v2958
            %v2991 = vunpack.c.l.bf16 %v2959
            %v2992 = vunpack.c.l.bf16 %v2960
            %v2993 = vunpack.c.l.bf16 %v2961
            %v2994 = vunpack.c.l.bf16 %v2962
            %v2995 = vunpack.c.l.bf16 %v2963
            %v2996 = vunpack.c.l.bf16 %v2964
            %v2997 = vunpack.c.l.bf16 %v2965
            %v2998 = vunpack.c.l.bf16 %v2966
            %v2999 = vunpack.c.l.bf16 %v2967
            %v3000 = vunpack.c.l.bf16 %v2968
            %v3001 = vunpack.c.l.bf16 %v2969
            %v3002 = vunpack.c.l.bf16 %v2970
            %v3003 = vunpack.c.l.bf16 %v2971
            %v3004 = vunpack.c.l.bf16 %v2972
            %v3005 = vunpack.c.l.bf16 %v2973
            %v3006 = vunpack.c.l.bf16 %v2974
            %v3007 = vunpack.c.l.bf16 %v2975
            %v3008 = vunpack.c.l.bf16 %v2976
            %v3009 = vunpack.c.l.bf16 %v2977
            %v3010 = vunpack.c.l.bf16 %v2978
            %v3012 = vlaneseq
            %v3013 = vshrl.u32 %v3012, 7
            %v3014 = vsub.s32 0, %v3013
            %v3015 = vrot.slane %v2942, %v3014
            %v3017 = vmul.f32 %v2979, %v3015
            %v3018 = vmul.f32 %v2980, %v3015
            %v3019 = vmul.f32 %v2981, %v3015
            %v3020 = vmul.f32 %v2982, %v3015
            %v3021 = vmul.f32 %v2983, %v3015
            %v3022 = vmul.f32 %v2984, %v3015
            %v3023 = vmul.f32 %v2985, %v3015
            %v3024 = vmul.f32 %v2986, %v3015
            %v3025 = vmul.f32 %v2987, %v3015
            %v3026 = vmul.f32 %v2988, %v3015
            %v3027 = vmul.f32 %v2989, %v3015
            %v3028 = vmul.f32 %v2990, %v3015
            %v3029 = vmul.f32 %v2991, %v3015
            %v3030 = vmul.f32 %v2992, %v3015
            %v3031 = vmul.f32 %v2993, %v3015
            %v3032 = vmul.f32 %v2994, %v3015
            %v3033 = vmul.f32 %v2995, %v3015
            %v3034 = vmul.f32 %v2996, %v3015
            %v3035 = vmul.f32 %v2997, %v3015
            %v3036 = vmul.f32 %v2998, %v3015
            %v3037 = vmul.f32 %v2999, %v3015
            %v3038 = vmul.f32 %v3000, %v3015
            %v3039 = vmul.f32 %v3001, %v3015
            %v3040 = vmul.f32 %v3002, %v3015
            %v3041 = vmul.f32 %v3003, %v3015
            %v3042 = vmul.f32 %v3004, %v3015
            %v3043 = vmul.f32 %v3005, %v3015
            %v3044 = vmul.f32 %v3006, %v3015
            %v3045 = vmul.f32 %v3007, %v3015
            %v3046 = vmul.f32 %v3008, %v3015
            %v3047 = vmul.f32 %v3009, %v3015
            %v3048 = vmul.f32 %v3010, %v3015
            %v3049 = vpack.c.bf16 %v3018, %v3017
            %v3050 = vpack.c.bf16 %v3020, %v3019
            %v3051 = vpack.c.bf16 %v3022, %v3021
            %v3052 = vpack.c.bf16 %v3024, %v3023
            %v3053 = vpack.c.bf16 %v3026, %v3025
            %v3054 = vpack.c.bf16 %v3028, %v3027
            %v3055 = vpack.c.bf16 %v3030, %v3029
            %v3056 = vpack.c.bf16 %v3032, %v3031
            %v3057 = vpack.c.bf16 %v3034, %v3033
            %v3058 = vpack.c.bf16 %v3036, %v3035
            %v3059 = vpack.c.bf16 %v3038, %v3037
            %v3060 = vpack.c.bf16 %v3040, %v3039
            %v3061 = vpack.c.bf16 %v3042, %v3041
            %v3062 = vpack.c.bf16 %v3044, %v3043
            %v3063 = vpack.c.bf16 %v3046, %v3045
            %v3064 = vpack.c.bf16 %v3048, %v3047
            %3065 = vst [vmem:[#allocation21] sm:$0xff] %v3049
            %3066 = vst [vmem:[#allocation21 + $0x8] sm:$0xff] %v3050
            %3067 = vst [vmem:[#allocation21 + $0x10] sm:$0xff] %v3051
            %3068 = vst [vmem:[#allocation21 + $0x18] sm:$0xff] %v3052
            %3069 = vst [vmem:[#allocation21 + $0x20] sm:$0xff] %v3053
            %3070 = vst [vmem:[#allocation21 + $0x28] sm:$0xff] %v3054
            %3071 = vst [vmem:[#allocation21 + $0x30] sm:$0xff] %v3055
            %3072 = vst [vmem:[#allocation21 + $0x38] sm:$0xff] %v3056
            %3073 = vst [vmem:[#allocation21 + $0x40] sm:$0xff] %v3057
            %3074 = vst [vmem:[#allocation21 + $0x48] sm:$0xff] %v3058
            %3075 = vst [vmem:[#allocation21 + $0x50] sm:$0xff] %v3059
            %3076 = vst [vmem:[#allocation21 + $0x58] sm:$0xff] %v3060
            %3077 = vst [vmem:[#allocation21 + $0x60] sm:$0xff] %v3061
            %3078 = vst [vmem:[#allocation21 + $0x68] sm:$0xff] %v3062
            %3079 = vst [vmem:[#allocation21 + $0x70] sm:$0xff] %v3063
            %3080 = vst [vmem:[#allocation21 + $0x78] sm:$0xff] %v3064
          $region248: #{tpu_custom_call.1} parent=239 // pred_fallthru
            _
        $region240: #{tpu_custom_call.1} parent=103 // pred_fallthru
          _
        %p3081 = scmp.eq.s32.totalorder %s49, 5
        // Predicated region
        $region249: #{tpu_custom_call.1} parent=103 // pred_check
          %p3082 = pneg %p3081
        $region250: #{tpu_custom_call.1} parent=103 // pred_check_branch
          %3084 = sbr.rel (%p3082) target = $region252
        $region251: #{tpu_custom_call.1} parent=103 // pred_region
          %v3085 = vld [vmem:[#allocation17] sm:$0xf]
          %v3086 = vld [vmem:[#allocation12] sm:$0x1]
          %v3088 = vlaneseq
          %v3089 = vshrl.u32 %v3088, 7
          %v3090 = vsub.s32 0, %v3089
          %v3091 = vrot.slane %v3086, %v3090
          %v3097 = vunpack.c.l.b16 %v963
          %v3098 = vunpack.c.l.b16 %v964
          %v3099 = vunpack.c.l.b16 %v965
          %v3100 = vunpack.c.l.b16 %v966
          %v3101 = vpack.c.b16 %v3098, %v3097
          %v3102 = vpack.c.b16 %v3100, %v3099
          %vm3103 = vcmask 64512
          %v3105 = vsel %vm3103, %v3101, 0
          %v3108 = vsel %vm3103, %v3102, 0
          %vm3110 = vcmask 1043456
          %v3112 = vsel %vm3110, %v3085, 0
          %3114 = vmatprep.subr.bf16.mxu0 0
          %3115 = vmatpush1.bf16.msra.mxu0 %v3112
          %3116 = vmatprep.subr.bf16.mxu0 0
          %3117 = vmatpush1.bf16.msra.mxu0 0
          %3118 = vmatprep.subr.bf16.mxu0 0
          %3119 = vmatpush1.bf16.msra.mxu0 0
          %3120 = vmatprep.subr.bf16.mxu0 0
          %3121 = vmatpush1.bf16.msra.mxu0 0
          %3122 = vmatprep.subr.bf16.mxu0 0
          %3123 = vmatpush1.bf16.msra.mxu0 0
          %3124 = vmatprep.subr.bf16.mxu0 0
          %3125 = vmatpush1.bf16.msra.mxu0 0
          %3126 = vmatprep.subr.bf16.mxu0 0
          %3127 = vmatpush1.bf16.msra.mxu0 0
          %3128 = vmatprep.subr.bf16.mxu0 0
          %3129 = vmatpush1.bf16.msra.mxu0 0
          %3130 = vmatprep.subr.bf16.mxu0 0
          %3131 = vmatpush1.bf16.msra.mxu0 0
          %3132 = vmatprep.subr.bf16.mxu0 0
          %3133 = vmatpush1.bf16.msra.mxu0 0
          %3134 = vmatprep.subr.bf16.mxu0 0
          %3135 = vmatpush1.bf16.msra.mxu0 0
          %3136 = vmatprep.subr.bf16.mxu0 0
          %3137 = vmatpush1.bf16.msra.mxu0 0
          %3138 = vmatprep.subr.bf16.mxu0 0
          %3139 = vmatpush1.bf16.msra.mxu0 0
          %3140 = vmatprep.subr.bf16.mxu0 0
          %3141 = vmatpush1.bf16.msra.mxu0 0
          %3142 = vmatprep.subr.bf16.mxu0 0
          %3143 = vmatpush1.bf16.msra.mxu0 0
          %3144 = vmatprep.subr.bf16.mxu0 0
          %3145 = vmatpush1.bf16.msra.mxu0 0
          %3146 = vmatprep.mubr.bf16.mxu0 0
          %3147 = vmatmul.mubr.bf16.gmra.mrb[0].mxu0 %v3105
          %v3148 = vpop.f32.mrb[0].mxu0
          %v3149 = vadd.f32 %v3091, %v3148
          %v3150 = vpop.f32.mrb[0].mxu0
          %v3151 = vpop.f32.mrb[0].mxu0
          %v3152 = vadd.f32 %v3091, %v3151
          %v3153 = vpop.f32.mrb[0].mxu0
          %3154 = vmatprep.mubr.bf16.mxu0 0
          %3155 = vmatmul.mubr.bf16.gmra.mrb[0].mxu0 %v3108
          %v3156 = vpop.f32.mrb[0].mxu0
          %v3157 = vadd.f32 %v3091, %v3156
          %v3158 = vpop.f32.mrb[0].mxu0
          %v3159 = vpop.f32.mrb[0].mxu0
          %v3160 = vadd.f32 %v3091, %v3159
          %v3161 = vpop.f32.mrb[0].mxu0
          %3162 = vdwg.mxu0
          %v3163 = vmax.f32 %v3149, 0.0
          %v3164 = vmax.f32 %v3152, 0.0
          %v3165 = vmax.f32 %v3157, 0.0
          %v3166 = vmax.f32 %v3160, 0.0
          %v3167 = vpack.c.bf16 %v3164, %v3163
          %v3168 = vpack.c.bf16 %v3166, %v3165
          %v3169 = vld [vmem:[#allocation18] sm:$0xff]
          %v3170 = vld [vmem:[#allocation18 + $0x8] sm:$0xff]
          %v3171 = vld [vmem:[#allocation18 + $0x10] sm:$0xff]
          %v3172 = vld [vmem:[#allocation18 + $0x18] sm:$0xff]
          %v3173 = vld [vmem:[#allocation13] sm:$0x1]
          %v3175 = vlaneseq
          %v3176 = vshrl.u32 %v3175, 7
          %v3177 = vsub.s32 0, %v3176
          %v3178 = vrot.slane %v3173, %v3177
          %vm3180 = vcmask 523264
          %v3182 = vsel %vm3180, %v3167, 0
          %v3185 = vsel %vm3180, %v3168, 0
          %3187 = vmatprep.subr.bf16.mxu0 0
          %3188 = vmatpush1.bf16.msra.mxu0 %v3169
          %3189 = vmatprep.subr.bf16.mxu0 0
          %3190 = vmatpush1.bf16.msra.mxu0 %v3170
          %3191 = vmatprep.subr.bf16.mxu0 0
          %3192 = vmatpush1.bf16.msra.mxu0 %v3171
          %3193 = vmatprep.subr.bf16.mxu0 0
          %3194 = vmatpush1.bf16.msra.mxu0 %v3172
          %3195 = vmatprep.subr.bf16.mxu0 0
          %3196 = vmatpush1.bf16.msra.mxu0 0
          %3197 = vmatprep.subr.bf16.mxu0 0
          %3198 = vmatpush1.bf16.msra.mxu0 0
          %3199 = vmatprep.subr.bf16.mxu0 0
          %3200 = vmatpush1.bf16.msra.mxu0 0
          %3201 = vmatprep.subr.bf16.mxu0 0
          %3202 = vmatpush1.bf16.msra.mxu0 0
          %3203 = vmatprep.subr.bf16.mxu0 0
          %3204 = vmatpush1.bf16.msra.mxu0 0
          %3205 = vmatprep.subr.bf16.mxu0 0
          %3206 = vmatpush1.bf16.msra.mxu0 0
          %3207 = vmatprep.subr.bf16.mxu0 0
          %3208 = vmatpush1.bf16.msra.mxu0 0
          %3209 = vmatprep.subr.bf16.mxu0 0
          %3210 = vmatpush1.bf16.msra.mxu0 0
          %3211 = vmatprep.subr.bf16.mxu0 0
          %3212 = vmatpush1.bf16.msra.mxu0 0
          %3213 = vmatprep.subr.bf16.mxu0 0
          %3214 = vmatpush1.bf16.msra.mxu0 0
          %3215 = vmatprep.subr.bf16.mxu0 0
          %3216 = vmatpush1.bf16.msra.mxu0 0
          %3217 = vmatprep.subr.bf16.mxu0 0
          %3218 = vmatpush1.bf16.msra.mxu0 0
          %3219 = vmatprep.mubr.bf16.mxu0 0
          %3220 = vmatmul.mubr.bf16.gmra.mrb[0].mxu0 %v3182
          %v3221 = vpop.f32.mrb[0].mxu0
          %v3222 = vadd.f32 %v3178, %v3221
          %v3223 = vpop.f32.mrb[0].mxu0
          %v3224 = vpop.f32.mrb[0].mxu0
          %v3225 = vadd.f32 %v3178, %v3224
          %v3226 = vpop.f32.mrb[0].mxu0
          %3227 = vmatprep.mubr.bf16.mxu0 0
          %3228 = vmatmul.mubr.bf16.gmra.mrb[0].mxu0 %v3185
          %v3229 = vpop.f32.mrb[0].mxu0
          %v3230 = vadd.f32 %v3178, %v3229
          %v3231 = vpop.f32.mrb[0].mxu0
          %v3232 = vpop.f32.mrb[0].mxu0
          %v3233 = vadd.f32 %v3178, %v3232
          %v3234 = vpop.f32.mrb[0].mxu0
          %3235 = vdwg.mxu0
          %v3236 = vmax.f32 %v3222, 0.0
          %v3237 = vmax.f32 %v3225, 0.0
          %v3238 = vmax.f32 %v3230, 0.0
          %v3239 = vmax.f32 %v3233, 0.0
          %v3240 = vpack.c.bf16 %v3237, %v3236
          %v3241 = vpack.c.bf16 %v3239, %v3238
          %v3242 = vld [vmem:[#allocation19] sm:$0xff]
          %v3243 = vld [vmem:[#allocation19 + $0x8] sm:$0xff]
          %v3244 = vld [vmem:[#allocation19 + $0x10] sm:$0xff]
          %v3245 = vld [vmem:[#allocation19 + $0x18] sm:$0xff]
          %v3246 = vld [vmem:[#allocation19 + $0x20] sm:$0xff]
          %v3247 = vld [vmem:[#allocation19 + $0x28] sm:$0xff]
          %v3248 = vld [vmem:[#allocation19 + $0x30] sm:$0xff]
          %v3249 = vld [vmem:[#allocation19 + $0x38] sm:$0xff]
          %v3250 = vld [vmem:[#allocation14] sm:$0x1]
          %v3252 = vlaneseq
          %v3253 = vshrl.u32 %v3252, 7
          %v3254 = vsub.s32 0, %v3253
          %v3255 = vrot.slane %v3250, %v3254
          %3257 = vmatprep.subr.bf16.mxu0 0
          %3258 = vmatpush1.bf16.msra.mxu0 %v3242
          %3259 = vmatprep.subr.bf16.mxu0 0
          %3260 = vmatpush1.bf16.msra.mxu0 %v3243
          %3261 = vmatprep.subr.bf16.mxu0 0
          %3262 = vmatpush1.bf16.msra.mxu0 %v3244
          %3263 = vmatprep.subr.bf16.mxu0 0
          %3264 = vmatpush1.bf16.msra.mxu0 %v3245
          %3265 = vmatprep.subr.bf16.mxu0 0
          %3266 = vmatpush1.bf16.msra.mxu0 %v3246
          %3267 = vmatprep.subr.bf16.mxu0 0
          %3268 = vmatpush1.bf16.msra.mxu0 %v3247
          %3269 = vmatprep.subr.bf16.mxu0 0
          %3270 = vmatpush1.bf16.msra.mxu0 %v3248
          %3271 = vmatprep.subr.bf16.mxu0 0
          %3272 = vmatpush1.bf16.msra.mxu0 %v3249
          %3273 = vmatprep.subr.bf16.mxu0 0
          %3274 = vmatpush1.bf16.msra.mxu0 0
          %3275 = vmatprep.subr.bf16.mxu0 0
          %3276 = vmatpush1.bf16.msra.mxu0 0
          %3277 = vmatprep.subr.bf16.mxu0 0
          %3278 = vmatpush1.bf16.msra.mxu0 0
          %3279 = vmatprep.subr.bf16.mxu0 0
          %3280 = vmatpush1.bf16.msra.mxu0 0
          %3281 = vmatprep.subr.bf16.mxu0 0
          %3282 = vmatpush1.bf16.msra.mxu0 0
          %3283 = vmatprep.subr.bf16.mxu0 0
          %3284 = vmatpush1.bf16.msra.mxu0 0
          %3285 = vmatprep.subr.bf16.mxu0 0
          %3286 = vmatpush1.bf16.msra.mxu0 0
          %3287 = vmatprep.subr.bf16.mxu0 0
          %3288 = vmatpush1.bf16.msra.mxu0 0
          %3289 = vmatprep.mubr.bf16.mxu0 0
          %3290 = vmatmul.mubr.bf16.gmra.mrb[0].mxu0 %v3240
          %v3291 = vpop.f32.mrb[0].mxu0
          %v3292 = vadd.f32 %v3255, %v3291
          %v3293 = vpop.f32.mrb[0].mxu0
          %v3294 = vpop.f32.mrb[0].mxu0
          %v3295 = vadd.f32 %v3255, %v3294
          %v3296 = vpop.f32.mrb[0].mxu0
          %3297 = vmatprep.mubr.bf16.mxu0 0
          %3298 = vmatmul.mubr.bf16.gmra.mrb[0].mxu0 %v3241
          %v3299 = vpop.f32.mrb[0].mxu0
          %v3300 = vadd.f32 %v3255, %v3299
          %v3301 = vpop.f32.mrb[0].mxu0
          %v3302 = vpop.f32.mrb[0].mxu0
          %v3303 = vadd.f32 %v3255, %v3302
          %v3304 = vpop.f32.mrb[0].mxu0
          %3305 = vdwg.mxu0
          %v3306 = vmax.f32 %v3292, 0.0
          %v3307 = vmax.f32 %v3295, 0.0
          %v3308 = vmax.f32 %v3300, 0.0
          %v3309 = vmax.f32 %v3303, 0.0
          %v3310 = vpack.c.bf16 %v3307, %v3306
          %v3311 = vpack.c.bf16 %v3309, %v3308
          %v3312 = vld [vmem:[#allocation20] sm:$0xff]
          %v3313 = vld [vmem:[#allocation20 + $0x8] sm:$0xff]
          %v3314 = vld [vmem:[#allocation20 + $0x10] sm:$0xff]
          %v3315 = vld [vmem:[#allocation20 + $0x18] sm:$0xff]
          %v3316 = vld [vmem:[#allocation20 + $0x20] sm:$0xff]
          %v3317 = vld [vmem:[#allocation20 + $0x28] sm:$0xff]
          %v3318 = vld [vmem:[#allocation20 + $0x30] sm:$0xff]
          %v3319 = vld [vmem:[#allocation20 + $0x38] sm:$0xff]
          %v3320 = vld [vmem:[#allocation20 + $0x40] sm:$0xff]
          %v3321 = vld [vmem:[#allocation20 + $0x48] sm:$0xff]
          %v3322 = vld [vmem:[#allocation20 + $0x50] sm:$0xff]
          %v3323 = vld [vmem:[#allocation20 + $0x58] sm:$0xff]
          %v3324 = vld [vmem:[#allocation20 + $0x60] sm:$0xff]
          %v3325 = vld [vmem:[#allocation20 + $0x68] sm:$0xff]
          %v3326 = vld [vmem:[#allocation20 + $0x70] sm:$0xff]
          %v3327 = vld [vmem:[#allocation20 + $0x78] sm:$0xff]
          %v3328 = vld [vmem:[#allocation15] sm:$0x3]
          %v3330 = vlaneseq
          %v3331 = vshrl.u32 %v3330, 7
          %v3332 = vsub.s32 0, %v3331
          %v3333 = vrot.slane %v3328, %v3332
          %v3334 = vlaneseq
          %v3335 = vshrl.u32 %v3334, 7
          %v3336 = vsub.s32 1, %v3335
          %v3337 = vrot.slane %v3328, %v3336
          %3340 = vmatprep.subr.bf16.mxu0 %v3313
          %3341 = vmatpush1.bf16.msra.mxu0 %v3312
          %3342 = vmatprep.subr.bf16.mxu0 %v3315
          %3343 = vmatpush1.bf16.msra.mxu0 %v3314
          %3344 = vmatprep.subr.bf16.mxu0 %v3317
          %3345 = vmatpush1.bf16.msra.mxu0 %v3316
          %3346 = vmatprep.subr.bf16.mxu0 %v3319
          %3347 = vmatpush1.bf16.msra.mxu0 %v3318
          %3348 = vmatprep.subr.bf16.mxu0 %v3321
          %3349 = vmatpush1.bf16.msra.mxu0 %v3320
          %3350 = vmatprep.subr.bf16.mxu0 %v3323
          %3351 = vmatpush1.bf16.msra.mxu0 %v3322
          %3352 = vmatprep.subr.bf16.mxu0 %v3325
          %3353 = vmatpush1.bf16.msra.mxu0 %v3324
          %3354 = vmatprep.subr.bf16.mxu0 %v3327
          %3355 = vmatpush1.bf16.msra.mxu0 %v3326
          %3356 = vmatprep.subr.bf16.mxu0 0
          %3357 = vmatpush1.bf16.msra.mxu0 0
          %3358 = vmatprep.subr.bf16.mxu0 0
          %3359 = vmatpush1.bf16.msra.mxu0 0
          %3360 = vmatprep.subr.bf16.mxu0 0
          %3361 = vmatpush1.bf16.msra.mxu0 0
          %3362 = vmatprep.subr.bf16.mxu0 0
          %3363 = vmatpush1.bf16.msra.mxu0 0
          %3364 = vmatprep.subr.bf16.mxu0 0
          %3365 = vmatpush1.bf16.msra.mxu0 0
          %3366 = vmatprep.subr.bf16.mxu0 0
          %3367 = vmatpush1.bf16.msra.mxu0 0
          %3368 = vmatprep.subr.bf16.mxu0 0
          %3369 = vmatpush1.bf16.msra.mxu0 0
          %3370 = vmatprep.subr.bf16.mxu0 0
          %3371 = vmatpush1.bf16.msra.mxu0 0
          %3372 = vmatprep.mubr.bf16.mxu0 0
          %3373 = vmatmul.mubr.bf16.gmra.mrb[0].mxu0 %v3310
          %v3374 = vpop.f32.mrb[0].mxu0
          %v3375 = vadd.f32 %v3333, %v3374
          %v3376 = vpop.f32.mrb[0].mxu0
          %v3377 = vadd.f32 %v3337, %v3376
          %v3378 = vpop.f32.mrb[0].mxu0
          %v3379 = vadd.f32 %v3333, %v3378
          %v3380 = vpop.f32.mrb[0].mxu0
          %v3381 = vadd.f32 %v3337, %v3380
          %3382 = vmatprep.mubr.bf16.mxu0 0
          %3383 = vmatmul.mubr.bf16.gmra.mrb[0].mxu0 %v3311
          %v3384 = vpop.f32.mrb[0].mxu0
          %v3385 = vadd.f32 %v3333, %v3384
          %v3386 = vpop.f32.mrb[0].mxu0
          %v3387 = vadd.f32 %v3337, %v3386
          %v3388 = vpop.f32.mrb[0].mxu0
          %v3389 = vadd.f32 %v3333, %v3388
          %v3390 = vpop.f32.mrb[0].mxu0
          %v3391 = vadd.f32 %v3337, %v3390
          %3392 = vdwg.mxu0
          %v3393 = vmax.f32 %v3375, 0.0
          %v3394 = vmax.f32 %v3377, 0.0
          %v3395 = vmax.f32 %v3379, 0.0
          %v3396 = vmax.f32 %v3381, 0.0
          %v3397 = vmax.f32 %v3385, 0.0
          %v3398 = vmax.f32 %v3387, 0.0
          %v3399 = vmax.f32 %v3389, 0.0
          %v3400 = vmax.f32 %v3391, 0.0
          %v3401 = vpack.c.bf16 %v3395, %v3393
          %v3402 = vpack.c.bf16 %v3396, %v3394
          %v3403 = vpack.c.bf16 %v3399, %v3397
          %v3404 = vpack.c.bf16 %v3400, %v3398
          %v3405 = vld [vmem:[#allocation21] sm:$0xff]
          %v3406 = vld [vmem:[#allocation21 + $0x8] sm:$0xff]
          %v3407 = vld [vmem:[#allocation21 + $0x10] sm:$0xff]
          %v3408 = vld [vmem:[#allocation21 + $0x18] sm:$0xff]
          %v3409 = vld [vmem:[#allocation21 + $0x20] sm:$0xff]
          %v3410 = vld [vmem:[#allocation21 + $0x28] sm:$0xff]
          %v3411 = vld [vmem:[#allocation21 + $0x30] sm:$0xff]
          %v3412 = vld [vmem:[#allocation21 + $0x38] sm:$0xff]
          %v3413 = vld [vmem:[#allocation21 + $0x40] sm:$0xff]
          %v3414 = vld [vmem:[#allocation21 + $0x48] sm:$0xff]
          %v3415 = vld [vmem:[#allocation21 + $0x50] sm:$0xff]
          %v3416 = vld [vmem:[#allocation21 + $0x58] sm:$0xff]
          %v3417 = vld [vmem:[#allocation21 + $0x60] sm:$0xff]
          %v3418 = vld [vmem:[#allocation21 + $0x68] sm:$0xff]
          %v3419 = vld [vmem:[#allocation21 + $0x70] sm:$0xff]
          %v3420 = vld [vmem:[#allocation21 + $0x78] sm:$0xff]
          %v3421 = vld [vmem:[#allocation16] sm:$0x1]
          %v3423 = vlaneseq
          %v3424 = vshrl.u32 %v3423, 7
          %v3425 = vsub.s32 0, %v3424
          %v3426 = vrot.slane %v3421, %v3425
          %3428 = vmatprep.subr.bf16.mxu0 0
          %3429 = vmatpush1.bf16.msra.mxu0 %v3405
          %3430 = vmatprep.subr.bf16.mxu0 0
          %3431 = vmatpush1.bf16.msra.mxu0 %v3406
          %3432 = vmatprep.subr.bf16.mxu0 0
          %3433 = vmatpush1.bf16.msra.mxu0 %v3407
          %3434 = vmatprep.subr.bf16.mxu0 0
          %3435 = vmatpush1.bf16.msra.mxu0 %v3408
          %3436 = vmatprep.subr.bf16.mxu0 0
          %3437 = vmatpush1.bf16.msra.mxu0 %v3409
          %3438 = vmatprep.subr.bf16.mxu0 0
          %3439 = vmatpush1.bf16.msra.mxu0 %v3410
          %3440 = vmatprep.subr.bf16.mxu0 0
          %3441 = vmatpush1.bf16.msra.mxu0 %v3411
          %3442 = vmatprep.subr.bf16.mxu0 0
          %3443 = vmatpush1.bf16.msra.mxu0 %v3412
          %3444 = vmatprep.subr.bf16.mxu0 0
          %3445 = vmatpush1.bf16.msra.mxu0 %v3413
          %3446 = vmatprep.subr.bf16.mxu0 0
          %3447 = vmatpush1.bf16.msra.mxu0 %v3414
          %3448 = vmatprep.subr.bf16.mxu0 0
          %3449 = vmatpush1.bf16.msra.mxu0 %v3415
          %3450 = vmatprep.subr.bf16.mxu0 0
          %3451 = vmatpush1.bf16.msra.mxu0 %v3416
          %3452 = vmatprep.subr.bf16.mxu0 0
          %3453 = vmatpush1.bf16.msra.mxu0 %v3417
          %3454 = vmatprep.subr.bf16.mxu0 0
          %3455 = vmatpush1.bf16.msra.mxu0 %v3418
          %3456 = vmatprep.subr.bf16.mxu0 0
          %3457 = vmatpush1.bf16.msra.mxu0 %v3419
          %3458 = vmatprep.subr.bf16.mxu0 0
          %3459 = vmatpush1.bf16.msra.mxu0 %v3420
          %3460 = vmatprep.mubr.bf16.mxu0 %v3402
          %3461 = vmatmul.mubr.bf16.gmra.mrb[0].mxu0 %v3401
          %v3462 = vpop.f32.mrb[0].mxu0
          %v3463 = vadd.f32 %v3426, %v3462
          %v3464 = vpop.f32.mrb[0].mxu0
          %v3465 = vpop.f32.mrb[0].mxu0
          %v3466 = vadd.f32 %v3426, %v3465
          %v3467 = vpop.f32.mrb[0].mxu0
          %3468 = vmatprep.mubr.bf16.mxu0 %v3404
          %3469 = vmatmul.mubr.bf16.gmra.mrb[0].mxu0 %v3403
          %v3470 = vpop.f32.mrb[0].mxu0
          %v3471 = vadd.f32 %v3426, %v3470
          %v3472 = vpop.f32.mrb[0].mxu0
          %v3473 = vpop.f32.mrb[0].mxu0
          %v3474 = vadd.f32 %v3426, %v3473
          %v3475 = vpop.f32.mrb[0].mxu0
          %3476 = vdwg.mxu0
          %v3477 = vmax.f32 %v3463, 0.0
          %v3478 = vmax.f32 %v3466, 0.0
          %v3479 = vmax.f32 %v3471, 0.0
          %v3480 = vmax.f32 %v3474, 0.0
          %v3481 = vmax.f32 %v3477, %v3478
          %v3482 = vrot.slane %v3481, 4
          %v3483 = vmax.f32 %v3481, %v3482
          %v3484 = vrot.slane %v3483, 2
          %v3485 = vmax.f32 %v3483, %v3484
          %v3486 = vrot.slane %v3485, 1
          %v3487 = vmax.f32 %v3485, %v3486
          %v3488 = vmax.f32 %v3479, %v3480
          %v3489 = vrot.slane %v3488, 4
          %v3490 = vmax.f32 %v3488, %v3489
          %v3491 = vrot.slane %v3490, 2
          %v3492 = vmax.f32 %v3490, %v3491
          %v3493 = vrot.slane %v3492, 1
          %v3494 = vmax.f32 %v3492, %v3493
          %s3495 = smul.u32 %s50, 2
          %vm3498 = vcmask 1041409
          %v3499 = vsel %vm3498, %v3494, %v3487
          %s3501 = scalar_lea.vmem [#allocation22], %s3495
          %3502 = vst [vmem:[%s3501] sm:$0x3] %v3499
          // Predicated region
          $region253: #{tpu_custom_call.1} parent=251 // pred_check
            %p3503 = pneg %p922
          $region254: #{tpu_custom_call.1} parent=251 // pred_check_branch
            %3505 = sbr.rel (%p3503) target = $region256
          $region255: #{tpu_custom_call.1} parent=251 // pred_region
            %s3506 = smul.u32 4, 32
            %s3507 = smul.u32 %s3506, 24
            %s3508 = sshll.u32 %s3507, 4
            %3509 = dma.done [#allocation24], %s3508
            %v3510 = vld [vmem:[#allocation22] sm:$0x3]
            %v3511 = vpack.c.bf16 %v3510, %v3510
            %v3512 = vld [vmem:[#allocation49] sm:$0xff]
            %v3513 = vld [vmem:[#allocation49 + $0x8] sm:$0xff]
            %v3514 = vld [vmem:[#allocation49 + $0x10] sm:$0xff]
            %v3515 = vld [vmem:[#allocation49 + $0x18] sm:$0xff]
            %v3516 = vld [vmem:[#allocation49 + $0x20] sm:$0xff]
            %v3517 = vld [vmem:[#allocation49 + $0x28] sm:$0xff]
            %v3518 = vld [vmem:[#allocation49 + $0x30] sm:$0xff]
            %v3519 = vld [vmem:[#allocation49 + $0x38] sm:$0xff]
            %v3520 = vld [vmem:[#allocation49 + $0x40] sm:$0xff]
            %v3521 = vld [vmem:[#allocation49 + $0x48] sm:$0xff]
            %v3522 = vld [vmem:[#allocation49 + $0x50] sm:$0xff]
            %v3523 = vld [vmem:[#allocation49 + $0x58] sm:$0xff]
            %v3524 = vld [vmem:[#allocation49 + $0x60] sm:$0xff]
            %v3525 = vld [vmem:[#allocation49 + $0x68] sm:$0xff]
            %v3526 = vld [vmem:[#allocation49 + $0x70] sm:$0xff]
            %v3527 = vld [vmem:[#allocation49 + $0x78] sm:$0xff]
            %v3528 = vld [vmem:[#allocation51] sm:$0x3]
            %v3530 = vlaneseq
            %v3531 = vshrl.u32 %v3530, 7
            %v3532 = vsub.s32 0, %v3531
            %v3533 = vrot.slane %v3528, %v3532
            %v3534 = vlaneseq
            %v3535 = vshrl.u32 %v3534, 7
            %v3536 = vsub.s32 1, %v3535
            %v3537 = vrot.slane %v3528, %v3536
            %v3556 = vunpack.c.l.b16 %v3512
            %v3557 = vunpack.c.h.b16 %v3512
            %v3558 = vunpack.c.l.b16 %v3513
            %v3559 = vunpack.c.h.b16 %v3513
            %v3560 = vunpack.c.l.b16 %v3514
            %v3561 = vunpack.c.h.b16 %v3514
            %v3562 = vunpack.c.l.b16 %v3515
            %v3563 = vunpack.c.h.b16 %v3515
            %v3564 = vunpack.c.l.b16 %v3516
            %v3565 = vunpack.c.h.b16 %v3516
            %v3566 = vunpack.c.l.b16 %v3517
            %v3567 = vunpack.c.h.b16 %v3517
            %v3568 = vunpack.c.l.b16 %v3518
            %v3569 = vunpack.c.h.b16 %v3518
            %v3570 = vunpack.c.l.b16 %v3519
            %v3571 = vunpack.c.h.b16 %v3519
            %v3572 = vunpack.c.l.b16 %v3520
            %v3573 = vunpack.c.h.b16 %v3520
            %v3574 = vunpack.c.l.b16 %v3521
            %v3575 = vunpack.c.h.b16 %v3521
            %v3576 = vunpack.c.l.b16 %v3522
            %v3577 = vunpack.c.h.b16 %v3522
            %v3578 = vunpack.c.l.b16 %v3523
            %v3579 = vunpack.c.h.b16 %v3523
            %v3580 = vunpack.c.l.b16 %v3524
            %v3581 = vunpack.c.h.b16 %v3524
            %v3582 = vunpack.c.l.b16 %v3525
            %v3583 = vunpack.c.h.b16 %v3525
            %v3584 = vunpack.c.l.b16 %v3526
            %v3585 = vunpack.c.h.b16 %v3526
            %v3586 = vunpack.c.l.b16 %v3527
            %v3587 = vunpack.c.h.b16 %v3527
            %v3588 = vpack.c.b16 %v3558, %v3556
            %v3589 = vpack.c.b16 %v3559, %v3557
            %v3590 = vpack.c.b16 %v3562, %v3560
            %v3591 = vpack.c.b16 %v3563, %v3561
            %v3592 = vpack.c.b16 %v3566, %v3564
            %v3593 = vpack.c.b16 %v3567, %v3565
            %v3594 = vpack.c.b16 %v3570, %v3568
            %v3595 = vpack.c.b16 %v3571, %v3569
            %v3596 = vpack.c.b16 %v3574, %v3572
            %v3597 = vpack.c.b16 %v3575, %v3573
            %v3598 = vpack.c.b16 %v3578, %v3576
            %v3599 = vpack.c.b16 %v3579, %v3577
            %v3600 = vpack.c.b16 %v3582, %v3580
            %v3601 = vpack.c.b16 %v3583, %v3581
            %v3602 = vpack.c.b16 %v3586, %v3584
            %v3603 = vpack.c.b16 %v3587, %v3585
            %3620 = vmatprep.subr.bf16.mxu0 %v3589
            %3621 = vmatpush1.bf16.msra.mxu0 %v3588
            %3622 = vmatprep.subr.bf16.mxu0 %v3591
            %3623 = vmatpush1.bf16.msra.mxu0 %v3590
            %3624 = vmatprep.subr.bf16.mxu0 %v3593
            %3625 = vmatpush1.bf16.msra.mxu0 %v3592
            %3626 = vmatprep.subr.bf16.mxu0 %v3595
            %3627 = vmatpush1.bf16.msra.mxu0 %v3594
            %3628 = vmatprep.subr.bf16.mxu0 %v3597
            %3629 = vmatpush1.bf16.msra.mxu0 %v3596
            %3630 = vmatprep.subr.bf16.mxu0 %v3599
            %3631 = vmatpush1.bf16.msra.mxu0 %v3598
            %3632 = vmatprep.subr.bf16.mxu0 %v3601
            %3633 = vmatpush1.bf16.msra.mxu0 %v3600
            %3634 = vmatprep.subr.bf16.mxu0 %v3603
            %3635 = vmatpush1.bf16.msra.mxu0 %v3602
            %3636 = vmatprep.subr.bf16.mxu0 0
            %3637 = vmatpush1.bf16.msra.mxu0 0
            %3638 = vmatprep.subr.bf16.mxu0 0
            %3639 = vmatpush1.bf16.msra.mxu0 0
            %3640 = vmatprep.subr.bf16.mxu0 0
            %3641 = vmatpush1.bf16.msra.mxu0 0
            %3642 = vmatprep.subr.bf16.mxu0 0
            %3643 = vmatpush1.bf16.msra.mxu0 0
            %3644 = vmatprep.subr.bf16.mxu0 0
            %3645 = vmatpush1.bf16.msra.mxu0 0
            %3646 = vmatprep.subr.bf16.mxu0 0
            %3647 = vmatpush1.bf16.msra.mxu0 0
            %3648 = vmatprep.subr.bf16.mxu0 0
            %3649 = vmatpush1.bf16.msra.mxu0 0
            %3650 = vmatprep.subr.bf16.mxu0 0
            %3651 = vmatpush1.bf16.msra.mxu0 0
            %3652 = vmatprep.mubr.bf16.mxu0 0
            %3653 = vmatmul.mubr.bf16.gmra.mrb[0].mxu0 %v3511
            %v3654 = vpop.f32.mrb[0].mxu0
            %v3655 = vadd.f32 %v3533, %v3654
            %v3656 = vpop.f32.mrb[0].mxu0
            %v3657 = vadd.f32 %v3537, %v3656
            %v3658 = vpop.f32.mrb[0].mxu0
            %v3659 = vpop.f32.mrb[0].mxu0
            %3660 = vdwg.mxu0
            %v3661 = vmax.f32 %v3655, 0.0
            %v3662 = vmax.f32 %v3657, 0.0
            %v3663 = vpack.c.bf16 %v3661, %v3661
            %v3664 = vpack.c.bf16 %v3662, %v3662
            %v3665 = vld [vmem:[#allocation52] sm:$0xff]
            %v3666 = vld [vmem:[#allocation52 + $0x8] sm:$0xff]
            %v3667 = vld [vmem:[#allocation52 + $0x10] sm:$0xff]
            %v3668 = vld [vmem:[#allocation52 + $0x18] sm:$0xff]
            %v3669 = vld [vmem:[#allocation52 + $0x20] sm:$0xff]
            %v3670 = vld [vmem:[#allocation52 + $0x28] sm:$0xff]
            %v3671 = vld [vmem:[#allocation52 + $0x30] sm:$0xff]
            %v3672 = vld [vmem:[#allocation52 + $0x38] sm:$0xff]
            %v3673 = vld [vmem:[#allocation52 + $0x40] sm:$0xff]
            %v3674 = vld [vmem:[#allocation52 + $0x48] sm:$0xff]
            %v3675 = vld [vmem:[#allocation52 + $0x50] sm:$0xff]
            %v3676 = vld [vmem:[#allocation52 + $0x58] sm:$0xff]
            %v3677 = vld [vmem:[#allocation52 + $0x60] sm:$0xff]
            %v3678 = vld [vmem:[#allocation52 + $0x68] sm:$0xff]
            %v3679 = vld [vmem:[#allocation52 + $0x70] sm:$0xff]
            %v3680 = vld [vmem:[#allocation52 + $0x78] sm:$0xff]
            %v3681 = vld [vmem:[#allocation52 + $0x80] sm:$0xff]
            %v3682 = vld [vmem:[#allocation52 + $0x88] sm:$0xff]
            %v3683 = vld [vmem:[#allocation52 + $0x90] sm:$0xff]
            %v3684 = vld [vmem:[#allocation52 + $0x98] sm:$0xff]
            %v3685 = vld [vmem:[#allocation52 + $0xa0] sm:$0xff]
            %v3686 = vld [vmem:[#allocation52 + $0xa8] sm:$0xff]
            %v3687 = vld [vmem:[#allocation52 + $0xb0] sm:$0xff]
            %v3688 = vld [vmem:[#allocation52 + $0xb8] sm:$0xff]
            %v3689 = vld [vmem:[#allocation52 + $0xc0] sm:$0xff]
            %v3690 = vld [vmem:[#allocation52 + $0xc8] sm:$0xff]
            %v3691 = vld [vmem:[#allocation52 + $0xd0] sm:$0xff]
            %v3692 = vld [vmem:[#allocation52 + $0xd8] sm:$0xff]
            %v3693 = vld [vmem:[#allocation52 + $0xe0] sm:$0xff]
            %v3694 = vld [vmem:[#allocation52 + $0xe8] sm:$0xff]
            %v3695 = vld [vmem:[#allocation52 + $0xf0] sm:$0xff]
            %v3696 = vld [vmem:[#allocation52 + $0xf8] sm:$0xff]
            %v3697 = vld [vmem:[#allocation54] sm:$0x3]
            %v3699 = vlaneseq
            %v3700 = vshrl.u32 %v3699, 7
            %v3701 = vsub.s32 0, %v3700
            %v3702 = vrot.slane %v3697, %v3701
            %v3703 = vlaneseq
            %v3704 = vshrl.u32 %v3703, 7
            %v3705 = vsub.s32 1, %v3704
            %v3706 = vrot.slane %v3697, %v3705
            %v3741 = vunpack.c.l.b16 %v3665
            %v3742 = vunpack.c.h.b16 %v3665
            %v3743 = vunpack.c.l.b16 %v3666
            %v3744 = vunpack.c.h.b16 %v3666
            %v3745 = vunpack.c.l.b16 %v3667
            %v3746 = vunpack.c.h.b16 %v3667
            %v3747 = vunpack.c.l.b16 %v3668
            %v3748 = vunpack.c.h.b16 %v3668
            %v3749 = vunpack.c.l.b16 %v3669
            %v3750 = vunpack.c.h.b16 %v3669
            %v3751 = vunpack.c.l.b16 %v3670
            %v3752 = vunpack.c.h.b16 %v3670
            %v3753 = vunpack.c.l.b16 %v3671
            %v3754 = vunpack.c.h.b16 %v3671
            %v3755 = vunpack.c.l.b16 %v3672
            %v3756 = vunpack.c.h.b16 %v3672
            %v3757 = vunpack.c.l.b16 %v3673
            %v3758 = vunpack.c.h.b16 %v3673
            %v3759 = vunpack.c.l.b16 %v3674
            %v3760 = vunpack.c.h.b16 %v3674
            %v3761 = vunpack.c.l.b16 %v3675
            %v3762 = vunpack.c.h.b16 %v3675
            %v3763 = vunpack.c.l.b16 %v3676
            %v3764 = vunpack.c.h.b16 %v3676
            %v3765 = vunpack.c.l.b16 %v3677
            %v3766 = vunpack.c.h.b16 %v3677
            %v3767 = vunpack.c.l.b16 %v3678
            %v3768 = vunpack.c.h.b16 %v3678
            %v3769 = vunpack.c.l.b16 %v3679
            %v3770 = vunpack.c.h.b16 %v3679
            %v3771 = vunpack.c.l.b16 %v3680
            %v3772 = vunpack.c.h.b16 %v3680
            %v3773 = vunpack.c.l.b16 %v3681
            %v3774 = vunpack.c.h.b16 %v3681
            %v3775 = vunpack.c.l.b16 %v3682
            %v3776 = vunpack.c.h.b16 %v3682
            %v3777 = vunpack.c.l.b16 %v3683
            %v3778 = vunpack.c.h.b16 %v3683
            %v3779 = vunpack.c.l.b16 %v3684
            %v3780 = vunpack.c.h.b16 %v3684
            %v3781 = vunpack.c.l.b16 %v3685
            %v3782 = vunpack.c.h.b16 %v3685
            %v3783 = vunpack.c.l.b16 %v3686
            %v3784 = vunpack.c.h.b16 %v3686
            %v3785 = vunpack.c.l.b16 %v3687
            %v3786 = vunpack.c.h.b16 %v3687
            %v3787 = vunpack.c.l.b16 %v3688
            %v3788 = vunpack.c.h.b16 %v3688
            %v3789 = vunpack.c.l.b16 %v3689
            %v3790 = vunpack.c.h.b16 %v3689
            %v3791 = vunpack.c.l.b16 %v3690
            %v3792 = vunpack.c.h.b16 %v3690
            %v3793 = vunpack.c.l.b16 %v3691
            %v3794 = vunpack.c.h.b16 %v3691
            %v3795 = vunpack.c.l.b16 %v3692
            %v3796 = vunpack.c.h.b16 %v3692
            %v3797 = vunpack.c.l.b16 %v3693
            %v3798 = vunpack.c.h.b16 %v3693
            %v3799 = vunpack.c.l.b16 %v3694
            %v3800 = vunpack.c.h.b16 %v3694
            %v3801 = vunpack.c.l.b16 %v3695
            %v3802 = vunpack.c.h.b16 %v3695
            %v3803 = vunpack.c.l.b16 %v3696
            %v3804 = vunpack.c.h.b16 %v3696
            %v3805 = vpack.c.b16 %v3743, %v3741
            %v3806 = vpack.c.b16 %v3744, %v3742
            %v3807 = vpack.c.b16 %v3747, %v3745
            %v3808 = vpack.c.b16 %v3748, %v3746
            %v3809 = vpack.c.b16 %v3751, %v3749
            %v3810 = vpack.c.b16 %v3752, %v3750
            %v3811 = vpack.c.b16 %v3755, %v3753
            %v3812 = vpack.c.b16 %v3756, %v3754
            %v3813 = vpack.c.b16 %v3759, %v3757
            %v3814 = vpack.c.b16 %v3760, %v3758
            %v3815 = vpack.c.b16 %v3763, %v3761
            %v3816 = vpack.c.b16 %v3764, %v3762
            %v3817 = vpack.c.b16 %v3767, %v3765
            %v3818 = vpack.c.b16 %v3768, %v3766
            %v3819 = vpack.c.b16 %v3771, %v3769
            %v3820 = vpack.c.b16 %v3772, %v3770
            %v3821 = vpack.c.b16 %v3775, %v3773
            %v3822 = vpack.c.b16 %v3776, %v3774
            %v3823 = vpack.c.b16 %v3779, %v3777
            %v3824 = vpack.c.b16 %v3780, %v3778
            %v3825 = vpack.c.b16 %v3783, %v3781
            %v3826 = vpack.c.b16 %v3784, %v3782
            %v3827 = vpack.c.b16 %v3787, %v3785
            %v3828 = vpack.c.b16 %v3788, %v3786
            %v3829 = vpack.c.b16 %v3791, %v3789
            %v3830 = vpack.c.b16 %v3792, %v3790
            %v3831 = vpack.c.b16 %v3795, %v3793
            %v3832 = vpack.c.b16 %v3796, %v3794
            %v3833 = vpack.c.b16 %v3799, %v3797
            %v3834 = vpack.c.b16 %v3800, %v3798
            %v3835 = vpack.c.b16 %v3803, %v3801
            %v3836 = vpack.c.b16 %v3804, %v3802
            %3869 = vmatprep.subr.bf16.mxu0 %v3806
            %3870 = vmatpush1.bf16.msra.mxu0 %v3805
            %3871 = vmatprep.subr.bf16.mxu0 %v3808
            %3872 = vmatpush1.bf16.msra.mxu0 %v3807
            %3873 = vmatprep.subr.bf16.mxu0 %v3810
            %3874 = vmatpush1.bf16.msra.mxu0 %v3809
            %3875 = vmatprep.subr.bf16.mxu0 %v3812
            %3876 = vmatpush1.bf16.msra.mxu0 %v3811
            %3877 = vmatprep.subr.bf16.mxu0 %v3814
            %3878 = vmatpush1.bf16.msra.mxu0 %v3813
            %3879 = vmatprep.subr.bf16.mxu0 %v3816
            %3880 = vmatpush1.bf16.msra.mxu0 %v3815
            %3881 = vmatprep.subr.bf16.mxu0 %v3818
            %3882 = vmatpush1.bf16.msra.mxu0 %v3817
            %3883 = vmatprep.subr.bf16.mxu0 %v3820
            %3884 = vmatpush1.bf16.msra.mxu0 %v3819
            %3885 = vmatprep.subr.bf16.mxu0 %v3822
            %3886 = vmatpush1.bf16.msra.mxu0 %v3821
            %3887 = vmatprep.subr.bf16.mxu0 %v3824
            %3888 = vmatpush1.bf16.msra.mxu0 %v3823
            %3889 = vmatprep.subr.bf16.mxu0 %v3826
            %3890 = vmatpush1.bf16.msra.mxu0 %v3825
            %3891 = vmatprep.subr.bf16.mxu0 %v3828
            %3892 = vmatpush1.bf16.msra.mxu0 %v3827
            %3893 = vmatprep.subr.bf16.mxu0 %v3830
            %3894 = vmatpush1.bf16.msra.mxu0 %v3829
            %3895 = vmatprep.subr.bf16.mxu0 %v3832
            %3896 = vmatpush1.bf16.msra.mxu0 %v3831
            %3897 = vmatprep.subr.bf16.mxu0 %v3834
            %3898 = vmatpush1.bf16.msra.mxu0 %v3833
            %3899 = vmatprep.subr.bf16.mxu0 %v3836
            %3900 = vmatpush1.bf16.msra.mxu0 %v3835
            %3901 = vmatprep.mubr.bf16.mxu0 %v3664
            %3902 = vmatmul.mubr.bf16.gmra.mrb[0].mxu0 %v3663
            %v3903 = vpop.f32.mrb[0].mxu0
            %v3904 = vadd.f32 %v3702, %v3903
            %v3905 = vpop.f32.mrb[0].mxu0
            %v3906 = vadd.f32 %v3706, %v3905
            %v3907 = vpop.f32.mrb[0].mxu0
            %v3908 = vpop.f32.mrb[0].mxu0
            %3909 = vdwg.mxu0
            %v3910 = vmax.f32 %v3904, 0.0
            %v3911 = vmax.f32 %v3906, 0.0
            %v3912 = vpack.c.bf16 %v3910, %v3910
            %v3913 = vpack.c.bf16 %v3911, %v3911
            %v3914 = vld [vmem:[#allocation23] sm:$0xff]
            %v3915 = vld [vmem:[#allocation23 + $0x8] sm:$0xff]
            %v3916 = vld [vmem:[#allocation23 + $0x10] sm:$0xff]
            %v3917 = vld [vmem:[#allocation23 + $0x18] sm:$0xff]
            %v3918 = vld [vmem:[#allocation23 + $0x20] sm:$0xff]
            %v3919 = vld [vmem:[#allocation23 + $0x28] sm:$0xff]
            %v3920 = vld [vmem:[#allocation23 + $0x30] sm:$0xff]
            %v3921 = vld [vmem:[#allocation23 + $0x38] sm:$0xff]
            %v3922 = vld [vmem:[#allocation23 + $0x40] sm:$0xff]
            %v3923 = vld [vmem:[#allocation23 + $0x48] sm:$0xff]
            %v3924 = vld [vmem:[#allocation23 + $0x50] sm:$0xff]
            %v3925 = vld [vmem:[#allocation23 + $0x58] sm:$0xff]
            %v3926 = vld [vmem:[#allocation23 + $0x60] sm:$0xff]
            %v3927 = vld [vmem:[#allocation23 + $0x68] sm:$0xff]
            %v3928 = vld [vmem:[#allocation23 + $0x70] sm:$0xff]
            %v3929 = vld [vmem:[#allocation23 + $0x78] sm:$0xff]
            %v3930 = vld [vmem:[#allocation23 + $0x80] sm:$0xff]
            %v3931 = vld [vmem:[#allocation23 + $0x88] sm:$0xff]
            %v3932 = vld [vmem:[#allocation23 + $0x90] sm:$0xff]
            %v3933 = vld [vmem:[#allocation23 + $0x98] sm:$0xff]
            %v3934 = vld [vmem:[#allocation23 + $0xa0] sm:$0xff]
            %v3935 = vld [vmem:[#allocation23 + $0xa8] sm:$0xff]
            %v3936 = vld [vmem:[#allocation23 + $0xb0] sm:$0xff]
            %v3937 = vld [vmem:[#allocation23 + $0xb8] sm:$0xff]
            %v3938 = vld [vmem:[#allocation23 + $0xc0] sm:$0xff]
            %v3939 = vld [vmem:[#allocation23 + $0xc8] sm:$0xff]
            %v3940 = vld [vmem:[#allocation23 + $0xd0] sm:$0xff]
            %v3941 = vld [vmem:[#allocation23 + $0xd8] sm:$0xff]
            %v3942 = vld [vmem:[#allocation23 + $0xe0] sm:$0xff]
            %v3943 = vld [vmem:[#allocation23 + $0xe8] sm:$0xff]
            %v3944 = vld [vmem:[#allocation23 + $0xf0] sm:$0xff]
            %v3945 = vld [vmem:[#allocation23 + $0xf8] sm:$0xff]
            %v3946 = vld [vmem:[#allocation23 + $0x100] sm:$0xff]
            %v3947 = vld [vmem:[#allocation23 + $0x108] sm:$0xff]
            %v3948 = vld [vmem:[#allocation23 + $0x110] sm:$0xff]
            %v3949 = vld [vmem:[#allocation23 + $0x118] sm:$0xff]
            %v3950 = vld [vmem:[#allocation23 + $0x120] sm:$0xff]
            %v3951 = vld [vmem:[#allocation23 + $0x128] sm:$0xff]
            %v3952 = vld [vmem:[#allocation23 + $0x130] sm:$0xff]
            %v3953 = vld [vmem:[#allocation23 + $0x138] sm:$0xff]
            %v3954 = vld [vmem:[#allocation23 + $0x140] sm:$0xff]
            %v3955 = vld [vmem:[#allocation23 + $0x148] sm:$0xff]
            %v3956 = vld [vmem:[#allocation23 + $0x150] sm:$0xff]
            %v3957 = vld [vmem:[#allocation23 + $0x158] sm:$0xff]
            %v3958 = vld [vmem:[#allocation23 + $0x160] sm:$0xff]
            %v3959 = vld [vmem:[#allocation23 + $0x168] sm:$0xff]
            %v3960 = vld [vmem:[#allocation23 + $0x170] sm:$0xff]
            %v3961 = vld [vmem:[#allocation23 + $0x178] sm:$0xff]
            %v3962 = vld [vmem:[#allocation23 + $0x180] sm:$0xff]
            %v3963 = vld [vmem:[#allocation23 + $0x188] sm:$0xff]
            %v3964 = vld [vmem:[#allocation23 + $0x190] sm:$0xff]
            %v3965 = vld [vmem:[#allocation23 + $0x198] sm:$0xff]
            %v3966 = vld [vmem:[#allocation23 + $0x1a0] sm:$0xff]
            %v3967 = vld [vmem:[#allocation23 + $0x1a8] sm:$0xff]
            %v3968 = vld [vmem:[#allocation23 + $0x1b0] sm:$0xff]
            %v3969 = vld [vmem:[#allocation23 + $0x1b8] sm:$0xff]
            %v3970 = vld [vmem:[#allocation23 + $0x1c0] sm:$0xff]
            %v3971 = vld [vmem:[#allocation23 + $0x1c8] sm:$0xff]
            %v3972 = vld [vmem:[#allocation23 + $0x1d0] sm:$0xff]
            %v3973 = vld [vmem:[#allocation23 + $0x1d8] sm:$0xff]
            %v3974 = vld [vmem:[#allocation23 + $0x1e0] sm:$0xff]
            %v3975 = vld [vmem:[#allocation23 + $0x1e8] sm:$0xff]
            %v3976 = vld [vmem:[#allocation23 + $0x1f0] sm:$0xff]
            %v3977 = vld [vmem:[#allocation23 + $0x1f8] sm:$0xff]
            %v3978 = vld [vmem:[#allocation23 + $0x200] sm:$0xff]
            %v3979 = vld [vmem:[#allocation23 + $0x208] sm:$0xff]
            %v3980 = vld [vmem:[#allocation23 + $0x210] sm:$0xff]
            %v3981 = vld [vmem:[#allocation23 + $0x218] sm:$0xff]
            %v3982 = vld [vmem:[#allocation23 + $0x220] sm:$0xff]
            %v3983 = vld [vmem:[#allocation23 + $0x228] sm:$0xff]
            %v3984 = vld [vmem:[#allocation23 + $0x230] sm:$0xff]
            %v3985 = vld [vmem:[#allocation23 + $0x238] sm:$0xff]
            %v3986 = vld [vmem:[#allocation23 + $0x240] sm:$0xff]
            %v3987 = vld [vmem:[#allocation23 + $0x248] sm:$0xff]
            %v3988 = vld [vmem:[#allocation23 + $0x250] sm:$0xff]
            %v3989 = vld [vmem:[#allocation23 + $0x258] sm:$0xff]
            %v3990 = vld [vmem:[#allocation23 + $0x260] sm:$0xff]
            %v3991 = vld [vmem:[#allocation23 + $0x268] sm:$0xff]
            %v3992 = vld [vmem:[#allocation23 + $0x270] sm:$0xff]
            %v3993 = vld [vmem:[#allocation23 + $0x278] sm:$0xff]
            %v3994 = vld [vmem:[#allocation23 + $0x280] sm:$0xff]
            %v3995 = vld [vmem:[#allocation23 + $0x288] sm:$0xff]
            %v3996 = vld [vmem:[#allocation23 + $0x290] sm:$0xff]
            %v3997 = vld [vmem:[#allocation23 + $0x298] sm:$0xff]
            %v3998 = vld [vmem:[#allocation23 + $0x2a0] sm:$0xff]
            %v3999 = vld [vmem:[#allocation23 + $0x2a8] sm:$0xff]
            %v4000 = vld [vmem:[#allocation23 + $0x2b0] sm:$0xff]
            %v4001 = vld [vmem:[#allocation23 + $0x2b8] sm:$0xff]
            %v4002 = vld [vmem:[#allocation23 + $0x2c0] sm:$0xff]
            %v4003 = vld [vmem:[#allocation23 + $0x2c8] sm:$0xff]
            %v4004 = vld [vmem:[#allocation23 + $0x2d0] sm:$0xff]
            %v4005 = vld [vmem:[#allocation23 + $0x2d8] sm:$0xff]
            %v4006 = vld [vmem:[#allocation23 + $0x2e0] sm:$0xff]
            %v4007 = vld [vmem:[#allocation23 + $0x2e8] sm:$0xff]
            %v4008 = vld [vmem:[#allocation23 + $0x2f0] sm:$0xff]
            %v4009 = vld [vmem:[#allocation23 + $0x2f8] sm:$0xff]
            %v4010 = vld [vmem:[#allocation23 + $0x300] sm:$0xff]
            %v4011 = vld [vmem:[#allocation23 + $0x308] sm:$0xff]
            %v4012 = vld [vmem:[#allocation23 + $0x310] sm:$0xff]
            %v4013 = vld [vmem:[#allocation23 + $0x318] sm:$0xff]
            %v4014 = vld [vmem:[#allocation23 + $0x320] sm:$0xff]
            %v4015 = vld [vmem:[#allocation23 + $0x328] sm:$0xff]
            %v4016 = vld [vmem:[#allocation23 + $0x330] sm:$0xff]
            %v4017 = vld [vmem:[#allocation23 + $0x338] sm:$0xff]
            %v4018 = vld [vmem:[#allocation23 + $0x340] sm:$0xff]
            %v4019 = vld [vmem:[#allocation23 + $0x348] sm:$0xff]
            %v4020 = vld [vmem:[#allocation23 + $0x350] sm:$0xff]
            %v4021 = vld [vmem:[#allocation23 + $0x358] sm:$0xff]
            %v4022 = vld [vmem:[#allocation23 + $0x360] sm:$0xff]
            %v4023 = vld [vmem:[#allocation23 + $0x368] sm:$0xff]
            %v4024 = vld [vmem:[#allocation23 + $0x370] sm:$0xff]
            %v4025 = vld [vmem:[#allocation23 + $0x378] sm:$0xff]
            %v4026 = vld [vmem:[#allocation23 + $0x380] sm:$0xff]
            %v4027 = vld [vmem:[#allocation23 + $0x388] sm:$0xff]
            %v4028 = vld [vmem:[#allocation23 + $0x390] sm:$0xff]
            %v4029 = vld [vmem:[#allocation23 + $0x398] sm:$0xff]
            %v4030 = vld [vmem:[#allocation23 + $0x3a0] sm:$0xff]
            %v4031 = vld [vmem:[#allocation23 + $0x3a8] sm:$0xff]
            %v4032 = vld [vmem:[#allocation23 + $0x3b0] sm:$0xff]
            %v4033 = vld [vmem:[#allocation23 + $0x3b8] sm:$0xff]
            %v4034 = vld [vmem:[#allocation23 + $0x3c0] sm:$0xff]
            %v4035 = vld [vmem:[#allocation23 + $0x3c8] sm:$0xff]
            %v4036 = vld [vmem:[#allocation23 + $0x3d0] sm:$0xff]
            %v4037 = vld [vmem:[#allocation23 + $0x3d8] sm:$0xff]
            %v4038 = vld [vmem:[#allocation23 + $0x3e0] sm:$0xff]
            %v4039 = vld [vmem:[#allocation23 + $0x3e8] sm:$0xff]
            %v4040 = vld [vmem:[#allocation23 + $0x3f0] sm:$0xff]
            %v4041 = vld [vmem:[#allocation23 + $0x3f8] sm:$0xff]
            %v4042 = vld [vmem:[#allocation23 + $0x400] sm:$0xff]
            %v4043 = vld [vmem:[#allocation23 + $0x408] sm:$0xff]
            %v4044 = vld [vmem:[#allocation23 + $0x410] sm:$0xff]
            %v4045 = vld [vmem:[#allocation23 + $0x418] sm:$0xff]
            %v4046 = vld [vmem:[#allocation23 + $0x420] sm:$0xff]
            %v4047 = vld [vmem:[#allocation23 + $0x428] sm:$0xff]
            %v4048 = vld [vmem:[#allocation23 + $0x430] sm:$0xff]
            %v4049 = vld [vmem:[#allocation23 + $0x438] sm:$0xff]
            %v4050 = vld [vmem:[#allocation23 + $0x440] sm:$0xff]
            %v4051 = vld [vmem:[#allocation23 + $0x448] sm:$0xff]
            %v4052 = vld [vmem:[#allocation23 + $0x450] sm:$0xff]
            %v4053 = vld [vmem:[#allocation23 + $0x458] sm:$0xff]
            %v4054 = vld [vmem:[#allocation23 + $0x460] sm:$0xff]
            %v4055 = vld [vmem:[#allocation23 + $0x468] sm:$0xff]
            %v4056 = vld [vmem:[#allocation23 + $0x470] sm:$0xff]
            %v4057 = vld [vmem:[#allocation23 + $0x478] sm:$0xff]
            %v4058 = vld [vmem:[#allocation23 + $0x480] sm:$0xff]
            %v4059 = vld [vmem:[#allocation23 + $0x488] sm:$0xff]
            %v4060 = vld [vmem:[#allocation23 + $0x490] sm:$0xff]
            %v4061 = vld [vmem:[#allocation23 + $0x498] sm:$0xff]
            %v4062 = vld [vmem:[#allocation23 + $0x4a0] sm:$0xff]
            %v4063 = vld [vmem:[#allocation23 + $0x4a8] sm:$0xff]
            %v4064 = vld [vmem:[#allocation23 + $0x4b0] sm:$0xff]
            %v4065 = vld [vmem:[#allocation23 + $0x4b8] sm:$0xff]
            %v4066 = vld [vmem:[#allocation23 + $0x4c0] sm:$0xff]
            %v4067 = vld [vmem:[#allocation23 + $0x4c8] sm:$0xff]
            %v4068 = vld [vmem:[#allocation23 + $0x4d0] sm:$0xff]
            %v4069 = vld [vmem:[#allocation23 + $0x4d8] sm:$0xff]
            %v4070 = vld [vmem:[#allocation23 + $0x4e0] sm:$0xff]
            %v4071 = vld [vmem:[#allocation23 + $0x4e8] sm:$0xff]
            %v4072 = vld [vmem:[#allocation23 + $0x4f0] sm:$0xff]
            %v4073 = vld [vmem:[#allocation23 + $0x4f8] sm:$0xff]
            %v4074 = vld [vmem:[#allocation23 + $0x500] sm:$0xff]
            %v4075 = vld [vmem:[#allocation23 + $0x508] sm:$0xff]
            %v4076 = vld [vmem:[#allocation23 + $0x510] sm:$0xff]
            %v4077 = vld [vmem:[#allocation23 + $0x518] sm:$0xff]
            %v4078 = vld [vmem:[#allocation23 + $0x520] sm:$0xff]
            %v4079 = vld [vmem:[#allocation23 + $0x528] sm:$0xff]
            %v4080 = vld [vmem:[#allocation23 + $0x530] sm:$0xff]
            %v4081 = vld [vmem:[#allocation23 + $0x538] sm:$0xff]
            %v4082 = vld [vmem:[#allocation23 + $0x540] sm:$0xff]
            %v4083 = vld [vmem:[#allocation23 + $0x548] sm:$0xff]
            %v4084 = vld [vmem:[#allocation23 + $0x550] sm:$0xff]
            %v4085 = vld [vmem:[#allocation23 + $0x558] sm:$0xff]
            %v4086 = vld [vmem:[#allocation23 + $0x560] sm:$0xff]
            %v4087 = vld [vmem:[#allocation23 + $0x568] sm:$0xff]
            %v4088 = vld [vmem:[#allocation23 + $0x570] sm:$0xff]
            %v4089 = vld [vmem:[#allocation23 + $0x578] sm:$0xff]
            %v4090 = vld [vmem:[#allocation23 + $0x580] sm:$0xff]
            %v4091 = vld [vmem:[#allocation23 + $0x588] sm:$0xff]
            %v4092 = vld [vmem:[#allocation23 + $0x590] sm:$0xff]
            %v4093 = vld [vmem:[#allocation23 + $0x598] sm:$0xff]
            %v4094 = vld [vmem:[#allocation23 + $0x5a0] sm:$0xff]
            %v4095 = vld [vmem:[#allocation23 + $0x5a8] sm:$0xff]
            %v4096 = vld [vmem:[#allocation23 + $0x5b0] sm:$0xff]
            %v4097 = vld [vmem:[#allocation23 + $0x5b8] sm:$0xff]
            %v4098 = vld [vmem:[#allocation23 + $0x5c0] sm:$0xff]
            %v4099 = vld [vmem:[#allocation23 + $0x5c8] sm:$0xff]
            %v4100 = vld [vmem:[#allocation23 + $0x5d0] sm:$0xff]
            %v4101 = vld [vmem:[#allocation23 + $0x5d8] sm:$0xff]
            %v4102 = vld [vmem:[#allocation23 + $0x5e0] sm:$0xff]
            %v4103 = vld [vmem:[#allocation23 + $0x5e8] sm:$0xff]
            %v4104 = vld [vmem:[#allocation23 + $0x5f0] sm:$0xff]
            %v4105 = vld [vmem:[#allocation23 + $0x5f8] sm:$0xff]
            %v4106 = vld [vmem:[#allocation23 + $0x600] sm:$0xff]
            %v4107 = vld [vmem:[#allocation23 + $0x608] sm:$0xff]
            %v4108 = vld [vmem:[#allocation23 + $0x610] sm:$0xff]
            %v4109 = vld [vmem:[#allocation23 + $0x618] sm:$0xff]
            %v4110 = vld [vmem:[#allocation23 + $0x620] sm:$0xff]
            %v4111 = vld [vmem:[#allocation23 + $0x628] sm:$0xff]
            %v4112 = vld [vmem:[#allocation23 + $0x630] sm:$0xff]
            %v4113 = vld [vmem:[#allocation23 + $0x638] sm:$0xff]
            %v4114 = vld [vmem:[#allocation23 + $0x640] sm:$0xff]
            %v4115 = vld [vmem:[#allocation23 + $0x648] sm:$0xff]
            %v4116 = vld [vmem:[#allocation23 + $0x650] sm:$0xff]
            %v4117 = vld [vmem:[#allocation23 + $0x658] sm:$0xff]
            %v4118 = vld [vmem:[#allocation23 + $0x660] sm:$0xff]
            %v4119 = vld [vmem:[#allocation23 + $0x668] sm:$0xff]
            %v4120 = vld [vmem:[#allocation23 + $0x670] sm:$0xff]
            %v4121 = vld [vmem:[#allocation23 + $0x678] sm:$0xff]
            %v4122 = vld [vmem:[#allocation23 + $0x680] sm:$0xff]
            %v4123 = vld [vmem:[#allocation23 + $0x688] sm:$0xff]
            %v4124 = vld [vmem:[#allocation23 + $0x690] sm:$0xff]
            %v4125 = vld [vmem:[#allocation23 + $0x698] sm:$0xff]
            %v4126 = vld [vmem:[#allocation23 + $0x6a0] sm:$0xff]
            %v4127 = vld [vmem:[#allocation23 + $0x6a8] sm:$0xff]
            %v4128 = vld [vmem:[#allocation23 + $0x6b0] sm:$0xff]
            %v4129 = vld [vmem:[#allocation23 + $0x6b8] sm:$0xff]
            %v4130 = vld [vmem:[#allocation23 + $0x6c0] sm:$0xff]
            %v4131 = vld [vmem:[#allocation23 + $0x6c8] sm:$0xff]
            %v4132 = vld [vmem:[#allocation23 + $0x6d0] sm:$0xff]
            %v4133 = vld [vmem:[#allocation23 + $0x6d8] sm:$0xff]
            %v4134 = vld [vmem:[#allocation23 + $0x6e0] sm:$0xff]
            %v4135 = vld [vmem:[#allocation23 + $0x6e8] sm:$0xff]
            %v4136 = vld [vmem:[#allocation23 + $0x6f0] sm:$0xff]
            %v4137 = vld [vmem:[#allocation23 + $0x6f8] sm:$0xff]
            %v4138 = vld [vmem:[#allocation23 + $0x700] sm:$0xff]
            %v4139 = vld [vmem:[#allocation23 + $0x708] sm:$0xff]
            %v4140 = vld [vmem:[#allocation23 + $0x710] sm:$0xff]
            %v4141 = vld [vmem:[#allocation23 + $0x718] sm:$0xff]
            %v4142 = vld [vmem:[#allocation23 + $0x720] sm:$0xff]
            %v4143 = vld [vmem:[#allocation23 + $0x728] sm:$0xff]
            %v4144 = vld [vmem:[#allocation23 + $0x730] sm:$0xff]
            %v4145 = vld [vmem:[#allocation23 + $0x738] sm:$0xff]
            %v4146 = vld [vmem:[#allocation23 + $0x740] sm:$0xff]
            %v4147 = vld [vmem:[#allocation23 + $0x748] sm:$0xff]
            %v4148 = vld [vmem:[#allocation23 + $0x750] sm:$0xff]
            %v4149 = vld [vmem:[#allocation23 + $0x758] sm:$0xff]
            %v4150 = vld [vmem:[#allocation23 + $0x760] sm:$0xff]
            %v4151 = vld [vmem:[#allocation23 + $0x768] sm:$0xff]
            %v4152 = vld [vmem:[#allocation23 + $0x770] sm:$0xff]
            %v4153 = vld [vmem:[#allocation23 + $0x778] sm:$0xff]
            %v4154 = vld [vmem:[#allocation23 + $0x780] sm:$0xff]
            %v4155 = vld [vmem:[#allocation23 + $0x788] sm:$0xff]
            %v4156 = vld [vmem:[#allocation23 + $0x790] sm:$0xff]
            %v4157 = vld [vmem:[#allocation23 + $0x798] sm:$0xff]
            %v4158 = vld [vmem:[#allocation23 + $0x7a0] sm:$0xff]
            %v4159 = vld [vmem:[#allocation23 + $0x7a8] sm:$0xff]
            %v4160 = vld [vmem:[#allocation23 + $0x7b0] sm:$0xff]
            %v4161 = vld [vmem:[#allocation23 + $0x7b8] sm:$0xff]
            %v4162 = vld [vmem:[#allocation23 + $0x7c0] sm:$0xff]
            %v4163 = vld [vmem:[#allocation23 + $0x7c8] sm:$0xff]
            %v4164 = vld [vmem:[#allocation23 + $0x7d0] sm:$0xff]
            %v4165 = vld [vmem:[#allocation23 + $0x7d8] sm:$0xff]
            %v4166 = vld [vmem:[#allocation23 + $0x7e0] sm:$0xff]
            %v4167 = vld [vmem:[#allocation23 + $0x7e8] sm:$0xff]
            %v4168 = vld [vmem:[#allocation23 + $0x7f0] sm:$0xff]
            %v4169 = vld [vmem:[#allocation23 + $0x7f8] sm:$0xff]
            %v4170 = vld [vmem:[#allocation23 + $0x800] sm:$0xff]
            %v4171 = vld [vmem:[#allocation23 + $0x808] sm:$0xff]
            %v4172 = vld [vmem:[#allocation23 + $0x810] sm:$0xff]
            %v4173 = vld [vmem:[#allocation23 + $0x818] sm:$0xff]
            %v4174 = vld [vmem:[#allocation23 + $0x820] sm:$0xff]
            %v4175 = vld [vmem:[#allocation23 + $0x828] sm:$0xff]
            %v4176 = vld [vmem:[#allocation23 + $0x830] sm:$0xff]
            %v4177 = vld [vmem:[#allocation23 + $0x838] sm:$0xff]
            %v4178 = vld [vmem:[#allocation23 + $0x840] sm:$0xff]
            %v4179 = vld [vmem:[#allocation23 + $0x848] sm:$0xff]
            %v4180 = vld [vmem:[#allocation23 + $0x850] sm:$0xff]
            %v4181 = vld [vmem:[#allocation23 + $0x858] sm:$0xff]
            %v4182 = vld [vmem:[#allocation23 + $0x860] sm:$0xff]
            %v4183 = vld [vmem:[#allocation23 + $0x868] sm:$0xff]
            %v4184 = vld [vmem:[#allocation23 + $0x870] sm:$0xff]
            %v4185 = vld [vmem:[#allocation23 + $0x878] sm:$0xff]
            %v4186 = vld [vmem:[#allocation23 + $0x880] sm:$0xff]
            %v4187 = vld [vmem:[#allocation23 + $0x888] sm:$0xff]
            %v4188 = vld [vmem:[#allocation23 + $0x890] sm:$0xff]
            %v4189 = vld [vmem:[#allocation23 + $0x898] sm:$0xff]
            %v4190 = vld [vmem:[#allocation23 + $0x8a0] sm:$0xff]
            %v4191 = vld [vmem:[#allocation23 + $0x8a8] sm:$0xff]
            %v4192 = vld [vmem:[#allocation23 + $0x8b0] sm:$0xff]
            %v4193 = vld [vmem:[#allocation23 + $0x8b8] sm:$0xff]
            %v4194 = vld [vmem:[#allocation23 + $0x8c0] sm:$0xff]
            %v4195 = vld [vmem:[#allocation23 + $0x8c8] sm:$0xff]
            %v4196 = vld [vmem:[#allocation23 + $0x8d0] sm:$0xff]
            %v4197 = vld [vmem:[#allocation23 + $0x8d8] sm:$0xff]
            %v4198 = vld [vmem:[#allocation23 + $0x8e0] sm:$0xff]
            %v4199 = vld [vmem:[#allocation23 + $0x8e8] sm:$0xff]
            %v4200 = vld [vmem:[#allocation23 + $0x8f0] sm:$0xff]
            %v4201 = vld [vmem:[#allocation23 + $0x8f8] sm:$0xff]
            %v4202 = vld [vmem:[#allocation23 + $0x900] sm:$0xff]
            %v4203 = vld [vmem:[#allocation23 + $0x908] sm:$0xff]
            %v4204 = vld [vmem:[#allocation23 + $0x910] sm:$0xff]
            %v4205 = vld [vmem:[#allocation23 + $0x918] sm:$0xff]
            %v4206 = vld [vmem:[#allocation23 + $0x920] sm:$0xff]
            %v4207 = vld [vmem:[#allocation23 + $0x928] sm:$0xff]
            %v4208 = vld [vmem:[#allocation23 + $0x930] sm:$0xff]
            %v4209 = vld [vmem:[#allocation23 + $0x938] sm:$0xff]
            %v4210 = vld [vmem:[#allocation23 + $0x940] sm:$0xff]
            %v4211 = vld [vmem:[#allocation23 + $0x948] sm:$0xff]
            %v4212 = vld [vmem:[#allocation23 + $0x950] sm:$0xff]
            %v4213 = vld [vmem:[#allocation23 + $0x958] sm:$0xff]
            %v4214 = vld [vmem:[#allocation23 + $0x960] sm:$0xff]
            %v4215 = vld [vmem:[#allocation23 + $0x968] sm:$0xff]
            %v4216 = vld [vmem:[#allocation23 + $0x970] sm:$0xff]
            %v4217 = vld [vmem:[#allocation23 + $0x978] sm:$0xff]
            %v4218 = vld [vmem:[#allocation23 + $0x980] sm:$0xff]
            %v4219 = vld [vmem:[#allocation23 + $0x988] sm:$0xff]
            %v4220 = vld [vmem:[#allocation23 + $0x990] sm:$0xff]
            %v4221 = vld [vmem:[#allocation23 + $0x998] sm:$0xff]
            %v4222 = vld [vmem:[#allocation23 + $0x9a0] sm:$0xff]
            %v4223 = vld [vmem:[#allocation23 + $0x9a8] sm:$0xff]
            %v4224 = vld [vmem:[#allocation23 + $0x9b0] sm:$0xff]
            %v4225 = vld [vmem:[#allocation23 + $0x9b8] sm:$0xff]
            %v4226 = vld [vmem:[#allocation23 + $0x9c0] sm:$0xff]
            %v4227 = vld [vmem:[#allocation23 + $0x9c8] sm:$0xff]
            %v4228 = vld [vmem:[#allocation23 + $0x9d0] sm:$0xff]
            %v4229 = vld [vmem:[#allocation23 + $0x9d8] sm:$0xff]
            %v4230 = vld [vmem:[#allocation23 + $0x9e0] sm:$0xff]
            %v4231 = vld [vmem:[#allocation23 + $0x9e8] sm:$0xff]
            %v4232 = vld [vmem:[#allocation23 + $0x9f0] sm:$0xff]
            %v4233 = vld [vmem:[#allocation23 + $0x9f8] sm:$0xff]
            %v4234 = vld [vmem:[#allocation23 + $0xa00] sm:$0xff]
            %v4235 = vld [vmem:[#allocation23 + $0xa08] sm:$0xff]
            %v4236 = vld [vmem:[#allocation23 + $0xa10] sm:$0xff]
            %v4237 = vld [vmem:[#allocation23 + $0xa18] sm:$0xff]
            %v4238 = vld [vmem:[#allocation23 + $0xa20] sm:$0xff]
            %v4239 = vld [vmem:[#allocation23 + $0xa28] sm:$0xff]
            %v4240 = vld [vmem:[#allocation23 + $0xa30] sm:$0xff]
            %v4241 = vld [vmem:[#allocation23 + $0xa38] sm:$0xff]
            %v4242 = vld [vmem:[#allocation23 + $0xa40] sm:$0xff]
            %v4243 = vld [vmem:[#allocation23 + $0xa48] sm:$0xff]
            %v4244 = vld [vmem:[#allocation23 + $0xa50] sm:$0xff]
            %v4245 = vld [vmem:[#allocation23 + $0xa58] sm:$0xff]
            %v4246 = vld [vmem:[#allocation23 + $0xa60] sm:$0xff]
            %v4247 = vld [vmem:[#allocation23 + $0xa68] sm:$0xff]
            %v4248 = vld [vmem:[#allocation23 + $0xa70] sm:$0xff]
            %v4249 = vld [vmem:[#allocation23 + $0xa78] sm:$0xff]
            %v4250 = vld [vmem:[#allocation23 + $0xa80] sm:$0xff]
            %v4251 = vld [vmem:[#allocation23 + $0xa88] sm:$0xff]
            %v4252 = vld [vmem:[#allocation23 + $0xa90] sm:$0xff]
            %v4253 = vld [vmem:[#allocation23 + $0xa98] sm:$0xff]
            %v4254 = vld [vmem:[#allocation23 + $0xaa0] sm:$0xff]
            %v4255 = vld [vmem:[#allocation23 + $0xaa8] sm:$0xff]
            %v4256 = vld [vmem:[#allocation23 + $0xab0] sm:$0xff]
            %v4257 = vld [vmem:[#allocation23 + $0xab8] sm:$0xff]
            %v4258 = vld [vmem:[#allocation23 + $0xac0] sm:$0xff]
            %v4259 = vld [vmem:[#allocation23 + $0xac8] sm:$0xff]
            %v4260 = vld [vmem:[#allocation23 + $0xad0] sm:$0xff]
            %v4261 = vld [vmem:[#allocation23 + $0xad8] sm:$0xff]
            %v4262 = vld [vmem:[#allocation23 + $0xae0] sm:$0xff]
            %v4263 = vld [vmem:[#allocation23 + $0xae8] sm:$0xff]
            %v4264 = vld [vmem:[#allocation23 + $0xaf0] sm:$0xff]
            %v4265 = vld [vmem:[#allocation23 + $0xaf8] sm:$0xff]
            %v4266 = vld [vmem:[#allocation23 + $0xb00] sm:$0xff]
            %v4267 = vld [vmem:[#allocation23 + $0xb08] sm:$0xff]
            %v4268 = vld [vmem:[#allocation23 + $0xb10] sm:$0xff]
            %v4269 = vld [vmem:[#allocation23 + $0xb18] sm:$0xff]
            %v4270 = vld [vmem:[#allocation23 + $0xb20] sm:$0xff]
            %v4271 = vld [vmem:[#allocation23 + $0xb28] sm:$0xff]
            %v4272 = vld [vmem:[#allocation23 + $0xb30] sm:$0xff]
            %v4273 = vld [vmem:[#allocation23 + $0xb38] sm:$0xff]
            %v4274 = vld [vmem:[#allocation23 + $0xb40] sm:$0xff]
            %v4275 = vld [vmem:[#allocation23 + $0xb48] sm:$0xff]
            %v4276 = vld [vmem:[#allocation23 + $0xb50] sm:$0xff]
            %v4277 = vld [vmem:[#allocation23 + $0xb58] sm:$0xff]
            %v4278 = vld [vmem:[#allocation23 + $0xb60] sm:$0xff]
            %v4279 = vld [vmem:[#allocation23 + $0xb68] sm:$0xff]
            %v4280 = vld [vmem:[#allocation23 + $0xb70] sm:$0xff]
            %v4281 = vld [vmem:[#allocation23 + $0xb78] sm:$0xff]
            %v4282 = vld [vmem:[#allocation23 + $0xb80] sm:$0xff]
            %v4283 = vld [vmem:[#allocation23 + $0xb88] sm:$0xff]
            %v4284 = vld [vmem:[#allocation23 + $0xb90] sm:$0xff]
            %v4285 = vld [vmem:[#allocation23 + $0xb98] sm:$0xff]
            %v4286 = vld [vmem:[#allocation23 + $0xba0] sm:$0xff]
            %v4287 = vld [vmem:[#allocation23 + $0xba8] sm:$0xff]
            %v4288 = vld [vmem:[#allocation23 + $0xbb0] sm:$0xff]
            %v4289 = vld [vmem:[#allocation23 + $0xbb8] sm:$0xff]
            %v4290 = vld [vmem:[#allocation23 + $0xbc0] sm:$0xff]
            %v4291 = vld [vmem:[#allocation23 + $0xbc8] sm:$0xff]
            %v4292 = vld [vmem:[#allocation23 + $0xbd0] sm:$0xff]
            %v4293 = vld [vmem:[#allocation23 + $0xbd8] sm:$0xff]
            %v4294 = vld [vmem:[#allocation23 + $0xbe0] sm:$0xff]
            %v4295 = vld [vmem:[#allocation23 + $0xbe8] sm:$0xff]
            %v4296 = vld [vmem:[#allocation23 + $0xbf0] sm:$0xff]
            %v4297 = vld [vmem:[#allocation23 + $0xbf8] sm:$0xff]
            %v4298 = vld [vmem:[#allocation55] sm:$0xff]
            %v4299 = vld [vmem:[#allocation55 + $0x8] sm:$0xff]
            %v4300 = vld [vmem:[#allocation55 + $0x10] sm:$0xff]
            %v4304 = vlaneseq
            %v4305 = vshrl.u32 %v4304, 7
            %v4306 = vsub.s32 0, %v4305
            %v4307 = vrot.slane %v4298, %v4306
            %v4308 = vlaneseq
            %v4309 = vshrl.u32 %v4308, 7
            %v4310 = vsub.s32 1, %v4309
            %v4311 = vrot.slane %v4298, %v4310
            %v4312 = vlaneseq
            %v4313 = vshrl.u32 %v4312, 7
            %v4314 = vsub.s32 2, %v4313
            %v4315 = vrot.slane %v4298, %v4314
            %v4316 = vlaneseq
            %v4317 = vshrl.u32 %v4316, 7
            %v4318 = vsub.s32 3, %v4317
            %v4319 = vrot.slane %v4298, %v4318
            %v4320 = vlaneseq
            %v4321 = vshrl.u32 %v4320, 7
            %v4322 = vsub.s32 4, %v4321
            %v4323 = vrot.slane %v4298, %v4322
            %v4324 = vlaneseq
            %v4325 = vshrl.u32 %v4324, 7
            %v4326 = vsub.s32 5, %v4325
            %v4327 = vrot.slane %v4298, %v4326
            %v4328 = vlaneseq
            %v4329 = vshrl.u32 %v4328, 7
            %v4330 = vsub.s32 6, %v4329
            %v4331 = vrot.slane %v4298, %v4330
            %v4332 = vlaneseq
            %v4333 = vshrl.u32 %v4332, 7
            %v4334 = vsub.s32 7, %v4333
            %v4335 = vrot.slane %v4298, %v4334
            %v4336 = vlaneseq
            %v4337 = vshrl.u32 %v4336, 7
            %v4338 = vsub.s32 0, %v4337
            %v4339 = vrot.slane %v4299, %v4338
            %v4340 = vlaneseq
            %v4341 = vshrl.u32 %v4340, 7
            %v4342 = vsub.s32 1, %v4341
            %v4343 = vrot.slane %v4299, %v4342
            %v4344 = vlaneseq
            %v4345 = vshrl.u32 %v4344, 7
            %v4346 = vsub.s32 2, %v4345
            %v4347 = vrot.slane %v4299, %v4346
            %v4348 = vlaneseq
            %v4349 = vshrl.u32 %v4348, 7
            %v4350 = vsub.s32 3, %v4349
            %v4351 = vrot.slane %v4299, %v4350
            %v4352 = vlaneseq
            %v4353 = vshrl.u32 %v4352, 7
            %v4354 = vsub.s32 4, %v4353
            %v4355 = vrot.slane %v4299, %v4354
            %v4356 = vlaneseq
            %v4357 = vshrl.u32 %v4356, 7
            %v4358 = vsub.s32 5, %v4357
            %v4359 = vrot.slane %v4299, %v4358
            %v4360 = vlaneseq
            %v4361 = vshrl.u32 %v4360, 7
            %v4362 = vsub.s32 6, %v4361
            %v4363 = vrot.slane %v4299, %v4362
            %v4364 = vlaneseq
            %v4365 = vshrl.u32 %v4364, 7
            %v4366 = vsub.s32 7, %v4365
            %v4367 = vrot.slane %v4299, %v4366
            %v4368 = vlaneseq
            %v4369 = vshrl.u32 %v4368, 7
            %v4370 = vsub.s32 0, %v4369
            %v4371 = vrot.slane %v4300, %v4370
            %v4372 = vlaneseq
            %v4373 = vshrl.u32 %v4372, 7
            %v4374 = vsub.s32 1, %v4373
            %v4375 = vrot.slane %v4300, %v4374
            %v4376 = vlaneseq
            %v4377 = vshrl.u32 %v4376, 7
            %v4378 = vsub.s32 2, %v4377
            %v4379 = vrot.slane %v4300, %v4378
            %v4380 = vlaneseq
            %v4381 = vshrl.u32 %v4380, 7
            %v4382 = vsub.s32 3, %v4381
            %v4383 = vrot.slane %v4300, %v4382
            %v4384 = vlaneseq
            %v4385 = vshrl.u32 %v4384, 7
            %v4386 = vsub.s32 4, %v4385
            %v4387 = vrot.slane %v4300, %v4386
            %v4388 = vlaneseq
            %v4389 = vshrl.u32 %v4388, 7
            %v4390 = vsub.s32 5, %v4389
            %v4391 = vrot.slane %v4300, %v4390
            %v4392 = vlaneseq
            %v4393 = vshrl.u32 %v4392, 7
            %v4394 = vsub.s32 6, %v4393
            %v4395 = vrot.slane %v4300, %v4394
            %v4396 = vlaneseq
            %v4397 = vshrl.u32 %v4396, 7
            %v4398 = vsub.s32 7, %v4397
            %v4399 = vrot.slane %v4300, %v4398
            %4424 = vmatprep.subr.bf16.mxu0 %v3915
            %4425 = vmatpush1.bf16.msra.mxu0 %v3914
            %4426 = vmatprep.subr.bf16.mxu0 %v3939
            %4427 = vmatpush1.bf16.msra.mxu0 %v3938
            %4428 = vmatprep.subr.bf16.mxu0 %v3963
            %4429 = vmatpush1.bf16.msra.mxu0 %v3962
            %4430 = vmatprep.subr.bf16.mxu0 %v3987
            %4431 = vmatpush1.bf16.msra.mxu0 %v3986
            %4432 = vmatprep.subr.bf16.mxu0 %v4011
            %4433 = vmatpush1.bf16.msra.mxu0 %v4010
            %4434 = vmatprep.subr.bf16.mxu0 %v4035
            %4435 = vmatpush1.bf16.msra.mxu0 %v4034
            %4436 = vmatprep.subr.bf16.mxu0 %v4059
            %4437 = vmatpush1.bf16.msra.mxu0 %v4058
            %4438 = vmatprep.subr.bf16.mxu0 %v4083
            %4439 = vmatpush1.bf16.msra.mxu0 %v4082
            %4440 = vmatprep.subr.bf16.mxu0 %v4107
            %4441 = vmatpush1.bf16.msra.mxu0 %v4106
            %4442 = vmatprep.subr.bf16.mxu0 %v4131
            %4443 = vmatpush1.bf16.msra.mxu0 %v4130
            %4444 = vmatprep.subr.bf16.mxu0 %v4155
            %4445 = vmatpush1.bf16.msra.mxu0 %v4154
            %4446 = vmatprep.subr.bf16.mxu0 %v4179
            %4447 = vmatpush1.bf16.msra.mxu0 %v4178
            %4448 = vmatprep.subr.bf16.mxu0 %v4203
            %4449 = vmatpush1.bf16.msra.mxu0 %v4202
            %4450 = vmatprep.subr.bf16.mxu0 %v4227
            %4451 = vmatpush1.bf16.msra.mxu0 %v4226
            %4452 = vmatprep.subr.bf16.mxu0 %v4251
            %4453 = vmatpush1.bf16.msra.mxu0 %v4250
            %4454 = vmatprep.subr.bf16.mxu0 %v4275
            %4455 = vmatpush1.bf16.msra.mxu0 %v4274
            %4456 = vmatprep.mubr.bf16.mxu0 %v3913
            %4457 = vmatmul.mubr.bf16.gmra.mrb[0].mxu0 %v3912
            %v4458 = vpop.f32.mrb[0].mxu0
            %v4459 = vadd.f32 %v4307, %v4458
            %v4460 = vpop.f32.mrb[0].mxu0
            %v4461 = vadd.f32 %v4311, %v4460
            %v4462 = vpop.f32.mrb[0].mxu0
            %v4463 = vpop.f32.mrb[0].mxu0
            %4464 = vdwg.mxu0
            %4465 = vmatprep.subr.bf16.mxu0 %v3917
            %4466 = vmatpush1.bf16.msra.mxu0 %v3916
            %4467 = vmatprep.subr.bf16.mxu0 %v3941
            %4468 = vmatpush1.bf16.msra.mxu0 %v3940
            %4469 = vmatprep.subr.bf16.mxu0 %v3965
            %4470 = vmatpush1.bf16.msra.mxu0 %v3964
            %4471 = vmatprep.subr.bf16.mxu0 %v3989
            %4472 = vmatpush1.bf16.msra.mxu0 %v3988
            %4473 = vmatprep.subr.bf16.mxu0 %v4013
            %4474 = vmatpush1.bf16.msra.mxu0 %v4012
            %4475 = vmatprep.subr.bf16.mxu0 %v4037
            %4476 = vmatpush1.bf16.msra.mxu0 %v4036
            %4477 = vmatprep.subr.bf16.mxu0 %v4061
            %4478 = vmatpush1.bf16.msra.mxu0 %v4060
            %4479 = vmatprep.subr.bf16.mxu0 %v4085
            %4480 = vmatpush1.bf16.msra.mxu0 %v4084
            %4481 = vmatprep.subr.bf16.mxu0 %v4109
            %4482 = vmatpush1.bf16.msra.mxu0 %v4108
            %4483 = vmatprep.subr.bf16.mxu0 %v4133
            %4484 = vmatpush1.bf16.msra.mxu0 %v4132
            %4485 = vmatprep.subr.bf16.mxu0 %v4157
            %4486 = vmatpush1.bf16.msra.mxu0 %v4156
            %4487 = vmatprep.subr.bf16.mxu0 %v4181
            %4488 = vmatpush1.bf16.msra.mxu0 %v4180
            %4489 = vmatprep.subr.bf16.mxu0 %v4205
            %4490 = vmatpush1.bf16.msra.mxu0 %v4204
            %4491 = vmatprep.subr.bf16.mxu0 %v4229
            %4492 = vmatpush1.bf16.msra.mxu0 %v4228
            %4493 = vmatprep.subr.bf16.mxu0 %v4253
            %4494 = vmatpush1.bf16.msra.mxu0 %v4252
            %4495 = vmatprep.subr.bf16.mxu0 %v4277
            %4496 = vmatpush1.bf16.msra.mxu0 %v4276
            %4497 = vmatprep.mubr.bf16.mxu0 %v3913
            %4498 = vmatmul.mubr.bf16.gmra.mrb[0].mxu0 %v3912
            %v4499 = vpop.f32.mrb[0].mxu0
            %v4500 = vadd.f32 %v4315, %v4499
            %v4501 = vpop.f32.mrb[0].mxu0
            %v4502 = vadd.f32 %v4319, %v4501
            %v4503 = vpop.f32.mrb[0].mxu0
            %v4504 = vpop.f32.mrb[0].mxu0
            %4505 = vdwg.mxu0
            %4506 = vmatprep.subr.bf16.mxu0 %v3919
            %4507 = vmatpush1.bf16.msra.mxu0 %v3918
            %4508 = vmatprep.subr.bf16.mxu0 %v3943
            %4509 = vmatpush1.bf16.msra.mxu0 %v3942
            %4510 = vmatprep.subr.bf16.mxu0 %v3967
            %4511 = vmatpush1.bf16.msra.mxu0 %v3966
            %4512 = vmatprep.subr.bf16.mxu0 %v3991
            %4513 = vmatpush1.bf16.msra.mxu0 %v3990
            %4514 = vmatprep.subr.bf16.mxu0 %v4015
            %4515 = vmatpush1.bf16.msra.mxu0 %v4014
            %4516 = vmatprep.subr.bf16.mxu0 %v4039
            %4517 = vmatpush1.bf16.msra.mxu0 %v4038
            %4518 = vmatprep.subr.bf16.mxu0 %v4063
            %4519 = vmatpush1.bf16.msra.mxu0 %v4062
            %4520 = vmatprep.subr.bf16.mxu0 %v4087
            %4521 = vmatpush1.bf16.msra.mxu0 %v4086
            %4522 = vmatprep.subr.bf16.mxu0 %v4111
            %4523 = vmatpush1.bf16.msra.mxu0 %v4110
            %4524 = vmatprep.subr.bf16.mxu0 %v4135
            %4525 = vmatpush1.bf16.msra.mxu0 %v4134
            %4526 = vmatprep.subr.bf16.mxu0 %v4159
            %4527 = vmatpush1.bf16.msra.mxu0 %v4158
            %4528 = vmatprep.subr.bf16.mxu0 %v4183
            %4529 = vmatpush1.bf16.msra.mxu0 %v4182
            %4530 = vmatprep.subr.bf16.mxu0 %v4207
            %4531 = vmatpush1.bf16.msra.mxu0 %v4206
            %4532 = vmatprep.subr.bf16.mxu0 %v4231
            %4533 = vmatpush1.bf16.msra.mxu0 %v4230
            %4534 = vmatprep.subr.bf16.mxu0 %v4255
            %4535 = vmatpush1.bf16.msra.mxu0 %v4254
            %4536 = vmatprep.subr.bf16.mxu0 %v4279
            %4537 = vmatpush1.bf16.msra.mxu0 %v4278
            %4538 = vmatprep.mubr.bf16.mxu0 %v3913
            %4539 = vmatmul.mubr.bf16.gmra.mrb[0].mxu0 %v3912
            %v4540 = vpop.f32.mrb[0].mxu0
            %v4541 = vadd.f32 %v4323, %v4540
            %v4542 = vpop.f32.mrb[0].mxu0
            %v4543 = vadd.f32 %v4327, %v4542
            %v4544 = vpop.f32.mrb[0].mxu0
            %v4545 = vpop.f32.mrb[0].mxu0
            %4546 = vdwg.mxu0
            %4547 = vmatprep.subr.bf16.mxu0 %v3921
            %4548 = vmatpush1.bf16.msra.mxu0 %v3920
            %4549 = vmatprep.subr.bf16.mxu0 %v3945
            %4550 = vmatpush1.bf16.msra.mxu0 %v3944
            %4551 = vmatprep.subr.bf16.mxu0 %v3969
            %4552 = vmatpush1.bf16.msra.mxu0 %v3968
            %4553 = vmatprep.subr.bf16.mxu0 %v3993
            %4554 = vmatpush1.bf16.msra.mxu0 %v3992
            %4555 = vmatprep.subr.bf16.mxu0 %v4017
            %4556 = vmatpush1.bf16.msra.mxu0 %v4016
            %4557 = vmatprep.subr.bf16.mxu0 %v4041
            %4558 = vmatpush1.bf16.msra.mxu0 %v4040
            %4559 = vmatprep.subr.bf16.mxu0 %v4065
            %4560 = vmatpush1.bf16.msra.mxu0 %v4064
            %4561 = vmatprep.subr.bf16.mxu0 %v4089
            %4562 = vmatpush1.bf16.msra.mxu0 %v4088
            %4563 = vmatprep.subr.bf16.mxu0 %v4113
            %4564 = vmatpush1.bf16.msra.mxu0 %v4112
            %4565 = vmatprep.subr.bf16.mxu0 %v4137
            %4566 = vmatpush1.bf16.msra.mxu0 %v4136
            %4567 = vmatprep.subr.bf16.mxu0 %v4161
            %4568 = vmatpush1.bf16.msra.mxu0 %v4160
            %4569 = vmatprep.subr.bf16.mxu0 %v4185
            %4570 = vmatpush1.bf16.msra.mxu0 %v4184
            %4571 = vmatprep.subr.bf16.mxu0 %v4209
            %4572 = vmatpush1.bf16.msra.mxu0 %v4208
            %4573 = vmatprep.subr.bf16.mxu0 %v4233
            %4574 = vmatpush1.bf16.msra.mxu0 %v4232
            %4575 = vmatprep.subr.bf16.mxu0 %v4257
            %4576 = vmatpush1.bf16.msra.mxu0 %v4256
            %4577 = vmatprep.subr.bf16.mxu0 %v4281
            %4578 = vmatpush1.bf16.msra.mxu0 %v4280
            %4579 = vmatprep.mubr.bf16.mxu0 %v3913
            %4580 = vmatmul.mubr.bf16.gmra.mrb[0].mxu0 %v3912
            %v4581 = vpop.f32.mrb[0].mxu0
            %v4582 = vadd.f32 %v4331, %v4581
            %v4583 = vpop.f32.mrb[0].mxu0
            %v4584 = vadd.f32 %v4335, %v4583
            %v4585 = vpop.f32.mrb[0].mxu0
            %v4586 = vpop.f32.mrb[0].mxu0
            %4587 = vdwg.mxu0
            %4588 = vmatprep.subr.bf16.mxu0 %v3923
            %4589 = vmatpush1.bf16.msra.mxu0 %v3922
            %4590 = vmatprep.subr.bf16.mxu0 %v3947
            %4591 = vmatpush1.bf16.msra.mxu0 %v3946
            %4592 = vmatprep.subr.bf16.mxu0 %v3971
            %4593 = vmatpush1.bf16.msra.mxu0 %v3970
            %4594 = vmatprep.subr.bf16.mxu0 %v3995
            %4595 = vmatpush1.bf16.msra.mxu0 %v3994
            %4596 = vmatprep.subr.bf16.mxu0 %v4019
            %4597 = vmatpush1.bf16.msra.mxu0 %v4018
            %4598 = vmatprep.subr.bf16.mxu0 %v4043
            %4599 = vmatpush1.bf16.msra.mxu0 %v4042
            %4600 = vmatprep.subr.bf16.mxu0 %v4067
            %4601 = vmatpush1.bf16.msra.mxu0 %v4066
            %4602 = vmatprep.subr.bf16.mxu0 %v4091
            %4603 = vmatpush1.bf16.msra.mxu0 %v4090
            %4604 = vmatprep.subr.bf16.mxu0 %v4115
            %4605 = vmatpush1.bf16.msra.mxu0 %v4114
            %4606 = vmatprep.subr.bf16.mxu0 %v4139
            %4607 = vmatpush1.bf16.msra.mxu0 %v4138
            %4608 = vmatprep.subr.bf16.mxu0 %v4163
            %4609 = vmatpush1.bf16.msra.mxu0 %v4162
            %4610 = vmatprep.subr.bf16.mxu0 %v4187
            %4611 = vmatpush1.bf16.msra.mxu0 %v4186
            %4612 = vmatprep.subr.bf16.mxu0 %v4211
            %4613 = vmatpush1.bf16.msra.mxu0 %v4210
            %4614 = vmatprep.subr.bf16.mxu0 %v4235
            %4615 = vmatpush1.bf16.msra.mxu0 %v4234
            %4616 = vmatprep.subr.bf16.mxu0 %v4259
            %4617 = vmatpush1.bf16.msra.mxu0 %v4258
            %4618 = vmatprep.subr.bf16.mxu0 %v4283
            %4619 = vmatpush1.bf16.msra.mxu0 %v4282
            %4620 = vmatprep.mubr.bf16.mxu0 %v3913
            %4621 = vmatmul.mubr.bf16.gmra.mrb[0].mxu0 %v3912
            %v4622 = vpop.f32.mrb[0].mxu0
            %v4623 = vadd.f32 %v4339, %v4622
            %v4624 = vpop.f32.mrb[0].mxu0
            %v4625 = vadd.f32 %v4343, %v4624
            %v4626 = vpop.f32.mrb[0].mxu0
            %v4627 = vpop.f32.mrb[0].mxu0
            %4628 = vdwg.mxu0
            %4629 = vmatprep.subr.bf16.mxu0 %v3925
            %4630 = vmatpush1.bf16.msra.mxu0 %v3924
            %4631 = vmatprep.subr.bf16.mxu0 %v3949
            %4632 = vmatpush1.bf16.msra.mxu0 %v3948
            %4633 = vmatprep.subr.bf16.mxu0 %v3973
            %4634 = vmatpush1.bf16.msra.mxu0 %v3972
            %4635 = vmatprep.subr.bf16.mxu0 %v3997
            %4636 = vmatpush1.bf16.msra.mxu0 %v3996
            %4637 = vmatprep.subr.bf16.mxu0 %v4021
            %4638 = vmatpush1.bf16.msra.mxu0 %v4020
            %4639 = vmatprep.subr.bf16.mxu0 %v4045
            %4640 = vmatpush1.bf16.msra.mxu0 %v4044
            %4641 = vmatprep.subr.bf16.mxu0 %v4069
            %4642 = vmatpush1.bf16.msra.mxu0 %v4068
            %4643 = vmatprep.subr.bf16.mxu0 %v4093
            %4644 = vmatpush1.bf16.msra.mxu0 %v4092
            %4645 = vmatprep.subr.bf16.mxu0 %v4117
            %4646 = vmatpush1.bf16.msra.mxu0 %v4116
            %4647 = vmatprep.subr.bf16.mxu0 %v4141
            %4648 = vmatpush1.bf16.msra.mxu0 %v4140
            %4649 = vmatprep.subr.bf16.mxu0 %v4165
            %4650 = vmatpush1.bf16.msra.mxu0 %v4164
            %4651 = vmatprep.subr.bf16.mxu0 %v4189
            %4652 = vmatpush1.bf16.msra.mxu0 %v4188
            %4653 = vmatprep.subr.bf16.mxu0 %v4213
            %4654 = vmatpush1.bf16.msra.mxu0 %v4212
            %4655 = vmatprep.subr.bf16.mxu0 %v4237
            %4656 = vmatpush1.bf16.msra.mxu0 %v4236
            %4657 = vmatprep.subr.bf16.mxu0 %v4261
            %4658 = vmatpush1.bf16.msra.mxu0 %v4260
            %4659 = vmatprep.subr.bf16.mxu0 %v4285
            %4660 = vmatpush1.bf16.msra.mxu0 %v4284
            %4661 = vmatprep.mubr.bf16.mxu0 %v3913
            %4662 = vmatmul.mubr.bf16.gmra.mrb[0].mxu0 %v3912
            %v4663 = vpop.f32.mrb[0].mxu0
            %v4664 = vadd.f32 %v4347, %v4663
            %v4665 = vpop.f32.mrb[0].mxu0
            %v4666 = vadd.f32 %v4351, %v4665
            %v4667 = vpop.f32.mrb[0].mxu0
            %v4668 = vpop.f32.mrb[0].mxu0
            %4669 = vdwg.mxu0
            %4670 = vmatprep.subr.bf16.mxu0 %v3927
            %4671 = vmatpush1.bf16.msra.mxu0 %v3926
            %4672 = vmatprep.subr.bf16.mxu0 %v3951
            %4673 = vmatpush1.bf16.msra.mxu0 %v3950
            %4674 = vmatprep.subr.bf16.mxu0 %v3975
            %4675 = vmatpush1.bf16.msra.mxu0 %v3974
            %4676 = vmatprep.subr.bf16.mxu0 %v3999
            %4677 = vmatpush1.bf16.msra.mxu0 %v3998
            %4678 = vmatprep.subr.bf16.mxu0 %v4023
            %4679 = vmatpush1.bf16.msra.mxu0 %v4022
            %4680 = vmatprep.subr.bf16.mxu0 %v4047
            %4681 = vmatpush1.bf16.msra.mxu0 %v4046
            %4682 = vmatprep.subr.bf16.mxu0 %v4071
            %4683 = vmatpush1.bf16.msra.mxu0 %v4070
            %4684 = vmatprep.subr.bf16.mxu0 %v4095
            %4685 = vmatpush1.bf16.msra.mxu0 %v4094
            %4686 = vmatprep.subr.bf16.mxu0 %v4119
            %4687 = vmatpush1.bf16.msra.mxu0 %v4118
            %4688 = vmatprep.subr.bf16.mxu0 %v4143
            %4689 = vmatpush1.bf16.msra.mxu0 %v4142
            %4690 = vmatprep.subr.bf16.mxu0 %v4167
            %4691 = vmatpush1.bf16.msra.mxu0 %v4166
            %4692 = vmatprep.subr.bf16.mxu0 %v4191
            %4693 = vmatpush1.bf16.msra.mxu0 %v4190
            %4694 = vmatprep.subr.bf16.mxu0 %v4215
            %4695 = vmatpush1.bf16.msra.mxu0 %v4214
            %4696 = vmatprep.subr.bf16.mxu0 %v4239
            %4697 = vmatpush1.bf16.msra.mxu0 %v4238
            %4698 = vmatprep.subr.bf16.mxu0 %v4263
            %4699 = vmatpush1.bf16.msra.mxu0 %v4262
            %4700 = vmatprep.subr.bf16.mxu0 %v4287
            %4701 = vmatpush1.bf16.msra.mxu0 %v4286
            %4702 = vmatprep.mubr.bf16.mxu0 %v3913
            %4703 = vmatmul.mubr.bf16.gmra.mrb[0].mxu0 %v3912
            %v4704 = vpop.f32.mrb[0].mxu0
            %v4705 = vadd.f32 %v4355, %v4704
            %v4706 = vpop.f32.mrb[0].mxu0
            %v4707 = vadd.f32 %v4359, %v4706
            %v4708 = vpop.f32.mrb[0].mxu0
            %v4709 = vpop.f32.mrb[0].mxu0
            %4710 = vdwg.mxu0
            %4711 = vmatprep.subr.bf16.mxu0 %v3929
            %4712 = vmatpush1.bf16.msra.mxu0 %v3928
            %4713 = vmatprep.subr.bf16.mxu0 %v3953
            %4714 = vmatpush1.bf16.msra.mxu0 %v3952
            %4715 = vmatprep.subr.bf16.mxu0 %v3977
            %4716 = vmatpush1.bf16.msra.mxu0 %v3976
            %4717 = vmatprep.subr.bf16.mxu0 %v4001
            %4718 = vmatpush1.bf16.msra.mxu0 %v4000
            %4719 = vmatprep.subr.bf16.mxu0 %v4025
            %4720 = vmatpush1.bf16.msra.mxu0 %v4024
            %4721 = vmatprep.subr.bf16.mxu0 %v4049
            %4722 = vmatpush1.bf16.msra.mxu0 %v4048
            %4723 = vmatprep.subr.bf16.mxu0 %v4073
            %4724 = vmatpush1.bf16.msra.mxu0 %v4072
            %4725 = vmatprep.subr.bf16.mxu0 %v4097
            %4726 = vmatpush1.bf16.msra.mxu0 %v4096
            %4727 = vmatprep.subr.bf16.mxu0 %v4121
            %4728 = vmatpush1.bf16.msra.mxu0 %v4120
            %4729 = vmatprep.subr.bf16.mxu0 %v4145
            %4730 = vmatpush1.bf16.msra.mxu0 %v4144
            %4731 = vmatprep.subr.bf16.mxu0 %v4169
            %4732 = vmatpush1.bf16.msra.mxu0 %v4168
            %4733 = vmatprep.subr.bf16.mxu0 %v4193
            %4734 = vmatpush1.bf16.msra.mxu0 %v4192
            %4735 = vmatprep.subr.bf16.mxu0 %v4217
            %4736 = vmatpush1.bf16.msra.mxu0 %v4216
            %4737 = vmatprep.subr.bf16.mxu0 %v4241
            %4738 = vmatpush1.bf16.msra.mxu0 %v4240
            %4739 = vmatprep.subr.bf16.mxu0 %v4265
            %4740 = vmatpush1.bf16.msra.mxu0 %v4264
            %4741 = vmatprep.subr.bf16.mxu0 %v4289
            %4742 = vmatpush1.bf16.msra.mxu0 %v4288
            %4743 = vmatprep.mubr.bf16.mxu0 %v3913
            %4744 = vmatmul.mubr.bf16.gmra.mrb[0].mxu0 %v3912
            %v4745 = vpop.f32.mrb[0].mxu0
            %v4746 = vadd.f32 %v4363, %v4745
            %v4747 = vpop.f32.mrb[0].mxu0
            %v4748 = vadd.f32 %v4367, %v4747
            %v4749 = vpop.f32.mrb[0].mxu0
            %v4750 = vpop.f32.mrb[0].mxu0
            %4751 = vdwg.mxu0
            %4752 = vmatprep.subr.bf16.mxu0 %v3931
            %4753 = vmatpush1.bf16.msra.mxu0 %v3930
            %4754 = vmatprep.subr.bf16.mxu0 %v3955
            %4755 = vmatpush1.bf16.msra.mxu0 %v3954
            %4756 = vmatprep.subr.bf16.mxu0 %v3979
            %4757 = vmatpush1.bf16.msra.mxu0 %v3978
            %4758 = vmatprep.subr.bf16.mxu0 %v4003
            %4759 = vmatpush1.bf16.msra.mxu0 %v4002
            %4760 = vmatprep.subr.bf16.mxu0 %v4027
            %4761 = vmatpush1.bf16.msra.mxu0 %v4026
            %4762 = vmatprep.subr.bf16.mxu0 %v4051
            %4763 = vmatpush1.bf16.msra.mxu0 %v4050
            %4764 = vmatprep.subr.bf16.mxu0 %v4075
            %4765 = vmatpush1.bf16.msra.mxu0 %v4074
            %4766 = vmatprep.subr.bf16.mxu0 %v4099
            %4767 = vmatpush1.bf16.msra.mxu0 %v4098
            %4768 = vmatprep.subr.bf16.mxu0 %v4123
            %4769 = vmatpush1.bf16.msra.mxu0 %v4122
            %4770 = vmatprep.subr.bf16.mxu0 %v4147
            %4771 = vmatpush1.bf16.msra.mxu0 %v4146
            %4772 = vmatprep.subr.bf16.mxu0 %v4171
            %4773 = vmatpush1.bf16.msra.mxu0 %v4170
            %4774 = vmatprep.subr.bf16.mxu0 %v4195
            %4775 = vmatpush1.bf16.msra.mxu0 %v4194
            %4776 = vmatprep.subr.bf16.mxu0 %v4219
            %4777 = vmatpush1.bf16.msra.mxu0 %v4218
            %4778 = vmatprep.subr.bf16.mxu0 %v4243
            %4779 = vmatpush1.bf16.msra.mxu0 %v4242
            %4780 = vmatprep.subr.bf16.mxu0 %v4267
            %4781 = vmatpush1.bf16.msra.mxu0 %v4266
            %4782 = vmatprep.subr.bf16.mxu0 %v4291
            %4783 = vmatpush1.bf16.msra.mxu0 %v4290
            %4784 = vmatprep.mubr.bf16.mxu0 %v3913
            %4785 = vmatmul.mubr.bf16.gmra.mrb[0].mxu0 %v3912
            %v4786 = vpop.f32.mrb[0].mxu0
            %v4787 = vadd.f32 %v4371, %v4786
            %v4788 = vpop.f32.mrb[0].mxu0
            %v4789 = vadd.f32 %v4375, %v4788
            %v4790 = vpop.f32.mrb[0].mxu0
            %v4791 = vpop.f32.mrb[0].mxu0
            %4792 = vdwg.mxu0
            %4793 = vmatprep.subr.bf16.mxu0 %v3933
            %4794 = vmatpush1.bf16.msra.mxu0 %v3932
            %4795 = vmatprep.subr.bf16.mxu0 %v3957
            %4796 = vmatpush1.bf16.msra.mxu0 %v3956
            %4797 = vmatprep.subr.bf16.mxu0 %v3981
            %4798 = vmatpush1.bf16.msra.mxu0 %v3980
            %4799 = vmatprep.subr.bf16.mxu0 %v4005
            %4800 = vmatpush1.bf16.msra.mxu0 %v4004
            %4801 = vmatprep.subr.bf16.mxu0 %v4029
            %4802 = vmatpush1.bf16.msra.mxu0 %v4028
            %4803 = vmatprep.subr.bf16.mxu0 %v4053
            %4804 = vmatpush1.bf16.msra.mxu0 %v4052
            %4805 = vmatprep.subr.bf16.mxu0 %v4077
            %4806 = vmatpush1.bf16.msra.mxu0 %v4076
            %4807 = vmatprep.subr.bf16.mxu0 %v4101
            %4808 = vmatpush1.bf16.msra.mxu0 %v4100
            %4809 = vmatprep.subr.bf16.mxu0 %v4125
            %4810 = vmatpush1.bf16.msra.mxu0 %v4124
            %4811 = vmatprep.subr.bf16.mxu0 %v4149
            %4812 = vmatpush1.bf16.msra.mxu0 %v4148
            %4813 = vmatprep.subr.bf16.mxu0 %v4173
            %4814 = vmatpush1.bf16.msra.mxu0 %v4172
            %4815 = vmatprep.subr.bf16.mxu0 %v4197
            %4816 = vmatpush1.bf16.msra.mxu0 %v4196
            %4817 = vmatprep.subr.bf16.mxu0 %v4221
            %4818 = vmatpush1.bf16.msra.mxu0 %v4220
            %4819 = vmatprep.subr.bf16.mxu0 %v4245
            %4820 = vmatpush1.bf16.msra.mxu0 %v4244
            %4821 = vmatprep.subr.bf16.mxu0 %v4269
            %4822 = vmatpush1.bf16.msra.mxu0 %v4268
            %4823 = vmatprep.subr.bf16.mxu0 %v4293
            %4824 = vmatpush1.bf16.msra.mxu0 %v4292
            %4825 = vmatprep.mubr.bf16.mxu0 %v3913
            %4826 = vmatmul.mubr.bf16.gmra.mrb[0].mxu0 %v3912
            %v4827 = vpop.f32.mrb[0].mxu0
            %v4828 = vadd.f32 %v4379, %v4827
            %v4829 = vpop.f32.mrb[0].mxu0
            %v4830 = vadd.f32 %v4383, %v4829
            %v4831 = vpop.f32.mrb[0].mxu0
            %v4832 = vpop.f32.mrb[0].mxu0
            %4833 = vdwg.mxu0
            %4834 = vmatprep.subr.bf16.mxu0 %v3935
            %4835 = vmatpush1.bf16.msra.mxu0 %v3934
            %4836 = vmatprep.subr.bf16.mxu0 %v3959
            %4837 = vmatpush1.bf16.msra.mxu0 %v3958
            %4838 = vmatprep.subr.bf16.mxu0 %v3983
            %4839 = vmatpush1.bf16.msra.mxu0 %v3982
            %4840 = vmatprep.subr.bf16.mxu0 %v4007
            %4841 = vmatpush1.bf16.msra.mxu0 %v4006
            %4842 = vmatprep.subr.bf16.mxu0 %v4031
            %4843 = vmatpush1.bf16.msra.mxu0 %v4030
            %4844 = vmatprep.subr.bf16.mxu0 %v4055
            %4845 = vmatpush1.bf16.msra.mxu0 %v4054
            %4846 = vmatprep.subr.bf16.mxu0 %v4079
            %4847 = vmatpush1.bf16.msra.mxu0 %v4078
            %4848 = vmatprep.subr.bf16.mxu0 %v4103
            %4849 = vmatpush1.bf16.msra.mxu0 %v4102
            %4850 = vmatprep.subr.bf16.mxu0 %v4127
            %4851 = vmatpush1.bf16.msra.mxu0 %v4126
            %4852 = vmatprep.subr.bf16.mxu0 %v4151
            %4853 = vmatpush1.bf16.msra.mxu0 %v4150
            %4854 = vmatprep.subr.bf16.mxu0 %v4175
            %4855 = vmatpush1.bf16.msra.mxu0 %v4174
            %4856 = vmatprep.subr.bf16.mxu0 %v4199
            %4857 = vmatpush1.bf16.msra.mxu0 %v4198
            %4858 = vmatprep.subr.bf16.mxu0 %v4223
            %4859 = vmatpush1.bf16.msra.mxu0 %v4222
            %4860 = vmatprep.subr.bf16.mxu0 %v4247
            %4861 = vmatpush1.bf16.msra.mxu0 %v4246
            %4862 = vmatprep.subr.bf16.mxu0 %v4271
            %4863 = vmatpush1.bf16.msra.mxu0 %v4270
            %4864 = vmatprep.subr.bf16.mxu0 %v4295
            %4865 = vmatpush1.bf16.msra.mxu0 %v4294
            %4866 = vmatprep.mubr.bf16.mxu0 %v3913
            %4867 = vmatmul.mubr.bf16.gmra.mrb[0].mxu0 %v3912
            %v4868 = vpop.f32.mrb[0].mxu0
            %v4869 = vadd.f32 %v4387, %v4868
            %v4870 = vpop.f32.mrb[0].mxu0
            %v4871 = vadd.f32 %v4391, %v4870
            %v4872 = vpop.f32.mrb[0].mxu0
            %v4873 = vpop.f32.mrb[0].mxu0
            %4874 = vdwg.mxu0
            %4875 = vmatprep.subr.bf16.mxu0 %v3937
            %4876 = vmatpush1.bf16.msra.mxu0 %v3936
            %4877 = vmatprep.subr.bf16.mxu0 %v3961
            %4878 = vmatpush1.bf16.msra.mxu0 %v3960
            %4879 = vmatprep.subr.bf16.mxu0 %v3985
            %4880 = vmatpush1.bf16.msra.mxu0 %v3984
            %4881 = vmatprep.subr.bf16.mxu0 %v4009
            %4882 = vmatpush1.bf16.msra.mxu0 %v4008
            %4883 = vmatprep.subr.bf16.mxu0 %v4033
            %4884 = vmatpush1.bf16.msra.mxu0 %v4032
            %4885 = vmatprep.subr.bf16.mxu0 %v4057
            %4886 = vmatpush1.bf16.msra.mxu0 %v4056
            %4887 = vmatprep.subr.bf16.mxu0 %v4081
            %4888 = vmatpush1.bf16.msra.mxu0 %v4080
            %4889 = vmatprep.subr.bf16.mxu0 %v4105
            %4890 = vmatpush1.bf16.msra.mxu0 %v4104
            %4891 = vmatprep.subr.bf16.mxu0 %v4129
            %4892 = vmatpush1.bf16.msra.mxu0 %v4128
            %4893 = vmatprep.subr.bf16.mxu0 %v4153
            %4894 = vmatpush1.bf16.msra.mxu0 %v4152
            %4895 = vmatprep.subr.bf16.mxu0 %v4177
            %4896 = vmatpush1.bf16.msra.mxu0 %v4176
            %4897 = vmatprep.subr.bf16.mxu0 %v4201
            %4898 = vmatpush1.bf16.msra.mxu0 %v4200
            %4899 = vmatprep.subr.bf16.mxu0 %v4225
            %4900 = vmatpush1.bf16.msra.mxu0 %v4224
            %4901 = vmatprep.subr.bf16.mxu0 %v4249
            %4902 = vmatpush1.bf16.msra.mxu0 %v4248
            %4903 = vmatprep.subr.bf16.mxu0 %v4273
            %4904 = vmatpush1.bf16.msra.mxu0 %v4272
            %4905 = vmatprep.subr.bf16.mxu0 %v4297
            %4906 = vmatpush1.bf16.msra.mxu0 %v4296
            %4907 = vmatprep.mubr.bf16.mxu0 %v3913
            %4908 = vmatmul.mubr.bf16.gmra.mrb[0].mxu0 %v3912
            %v4909 = vpop.f32.mrb[0].mxu0
            %v4910 = vadd.f32 %v4395, %v4909
            %v4911 = vpop.f32.mrb[0].mxu0
            %v4912 = vadd.f32 %v4399, %v4911
            %v4913 = vpop.f32.mrb[0].mxu0
            %v4914 = vpop.f32.mrb[0].mxu0
            %4915 = vdwg.mxu0
            %v4940 = vcombine.low %v4459, %v4461
            %v4941 = vcombine.low %v4500, %v4502
            %v4943 = vunpack.c.l.s4 1983009808
            %v4944 = vunpack.c.0.s8 %v4943
            %v4945 = vlaneseq
            %v4946 = vshrl.u32 %v4945, 7
            %v4947 = vsub.s32 %v4944, %v4946
            %v4948 = vrot.slane %v4940, %v4947
            %v4950 = vunpack.c.l.s4 1983009808
            %v4951 = vunpack.c.0.s8 %v4950
            %v4952 = vlaneseq
            %v4953 = vshrl.u32 %v4952, 7
            %v4954 = vsub.s32 %v4951, %v4953
            %v4955 = vrot.slane %v4941, %v4954
            %v4956 = vcombine.low %v4948, %v4955
            %v4957 = vcombine.low %v4541, %v4543
            %v4958 = vcombine.low %v4582, %v4584
            %v4960 = vunpack.c.l.s4 1983009808
            %v4961 = vunpack.c.0.s8 %v4960
            %v4962 = vlaneseq
            %v4963 = vshrl.u32 %v4962, 7
            %v4964 = vsub.s32 %v4961, %v4963
            %v4965 = vrot.slane %v4957, %v4964
            %v4967 = vunpack.c.l.s4 1983009808
            %v4968 = vunpack.c.0.s8 %v4967
            %v4969 = vlaneseq
            %v4970 = vshrl.u32 %v4969, 7
            %v4971 = vsub.s32 %v4968, %v4970
            %v4972 = vrot.slane %v4958, %v4971
            %v4973 = vcombine.low %v4965, %v4972
            %v4974 = vcombine.low %v4623, %v4625
            %v4975 = vcombine.low %v4664, %v4666
            %v4977 = vunpack.c.l.s4 1983009808
            %v4978 = vunpack.c.0.s8 %v4977
            %v4979 = vlaneseq
            %v4980 = vshrl.u32 %v4979, 7
            %v4981 = vsub.s32 %v4978, %v4980
            %v4982 = vrot.slane %v4974, %v4981
            %v4984 = vunpack.c.l.s4 1983009808
            %v4985 = vunpack.c.0.s8 %v4984
            %v4986 = vlaneseq
            %v4987 = vshrl.u32 %v4986, 7
            %v4988 = vsub.s32 %v4985, %v4987
            %v4989 = vrot.slane %v4975, %v4988
            %v4990 = vcombine.low %v4982, %v4989
            %v4991 = vcombine.low %v4705, %v4707
            %v4992 = vcombine.low %v4746, %v4748
            %v4994 = vunpack.c.l.s4 1983009808
            %v4995 = vunpack.c.0.s8 %v4994
            %v4996 = vlaneseq
            %v4997 = vshrl.u32 %v4996, 7
            %v4998 = vsub.s32 %v4995, %v4997
            %v4999 = vrot.slane %v4991, %v4998
            %v5001 = vunpack.c.l.s4 1983009808
            %v5002 = vunpack.c.0.s8 %v5001
            %v5003 = vlaneseq
            %v5004 = vshrl.u32 %v5003, 7
            %v5005 = vsub.s32 %v5002, %v5004
            %v5006 = vrot.slane %v4992, %v5005
            %v5007 = vcombine.low %v4999, %v5006
            %v5008 = vcombine.low %v4787, %v4789
            %v5009 = vcombine.low %v4828, %v4830
            %v5011 = vunpack.c.l.s4 1983009808
            %v5012 = vunpack.c.0.s8 %v5011
            %v5013 = vlaneseq
            %v5014 = vshrl.u32 %v5013, 7
            %v5015 = vsub.s32 %v5012, %v5014
            %v5016 = vrot.slane %v5008, %v5015
            %v5018 = vunpack.c.l.s4 1983009808
            %v5019 = vunpack.c.0.s8 %v5018
            %v5020 = vlaneseq
            %v5021 = vshrl.u32 %v5020, 7
            %v5022 = vsub.s32 %v5019, %v5021
            %v5023 = vrot.slane %v5009, %v5022
            %v5024 = vcombine.low %v5016, %v5023
            %v5025 = vcombine.low %v4869, %v4871
            %v5026 = vcombine.low %v4910, %v4912
            %v5028 = vunpack.c.l.s4 1983009808
            %v5029 = vunpack.c.0.s8 %v5028
            %v5030 = vlaneseq
            %v5031 = vshrl.u32 %v5030, 7
            %v5032 = vsub.s32 %v5029, %v5031
            %v5033 = vrot.slane %v5025, %v5032
            %v5035 = vunpack.c.l.s4 1983009808
            %v5036 = vunpack.c.0.s8 %v5035
            %v5037 = vlaneseq
            %v5038 = vshrl.u32 %v5037, 7
            %v5039 = vsub.s32 %v5036, %v5038
            %v5040 = vrot.slane %v5026, %v5039
            %v5041 = vcombine.low %v5033, %v5040
            %5048 = vst [vmem:[#allocation57] sm:$0xff] %v4956
            %5049 = vst [vmem:[#allocation57 + $0x8] sm:$0xff] %v4973
            %5050 = vst [vmem:[#allocation57 + $0x10] sm:$0xff] %v4990
            %5051 = vst [vmem:[#allocation57 + $0x18] sm:$0xff] %v5007
            %5052 = vst [vmem:[#allocation57 + $0x20] sm:$0xff] %v5024
            %5053 = vst [vmem:[#allocation57 + $0x28] sm:$0xff] %v5041
          $region256: #{tpu_custom_call.1} parent=251 // pred_fallthru
            _
        $region252: #{tpu_custom_call.1} parent=103 // pred_fallthru
          _
        // Predicated region
        $region257: #{tpu_custom_call.1} parent=103 // pred_check
          %p5054 = pneg %p516
        $region258: #{tpu_custom_call.1} parent=103 // pred_check_branch
          %5056 = sbr.rel (%p5054) target = $region260
        $region259: #{tpu_custom_call.1} parent=103 // pred_region
          %s5058 = ssub.s32 768, 768
          %5059 = vsyncadd [#allocation27], %s5058
          %s5061 = sshll.u32 [#allocation57], 4
          %s5062 = int_to_ptr.vmem [resolvable:$true] %s5061
          %5064 = dma.vmem_to_hbm [thread:$0]  %s5062, 768, %s22, [#allocation27]
        $region260: #{tpu_custom_call.1} parent=103 // pred_fallthru
          _
        // Predicated region
        $region261: #{tpu_custom_call.1} parent=103 // pred_check
          %p5065 = pneg %p516
        $region262: #{tpu_custom_call.1} parent=103 // pred_check_branch
          %5067 = sbr.rel (%p5065) target = $region264
        $region263: #{tpu_custom_call.1} parent=103 // pred_region
          %5068 = dma.done [#allocation27], 768
        $region264: #{tpu_custom_call.1} parent=103 // pred_fallthru
          _
      $region104: #{tpu_custom_call.1} parent=5 // pred_fallthru
        _
      %p5069 = scmp.le.s32.totalorder 2, %s40
      // Predicated region
      $region265: #{tpu_custom_call.1} parent=5 // pred_check
        %p5070 = pneg %p5069
      $region266: #{tpu_custom_call.1} parent=5 // pred_check_branch
        %5072 = sbr.rel (%p5070) target = $region268
      $region267: #{tpu_custom_call.1} parent=5 // pred_region
        %s5073 = ssub.s32 %s40, 2
      $region268: #{tpu_custom_call.1} parent=5 // pred_fallthru
        _
    $region6: #{tpu_custom_call.1} parent=1 // loop_footer
      %s44 = sadd.s32 1, %s40
    $region7: #{tpu_custom_call.1} parent=1 // loop_footer_branch
      %39 = sbr.rel target = $region3
    $region8: #{tpu_custom_call.1} parent=1 // loop_exit
      _
    %5074 = vsyncpa [#allocation26], 1
    %s5075 = scalar_lea.sflag [#allocation26], 1
    %5076 = vsyncpa %s5075, 1
    %5077 = vsyncpa [#allocation29], 1
    %5078 = vsyncpa [#allocation32], 1
    %5079 = vsyncpa [#allocation35], 1
    %5080 = vsyncpa [#allocation38], 1
    %5081 = vsyncpa [#allocation41], 1
    %5082 = vsyncpa [#allocation44], 1
    %5083 = vsyncpa [#allocation47], 1
    %5084 = vsyncpa [#allocation50], 1
    %5085 = vsyncpa [#allocation53], 1
    %5086 = vsyncpa [#allocation56], 1
    %5087 = vsyncpa [#allocation27], 1
    %s5088 = scalar_lea.sflag [#allocation27], 1
    %5089 = vsyncpa %s5088, 1
  %5090 = vsyncmov [#allocation24]
  %s5091 = vpop.sfrf %5090
  %p5092 = scmp.eq.s32.totalorder %s5091, 0
  %p5093 = pneg %p5092
  %5095 = shalt.err (%p5093)

</llo_original>
